<compile_context>
chip_gen: v7x
topology: tpu7x:2x2x1
jax: 0.10.0
libtpu: 0.0.40
codegen_flags: <defaults>
</compile_context>

<pallas_src>
import math
import functools

import jax
import jax.numpy as jnp
from jax.experimental import pallas as pl
from jax.experimental.pallas import tpu as pltpu

NEG_INF = -1e9                    # finite stand-in for -inf masking
MXU_DTYPE = jnp.bfloat16          # matmul operand dtype (fp32 accumulation)
ACT_DTYPE = jnp.bfloat16          # inter-kernel activation storage dtype
LN_EPS = 1e-5


def _vmem_limit_bytes():
    # ~75% of physical VMEM, capped at 100 MiB (v5e/v6e ~96 MiB, v7x ~48 MiB).
    try:
        cap = int(pltpu.get_tpu_info().vmem_capacity_bytes)
        return int(min(100 * 1024 * 1024, cap * 3 // 4))
    except Exception:
        return 48 * 1024 * 1024   # safe on every generation


VMEM_LIMIT = _vmem_limit_bytes()
_CP1 = pltpu.CompilerParams(dimension_semantics=("parallel",),
                            vmem_limit_bytes=VMEM_LIMIT)
_CP2 = pltpu.CompilerParams(dimension_semantics=("parallel", "parallel"),
                            vmem_limit_bytes=VMEM_LIMIT)


def _row_tile(m, cap=512):
    """Row tile <= cap (multiple of 8), preferring >=2 grid steps (megacore)."""
    if m <= 8:
        return m
    if m <= cap:
        half = (m + 1) // 2
        return min(m, ((half + 7) // 8) * 8)
    return cap


def _col_tile(n, cap=2048):
    return n if n <= cap else cap


# ----------------------------------------------------------------------------
# In-kernel helpers
# ----------------------------------------------------------------------------
def _ln(x32, g, b, eps):
    mean = jnp.mean(x32, axis=-1, keepdims=True)
    c = x32 - mean
    var = jnp.mean(c * c, axis=-1, keepdims=True)
    return c * jax.lax.rsqrt(var + eps) * g + b


def _heads_proj(xb, w_ref, b_ref):
    """xb (nhead, rows, E) bf16 @ w (nhead, E, dh) + b (nhead, 1, dh) -> fp32."""
    y = jnp.einsum('hre,hed->hrd', xb, w_ref[...],
                   preferred_element_type=jnp.float32)
    return y + b_ref[...]


def _mha(x_q, x_kv, am, kp, wq_ref, bq_ref, wk_ref, bk_ref, wv_ref, bv_ref,
         wo_ref, bo_ref, *, scale):
    """Multi-head attention on one batch element.

    x_q (L, E) bf16, x_kv (S, E) bf16, am (L, S) fp32 additive mask,
    kp (1, S) fp32 key-padding bias -> (L, E) fp32 attention output
    (output projection included, pre-residual).
    """
    nhead = wq_ref.shape[0]
    # Heads as a leading batch dim: no lane slices, no transposes, no concat.
    qb = jnp.broadcast_to(x_q, (nhead,) + x_q.shape)
    kvb = jnp.broadcast_to(x_kv, (nhead,) + x_kv.shape)
    q = _heads_proj(qb, wq_ref, bq_ref) * scale            # (h, L, dh) fp32
    k = _heads_proj(kvb, wk_ref, bk_ref)                   # (h, S, dh)
    v = _heads_proj(kvb, wv_ref, bv_ref)                   # (h, S, dh)

    # TODO(synk): for long S add flash-style kv-tiling (online softmax with a
    # grid axis over S) so the (h, L, S) score tile never exceeds v7x VMEM.
    s = jnp.einsum('hld,hsd->hls', q.astype(MXU_DTYPE), k.astype(MXU_DTYPE),
                   preferred_element_type=jnp.float32)
    s = s + am[None, :, :] + kp[None, :, :]                # fp32 mask math
    s = s - jnp.max(s, axis=-1, keepdims=True)
    p = jnp.exp(s)
    p = p * pl.reciprocal(jnp.sum(p, axis=-1, keepdims=True), approx=True)

    o = jnp.einsum('hls,hsd->hld', p.astype(MXU_DTYPE), v.astype(MXU_DTYPE),
                   preferred_element_type=jnp.float32)      # (h, L, dh)
    # Per-head output projection, summed over heads (== concat @ Wo^T).
    o = jnp.einsum('hld,hde->hle', o.astype(MXU_DTYPE), wo_ref[...],
                   preferred_element_type=jnp.float32)      # (h, L, E)
    return jnp.sum(o, axis=0) + bo_ref[...]                 # (L, E)


# ----------------------------------------------------------------------------
# Pallas kernels (one fused kernel per sub-layer)
# ----------------------------------------------------------------------------
def _self_attn_kernel(x_ref, am_ref, kp_ref, wq_ref, bq_ref, wk_ref, bk_ref,
                      wv_ref, bv_ref, wo_ref, bo_ref, g_ref, b_ref, o_ref,
                      *, scale, eps):
    x = x_ref[0]                                           # (L, E) bf16
    xm = x.astype(MXU_DTYPE)
    attn = _mha(xm, xm, am_ref[...], kp_ref[0], wq_ref, bq_ref, wk_ref, bk_ref,
                wv_ref, bv_ref, wo_ref, bo_ref, scale=scale)
    y = attn + x.astype(jnp.float32)                       # residual
    o_ref[0] = _ln(y, g_ref[...], b_ref[...], eps).astype(o_ref.dtype)


def _cross_attn_kernel(x_ref, mem_ref, am_ref, kp_ref, wq_ref, bq_ref, wk_ref,
                       bk_ref, wv_ref, bv_ref, wo_ref, bo_ref, g_ref, b_ref,
                       o_ref, *, scale, eps):
    x = x_ref[0]                                           # (L, E)
    attn = _mha(x.astype(MXU_DTYPE), mem_ref[0].astype(MXU_DTYPE),
                am_ref[...], kp_ref[0], wq_ref, bq_ref, wk_ref, bk_ref,
                wv_ref, bv_ref, wo_ref, bo_ref, scale=scale)
    y = attn + x.astype(jnp.float32)
    o_ref[0] = _ln(y, g_ref[...], b_ref[...], eps).astype(o_ref.dtype)


def _ffn_kernel(x_ref, w1_ref, b1_ref, w2_ref, b2_ref, g_ref, b_ref, o_ref,
                *, eps):
    # Fused linear -> ReLU -> linear -> +residual -> LayerNorm.
    x = x_ref[...]
    h = jnp.dot(x.astype(MXU_DTYPE), w1_ref[...],
                preferred_element_type=jnp.float32)
    h = jnp.maximum(h + b1_ref[...], 0.0)
    y = jnp.dot(h.astype(MXU_DTYPE), w2_ref[...],
                preferred_element_type=jnp.float32) + b2_ref[...]
    y = y + x.astype(jnp.float32)                          # residual
    o_ref[...] = _ln(y, g_ref[...], b_ref[...], eps).astype(o_ref.dtype)


def _ln_kernel(x_ref, g_ref, b_ref, o_ref, *, eps):
    o_ref[...] = _ln(x_ref[...].astype(jnp.float32), g_ref[...], b_ref[...],
                     eps).astype(o_ref.dtype)


def _linear_kernel(x_ref, w_ref, b_ref, o_ref):
    acc = jnp.dot(x_ref[...].astype(MXU_DTYPE), w_ref[...],
                  preferred_element_type=jnp.float32)
    o_ref[...] = (acc + b_ref[...]).astype(o_ref.dtype)


# ----------------------------------------------------------------------------
# pallas_call wrappers
# ----------------------------------------------------------------------------
def attn_sublayer(x, attn_mask, kp_bias, p, ln_w, ln_b, memory=None):
    """Fused MHA sub-layer (projections + attention + out-proj + add + LN).

    x: (N, L, E) bf16; attn_mask: (L, S) fp32 (resident, shared across batch);
    kp_bias: (N, 1, S) fp32 additive key-padding bias; memory: (N, S, E) bf16
    for cross-attention (None -> self-attention).  Output: (N, L, E) bf16.
    """
    N, L, E = x.shape
    nhead, _, dh = p["wq"].shape
    scale = 1.0 / math.sqrt(dh)

    def resident(shape):
        return pl.BlockSpec(shape, lambda n: (0,) * len(shape))

    if memory is None:
        S = L
        kern = functools.partial(_self_attn_kernel, scale=scale, eps=LN_EPS)
        arrays = [x]
        specs = [pl.BlockSpec((1, L, E), lambda n: (n, 0, 0))]
    else:
        S = memory.shape[1]
        kern = functools.partial(_cross_attn_kernel, scale=scale, eps=LN_EPS)
        arrays = [x, memory]
        specs = [pl.BlockSpec((1, L, E), lambda n: (n, 0, 0)),
                 pl.BlockSpec((1, S, E), lambda n: (n, 0, 0))]

    arrays += [attn_mask, kp_bias, p["wq"], p["bq"], p["wk"], p["bk"],
               p["wv"], p["bv"], p["wo"], p["bo"],
               ln_w.reshape(1, E), ln_b.reshape(1, E)]
    specs += [resident((L, S)),                                 # attn mask
              pl.BlockSpec((1, 1, S), lambda n: (n, 0, 0)),     # key padding
              resident(p["wq"].shape), resident(p["bq"].shape),
              resident(p["wk"].shape), resident(p["bk"].shape),
              resident(p["wv"].shape), resident(p["bv"].shape),
              resident(p["wo"].shape), resident(p["bo"].shape),
              resident((1, E)), resident((1, E))]

    # TODO(synk): for better MXU utilization at realistic shapes, fold several
    # batch elements per grid step (taller M per matmul) instead of grid=(N,).
    return pl.pallas_call(
        kern,
        out_shape=jax.ShapeDtypeStruct((N, L, E), x.dtype),
        grid=(N,),
        in_specs=specs,
        out_specs=pl.BlockSpec((1, L, E), lambda n: (n, 0, 0)),
        compiler_params=_CP1,
    )(*arrays)


def ffn_sublayer(x2d, p, ln_w, ln_b):
    M, E = x2d.shape
    F = p["ff1_w"].shape[1]
    tm = _row_tile(M)
    # TODO(synk): for realistic E/F on v7x (64 MiB VMEM) single-buffer the two
    # resident weight blocks (pl.Buffered(1)) or add an F grid axis.
    return pl.pallas_call(
        functools.partial(_ffn_kernel, eps=LN_EPS),
        out_shape=jax.ShapeDtypeStruct((M, E), x2d.dtype),
        grid=(pl.cdiv(M, tm),),
        in_specs=[
            pl.BlockSpec((tm, E), lambda i: (i, 0)),
            pl.BlockSpec((E, F), lambda i: (0, 0)),
            pl.BlockSpec((1, F), lambda i: (0, 0)),
            pl.BlockSpec((F, E), lambda i: (0, 0)),
            pl.BlockSpec((1, E), lambda i: (0, 0)),
            pl.BlockSpec((1, E), lambda i: (0, 0)),
            pl.BlockSpec((1, E), lambda i: (0, 0)),
        ],
        out_specs=pl.BlockSpec((tm, E), lambda i: (i, 0)),
        compiler_params=_CP1,
    )(x2d, p["ff1_w"], p["ff1_b"].reshape(1, F), p["ff2_w"],
      p["ff2_b"].reshape(1, E), ln_w.reshape(1, E), ln_b.reshape(1, E))


def layer_norm(x2d, g, b):
    M, E = x2d.shape
    tm = _row_tile(M)
    return pl.pallas_call(
        functools.partial(_ln_kernel, eps=LN_EPS),
        out_shape=jax.ShapeDtypeStruct((M, E), x2d.dtype),
        grid=(pl.cdiv(M, tm),),
        in_specs=[pl.BlockSpec((tm, E), lambda i: (i, 0)),
                  pl.BlockSpec((1, E), lambda i: (0, 0)),
                  pl.BlockSpec((1, E), lambda i: (0, 0))],
        out_specs=pl.BlockSpec((tm, E), lambda i: (i, 0)),
        compiler_params=_CP1,
    )(x2d, g.reshape(1, E), b.reshape(1, E))


def linear(x, w_t, b, out_dtype=jnp.float32):
    """x: (M, K) @ w_t: (K, N) + b: (N,) -> (M, N). Tiled over (rows, cols)."""
    M, K = x.shape
    N = w_t.shape[1]
    tm, tn = _row_tile(M), _col_tile(N)
    return pl.pallas_call(
        _linear_kernel,
        out_shape=jax.ShapeDtypeStruct((M, N), out_dtype),
        grid=(pl.cdiv(M, tm), pl.cdiv(N, tn)),
        in_specs=[
            pl.BlockSpec((tm, K), lambda i, j: (i, 0)),
            pl.BlockSpec((K, tn), lambda i, j: (0, j)),
            pl.BlockSpec((1, tn), lambda i, j: (0, j)),
        ],
        out_specs=pl.BlockSpec((tm, tn), lambda i, j: (i, j)),
        compiler_params=_CP2,
    )(x, w_t, b.reshape(1, N))


# ----------------------------------------------------------------------------
# Model glue (embeddings, mask prep, layer loop) in plain JAX
# ----------------------------------------------------------------------------
def transformer_forward(params, src, trg, src_mask, tgt_mask,
                        src_padding_mask, tgt_padding_mask,
                        memory_key_padding_mask, *, nhead):
    E = params["src_emb"].shape[1]
    S, N = src.shape
    T, _ = trg.shape
    scale_e = math.sqrt(E)
    pos = params["pos_emb"]                          # (maxlen, E)

    # Embedding * sqrt(E) + positional encoding; batch-major (N, seq, E) bf16.
    # TODO(synk): dropout (p=0.1) is an eval-mode no-op here.
    src_x = (params["src_emb"][src.T] * scale_e + pos[:S][None]).astype(ACT_DTYPE)
    tgt_x = (params["tgt_emb"][trg.T] * scale_e + pos[:T][None]).astype(ACT_DTYPE)

    # Tiny additive key-padding biases (N, 1, S); no (N, L, S) mask anywhere.
    src_kp = jnp.where(src_padding_mask, NEG_INF, 0.0).astype(jnp.float32)[:, None, :]
    tgt_kp = jnp.where(tgt_padding_mask, NEG_INF, 0.0).astype(jnp.float32)[:, None, :]
    mem_kp = jnp.where(memory_key_padding_mask, NEG_INF, 0.0).astype(jnp.float32)[:, None, :]

    src_am = src_mask.astype(jnp.float32)            # (S, S), resident in VMEM
    tgt_am = tgt_mask.astype(jnp.float32)            # (T, T)
    mem_am = jnp.zeros((T, S), jnp.float32)          # memory_mask is None

    # ---- encoder ----
    mem = src_x
    for lp in params["enc_layers"]:
        mem = attn_sublayer(mem, src_am, src_kp, lp["self_attn"],
                            lp["norm1_w"], lp["norm1_b"])
        mem = ffn_sublayer(mem.reshape(N * S, E), lp,
                           lp["norm2_w"], lp["norm2_b"]).reshape(N, S, E)
    mem = layer_norm(mem.reshape(N * S, E),
                     params["enc_norm_w"], params["enc_norm_b"]).reshape(N, S, E)

    # ---- decoder ----
    x = tgt_x
    for lp in params["dec_layers"]:
        x = attn_sublayer(x, tgt_am, tgt_kp, lp["self_attn"],
                          lp["norm1_w"], lp["norm1_b"])
        x = attn_sublayer(x, mem_am, mem_kp, lp["cross_attn"],
                          lp["norm2_w"], lp["norm2_b"], memory=mem)
        x = ffn_sublayer(x.reshape(N * T, E), lp,
                         lp["norm3_w"], lp["norm3_b"]).reshape(N, T, E)
    x2d = layer_norm(x.reshape(N * T, E),
                     params["dec_norm_w"], params["dec_norm_b"])

    # ---- generator ----
    logits = linear(x2d, params["gen_w_t"], params["gen_b"], out_dtype=jnp.float32)
    V = params["gen_b"].shape[0]
    return logits.reshape(N, T, V).transpose(1, 0, 2)   # (T, N, V) like torch


# ----------------------------------------------------------------------------
# Deterministic parameter init (synthetic; shapes mirror torch module)
# ----------------------------------------------------------------------------
def _sinusoidal_pos_embedding(maxlen, emb_size):
    den = jnp.exp(-jnp.arange(0, emb_size, 2, dtype=jnp.float32)
                  * math.log(10000.0) / emb_size)
    pos = jnp.arange(0, maxlen, dtype=jnp.float32).reshape(maxlen, 1)
    pe = jnp.zeros((maxlen, emb_size), jnp.float32)
    pe = pe.at[:, 0::2].set(jnp.sin(pos * den))
    pe = pe.at[:, 1::2].set(jnp.cos(pos * den))
    return pe


def init_params(key, *, num_enc, num_dec, emb_size, nhead, dim_ff,
                src_vocab, tgt_vocab, maxlen=128):
    dh = emb_size // nhead
    keys = iter(jax.random.split(key, 4096))

    def w(shape, scale=0.02):
        # matmul weights in bf16 (halves weight DMA bytes; fp32 accumulation)
        return (jax.random.normal(next(keys), shape, jnp.float32) * scale
                ).astype(MXU_DTYPE)

    def zeros(shape):
        return jnp.zeros(shape, jnp.float32)

    def ones(shape):
        return jnp.ones(shape, jnp.float32)

    def attn_params(E):
        # Per-head layout: leading `nhead` batch dim -> no in-kernel slices.
        return {"wq": w((nhead, E, dh)), "bq": zeros((nhead, 1, dh)),
                "wk": w((nhead, E, dh)), "bk": zeros((nhead, 1, dh)),
                "wv": w((nhead, E, dh)), "bv": zeros((nhead, 1, dh)),
                "wo": w((nhead, dh, E)), "bo": zeros((1, E))}

    def enc_layer(E, F):
        return {"self_attn": attn_params(E),
                "ff1_w": w((E, F)), "ff1_b": zeros((F,)),
                "ff2_w": w((F, E)), "ff2_b": zeros((E,)),
                "norm1_w": ones((E,)), "norm1_b": zeros((E,)),
                "norm2_w": ones((E,)), "norm2_b": zeros((E,))}

    def dec_layer(E, F):
        p = enc_layer(E, F)
        p["cross_attn"] = attn_params(E)
        p["norm3_w"] = ones((E,))
        p["norm3_b"] = zeros((E,))
        return p

    E, F = emb_size, dim_ff
    return {
        "src_emb": jax.random.normal(next(keys), (src_vocab, E), jnp.float32),
        "tgt_emb": jax.random.normal(next(keys), (tgt_vocab, E), jnp.float32),
        "pos_emb": _sinusoidal_pos_embedding(maxlen, E),
        "enc_layers": [enc_layer(E, F) for _ in range(num_enc)],
        "dec_layers": [dec_layer(E, F) for _ in range(num_dec)],
        "enc_norm_w": ones((E,)), "enc_norm_b": zeros((E,)),
        "dec_norm_w": ones((E,)), "dec_norm_b": zeros((E,)),
        "gen_w_t": w((E, tgt_vocab)), "gen_b": zeros((tgt_vocab,)),
    }


# ----------------------------------------------------------------------------
if __name__ == "__main__":
    # Small, forward-consistent shapes (E divisible by nhead; lane-dense E).
    EMB, NHEAD, FF = 128, 4, 128
    NUM_ENC, NUM_DEC = 2, 2
    SRC_VOCAB, TGT_VOCAB = 48, 56
    S, T, N = 8, 8, 2  # src len, tgt len, batch

    root = jax.random.PRNGKey(0)
    kp_, ks, kt = jax.random.split(root, 3)

    params = init_params(kp_, num_enc=NUM_ENC, num_dec=NUM_DEC, emb_size=EMB,
                         nhead=NHEAD, dim_ff=FF, src_vocab=SRC_VOCAB,
                         tgt_vocab=TGT_VOCAB)

    src = jax.random.randint(ks, (S, N), 0, SRC_VOCAB, dtype=jnp.int32)
    trg = jax.random.randint(kt, (T, N), 0, TGT_VOCAB, dtype=jnp.int32)

    # src_mask: no masking; tgt_mask: causal (generate_square_subsequent_mask)
    src_mask = jnp.zeros((S, S), jnp.float32)
    tgt_mask = jnp.where(jnp.triu(jnp.ones((T, T), bool), k=1), NEG_INF, 0.0)

    src_padding_mask = jnp.zeros((N, S), bool).at[1, -1].set(True)
    tgt_padding_mask = jnp.zeros((N, T), bool).at[1, -1].set(True)
    memory_key_padding_mask = src_padding_mask

    fwd = jax.jit(functools.partial(transformer_forward, nhead=NHEAD))
    logits = fwd(params, src, trg, src_mask, tgt_mask,
                 src_padding_mask, tgt_padding_mask, memory_key_padding_mask)
    logits = jax.block_until_ready(logits)

    assert logits.shape == (T, N, TGT_VOCAB), logits.shape
    assert bool(jnp.all(jnp.isfinite(logits)))
    print("KERNEL_OK")
</pallas_src>

<mosaic_0001>
module attributes {stable_mosaic.version = 11 : i64} {
  func.func @_ln_kernel(%arg0: i32, %arg1: memref<8x128xbf16, #tpu.memory_space<vmem>>, %arg2: memref<1x128xf32, #tpu.memory_space<vmem>>, %arg3: memref<1x128xf32, #tpu.memory_space<vmem>>, %arg4: memref<8x128xbf16, #tpu.memory_space<vmem>>) attributes {dimension_semantics = [#tpu.dimension_semantics<parallel>], iteration_bounds = array<i64: 2>, scalar_prefetch = 0 : i64, scratch_operands = 0 : i64, tpu.core_type = #tpu.core_type<tc>, window_params = [{transform_indices = @transform_0, window_bounds = array<i64: 8, 128>}, {pipeline_mode = #tpu.pipeline_mode<synchronous>, transform_indices = @transform_1, window_bounds = array<i64: 1, 128>}, {pipeline_mode = #tpu.pipeline_mode<synchronous>, transform_indices = @transform_2, window_bounds = array<i64: 1, 128>}, {transform_indices = @transform_3, window_bounds = array<i64: 8, 128>}]} {
    %c0 = arith.constant 0 : index
    %c0_0 = arith.constant 0 : index
    %0 = vector.load %arg1[%c0, %c0_0] : memref<8x128xbf16, #tpu.memory_space<vmem>>, vector<8x128xbf16>
    %1 = arith.extf %0 : vector<8x128xbf16> to vector<8x128xf32>
    %c0_1 = arith.constant 0 : index
    %c0_2 = arith.constant 0 : index
    %2 = vector.load %arg2[%c0_1, %c0_2] : memref<1x128xf32, #tpu.memory_space<vmem>>, vector<1x128xf32>
    %c0_3 = arith.constant 0 : index
    %c0_4 = arith.constant 0 : index
    %3 = vector.load %arg3[%c0_3, %c0_4] : memref<1x128xf32, #tpu.memory_space<vmem>>, vector<1x128xf32>
    %cst = arith.constant dense<0.000000e+00> : vector<8xf32>
    %4 = vector.multi_reduction <add>, %1, %cst [1] : vector<8x128xf32> to vector<8xf32>
    %5 = vector.shape_cast %4 : vector<8xf32> to vector<8x1xf32>
    %cst_5 = arith.constant 1.280000e+02 : f32
    %6 = vector.broadcast %cst_5 : f32 to vector<8x1xf32>
    %7 = arith.divf %5, %6 : vector<8x1xf32>
    %8 = vector.broadcast %7 : vector<8x1xf32> to vector<8x128xf32>
    %9 = arith.subf %1, %8 : vector<8x128xf32>
    %10 = arith.mulf %9, %9 : vector<8x128xf32>
    %cst_6 = arith.constant dense<0.000000e+00> : vector<8xf32>
    %11 = vector.multi_reduction <add>, %10, %cst_6 [1] : vector<8x128xf32> to vector<8xf32>
    %12 = vector.shape_cast %11 : vector<8xf32> to vector<8x1xf32>
    %cst_7 = arith.constant 1.280000e+02 : f32
    %13 = vector.broadcast %cst_7 : f32 to vector<8x1xf32>
    %14 = arith.divf %12, %13 : vector<8x1xf32>
    %cst_8 = arith.constant 9.99999974E-6 : f32
    %15 = vector.broadcast %cst_8 : f32 to vector<8x1xf32>
    %16 = arith.addf %14, %15 : vector<8x1xf32>
    %17 = math.rsqrt %16 : vector<8x1xf32>
    %18 = vector.broadcast %17 : vector<8x1xf32> to vector<8x128xf32>
    %19 = arith.mulf %9, %18 : vector<8x128xf32>
    %20 = vector.broadcast %2 : vector<1x128xf32> to vector<8x128xf32>
    %21 = arith.mulf %19, %20 : vector<8x128xf32>
    %22 = vector.broadcast %3 : vector<1x128xf32> to vector<8x128xf32>
    %23 = arith.addf %21, %22 : vector<8x128xf32>
    %24 = arith.truncf %23 : vector<8x128xf32> to vector<8x128xbf16>
    %c0_9 = arith.constant 0 : index
    %c0_10 = arith.constant 0 : index
    %25 = vector.load %arg4[%c0_9, %c0_10] : memref<8x128xbf16, #tpu.memory_space<vmem>>, vector<8x128xbf16>
    tpu.vector_store %arg4[%c0_9, %c0_10], %24 {strides = array<i32>} : memref<8x128xbf16, #tpu.memory_space<vmem>>, vector<8x128xbf16>,
    return
  }
  func.func @transform_0(%arg0: i32) -> (i32, i32) {
    %c0_i32 = arith.constant 0 : i32
    %c0_i32_0 = arith.constant 0 : i32
    return %arg0, %c0_i32 : i32, i32
  }
  func.func @transform_1(%arg0: i32) -> (i32, i32) {
    %c0_i32 = arith.constant 0 : i32
    %c0_i32_0 = arith.constant 0 : i32
    %c0_i32_1 = arith.constant 0 : i32
    return %c0_i32, %c0_i32_0 : i32, i32
  }
  func.func @transform_2(%arg0: i32) -> (i32, i32) {
    %c0_i32 = arith.constant 0 : i32
    %c0_i32_0 = arith.constant 0 : i32
    %c0_i32_1 = arith.constant 0 : i32
    return %c0_i32, %c0_i32_0 : i32, i32
  }
  func.func @transform_3(%arg0: i32) -> (i32, i32) {
    %c0_i32 = arith.constant 0 : i32
    %c0_i32_0 = arith.constant 0 : i32
    return %arg0, %c0_i32 : i32, i32
  }
}

module attributes {stable_mosaic.version = 11 : i64} {
  func.func @_ffn_kernel(%arg0: i32, %arg1: memref<8x128xbf16, #tpu.memory_space<vmem>>, %arg2: memref<128x128xbf16, #tpu.memory_space<vmem>>, %arg3: memref<1x128xf32, #tpu.memory_space<vmem>>, %arg4: memref<128x128xbf16, #tpu.memory_space<vmem>>, %arg5: memref<1x128xf32, #tpu.memory_space<vmem>>, %arg6: memref<1x128xf32, #tpu.memory_space<vmem>>, %arg7: memref<1x128xf32, #tpu.memory_space<vmem>>, %arg8: memref<8x128xbf16, #tpu.memory_space<vmem>>) attributes {dimension_semantics = [#tpu.dimension_semantics<parallel>], iteration_bounds = array<i64: 2>, scalar_prefetch = 0 : i64, scratch_operands = 0 : i64, tpu.core_type = #tpu.core_type<tc>, window_params = [{transform_indices = @transform_0, window_bounds = array<i64: 8, 128>}, {pipeline_mode = #tpu.pipeline_mode<synchronous>, transform_indices = @transform_1, window_bounds = array<i64: 128, 128>}, {pipeline_mode = #tpu.pipeline_mode<synchronous>, transform_indices = @transform_2, window_bounds = array<i64: 1, 128>}, {pipeline_mode = #tpu.pipeline_mode<synchronous>, transform_indices = @transform_3, window_bounds = array<i64: 128, 128>}, {pipeline_mode = #tpu.pipeline_mode<synchronous>, transform_indices = @transform_4, window_bounds = array<i64: 1, 128>}, {pipeline_mode = #tpu.pipeline_mode<synchronous>, transform_indices = @transform_5, window_bounds = array<i64: 1, 128>}, {pipeline_mode = #tpu.pipeline_mode<synchronous>, transform_indices = @transform_6, window_bounds = array<i64: 1, 128>}, {transform_indices = @transform_7, window_bounds = array<i64: 8, 128>}]} {
    %c0 = arith.constant 0 : index
    %c0_0 = arith.constant 0 : index
    %0 = vector.load %arg1[%c0, %c0_0] : memref<8x128xbf16, #tpu.memory_space<vmem>>, vector<8x128xbf16>
    %c0_1 = arith.constant 0 : index
    %c0_2 = arith.constant 0 : index
    %1 = vector.load %arg2[%c0_1, %c0_2] : memref<128x128xbf16, #tpu.memory_space<vmem>>, vector<128x128xbf16>
    %cst = arith.constant dense<0.000000e+00> : vector<8x128xf32>
    %2 = tpu.matmul %0, %1, %cst {dimension_numbers = #tpu.dot_dimension_numbers<[1], [0], [0], [1], [0, 0, 1, 1], [], []>} : vector<8x128xbf16>, vector<128x128xbf16>, vector<8x128xf32> -> vector<8x128xf32>
    %c0_3 = arith.constant 0 : index
    %c0_4 = arith.constant 0 : index
    %3 = vector.load %arg3[%c0_3, %c0_4] : memref<1x128xf32, #tpu.memory_space<vmem>>, vector<1x128xf32>
    %4 = vector.broadcast %3 : vector<1x128xf32> to vector<8x128xf32>
    %5 = arith.addf %2, %4 : vector<8x128xf32>
    %cst_5 = arith.constant 0.000000e+00 : f32
    %6 = vector.broadcast %cst_5 : f32 to vector<8x128xf32>
    %7 = arith.maximumf %5, %6 : vector<8x128xf32>
    %8 = arith.truncf %7 : vector<8x128xf32> to vector<8x128xbf16>
    %c0_6 = arith.constant 0 : index
    %c0_7 = arith.constant 0 : index
    %9 = vector.load %arg4[%c0_6, %c0_7] : memref<128x128xbf16, #tpu.memory_space<vmem>>, vector<128x128xbf16>
    %cst_8 = arith.constant dense<0.000000e+00> : vector<8x128xf32>
    %10 = tpu.matmul %8, %9, %cst_8 {dimension_numbers = #tpu.dot_dimension_numbers<[1], [0], [0], [1], [0, 0, 1, 1], [], []>} : vector<8x128xbf16>, vector<128x128xbf16>, vector<8x128xf32> -> vector<8x128xf32>
    %c0_9 = arith.constant 0 : index
    %c0_10 = arith.constant 0 : index
    %11 = vector.load %arg5[%c0_9, %c0_10] : memref<1x128xf32, #tpu.memory_space<vmem>>, vector<1x128xf32>
    %12 = vector.broadcast %11 : vector<1x128xf32> to vector<8x128xf32>
    %13 = arith.addf %10, %12 : vector<8x128xf32>
    %14 = arith.extf %0 : vector<8x128xbf16> to vector<8x128xf32>
    %15 = arith.addf %13, %14 : vector<8x128xf32>
    %c0_11 = arith.constant 0 : index
    %c0_12 = arith.constant 0 : index
    %16 = vector.load %arg6[%c0_11, %c0_12] : memref<1x128xf32, #tpu.memory_space<vmem>>, vector<1x128xf32>
    %c0_13 = arith.constant 0 : index
    %c0_14 = arith.constant 0 : index
    %17 = vector.load %arg7[%c0_13, %c0_14] : memref<1x128xf32, #tpu.memory_space<vmem>>, vector<1x128xf32>
    %cst_15 = arith.constant dense<0.000000e+00> : vector<8xf32>
    %18 = vector.multi_reduction <add>, %15, %cst_15 [1] : vector<8x128xf32> to vector<8xf32>
    %19 = vector.shape_cast %18 : vector<8xf32> to vector<8x1xf32>
    %cst_16 = arith.constant 1.280000e+02 : f32
    %20 = vector.broadcast %cst_16 : f32 to vector<8x1xf32>
    %21 = arith.divf %19, %20 : vector<8x1xf32>
    %22 = vector.broadcast %21 : vector<8x1xf32> to vector<8x128xf32>
    %23 = arith.subf %15, %22 : vector<8x128xf32>
    %24 = arith.mulf %23, %23 : vector<8x128xf32>
    %cst_17 = arith.constant dense<0.000000e+00> : vector<8xf32>
    %25 = vector.multi_reduction <add>, %24, %cst_17 [1] : vector<8x128xf32> to vector<8xf32>
    %26 = vector.shape_cast %25 : vector<8xf32> to vector<8x1xf32>
    %cst_18 = arith.constant 1.280000e+02 : f32
    %27 = vector.broadcast %cst_18 : f32 to vector<8x1xf32>
    %28 = arith.divf %26, %27 : vector<8x1xf32>
    %cst_19 = arith.constant 9.99999974E-6 : f32
    %29 = vector.broadcast %cst_19 : f32 to vector<8x1xf32>
    %30 = arith.addf %28, %29 : vector<8x1xf32>
    %31 = math.rsqrt %30 : vector<8x1xf32>
    %32 = vector.broadcast %31 : vector<8x1xf32> to vector<8x128xf32>
    %33 = arith.mulf %23, %32 : vector<8x128xf32>
    %34 = vector.broadcast %16 : vector<1x128xf32> to vector<8x128xf32>
    %35 = arith.mulf %33, %34 : vector<8x128xf32>
    %36 = vector.broadcast %17 : vector<1x128xf32> to vector<8x128xf32>
    %37 = arith.addf %35, %36 : vector<8x128xf32>
    %38 = arith.truncf %37 : vector<8x128xf32> to vector<8x128xbf16>
    %c0_20 = arith.constant 0 : index
    %c0_21 = arith.constant 0 : index
    %39 = vector.load %arg8[%c0_20, %c0_21] : memref<8x128xbf16, #tpu.memory_space<vmem>>, vector<8x128xbf16>
    tpu.vector_store %arg8[%c0_20, %c0_21], %38 {strides = array<i32>} : memref<8x128xbf16, #tpu.memory_space<vmem>>, vector<8x128xbf16>,
    return
  }
  func.func @transform_0(%arg0: i32) -> (i32, i32) {
    %c0_i32 = arith.constant 0 : i32
    %c0_i32_0 = arith.constant 0 : i32
    return %arg0, %c0_i32 : i32, i32
  }
  func.func @transform_1(%arg0: i32) -> (i32, i32) {
    %c0_i32 = arith.constant 0 : i32
    %c0_i32_0 = arith.constant 0 : i32
    %c0_i32_1 = arith.constant 0 : i32
    return %c0_i32, %c0_i32_0 : i32, i32
  }
  func.func @transform_2(%arg0: i32) -> (i32, i32) {
    %c0_i32 = arith.constant 0 : i32
    %c0_i32_0 = arith.constant 0 : i32
    %c0_i32_1 = arith.constant 0 : i32
    return %c0_i32, %c0_i32_0 : i32, i32
  }
  func.func @transform_3(%arg0: i32) -> (i32, i32) {
    %c0_i32 = arith.constant 0 : i32
    %c0_i32_0 = arith.constant 0 : i32
    %c0_i32_1 = arith.constant 0 : i32
    return %c0_i32, %c0_i32_0 : i32, i32
  }
  func.func @transform_4(%arg0: i32) -> (i32, i32) {
    %c0_i32 = arith.constant 0 : i32
    %c0_i32_0 = arith.constant 0 : i32
    %c0_i32_1 = arith.constant 0 : i32
    return %c0_i32, %c0_i32_0 : i32, i32
  }
  func.func @transform_5(%arg0: i32) -> (i32, i32) {
    %c0_i32 = arith.constant 0 : i32
    %c0_i32_0 = arith.constant 0 : i32
    %c0_i32_1 = arith.constant 0 : i32
    return %c0_i32, %c0_i32_0 : i32, i32
  }
  func.func @transform_6(%arg0: i32) -> (i32, i32) {
    %c0_i32 = arith.constant 0 : i32
    %c0_i32_0 = arith.constant 0 : i32
    %c0_i32_1 = arith.constant 0 : i32
    return %c0_i32, %c0_i32_0 : i32, i32
  }
  func.func @transform_7(%arg0: i32) -> (i32, i32) {
    %c0_i32 = arith.constant 0 : i32
    %c0_i32_0 = arith.constant 0 : i32
    return %arg0, %c0_i32 : i32, i32
  }
}

module attributes {stable_mosaic.version = 11 : i64} {
  func.func @_self_attn_kernel(%arg0: i32, %arg1: memref<1x8x128xbf16, #tpu.memory_space<vmem>>, %arg2: memref<8x8xf32, #tpu.memory_space<vmem>>, %arg3: memref<1x1x8xf32, #tpu.memory_space<vmem>>, %arg4: memref<4x128x32xbf16, #tpu.memory_space<vmem>>, %arg5: memref<4x1x32xf32, #tpu.memory_space<vmem>>, %arg6: memref<4x128x32xbf16, #tpu.memory_space<vmem>>, %arg7: memref<4x1x32xf32, #tpu.memory_space<vmem>>, %arg8: memref<4x128x32xbf16, #tpu.memory_space<vmem>>, %arg9: memref<4x1x32xf32, #tpu.memory_space<vmem>>, %arg10: memref<4x32x128xbf16, #tpu.memory_space<vmem>>, %arg11: memref<1x128xf32, #tpu.memory_space<vmem>>, %arg12: memref<1x128xf32, #tpu.memory_space<vmem>>, %arg13: memref<1x128xf32, #tpu.memory_space<vmem>>, %arg14: memref<1x8x128xbf16, #tpu.memory_space<vmem>>) attributes {dimension_semantics = [#tpu.dimension_semantics<parallel>], iteration_bounds = array<i64: 2>, scalar_prefetch = 0 : i64, scratch_operands = 0 : i64, tpu.core_type = #tpu.core_type<tc>, window_params = [{transform_indices = @transform_0, window_bounds = array<i64: 1, 8, 128>}, {pipeline_mode = #tpu.pipeline_mode<synchronous>, transform_indices = @transform_1, window_bounds = array<i64: 8, 8>}, {transform_indices = @transform_2, window_bounds = array<i64: 1, 1, 8>}, {pipeline_mode = #tpu.pipeline_mode<synchronous>, transform_indices = @transform_3, window_bounds = array<i64: 4, 128, 32>}, {pipeline_mode = #tpu.pipeline_mode<synchronous>, transform_indices = @transform_4, window_bounds = array<i64: 4, 1, 32>}, {pipeline_mode = #tpu.pipeline_mode<synchronous>, transform_indices = @transform_5, window_bounds = array<i64: 4, 128, 32>}, {pipeline_mode = #tpu.pipeline_mode<synchronous>, transform_indices = @transform_6, window_bounds = array<i64: 4, 1, 32>}, {pipeline_mode = #tpu.pipeline_mode<synchronous>, transform_indices = @transform_7, window_bounds = array<i64: 4, 128, 32>}, {pipeline_mode = #tpu.pipeline_mode<synchronous>, transform_indices = @transform_8, window_bounds = array<i64: 4, 1, 32>}, {pipeline_mode = #tpu.pipeline_mode<synchronous>, transform_indices = @transform_9, window_bounds = array<i64: 4, 32, 128>}, {pipeline_mode = #tpu.pipeline_mode<synchronous>, transform_indices = @transform_10, window_bounds = array<i64: 1, 128>}, {pipeline_mode = #tpu.pipeline_mode<synchronous>, transform_indices = @transform_11, window_bounds = array<i64: 1, 128>}, {pipeline_mode = #tpu.pipeline_mode<synchronous>, transform_indices = @transform_12, window_bounds = array<i64: 1, 128>}, {transform_indices = @transform_13, window_bounds = array<i64: 1, 8, 128>}]} {
    %c0 = arith.constant 0 : index
    %c0_0 = arith.constant 0 : index
    %c0_1 = arith.constant 0 : index
    %0 = vector.load %arg1[%c0, %c0_0, %c0_1] : memref<1x8x128xbf16, #tpu.memory_space<vmem>>, vector<1x8x128xbf16>
    %1 = vector.shape_cast %0 : vector<1x8x128xbf16> to vector<8x128xbf16>
    %c0_2 = arith.constant 0 : index
    %c0_3 = arith.constant 0 : index
    %2 = vector.load %arg2[%c0_2, %c0_3] : memref<8x8xf32, #tpu.memory_space<vmem>>, vector<8x8xf32>
    %c0_4 = arith.constant 0 : index
    %c0_5 = arith.constant 0 : index
    %c0_6 = arith.constant 0 : index
    %3 = vector.load %arg3[%c0_4, %c0_5, %c0_6] : memref<1x1x8xf32, #tpu.memory_space<vmem>>, vector<1x1x8xf32>
    %4 = vector.shape_cast %3 : vector<1x1x8xf32> to vector<1x8xf32>
    %5 = vector.shape_cast %1 : vector<8x128xbf16> to vector<1x8x128xbf16>
    %6 = vector.broadcast %5 : vector<1x8x128xbf16> to vector<4x8x128xbf16>
    %7 = vector.shape_cast %1 : vector<8x128xbf16> to vector<1x8x128xbf16>
    %8 = vector.broadcast %7 : vector<1x8x128xbf16> to vector<4x8x128xbf16>
    %c0_7 = arith.constant 0 : index
    %c0_8 = arith.constant 0 : index
    %c0_9 = arith.constant 0 : index
    %9 = vector.load %arg4[%c0_7, %c0_8, %c0_9] : memref<4x128x32xbf16, #tpu.memory_space<vmem>>, vector<4x128x32xbf16>
    "tpu.trace_start"() <{level = 10 : i32, message = "hre,hed->hrd"}> : () -> ()
    %cst = arith.constant dense<0.000000e+00> : vector<4x8x32xf32>
    %10 = tpu.matmul %6, %9, %cst {dimension_numbers = #tpu.dot_dimension_numbers<[2], [1], [1], [2], [0, 0, 0, 1, 1, 2], [0], [0]>} : vector<4x8x128xbf16>, vector<4x128x32xbf16>, vector<4x8x32xf32> -> vector<4x8x32xf32>
    "tpu.trace_stop"() : () -> ()
    %c0_10 = arith.constant 0 : index
    %c0_11 = arith.constant 0 : index
    %c0_12 = arith.constant 0 : index
    %11 = vector.load %arg5[%c0_10, %c0_11, %c0_12] : memref<4x1x32xf32, #tpu.memory_space<vmem>>, vector<4x1x32xf32>
    %12 = vector.broadcast %11 : vector<4x1x32xf32> to vector<4x8x32xf32>
    %13 = arith.addf %10, %12 : vector<4x8x32xf32>
    %cst_13 = arith.constant 0.176776692 : f32
    %14 = vector.broadcast %cst_13 : f32 to vector<4x8x32xf32>
    %15 = arith.mulf %13, %14 : vector<4x8x32xf32>
    %c0_14 = arith.constant 0 : index
    %c0_15 = arith.constant 0 : index
    %c0_16 = arith.constant 0 : index
    %16 = vector.load %arg6[%c0_14, %c0_15, %c0_16] : memref<4x128x32xbf16, #tpu.memory_space<vmem>>, vector<4x128x32xbf16>
    "tpu.trace_start"() <{level = 10 : i32, message = "hre,hed->hrd"}> : () -> ()
    %cst_17 = arith.constant dense<0.000000e+00> : vector<4x8x32xf32>
    %17 = tpu.matmul %8, %16, %cst_17 {dimension_numbers = #tpu.dot_dimension_numbers<[2], [1], [1], [2], [0, 0, 0, 1, 1, 2], [0], [0]>} : vector<4x8x128xbf16>, vector<4x128x32xbf16>, vector<4x8x32xf32> -> vector<4x8x32xf32>
    "tpu.trace_stop"() : () -> ()
    %c0_18 = arith.constant 0 : index
    %c0_19 = arith.constant 0 : index
    %c0_20 = arith.constant 0 : index
    %18 = vector.load %arg7[%c0_18, %c0_19, %c0_20] : memref<4x1x32xf32, #tpu.memory_space<vmem>>, vector<4x1x32xf32>
    %19 = vector.broadcast %18 : vector<4x1x32xf32> to vector<4x8x32xf32>
    %20 = arith.addf %17, %19 : vector<4x8x32xf32>
    %c0_21 = arith.constant 0 : index
    %c0_22 = arith.constant 0 : index
    %c0_23 = arith.constant 0 : index
    %21 = vector.load %arg8[%c0_21, %c0_22, %c0_23] : memref<4x128x32xbf16, #tpu.memory_space<vmem>>, vector<4x128x32xbf16>
    "tpu.trace_start"() <{level = 10 : i32, message = "hre,hed->hrd"}> : () -> ()
    %cst_24 = arith.constant dense<0.000000e+00> : vector<4x8x32xf32>
    %22 = tpu.matmul %8, %21, %cst_24 {dimension_numbers = #tpu.dot_dimension_numbers<[2], [1], [1], [2], [0, 0, 0, 1, 1, 2], [0], [0]>} : vector<4x8x128xbf16>, vector<4x128x32xbf16>, vector<4x8x32xf32> -> vector<4x8x32xf32>
    "tpu.trace_stop"() : () -> ()
    %c0_25 = arith.constant 0 : index
    %c0_26 = arith.constant 0 : index
    %c0_27 = arith.constant 0 : index
    %23 = vector.load %arg9[%c0_25, %c0_26, %c0_27] : memref<4x1x32xf32, #tpu.memory_space<vmem>>, vector<4x1x32xf32>
    %24 = vector.broadcast %23 : vector<4x1x32xf32> to vector<4x8x32xf32>
    %25 = arith.addf %22, %24 : vector<4x8x32xf32>
    %26 = arith.truncf %15 : vector<4x8x32xf32> to vector<4x8x32xbf16>
    %27 = arith.truncf %20 : vector<4x8x32xf32> to vector<4x8x32xbf16>
    "tpu.trace_start"() <{level = 10 : i32, message = "hld,hsd->hls"}> : () -> ()
    %cst_28 = arith.constant dense<0.000000e+00> : vector<4x8x8xf32>
    %28 = tpu.matmul %26, %27, %cst_28 {dimension_numbers = #tpu.dot_dimension_numbers<[2], [2], [1], [1], [0, 0, 0, 1, 1, 1], [0], [0]>} : vector<4x8x32xbf16>, vector<4x8x32xbf16>, vector<4x8x8xf32> -> vector<4x8x8xf32>
    "tpu.trace_stop"() : () -> ()
    %29 = vector.shape_cast %2 : vector<8x8xf32> to vector<1x8x8xf32>
    %30 = vector.broadcast %29 : vector<1x8x8xf32> to vector<4x8x8xf32>
    %31 = arith.addf %28, %30 : vector<4x8x8xf32>
    %32 = vector.shape_cast %4 : vector<1x8xf32> to vector<1x1x8xf32>
    %33 = vector.broadcast %32 : vector<1x1x8xf32> to vector<4x8x8xf32>
    %34 = arith.addf %31, %33 : vector<4x8x8xf32>
    %cst_29 = arith.constant dense<0xFF800000> : vector<4x8xf32>
    %35 = vector.multi_reduction <maximumf>, %34, %cst_29 [2] : vector<4x8x8xf32> to vector<4x8xf32>
    %36 = vector.shape_cast %35 : vector<4x8xf32> to vector<4x8x1xf32>
    %37 = vector.broadcast %36 : vector<4x8x1xf32> to vector<4x8x8xf32>
    %38 = arith.subf %34, %37 : vector<4x8x8xf32>
    %39 = math.exp %38 : vector<4x8x8xf32>
    %cst_30 = arith.constant dense<0.000000e+00> : vector<4x8xf32>
    %40 = vector.multi_reduction <add>, %39, %cst_30 [2] : vector<4x8x8xf32> to vector<4x8xf32>
    %41 = vector.shape_cast %40 : vector<4x8xf32> to vector<4x8x1xf32>
    %42 = tpu.reciprocal %41 {approx = true} : vector<4x8x1xf32> -> vector<4x8x1xf32>
    %43 = vector.broadcast %42 : vector<4x8x1xf32> to vector<4x8x8xf32>
    %44 = arith.mulf %39, %43 : vector<4x8x8xf32>
    %45 = arith.truncf %44 : vector<4x8x8xf32> to vector<4x8x8xbf16>
    %46 = arith.truncf %25 : vector<4x8x32xf32> to vector<4x8x32xbf16>
    "tpu.trace_start"() <{level = 10 : i32, message = "hls,hsd->hld"}> : () -> ()
    %cst_31 = arith.constant dense<0.000000e+00> : vector<4x8x32xf32>
    %47 = tpu.matmul %45, %46, %cst_31 {dimension_numbers = #tpu.dot_dimension_numbers<[2], [1], [1], [2], [0, 0, 0, 1, 1, 2], [0], [0]>} : vector<4x8x8xbf16>, vector<4x8x32xbf16>, vector<4x8x32xf32> -> vector<4x8x32xf32>
    "tpu.trace_stop"() : () -> ()
    %48 = arith.truncf %47 : vector<4x8x32xf32> to vector<4x8x32xbf16>
    %c0_32 = arith.constant 0 : index
    %c0_33 = arith.constant 0 : index
    %c0_34 = arith.constant 0 : index
    %49 = vector.load %arg10[%c0_32, %c0_33, %c0_34] : memref<4x32x128xbf16, #tpu.memory_space<vmem>>, vector<4x32x128xbf16>
    "tpu.trace_start"() <{level = 10 : i32, message = "hld,hde->hle"}> : () -> ()
    %cst_35 = arith.constant dense<0.000000e+00> : vector<4x8x128xf32>
    %50 = tpu.matmul %48, %49, %cst_35 {dimension_numbers = #tpu.dot_dimension_numbers<[2], [1], [1], [2], [0, 0, 0, 1, 1, 2], [0], [0]>} : vector<4x8x32xbf16>, vector<4x32x128xbf16>, vector<4x8x128xf32> -> vector<4x8x128xf32>
    "tpu.trace_stop"() : () -> ()
    %cst_36 = arith.constant dense<0.000000e+00> : vector<8x128xf32>
    %51 = vector.multi_reduction <add>, %50, %cst_36 [0] : vector<4x8x128xf32> to vector<8x128xf32>
    %c0_37 = arith.constant 0 : index
    %c0_38 = arith.constant 0 : index
    %52 = vector.load %arg11[%c0_37, %c0_38] : memref<1x128xf32, #tpu.memory_space<vmem>>, vector<1x128xf32>
    %53 = vector.broadcast %52 : vector<1x128xf32> to vector<8x128xf32>
    %54 = arith.addf %51, %53 : vector<8x128xf32>
    %55 = arith.extf %1 : vector<8x128xbf16> to vector<8x128xf32>
    %56 = arith.addf %54, %55 : vector<8x128xf32>
    %c0_39 = arith.constant 0 : index
    %c0_40 = arith.constant 0 : index
    %57 = vector.load %arg12[%c0_39, %c0_40] : memref<1x128xf32, #tpu.memory_space<vmem>>, vector<1x128xf32>
    %c0_41 = arith.constant 0 : index
    %c0_42 = arith.constant 0 : index
    %58 = vector.load %arg13[%c0_41, %c0_42] : memref<1x128xf32, #tpu.memory_space<vmem>>, vector<1x128xf32>
    %cst_43 = arith.constant dense<0.000000e+00> : vector<8xf32>
    %59 = vector.multi_reduction <add>, %56, %cst_43 [1] : vector<8x128xf32> to vector<8xf32>
    %60 = vector.shape_cast %59 : vector<8xf32> to vector<8x1xf32>
    %cst_44 = arith.constant 1.280000e+02 : f32
    %61 = vector.broadcast %cst_44 : f32 to vector<8x1xf32>
    %62 = arith.divf %60, %61 : vector<8x1xf32>
    %63 = vector.broadcast %62 : vector<8x1xf32> to vector<8x128xf32>
    %64 = arith.subf %56, %63 : vector<8x128xf32>
    %65 = arith.mulf %64, %64 : vector<8x128xf32>
    %cst_45 = arith.constant dense<0.000000e+00> : vector<8xf32>
    %66 = vector.multi_reduction <add>, %65, %cst_45 [1] : vector<8x128xf32> to vector<8xf32>
    %67 = vector.shape_cast %66 : vector<8xf32> to vector<8x1xf32>
    %cst_46 = arith.constant 1.280000e+02 : f32
    %68 = vector.broadcast %cst_46 : f32 to vector<8x1xf32>
    %69 = arith.divf %67, %68 : vector<8x1xf32>
    %cst_47 = arith.constant 9.99999974E-6 : f32
    %70 = vector.broadcast %cst_47 : f32 to vector<8x1xf32>
    %71 = arith.addf %69, %70 : vector<8x1xf32>
    %72 = math.rsqrt %71 : vector<8x1xf32>
    %73 = vector.broadcast %72 : vector<8x1xf32> to vector<8x128xf32>
    %74 = arith.mulf %64, %73 : vector<8x128xf32>
    %75 = vector.broadcast %57 : vector<1x128xf32> to vector<8x128xf32>
    %76 = arith.mulf %74, %75 : vector<8x128xf32>
    %77 = vector.broadcast %58 : vector<1x128xf32> to vector<8x128xf32>
    %78 = arith.addf %76, %77 : vector<8x128xf32>
    %79 = arith.truncf %78 : vector<8x128xf32> to vector<8x128xbf16>
    %c0_48 = arith.constant 0 : index
    %c0_49 = arith.constant 0 : index
    %c0_50 = arith.constant 0 : index
    %80 = vector.load %arg14[%c0_48, %c0_49, %c0_50] : memref<1x8x128xbf16, #tpu.memory_space<vmem>>, vector<1x8x128xbf16>
    %81 = vector.shape_cast %80 : vector<1x8x128xbf16> to vector<8x128xbf16>
    %82 = vector.shape_cast %79 : vector<8x128xbf16> to vector<1x8x128xbf16>
    tpu.vector_store %arg14[%c0_48, %c0_49, %c0_50], %82 {strides = array<i32>} : memref<1x8x128xbf16, #tpu.memory_space<vmem>>, vector<1x8x128xbf16>,
    return
  }
  func.func @transform_0(%arg0: i32) -> (i32, i32, i32) {
    %c0_i32 = arith.constant 0 : i32
    %c0_i32_0 = arith.constant 0 : i32
    %c0_i32_1 = arith.constant 0 : i32
    return %arg0, %c0_i32, %c0_i32_0 : i32, i32, i32
  }
  func.func @transform_1(%arg0: i32) -> (i32, i32) {
    %c0_i32 = arith.constant 0 : i32
    %c0_i32_0 = arith.constant 0 : i32
    %c0_i32_1 = arith.constant 0 : i32
    return %c0_i32, %c0_i32_0 : i32, i32
  }
  func.func @transform_2(%arg0: i32) -> (i32, i32, i32) {
    %c0_i32 = arith.constant 0 : i32
    %c0_i32_0 = arith.constant 0 : i32
    %c0_i32_1 = arith.constant 0 : i32
    return %arg0, %c0_i32, %c0_i32_0 : i32, i32, i32
  }
  func.func @transform_3(%arg0: i32) -> (i32, i32, i32) {
    %c0_i32 = arith.constant 0 : i32
    %c0_i32_0 = arith.constant 0 : i32
    %c0_i32_1 = arith.constant 0 : i32
    %c0_i32_2 = arith.constant 0 : i32
    return %c0_i32, %c0_i32_0, %c0_i32_1 : i32, i32, i32
  }
  func.func @transform_4(%arg0: i32) -> (i32, i32, i32) {
    %c0_i32 = arith.constant 0 : i32
    %c0_i32_0 = arith.constant 0 : i32
    %c0_i32_1 = arith.constant 0 : i32
    %c0_i32_2 = arith.constant 0 : i32
    return %c0_i32, %c0_i32_0, %c0_i32_1 : i32, i32, i32
  }
  func.func @transform_5(%arg0: i32) -> (i32, i32, i32) {
    %c0_i32 = arith.constant 0 : i32
    %c0_i32_0 = arith.constant 0 : i32
    %c0_i32_1 = arith.constant 0 : i32
    %c0_i32_2 = arith.constant 0 : i32
    return %c0_i32, %c0_i32_0, %c0_i32_1 : i32, i32, i32
  }
  func.func @transform_6(%arg0: i32) -> (i32, i32, i32) {
    %c0_i32 = arith.constant 0 : i32
    %c0_i32_0 = arith.constant 0 : i32
    %c0_i32_1 = arith.constant 0 : i32
    %c0_i32_2 = arith.constant 0 : i32
    return %c0_i32, %c0_i32_0, %c0_i32_1 : i32, i32, i32
  }
  func.func @transform_7(%arg0: i32) -> (i32, i32, i32) {
    %c0_i32 = arith.constant 0 : i32
    %c0_i32_0 = arith.constant 0 : i32
    %c0_i32_1 = arith.constant 0 : i32
    %c0_i32_2 = arith.constant 0 : i32
    return %c0_i32, %c0_i32_0, %c0_i32_1 : i32, i32, i32
  }
  func.func @transform_8(%arg0: i32) -> (i32, i32, i32) {
    %c0_i32 = arith.constant 0 : i32
    %c0_i32_0 = arith.constant 0 : i32
    %c0_i32_1 = arith.constant 0 : i32
    %c0_i32_2 = arith.constant 0 : i32
    return %c0_i32, %c0_i32_0, %c0_i32_1 : i32, i32, i32
  }
  func.func @transform_9(%arg0: i32) -> (i32, i32, i32) {
    %c0_i32 = arith.constant 0 : i32
    %c0_i32_0 = arith.constant 0 : i32
    %c0_i32_1 = arith.constant 0 : i32
    %c0_i32_2 = arith.constant 0 : i32
    return %c0_i32, %c0_i32_0, %c0_i32_1 : i32, i32, i32
  }
  func.func @transform_10(%arg0: i32) -> (i32, i32) {
    %c0_i32 = arith.constant 0 : i32
    %c0_i32_0 = arith.constant 0 : i32
    %c0_i32_1 = arith.constant 0 : i32
    return %c0_i32, %c0_i32_0 : i32, i32
  }
  func.func @transform_11(%arg0: i32) -> (i32, i32) {
    %c0_i32 = arith.constant 0 : i32
    %c0_i32_0 = arith.constant 0 : i32
    %c0_i32_1 = arith.constant 0 : i32
    return %c0_i32, %c0_i32_0 : i32, i32
  }
  func.func @transform_12(%arg0: i32) -> (i32, i32) {
    %c0_i32 = arith.constant 0 : i32
    %c0_i32_0 = arith.constant 0 : i32
    %c0_i32_1 = arith.constant 0 : i32
    return %c0_i32, %c0_i32_0 : i32, i32
  }
  func.func @transform_13(%arg0: i32) -> (i32, i32, i32) {
    %c0_i32 = arith.constant 0 : i32
    %c0_i32_0 = arith.constant 0 : i32
    %c0_i32_1 = arith.constant 0 : i32
    return %arg0, %c0_i32, %c0_i32_0 : i32, i32, i32
  }
}

module attributes {stable_mosaic.version = 11 : i64} {
  func.func @_cross_attn_kernel(%arg0: i32, %arg1: memref<1x8x128xbf16, #tpu.memory_space<vmem>>, %arg2: memref<1x8x128xbf16, #tpu.memory_space<vmem>>, %arg3: memref<8x8xf32, #tpu.memory_space<vmem>>, %arg4: memref<1x1x8xf32, #tpu.memory_space<vmem>>, %arg5: memref<4x128x32xbf16, #tpu.memory_space<vmem>>, %arg6: memref<4x1x32xf32, #tpu.memory_space<vmem>>, %arg7: memref<4x128x32xbf16, #tpu.memory_space<vmem>>, %arg8: memref<4x1x32xf32, #tpu.memory_space<vmem>>, %arg9: memref<4x128x32xbf16, #tpu.memory_space<vmem>>, %arg10: memref<4x1x32xf32, #tpu.memory_space<vmem>>, %arg11: memref<4x32x128xbf16, #tpu.memory_space<vmem>>, %arg12: memref<1x128xf32, #tpu.memory_space<vmem>>, %arg13: memref<1x128xf32, #tpu.memory_space<vmem>>, %arg14: memref<1x128xf32, #tpu.memory_space<vmem>>, %arg15: memref<1x8x128xbf16, #tpu.memory_space<vmem>>) attributes {dimension_semantics = [#tpu.dimension_semantics<parallel>], iteration_bounds = array<i64: 2>, scalar_prefetch = 0 : i64, scratch_operands = 0 : i64, tpu.core_type = #tpu.core_type<tc>, window_params = [{transform_indices = @transform_0, window_bounds = array<i64: 1, 8, 128>}, {transform_indices = @transform_1, window_bounds = array<i64: 1, 8, 128>}, {pipeline_mode = #tpu.pipeline_mode<synchronous>, transform_indices = @transform_2, window_bounds = array<i64: 8, 8>}, {transform_indices = @transform_3, window_bounds = array<i64: 1, 1, 8>}, {pipeline_mode = #tpu.pipeline_mode<synchronous>, transform_indices = @transform_4, window_bounds = array<i64: 4, 128, 32>}, {pipeline_mode = #tpu.pipeline_mode<synchronous>, transform_indices = @transform_5, window_bounds = array<i64: 4, 1, 32>}, {pipeline_mode = #tpu.pipeline_mode<synchronous>, transform_indices = @transform_6, window_bounds = array<i64: 4, 128, 32>}, {pipeline_mode = #tpu.pipeline_mode<synchronous>, transform_indices = @transform_7, window_bounds = array<i64: 4, 1, 32>}, {pipeline_mode = #tpu.pipeline_mode<synchronous>, transform_indices = @transform_8, window_bounds = array<i64: 4, 128, 32>}, {pipeline_mode = #tpu.pipeline_mode<synchronous>, transform_indices = @transform_9, window_bounds = array<i64: 4, 1, 32>}, {pipeline_mode = #tpu.pipeline_mode<synchronous>, transform_indices = @transform_10, window_bounds = array<i64: 4, 32, 128>}, {pipeline_mode = #tpu.pipeline_mode<synchronous>, transform_indices = @transform_11, window_bounds = array<i64: 1, 128>}, {pipeline_mode = #tpu.pipeline_mode<synchronous>, transform_indices = @transform_12, window_bounds = array<i64: 1, 128>}, {pipeline_mode = #tpu.pipeline_mode<synchronous>, transform_indices = @transform_13, window_bounds = array<i64: 1, 128>}, {transform_indices = @transform_14, window_bounds = array<i64: 1, 8, 128>}]} {
    %c0 = arith.constant 0 : index
    %c0_0 = arith.constant 0 : index
    %c0_1 = arith.constant 0 : index
    %0 = vector.load %arg1[%c0, %c0_0, %c0_1] : memref<1x8x128xbf16, #tpu.memory_space<vmem>>, vector<1x8x128xbf16>
    %1 = vector.shape_cast %0 : vector<1x8x128xbf16> to vector<8x128xbf16>
    %c0_2 = arith.constant 0 : index
    %c0_3 = arith.constant 0 : index
    %c0_4 = arith.constant 0 : index
    %2 = vector.load %arg2[%c0_2, %c0_3, %c0_4] : memref<1x8x128xbf16, #tpu.memory_space<vmem>>, vector<1x8x128xbf16>
    %3 = vector.shape_cast %2 : vector<1x8x128xbf16> to vector<8x128xbf16>
    %c0_5 = arith.constant 0 : index
    %c0_6 = arith.constant 0 : index
    %4 = vector.load %arg3[%c0_5, %c0_6] : memref<8x8xf32, #tpu.memory_space<vmem>>, vector<8x8xf32>
    %c0_7 = arith.constant 0 : index
    %c0_8 = arith.constant 0 : index
    %c0_9 = arith.constant 0 : index
    %5 = vector.load %arg4[%c0_7, %c0_8, %c0_9] : memref<1x1x8xf32, #tpu.memory_space<vmem>>, vector<1x1x8xf32>
    %6 = vector.shape_cast %5 : vector<1x1x8xf32> to vector<1x8xf32>
    %7 = vector.shape_cast %1 : vector<8x128xbf16> to vector<1x8x128xbf16>
    %8 = vector.broadcast %7 : vector<1x8x128xbf16> to vector<4x8x128xbf16>
    %9 = vector.shape_cast %3 : vector<8x128xbf16> to vector<1x8x128xbf16>
    %10 = vector.broadcast %9 : vector<1x8x128xbf16> to vector<4x8x128xbf16>
    %c0_10 = arith.constant 0 : index
    %c0_11 = arith.constant 0 : index
    %c0_12 = arith.constant 0 : index
    %11 = vector.load %arg5[%c0_10, %c0_11, %c0_12] : memref<4x128x32xbf16, #tpu.memory_space<vmem>>, vector<4x128x32xbf16>
    "tpu.trace_start"() <{level = 10 : i32, message = "hre,hed->hrd"}> : () -> ()
    %cst = arith.constant dense<0.000000e+00> : vector<4x8x32xf32>
    %12 = tpu.matmul %8, %11, %cst {dimension_numbers = #tpu.dot_dimension_numbers<[2], [1], [1], [2], [0, 0, 0, 1, 1, 2], [0], [0]>} : vector<4x8x128xbf16>, vector<4x128x32xbf16>, vector<4x8x32xf32> -> vector<4x8x32xf32>
    "tpu.trace_stop"() : () -> ()
    %c0_13 = arith.constant 0 : index
    %c0_14 = arith.constant 0 : index
    %c0_15 = arith.constant 0 : index
    %13 = vector.load %arg6[%c0_13, %c0_14, %c0_15] : memref<4x1x32xf32, #tpu.memory_space<vmem>>, vector<4x1x32xf32>
    %14 = vector.broadcast %13 : vector<4x1x32xf32> to vector<4x8x32xf32>
    %15 = arith.addf %12, %14 : vector<4x8x32xf32>
    %cst_16 = arith.constant 0.176776692 : f32
    %16 = vector.broadcast %cst_16 : f32 to vector<4x8x32xf32>
    %17 = arith.mulf %15, %16 : vector<4x8x32xf32>
    %c0_17 = arith.constant 0 : index
    %c0_18 = arith.constant 0 : index
    %c0_19 = arith.constant 0 : index
    %18 = vector.load %arg7[%c0_17, %c0_18, %c0_19] : memref<4x128x32xbf16, #tpu.memory_space<vmem>>, vector<4x128x32xbf16>
    "tpu.trace_start"() <{level = 10 : i32, message = "hre,hed->hrd"}> : () -> ()
    %cst_20 = arith.constant dense<0.000000e+00> : vector<4x8x32xf32>
    %19 = tpu.matmul %10, %18, %cst_20 {dimension_numbers = #tpu.dot_dimension_numbers<[2], [1], [1], [2], [0, 0, 0, 1, 1, 2], [0], [0]>} : vector<4x8x128xbf16>, vector<4x128x32xbf16>, vector<4x8x32xf32> -> vector<4x8x32xf32>
    "tpu.trace_stop"() : () -> ()
    %c0_21 = arith.constant 0 : index
    %c0_22 = arith.constant 0 : index
    %c0_23 = arith.constant 0 : index
    %20 = vector.load %arg8[%c0_21, %c0_22, %c0_23] : memref<4x1x32xf32, #tpu.memory_space<vmem>>, vector<4x1x32xf32>
    %21 = vector.broadcast %20 : vector<4x1x32xf32> to vector<4x8x32xf32>
    %22 = arith.addf %19, %21 : vector<4x8x32xf32>
    %c0_24 = arith.constant 0 : index
    %c0_25 = arith.constant 0 : index
    %c0_26 = arith.constant 0 : index
    %23 = vector.load %arg9[%c0_24, %c0_25, %c0_26] : memref<4x128x32xbf16, #tpu.memory_space<vmem>>, vector<4x128x32xbf16>
    "tpu.trace_start"() <{level = 10 : i32, message = "hre,hed->hrd"}> : () -> ()
    %cst_27 = arith.constant dense<0.000000e+00> : vector<4x8x32xf32>
    %24 = tpu.matmul %10, %23, %cst_27 {dimension_numbers = #tpu.dot_dimension_numbers<[2], [1], [1], [2], [0, 0, 0, 1, 1, 2], [0], [0]>} : vector<4x8x128xbf16>, vector<4x128x32xbf16>, vector<4x8x32xf32> -> vector<4x8x32xf32>
    "tpu.trace_stop"() : () -> ()
    %c0_28 = arith.constant 0 : index
    %c0_29 = arith.constant 0 : index
    %c0_30 = arith.constant 0 : index
    %25 = vector.load %arg10[%c0_28, %c0_29, %c0_30] : memref<4x1x32xf32, #tpu.memory_space<vmem>>, vector<4x1x32xf32>
    %26 = vector.broadcast %25 : vector<4x1x32xf32> to vector<4x8x32xf32>
    %27 = arith.addf %24, %26 : vector<4x8x32xf32>
    %28 = arith.truncf %17 : vector<4x8x32xf32> to vector<4x8x32xbf16>
    %29 = arith.truncf %22 : vector<4x8x32xf32> to vector<4x8x32xbf16>
    "tpu.trace_start"() <{level = 10 : i32, message = "hld,hsd->hls"}> : () -> ()
    %cst_31 = arith.constant dense<0.000000e+00> : vector<4x8x8xf32>
    %30 = tpu.matmul %28, %29, %cst_31 {dimension_numbers = #tpu.dot_dimension_numbers<[2], [2], [1], [1], [0, 0, 0, 1, 1, 1], [0], [0]>} : vector<4x8x32xbf16>, vector<4x8x32xbf16>, vector<4x8x8xf32> -> vector<4x8x8xf32>
    "tpu.trace_stop"() : () -> ()
    %31 = vector.shape_cast %4 : vector<8x8xf32> to vector<1x8x8xf32>
    %32 = vector.broadcast %31 : vector<1x8x8xf32> to vector<4x8x8xf32>
    %33 = arith.addf %30, %32 : vector<4x8x8xf32>
    %34 = vector.shape_cast %6 : vector<1x8xf32> to vector<1x1x8xf32>
    %35 = vector.broadcast %34 : vector<1x1x8xf32> to vector<4x8x8xf32>
    %36 = arith.addf %33, %35 : vector<4x8x8xf32>
    %cst_32 = arith.constant dense<0xFF800000> : vector<4x8xf32>
    %37 = vector.multi_reduction <maximumf>, %36, %cst_32 [2] : vector<4x8x8xf32> to vector<4x8xf32>
    %38 = vector.shape_cast %37 : vector<4x8xf32> to vector<4x8x1xf32>
    %39 = vector.broadcast %38 : vector<4x8x1xf32> to vector<4x8x8xf32>
    %40 = arith.subf %36, %39 : vector<4x8x8xf32>
    %41 = math.exp %40 : vector<4x8x8xf32>
    %cst_33 = arith.constant dense<0.000000e+00> : vector<4x8xf32>
    %42 = vector.multi_reduction <add>, %41, %cst_33 [2] : vector<4x8x8xf32> to vector<4x8xf32>
    %43 = vector.shape_cast %42 : vector<4x8xf32> to vector<4x8x1xf32>
    %44 = tpu.reciprocal %43 {approx = true} : vector<4x8x1xf32> -> vector<4x8x1xf32>
    %45 = vector.broadcast %44 : vector<4x8x1xf32> to vector<4x8x8xf32>
    %46 = arith.mulf %41, %45 : vector<4x8x8xf32>
    %47 = arith.truncf %46 : vector<4x8x8xf32> to vector<4x8x8xbf16>
    %48 = arith.truncf %27 : vector<4x8x32xf32> to vector<4x8x32xbf16>
    "tpu.trace_start"() <{level = 10 : i32, message = "hls,hsd->hld"}> : () -> ()
    %cst_34 = arith.constant dense<0.000000e+00> : vector<4x8x32xf32>
    %49 = tpu.matmul %47, %48, %cst_34 {dimension_numbers = #tpu.dot_dimension_numbers<[2], [1], [1], [2], [0, 0, 0, 1, 1, 2], [0], [0]>} : vector<4x8x8xbf16>, vector<4x8x32xbf16>, vector<4x8x32xf32> -> vector<4x8x32xf32>
    "tpu.trace_stop"() : () -> ()
    %50 = arith.truncf %49 : vector<4x8x32xf32> to vector<4x8x32xbf16>
    %c0_35 = arith.constant 0 : index
    %c0_36 = arith.constant 0 : index
    %c0_37 = arith.constant 0 : index
    %51 = vector.load %arg11[%c0_35, %c0_36, %c0_37] : memref<4x32x128xbf16, #tpu.memory_space<vmem>>, vector<4x32x128xbf16>
    "tpu.trace_start"() <{level = 10 : i32, message = "hld,hde->hle"}> : () -> ()
    %cst_38 = arith.constant dense<0.000000e+00> : vector<4x8x128xf32>
    %52 = tpu.matmul %50, %51, %cst_38 {dimension_numbers = #tpu.dot_dimension_numbers<[2], [1], [1], [2], [0, 0, 0, 1, 1, 2], [0], [0]>} : vector<4x8x32xbf16>, vector<4x32x128xbf16>, vector<4x8x128xf32> -> vector<4x8x128xf32>
    "tpu.trace_stop"() : () -> ()
    %cst_39 = arith.constant dense<0.000000e+00> : vector<8x128xf32>
    %53 = vector.multi_reduction <add>, %52, %cst_39 [0] : vector<4x8x128xf32> to vector<8x128xf32>
    %c0_40 = arith.constant 0 : index
    %c0_41 = arith.constant 0 : index
    %54 = vector.load %arg12[%c0_40, %c0_41] : memref<1x128xf32, #tpu.memory_space<vmem>>, vector<1x128xf32>
    %55 = vector.broadcast %54 : vector<1x128xf32> to vector<8x128xf32>
    %56 = arith.addf %53, %55 : vector<8x128xf32>
    %57 = arith.extf %1 : vector<8x128xbf16> to vector<8x128xf32>
    %58 = arith.addf %56, %57 : vector<8x128xf32>
    %c0_42 = arith.constant 0 : index
    %c0_43 = arith.constant 0 : index
    %59 = vector.load %arg13[%c0_42, %c0_43] : memref<1x128xf32, #tpu.memory_space<vmem>>, vector<1x128xf32>
    %c0_44 = arith.constant 0 : index
    %c0_45 = arith.constant 0 : index
    %60 = vector.load %arg14[%c0_44, %c0_45] : memref<1x128xf32, #tpu.memory_space<vmem>>, vector<1x128xf32>
    %cst_46 = arith.constant dense<0.000000e+00> : vector<8xf32>
    %61 = vector.multi_reduction <add>, %58, %cst_46 [1] : vector<8x128xf32> to vector<8xf32>
    %62 = vector.shape_cast %61 : vector<8xf32> to vector<8x1xf32>
    %cst_47 = arith.constant 1.280000e+02 : f32
    %63 = vector.broadcast %cst_47 : f32 to vector<8x1xf32>
    %64 = arith.divf %62, %63 : vector<8x1xf32>
    %65 = vector.broadcast %64 : vector<8x1xf32> to vector<8x128xf32>
    %66 = arith.subf %58, %65 : vector<8x128xf32>
    %67 = arith.mulf %66, %66 : vector<8x128xf32>
    %cst_48 = arith.constant dense<0.000000e+00> : vector<8xf32>
    %68 = vector.multi_reduction <add>, %67, %cst_48 [1] : vector<8x128xf32> to vector<8xf32>
    %69 = vector.shape_cast %68 : vector<8xf32> to vector<8x1xf32>
    %cst_49 = arith.constant 1.280000e+02 : f32
    %70 = vector.broadcast %cst_49 : f32 to vector<8x1xf32>
    %71 = arith.divf %69, %70 : vector<8x1xf32>
    %cst_50 = arith.constant 9.99999974E-6 : f32
    %72 = vector.broadcast %cst_50 : f32 to vector<8x1xf32>
    %73 = arith.addf %71, %72 : vector<8x1xf32>
    %74 = math.rsqrt %73 : vector<8x1xf32>
    %75 = vector.broadcast %74 : vector<8x1xf32> to vector<8x128xf32>
    %76 = arith.mulf %66, %75 : vector<8x128xf32>
    %77 = vector.broadcast %59 : vector<1x128xf32> to vector<8x128xf32>
    %78 = arith.mulf %76, %77 : vector<8x128xf32>
    %79 = vector.broadcast %60 : vector<1x128xf32> to vector<8x128xf32>
    %80 = arith.addf %78, %79 : vector<8x128xf32>
    %81 = arith.truncf %80 : vector<8x128xf32> to vector<8x128xbf16>
    %c0_51 = arith.constant 0 : index
    %c0_52 = arith.constant 0 : index
    %c0_53 = arith.constant 0 : index
    %82 = vector.load %arg15[%c0_51, %c0_52, %c0_53] : memref<1x8x128xbf16, #tpu.memory_space<vmem>>, vector<1x8x128xbf16>
    %83 = vector.shape_cast %82 : vector<1x8x128xbf16> to vector<8x128xbf16>
    %84 = vector.shape_cast %81 : vector<8x128xbf16> to vector<1x8x128xbf16>
    tpu.vector_store %arg15[%c0_51, %c0_52, %c0_53], %84 {strides = array<i32>} : memref<1x8x128xbf16, #tpu.memory_space<vmem>>, vector<1x8x128xbf16>,
    return
  }
  func.func @transform_0(%arg0: i32) -> (i32, i32, i32) {
    %c0_i32 = arith.constant 0 : i32
    %c0_i32_0 = arith.constant 0 : i32
    %c0_i32_1 = arith.constant 0 : i32
    return %arg0, %c0_i32, %c0_i32_0 : i32, i32, i32
  }
  func.func @transform_1(%arg0: i32) -> (i32, i32, i32) {
    %c0_i32 = arith.constant 0 : i32
    %c0_i32_0 = arith.constant 0 : i32
    %c0_i32_1 = arith.constant 0 : i32
    return %arg0, %c0_i32, %c0_i32_0 : i32, i32, i32
  }
  func.func @transform_2(%arg0: i32) -> (i32, i32) {
    %c0_i32 = arith.constant 0 : i32
    %c0_i32_0 = arith.constant 0 : i32
    %c0_i32_1 = arith.constant 0 : i32
    return %c0_i32, %c0_i32_0 : i32, i32
  }
  func.func @transform_3(%arg0: i32) -> (i32, i32, i32) {
    %c0_i32 = arith.constant 0 : i32
    %c0_i32_0 = arith.constant 0 : i32
    %c0_i32_1 = arith.constant 0 : i32
    return %arg0, %c0_i32, %c0_i32_0 : i32, i32, i32
  }
  func.func @transform_4(%arg0: i32) -> (i32, i32, i32) {
    %c0_i32 = arith.constant 0 : i32
    %c0_i32_0 = arith.constant 0 : i32
    %c0_i32_1 = arith.constant 0 : i32
    %c0_i32_2 = arith.constant 0 : i32
    return %c0_i32, %c0_i32_0, %c0_i32_1 : i32, i32, i32
  }
  func.func @transform_5(%arg0: i32) -> (i32, i32, i32) {
    %c0_i32 = arith.constant 0 : i32
    %c0_i32_0 = arith.constant 0 : i32
    %c0_i32_1 = arith.constant 0 : i32
    %c0_i32_2 = arith.constant 0 : i32
    return %c0_i32, %c0_i32_0, %c0_i32_1 : i32, i32, i32
  }
  func.func @transform_6(%arg0: i32) -> (i32, i32, i32) {
    %c0_i32 = arith.constant 0 : i32
    %c0_i32_0 = arith.constant 0 : i32
    %c0_i32_1 = arith.constant 0 : i32
    %c0_i32_2 = arith.constant 0 : i32
    return %c0_i32, %c0_i32_0, %c0_i32_1 : i32, i32, i32
  }
  func.func @transform_7(%arg0: i32) -> (i32, i32, i32) {
    %c0_i32 = arith.constant 0 : i32
    %c0_i32_0 = arith.constant 0 : i32
    %c0_i32_1 = arith.constant 0 : i32
    %c0_i32_2 = arith.constant 0 : i32
    return %c0_i32, %c0_i32_0, %c0_i32_1 : i32, i32, i32
  }
  func.func @transform_8(%arg0: i32) -> (i32, i32, i32) {
    %c0_i32 = arith.constant 0 : i32
    %c0_i32_0 = arith.constant 0 : i32
    %c0_i32_1 = arith.constant 0 : i32
    %c0_i32_2 = arith.constant 0 : i32
    return %c0_i32, %c0_i32_0, %c0_i32_1 : i32, i32, i32
  }
  func.func @transform_9(%arg0: i32) -> (i32, i32, i32) {
    %c0_i32 = arith.constant 0 : i32
    %c0_i32_0 = arith.constant 0 : i32
    %c0_i32_1 = arith.constant 0 : i32
    %c0_i32_2 = arith.constant 0 : i32
    return %c0_i32, %c0_i32_0, %c0_i32_1 : i32, i32, i32
  }
  func.func @transform_10(%arg0: i32) -> (i32, i32, i32) {
    %c0_i32 = arith.constant 0 : i32
    %c0_i32_0 = arith.constant 0 : i32
    %c0_i32_1 = arith.constant 0 : i32
    %c0_i32_2 = arith.constant 0 : i32
    return %c0_i32, %c0_i32_0, %c0_i32_1 : i32, i32, i32
  }
  func.func @transform_11(%arg0: i32) -> (i32, i32) {
    %c0_i32 = arith.constant 0 : i32
    %c0_i32_0 = arith.constant 0 : i32
    %c0_i32_1 = arith.constant 0 : i32
    return %c0_i32, %c0_i32_0 : i32, i32
  }
  func.func @transform_12(%arg0: i32) -> (i32, i32) {
    %c0_i32 = arith.constant 0 : i32
    %c0_i32_0 = arith.constant 0 : i32
    %c0_i32_1 = arith.constant 0 : i32
    return %c0_i32, %c0_i32_0 : i32, i32
  }
  func.func @transform_13(%arg0: i32) -> (i32, i32) {
    %c0_i32 = arith.constant 0 : i32
    %c0_i32_0 = arith.constant 0 : i32
    %c0_i32_1 = arith.constant 0 : i32
    return %c0_i32, %c0_i32_0 : i32, i32
  }
  func.func @transform_14(%arg0: i32) -> (i32, i32, i32) {
    %c0_i32 = arith.constant 0 : i32
    %c0_i32_0 = arith.constant 0 : i32
    %c0_i32_1 = arith.constant 0 : i32
    return %arg0, %c0_i32, %c0_i32_0 : i32, i32, i32
  }
}

module attributes {stable_mosaic.version = 11 : i64} {
  func.func @_linear_kernel(%arg0: i32, %arg1: i32, %arg2: memref<8x128xbf16, #tpu.memory_space<vmem>>, %arg3: memref<128x56xbf16, #tpu.memory_space<vmem>>, %arg4: memref<1x56xf32, #tpu.memory_space<vmem>>, %arg5: memref<8x56xf32, #tpu.memory_space<vmem>>) attributes {dimension_semantics = [#tpu.dimension_semantics<parallel>, #tpu.dimension_semantics<parallel>], iteration_bounds = array<i64: 2, 1>, scalar_prefetch = 0 : i64, scratch_operands = 0 : i64, tpu.core_type = #tpu.core_type<tc>, window_params = [{transform_indices = @transform_0, window_bounds = array<i64: 8, 128>}, {transform_indices = @transform_1, window_bounds = array<i64: 128, 56>}, {transform_indices = @transform_2, window_bounds = array<i64: 1, 56>}, {transform_indices = @transform_3, window_bounds = array<i64: 8, 56>}]} {
    %c0 = arith.constant 0 : index
    %c0_0 = arith.constant 0 : index
    %0 = vector.load %arg2[%c0, %c0_0] : memref<8x128xbf16, #tpu.memory_space<vmem>>, vector<8x128xbf16>
    %c0_1 = arith.constant 0 : index
    %c0_2 = arith.constant 0 : index
    %1 = vector.load %arg3[%c0_1, %c0_2] : memref<128x56xbf16, #tpu.memory_space<vmem>>, vector<128x56xbf16>
    %cst = arith.constant dense<0.000000e+00> : vector<8x56xf32>
    %2 = tpu.matmul %0, %1, %cst {dimension_numbers = #tpu.dot_dimension_numbers<[1], [0], [0], [1], [0, 0, 1, 1], [], []>} : vector<8x128xbf16>, vector<128x56xbf16>, vector<8x56xf32> -> vector<8x56xf32>
    %c0_3 = arith.constant 0 : index
    %c0_4 = arith.constant 0 : index
    %3 = vector.load %arg4[%c0_3, %c0_4] : memref<1x56xf32, #tpu.memory_space<vmem>>, vector<1x56xf32>
    %4 = vector.broadcast %3 : vector<1x56xf32> to vector<8x56xf32>
    %5 = arith.addf %2, %4 : vector<8x56xf32>
    %c0_5 = arith.constant 0 : index
    %c0_6 = arith.constant 0 : index
    %6 = vector.load %arg5[%c0_5, %c0_6] : memref<8x56xf32, #tpu.memory_space<vmem>>, vector<8x56xf32>
    tpu.vector_store %arg5[%c0_5, %c0_6], %5 {strides = array<i32>} : memref<8x56xf32, #tpu.memory_space<vmem>>, vector<8x56xf32>,
    return
  }
  func.func @transform_0(%arg0: i32, %arg1: i32) -> (i32, i32) {
    %c0_i32 = arith.constant 0 : i32
    %c0_i32_0 = arith.constant 0 : i32
    return %arg0, %c0_i32 : i32, i32
  }
  func.func @transform_1(%arg0: i32, %arg1: i32) -> (i32, i32) {
    %c0_i32 = arith.constant 0 : i32
    %c0_i32_0 = arith.constant 0 : i32
    return %c0_i32, %arg1 : i32, i32
  }
  func.func @transform_2(%arg0: i32, %arg1: i32) -> (i32, i32) {
    %c0_i32 = arith.constant 0 : i32
    %c0_i32_0 = arith.constant 0 : i32
    return %c0_i32, %arg1 : i32, i32
  }
  func.func @transform_3(%arg0: i32, %arg1: i32) -> (i32, i32) {
    %c0_i32 = arith.constant 0 : i32
    return %arg0, %arg1 : i32, i32
  }
}

</mosaic_0001>

<llo_original>
// kernel: transformer_forward.17
$region0: #{transformer_forward.17}
  #allocation0 [shape = 'u32[]', space=smem, size = 0x4, offset = 0x4, fixed_abs, tag = 'smem constant byte address 0x4 - core index']
  #allocation1 [shape = 'u32[144,128]{1,0:T(1,128)}', space=vmem, size = 0x12000, scoped, tag = 'internal scratch']
  %s0 = inlined_call_operand.vmem [shape: bf16[16,128], index: 0, kind: input, shape index: {}]
  %s1 = inlined_call_operand.vmem [shape: f32[1,128], index: 1, kind: input, shape index: {}]
  %s2 = inlined_call_operand.vmem [shape: f32[1,128], index: 2, kind: input, shape index: {}]
  %s3 = inlined_call_operand.vmem [shape: bf16[16,128], index: 3, kind: output, shape index: {}]
  %s4 = sld [smem:[#allocation0]]
  $region45: #{transformer_forward.17} parent=0
    _
  %s6 = ssub.s32 1, %s4
  %s7 = scalar_select 0, %s6, %s4
  loop: start=0, step=1, limit=4
  $region2: #{transformer_forward.17} parent=0 // loop_pre_header
    _
  $region3: #{transformer_forward.17} parent=0 // loop_header
    %s9 = sphi 0, %s13
    %p10 = scmp.ge.s32.totalorder %s9, 4
    %s19 = sphi 0, %s21
    %s22 = sphi 0, %s19
    %s23 = sphi 0, %s22
    %s39 = sphi 0, %s23
    %s43 = sphi 0, %s43
    %s45 = sphi 0, %s43
    %s46 = sphi 0, %s45
    %s60 = sphi 0, %s46
    %s64 = sphi 0, %s64
    %s66 = sphi 0, %s64
    %s67 = sphi 0, %s66
    %s81 = sphi 0, %s67
    %s87 = sphi 0, %s89
    %s90 = sphi 0, %s87
    %s91 = sphi 0, %s90
    %s107 = sphi 0, %s91
  $region4: #{transformer_forward.17} parent=0 // loop_header_branch
    %12 = sbr.rel (%p10) target = $region8
  $region5: #{transformer_forward.17} parent=0 // loop_body
    %s14 = ssub.s32 %s9, 1
    %s15 = ssub.s32 %s9, 2
    %s16 = sadd.s32 %s9, 1
    %s17 = ssub.s32 %s9, %s16
    %p18 = scmp.eq.s32.totalorder %s17, 0
    %s20 = sadd.s32 %s19, 1
    %s21 = scalar_select %p18, %s19, %s20
    %p24 = pneg %p18
    %p25 = scmp.eq.s32.totalorder %s9, 1
    %p26 = por %p24, %p25
    %p27 = scmp.ne.s32.totalorder %s19, %s22
    %p28 = scmp.eq.s32.totalorder %s9, 0
    %p29 = por %p27, %p28
    %p30 = scmp.ne.s32.totalorder %s19, %s22
    %p31 = scmp.eq.s32.totalorder %s14, 1
    %p32 = por %p30, %p31
    %p33 = scmp.ne.s32.totalorder %s22, %s23
    %p34 = scmp.eq.s32.totalorder %s14, 0
    %p35 = por %p33, %p34
    %p36 = scmp.ne.s32.totalorder %s22, %s23
    %p37 = scmp.eq.s32.totalorder %s15, 1
    %p38 = por %p36, %p37
    %p40 = scmp.ne.s32.totalorder %s23, %s39
    %p41 = scmp.eq.s32.totalorder %s15, 0
    %p42 = por %p40, %p41
    %s44 = sadd.s32 %s43, 1
    %p47 = scmp.eq.s32.totalorder %s9, 1
    %p48 = scmp.ne.s32.totalorder %s43, %s45
    %p49 = scmp.eq.s32.totalorder %s9, 0
    %p50 = por %p48, %p49
    %p51 = scmp.ne.s32.totalorder %s43, %s45
    %p52 = scmp.eq.s32.totalorder %s14, 1
    %p53 = por %p51, %p52
    %p54 = scmp.ne.s32.totalorder %s45, %s46
    %p55 = scmp.eq.s32.totalorder %s14, 0
    %p56 = por %p54, %p55
    %p57 = scmp.ne.s32.totalorder %s45, %s46
    %p58 = scmp.eq.s32.totalorder %s15, 1
    %p59 = por %p57, %p58
    %p61 = scmp.ne.s32.totalorder %s46, %s60
    %p62 = scmp.eq.s32.totalorder %s15, 0
    %p63 = por %p61, %p62
    %s65 = sadd.s32 %s64, 1
    %p68 = scmp.eq.s32.totalorder %s9, 1
    %p69 = scmp.ne.s32.totalorder %s64, %s66
    %p70 = scmp.eq.s32.totalorder %s9, 0
    %p71 = por %p69, %p70
    %p72 = scmp.ne.s32.totalorder %s64, %s66
    %p73 = scmp.eq.s32.totalorder %s14, 1
    %p74 = por %p72, %p73
    %p75 = scmp.ne.s32.totalorder %s66, %s67
    %p76 = scmp.eq.s32.totalorder %s14, 0
    %p77 = por %p75, %p76
    %p78 = scmp.ne.s32.totalorder %s66, %s67
    %p79 = scmp.eq.s32.totalorder %s15, 1
    %p80 = por %p78, %p79
    %p82 = scmp.ne.s32.totalorder %s67, %s81
    %p83 = scmp.eq.s32.totalorder %s15, 0
    %p84 = por %p82, %p83
    %s85 = ssub.s32 %s9, %s16
    %p86 = scmp.eq.s32.totalorder %s85, 0
    %s88 = sadd.s32 %s87, 1
    %s89 = scalar_select %p86, %s87, %s88
    %p92 = pneg %p86
    %p93 = scmp.eq.s32.totalorder %s9, 1
    %p94 = por %p92, %p93
    %p95 = scmp.ne.s32.totalorder %s87, %s90
    %p96 = scmp.eq.s32.totalorder %s9, 0
    %p97 = por %p95, %p96
    %p98 = scmp.ne.s32.totalorder %s87, %s90
    %p99 = scmp.eq.s32.totalorder %s14, 1
    %p100 = por %p98, %p99
    %p101 = scmp.ne.s32.totalorder %s90, %s91
    %p102 = scmp.eq.s32.totalorder %s14, 0
    %p103 = por %p101, %p102
    %p104 = scmp.ne.s32.totalorder %s90, %s91
    %p105 = scmp.eq.s32.totalorder %s15, 1
    %p106 = por %p104, %p105
    %p108 = scmp.ne.s32.totalorder %s91, %s107
    %p109 = scmp.eq.s32.totalorder %s15, 0
    %p110 = por %p108, %p109
    %p111 = scmp.le.s32.totalorder 1, %s9
    %p112 = scmp.lt.s32.totalorder %s9, 3
    %p113 = pnand %p111, %p112
    %p114 = pneg %p113
    // Predicated region
    $region9: #{transformer_forward.17} parent=5 // pred_check
      _
    $region10: #{transformer_forward.17} parent=5 // pred_check_branch
      %116 = sbr.rel (%p113) target = $region12
    $region11: #{transformer_forward.17} parent=5 // pred_region
      %s117 = ssub.s32 %s9, 1
      // Predicated region
      $region13: #{transformer_forward.17} parent=11 // pred_check
        %p118 = pneg %p56
      $region14: #{transformer_forward.17} parent=11 // pred_check_branch
        %120 = sbr.rel (%p118) target = $region16
      $region15: #{transformer_forward.17} parent=11 // pred_region
        _
      $region16: #{transformer_forward.17} parent=11 // pred_fallthru
        _
      // Predicated region
      $region17: #{transformer_forward.17} parent=11 // pred_check
        %p121 = pneg %p77
      $region18: #{transformer_forward.17} parent=11 // pred_check_branch
        %123 = sbr.rel (%p121) target = $region20
      $region19: #{transformer_forward.17} parent=11 // pred_region
        _
      $region20: #{transformer_forward.17} parent=11 // pred_fallthru
        _
    $region12: #{transformer_forward.17} parent=5 // pred_fallthru
      _
    %p124 = scmp.lt.s32.totalorder %s9, 2
    // Predicated region
    $region21: #{transformer_forward.17} parent=5 // pred_check
      %p125 = pneg %p124
    $region22: #{transformer_forward.17} parent=5 // pred_check_branch
      %127 = sbr.rel (%p125) target = $region24
    $region23: #{transformer_forward.17} parent=5 // pred_region
      // Predicated region
      $region25: #{transformer_forward.17} parent=23 // pred_check
        %p128 = pneg %p29
      $region26: #{transformer_forward.17} parent=23 // pred_check_branch
        %130 = sbr.rel (%p128) target = $region28
      $region27: #{transformer_forward.17} parent=23 // pred_region
        %p131 = scmp.lt.s32.totalorder %s9, 1
        %s132 = scalar_select %p131, %s9, 1
        %s133 = smul.addr %s132, 4
        %s134 = scalar_lea.vmem %s0, %s133
      $region28: #{transformer_forward.17} parent=23 // pred_fallthru
        _
    $region24: #{transformer_forward.17} parent=5 // pred_fallthru
      _
    %p135 = scmp.le.s32.totalorder 1, %s9
    %p136 = scmp.lt.s32.totalorder %s9, 3
    %p137 = pnand %p135, %p136
    %p138 = pneg %p137
    // Predicated region
    $region29: #{transformer_forward.17} parent=5 // pred_check
      _
    $region30: #{transformer_forward.17} parent=5 // pred_check_branch
      %140 = sbr.rel (%p137) target = $region32
    $region31: #{transformer_forward.17} parent=5 // pred_region
      %s141 = ssub.s32 %s9, 1
      %p142 = scmp.lt.s32.totalorder %s14, 1
      %s143 = scalar_select %p142, %s14, 1
      %s144 = smul.addr %s143, 4
      %s145 = scalar_lea.vmem %s0, %s144
      %p146 = pneg %p35
      %p147 = pneg %p32
      %p148 = pneg %p56
      %p149 = pneg %p53
      %p150 = pneg %p77
      %p151 = pneg %p74
      %p152 = pneg %p103
      %p153 = pneg %p100
      %p154 = scmp.lt.s32.totalorder %s14, 1
      %s155 = scalar_select %p154, %s14, 1
      %s156 = smul.addr %s155, 4
      %s157 = scalar_lea.vmem %s3, %s156
      %p158 = scmp.lt.s32.totalorder %s14, 1
      %s159 = scalar_select %p158, %s14, 1
      %s160 = smul.addr %s159, 4
      %s161 = scalar_lea.vmem %s0, %s160
      %p162 = scmp.lt.s32.totalorder %s14, 1
      %s163 = scalar_select %p162, %s14, 1
      %s164 = smul.addr %s163, 4
      %s165 = scalar_lea.vmem %s3, %s164
      %v166 = vld [vmem:[%s161] sm:$0xf]
      %v167 = vunpack.c.l.bf16 %v166
      %v168 = vld [vmem:[%s1] sm:$0x1]
      %v169 = vld [vmem:[%s2] sm:$0x1]
      %170 = vadd.xlane.f32.xlu0 %v167
      %v171 = vpop.xlane.xlu0 %170
      %v172 = vrcp.pop 128.0
      %v173 = vmul.f32 %v171, %v172
      %v174 = vsub.f32 %v167, %v173
      %v175 = vmul.f32 %v174, %v174
      %176 = vadd.xlane.f32.xlu0 %v175
      %v177 = vpop.xlane.xlu0 %176
      %v178 = vmul.f32 %v177, %v172
      %v179 = vadd.f32 %v178, 1e-05
      %v180 = vrsqrt.pop %v179
      %v181 = vmul.f32 %v174, %v180
      %v183 = vlaneseq
      %v184 = vshrl.u32 %v183, 7
      %v185 = vsub.s32 0, %v184
      %v186 = vrot.slane %v168, %v185
      %v188 = vmul.f32 %v181, %v186
      %v190 = vlaneseq
      %v191 = vshrl.u32 %v190, 7
      %v192 = vsub.s32 0, %v191
      %v193 = vrot.slane %v169, %v192
      %v195 = vadd.f32 %v188, %v193
      %v196 = vpack.c.bf16 %v195, %v195
      %197 = vst [vmem:[%s165] sm:$0xf] %v196
      %p198 = scmp.lt.s32.totalorder %s14, 1
      %s199 = scalar_select %p198, %s14, 1
      %s200 = smul.addr %s199, 4
      %s201 = scalar_lea.vmem %s3, %s200
      // Predicated region
      $region33: #{transformer_forward.17} parent=31 // pred_check
        %p202 = pneg %p100
      $region34: #{transformer_forward.17} parent=31 // pred_check_branch
        %204 = sbr.rel (%p202) target = $region36
      $region35: #{transformer_forward.17} parent=31 // pred_region
        _
      $region36: #{transformer_forward.17} parent=31 // pred_fallthru
        _
    $region32: #{transformer_forward.17} parent=5 // pred_fallthru
      _
    %p205 = scmp.le.s32.totalorder 2, %s9
    // Predicated region
    $region37: #{transformer_forward.17} parent=5 // pred_check
      %p206 = pneg %p205
    $region38: #{transformer_forward.17} parent=5 // pred_check_branch
      %208 = sbr.rel (%p206) target = $region40
    $region39: #{transformer_forward.17} parent=5 // pred_region
      %s209 = ssub.s32 %s9, 2
      // Predicated region
      $region41: #{transformer_forward.17} parent=39 // pred_check
        %p210 = pneg %p106
      $region42: #{transformer_forward.17} parent=39 // pred_check_branch
        %212 = sbr.rel (%p210) target = $region44
      $region43: #{transformer_forward.17} parent=39 // pred_region
        %p213 = scmp.lt.s32.totalorder %s15, 1
        %s214 = scalar_select %p213, %s15, 1
        %s215 = smul.addr %s214, 4
        %s216 = scalar_lea.vmem %s3, %s215
      $region44: #{transformer_forward.17} parent=39 // pred_fallthru
        _
    $region40: #{transformer_forward.17} parent=5 // pred_fallthru
      _
  $region6: #{transformer_forward.17} parent=0 // loop_footer
    %s13 = sadd.s32 1, %s9
  $region7: #{transformer_forward.17} parent=0 // loop_footer_branch
    %8 = sbr.rel target = $region3
  $region8: #{transformer_forward.17} parent=0 // loop_exit
    _

// kernel: transformer_forward.14
$region0: #{transformer_forward.14}
  #allocation0 [shape = 'u32[]', space=smem, size = 0x4, offset = 0x4, fixed_abs, tag = 'smem constant byte address 0x4 - core index']
  #allocation1 [shape = 'u32[144,128]{1,0:T(1,128)}', space=vmem, size = 0x12000, scoped, tag = 'internal scratch']
  %s0 = inlined_call_operand.vmem [shape: bf16[16,128], index: 0, kind: input, shape index: {}]
  %s1 = inlined_call_operand.vmem [shape: bf16[128,128], index: 1, kind: input, shape index: {}]
  %s2 = inlined_call_operand.vmem [shape: f32[1,128], index: 2, kind: input, shape index: {}]
  %s3 = inlined_call_operand.vmem [shape: bf16[128,128], index: 3, kind: input, shape index: {}]
  %s4 = inlined_call_operand.vmem [shape: f32[1,128], index: 4, kind: input, shape index: {}]
  %s5 = inlined_call_operand.vmem [shape: f32[1,128], index: 5, kind: input, shape index: {}]
  %s6 = inlined_call_operand.vmem [shape: f32[1,128], index: 6, kind: input, shape index: {}]
  %s7 = inlined_call_operand.vmem [shape: bf16[16,128], index: 7, kind: output, shape index: {}]
  %s8 = sld [smem:[#allocation0]]
  $region61: #{transformer_forward.14} parent=0
    _
  %s10 = ssub.s32 1, %s8
  %s11 = scalar_select 0, %s10, %s8
  loop: start=0, step=1, limit=4
  $region2: #{transformer_forward.14} parent=0 // loop_pre_header
    _
  $region3: #{transformer_forward.14} parent=0 // loop_header
    %s13 = sphi 0, %s17
    %p14 = scmp.ge.s32.totalorder %s13, 4
    %s23 = sphi 0, %s25
    %s26 = sphi 0, %s23
    %s27 = sphi 0, %s26
    %s43 = sphi 0, %s27
    %s47 = sphi 0, %s47
    %s49 = sphi 0, %s47
    %s50 = sphi 0, %s49
    %s64 = sphi 0, %s50
    %s68 = sphi 0, %s68
    %s70 = sphi 0, %s68
    %s71 = sphi 0, %s70
    %s85 = sphi 0, %s71
    %s89 = sphi 0, %s89
    %s91 = sphi 0, %s89
    %s92 = sphi 0, %s91
    %s106 = sphi 0, %s92
    %s110 = sphi 0, %s110
    %s112 = sphi 0, %s110
    %s113 = sphi 0, %s112
    %s127 = sphi 0, %s113
    %s131 = sphi 0, %s131
    %s133 = sphi 0, %s131
    %s134 = sphi 0, %s133
    %s148 = sphi 0, %s134
    %s152 = sphi 0, %s152
    %s154 = sphi 0, %s152
    %s155 = sphi 0, %s154
    %s169 = sphi 0, %s155
    %s175 = sphi 0, %s177
    %s178 = sphi 0, %s175
    %s179 = sphi 0, %s178
    %s195 = sphi 0, %s179
  $region4: #{transformer_forward.14} parent=0 // loop_header_branch
    %16 = sbr.rel (%p14) target = $region8
  $region5: #{transformer_forward.14} parent=0 // loop_body
    %s18 = ssub.s32 %s13, 1
    %s19 = ssub.s32 %s13, 2
    %s20 = sadd.s32 %s13, 1
    %s21 = ssub.s32 %s13, %s20
    %p22 = scmp.eq.s32.totalorder %s21, 0
    %s24 = sadd.s32 %s23, 1
    %s25 = scalar_select %p22, %s23, %s24
    %p28 = pneg %p22
    %p29 = scmp.eq.s32.totalorder %s13, 1
    %p30 = por %p28, %p29
    %p31 = scmp.ne.s32.totalorder %s23, %s26
    %p32 = scmp.eq.s32.totalorder %s13, 0
    %p33 = por %p31, %p32
    %p34 = scmp.ne.s32.totalorder %s23, %s26
    %p35 = scmp.eq.s32.totalorder %s18, 1
    %p36 = por %p34, %p35
    %p37 = scmp.ne.s32.totalorder %s26, %s27
    %p38 = scmp.eq.s32.totalorder %s18, 0
    %p39 = por %p37, %p38
    %p40 = scmp.ne.s32.totalorder %s26, %s27
    %p41 = scmp.eq.s32.totalorder %s19, 1
    %p42 = por %p40, %p41
    %p44 = scmp.ne.s32.totalorder %s27, %s43
    %p45 = scmp.eq.s32.totalorder %s19, 0
    %p46 = por %p44, %p45
    %s48 = sadd.s32 %s47, 1
    %p51 = scmp.eq.s32.totalorder %s13, 1
    %p52 = scmp.ne.s32.totalorder %s47, %s49
    %p53 = scmp.eq.s32.totalorder %s13, 0
    %p54 = por %p52, %p53
    %p55 = scmp.ne.s32.totalorder %s47, %s49
    %p56 = scmp.eq.s32.totalorder %s18, 1
    %p57 = por %p55, %p56
    %p58 = scmp.ne.s32.totalorder %s49, %s50
    %p59 = scmp.eq.s32.totalorder %s18, 0
    %p60 = por %p58, %p59
    %p61 = scmp.ne.s32.totalorder %s49, %s50
    %p62 = scmp.eq.s32.totalorder %s19, 1
    %p63 = por %p61, %p62
    %p65 = scmp.ne.s32.totalorder %s50, %s64
    %p66 = scmp.eq.s32.totalorder %s19, 0
    %p67 = por %p65, %p66
    %s69 = sadd.s32 %s68, 1
    %p72 = scmp.eq.s32.totalorder %s13, 1
    %p73 = scmp.ne.s32.totalorder %s68, %s70
    %p74 = scmp.eq.s32.totalorder %s13, 0
    %p75 = por %p73, %p74
    %p76 = scmp.ne.s32.totalorder %s68, %s70
    %p77 = scmp.eq.s32.totalorder %s18, 1
    %p78 = por %p76, %p77
    %p79 = scmp.ne.s32.totalorder %s70, %s71
    %p80 = scmp.eq.s32.totalorder %s18, 0
    %p81 = por %p79, %p80
    %p82 = scmp.ne.s32.totalorder %s70, %s71
    %p83 = scmp.eq.s32.totalorder %s19, 1
    %p84 = por %p82, %p83
    %p86 = scmp.ne.s32.totalorder %s71, %s85
    %p87 = scmp.eq.s32.totalorder %s19, 0
    %p88 = por %p86, %p87
    %s90 = sadd.s32 %s89, 1
    %p93 = scmp.eq.s32.totalorder %s13, 1
    %p94 = scmp.ne.s32.totalorder %s89, %s91
    %p95 = scmp.eq.s32.totalorder %s13, 0
    %p96 = por %p94, %p95
    %p97 = scmp.ne.s32.totalorder %s89, %s91
    %p98 = scmp.eq.s32.totalorder %s18, 1
    %p99 = por %p97, %p98
    %p100 = scmp.ne.s32.totalorder %s91, %s92
    %p101 = scmp.eq.s32.totalorder %s18, 0
    %p102 = por %p100, %p101
    %p103 = scmp.ne.s32.totalorder %s91, %s92
    %p104 = scmp.eq.s32.totalorder %s19, 1
    %p105 = por %p103, %p104
    %p107 = scmp.ne.s32.totalorder %s92, %s106
    %p108 = scmp.eq.s32.totalorder %s19, 0
    %p109 = por %p107, %p108
    %s111 = sadd.s32 %s110, 1
    %p114 = scmp.eq.s32.totalorder %s13, 1
    %p115 = scmp.ne.s32.totalorder %s110, %s112
    %p116 = scmp.eq.s32.totalorder %s13, 0
    %p117 = por %p115, %p116
    %p118 = scmp.ne.s32.totalorder %s110, %s112
    %p119 = scmp.eq.s32.totalorder %s18, 1
    %p120 = por %p118, %p119
    %p121 = scmp.ne.s32.totalorder %s112, %s113
    %p122 = scmp.eq.s32.totalorder %s18, 0
    %p123 = por %p121, %p122
    %p124 = scmp.ne.s32.totalorder %s112, %s113
    %p125 = scmp.eq.s32.totalorder %s19, 1
    %p126 = por %p124, %p125
    %p128 = scmp.ne.s32.totalorder %s113, %s127
    %p129 = scmp.eq.s32.totalorder %s19, 0
    %p130 = por %p128, %p129
    %s132 = sadd.s32 %s131, 1
    %p135 = scmp.eq.s32.totalorder %s13, 1
    %p136 = scmp.ne.s32.totalorder %s131, %s133
    %p137 = scmp.eq.s32.totalorder %s13, 0
    %p138 = por %p136, %p137
    %p139 = scmp.ne.s32.totalorder %s131, %s133
    %p140 = scmp.eq.s32.totalorder %s18, 1
    %p141 = por %p139, %p140
    %p142 = scmp.ne.s32.totalorder %s133, %s134
    %p143 = scmp.eq.s32.totalorder %s18, 0
    %p144 = por %p142, %p143
    %p145 = scmp.ne.s32.totalorder %s133, %s134
    %p146 = scmp.eq.s32.totalorder %s19, 1
    %p147 = por %p145, %p146
    %p149 = scmp.ne.s32.totalorder %s134, %s148
    %p150 = scmp.eq.s32.totalorder %s19, 0
    %p151 = por %p149, %p150
    %s153 = sadd.s32 %s152, 1
    %p156 = scmp.eq.s32.totalorder %s13, 1
    %p157 = scmp.ne.s32.totalorder %s152, %s154
    %p158 = scmp.eq.s32.totalorder %s13, 0
    %p159 = por %p157, %p158
    %p160 = scmp.ne.s32.totalorder %s152, %s154
    %p161 = scmp.eq.s32.totalorder %s18, 1
    %p162 = por %p160, %p161
    %p163 = scmp.ne.s32.totalorder %s154, %s155
    %p164 = scmp.eq.s32.totalorder %s18, 0
    %p165 = por %p163, %p164
    %p166 = scmp.ne.s32.totalorder %s154, %s155
    %p167 = scmp.eq.s32.totalorder %s19, 1
    %p168 = por %p166, %p167
    %p170 = scmp.ne.s32.totalorder %s155, %s169
    %p171 = scmp.eq.s32.totalorder %s19, 0
    %p172 = por %p170, %p171
    %s173 = ssub.s32 %s13, %s20
    %p174 = scmp.eq.s32.totalorder %s173, 0
    %s176 = sadd.s32 %s175, 1
    %s177 = scalar_select %p174, %s175, %s176
    %p180 = pneg %p174
    %p181 = scmp.eq.s32.totalorder %s13, 1
    %p182 = por %p180, %p181
    %p183 = scmp.ne.s32.totalorder %s175, %s178
    %p184 = scmp.eq.s32.totalorder %s13, 0
    %p185 = por %p183, %p184
    %p186 = scmp.ne.s32.totalorder %s175, %s178
    %p187 = scmp.eq.s32.totalorder %s18, 1
    %p188 = por %p186, %p187
    %p189 = scmp.ne.s32.totalorder %s178, %s179
    %p190 = scmp.eq.s32.totalorder %s18, 0
    %p191 = por %p189, %p190
    %p192 = scmp.ne.s32.totalorder %s178, %s179
    %p193 = scmp.eq.s32.totalorder %s19, 1
    %p194 = por %p192, %p193
    %p196 = scmp.ne.s32.totalorder %s179, %s195
    %p197 = scmp.eq.s32.totalorder %s19, 0
    %p198 = por %p196, %p197
    %p199 = scmp.le.s32.totalorder 1, %s13
    %p200 = scmp.lt.s32.totalorder %s13, 3
    %p201 = pnand %p199, %p200
    %p202 = pneg %p201
    // Predicated region
    $region9: #{transformer_forward.14} parent=5 // pred_check
      _
    $region10: #{transformer_forward.14} parent=5 // pred_check_branch
      %204 = sbr.rel (%p201) target = $region12
    $region11: #{transformer_forward.14} parent=5 // pred_region
      %s205 = ssub.s32 %s13, 1
      // Predicated region
      $region13: #{transformer_forward.14} parent=11 // pred_check
        %p206 = pneg %p60
      $region14: #{transformer_forward.14} parent=11 // pred_check_branch
        %208 = sbr.rel (%p206) target = $region16
      $region15: #{transformer_forward.14} parent=11 // pred_region
        _
      $region16: #{transformer_forward.14} parent=11 // pred_fallthru
        _
      // Predicated region
      $region17: #{transformer_forward.14} parent=11 // pred_check
        %p209 = pneg %p81
      $region18: #{transformer_forward.14} parent=11 // pred_check_branch
        %211 = sbr.rel (%p209) target = $region20
      $region19: #{transformer_forward.14} parent=11 // pred_region
        _
      $region20: #{transformer_forward.14} parent=11 // pred_fallthru
        _
      // Predicated region
      $region21: #{transformer_forward.14} parent=11 // pred_check
        %p212 = pneg %p102
      $region22: #{transformer_forward.14} parent=11 // pred_check_branch
        %214 = sbr.rel (%p212) target = $region24
      $region23: #{transformer_forward.14} parent=11 // pred_region
        _
      $region24: #{transformer_forward.14} parent=11 // pred_fallthru
        _
      // Predicated region
      $region25: #{transformer_forward.14} parent=11 // pred_check
        %p215 = pneg %p123
      $region26: #{transformer_forward.14} parent=11 // pred_check_branch
        %217 = sbr.rel (%p215) target = $region28
      $region27: #{transformer_forward.14} parent=11 // pred_region
        _
      $region28: #{transformer_forward.14} parent=11 // pred_fallthru
        _
      // Predicated region
      $region29: #{transformer_forward.14} parent=11 // pred_check
        %p218 = pneg %p144
      $region30: #{transformer_forward.14} parent=11 // pred_check_branch
        %220 = sbr.rel (%p218) target = $region32
      $region31: #{transformer_forward.14} parent=11 // pred_region
        _
      $region32: #{transformer_forward.14} parent=11 // pred_fallthru
        _
      // Predicated region
      $region33: #{transformer_forward.14} parent=11 // pred_check
        %p221 = pneg %p165
      $region34: #{transformer_forward.14} parent=11 // pred_check_branch
        %223 = sbr.rel (%p221) target = $region36
      $region35: #{transformer_forward.14} parent=11 // pred_region
        _
      $region36: #{transformer_forward.14} parent=11 // pred_fallthru
        _
    $region12: #{transformer_forward.14} parent=5 // pred_fallthru
      _
    %p224 = scmp.lt.s32.totalorder %s13, 2
    // Predicated region
    $region37: #{transformer_forward.14} parent=5 // pred_check
      %p225 = pneg %p224
    $region38: #{transformer_forward.14} parent=5 // pred_check_branch
      %227 = sbr.rel (%p225) target = $region40
    $region39: #{transformer_forward.14} parent=5 // pred_region
      // Predicated region
      $region41: #{transformer_forward.14} parent=39 // pred_check
        %p228 = pneg %p33
      $region42: #{transformer_forward.14} parent=39 // pred_check_branch
        %230 = sbr.rel (%p228) target = $region44
      $region43: #{transformer_forward.14} parent=39 // pred_region
        %p231 = scmp.lt.s32.totalorder %s13, 1
        %s232 = scalar_select %p231, %s13, 1
        %s233 = smul.addr %s232, 4
        %s234 = scalar_lea.vmem %s0, %s233
      $region44: #{transformer_forward.14} parent=39 // pred_fallthru
        _
    $region40: #{transformer_forward.14} parent=5 // pred_fallthru
      _
    %p235 = scmp.le.s32.totalorder 1, %s13
    %p236 = scmp.lt.s32.totalorder %s13, 3
    %p237 = pnand %p235, %p236
    %p238 = pneg %p237
    // Predicated region
    $region45: #{transformer_forward.14} parent=5 // pred_check
      _
    $region46: #{transformer_forward.14} parent=5 // pred_check_branch
      %240 = sbr.rel (%p237) target = $region48
    $region47: #{transformer_forward.14} parent=5 // pred_region
      %s241 = ssub.s32 %s13, 1
      %p242 = scmp.lt.s32.totalorder %s18, 1
      %s243 = scalar_select %p242, %s18, 1
      %s244 = smul.addr %s243, 4
      %s245 = scalar_lea.vmem %s0, %s244
      %p246 = pneg %p39
      %p247 = pneg %p36
      %p248 = pneg %p60
      %p249 = pneg %p57
      %p250 = pneg %p81
      %p251 = pneg %p78
      %p252 = pneg %p102
      %p253 = pneg %p99
      %p254 = pneg %p123
      %p255 = pneg %p120
      %p256 = pneg %p144
      %p257 = pneg %p141
      %p258 = pneg %p165
      %p259 = pneg %p162
      %p260 = pneg %p191
      %p261 = pneg %p188
      %p262 = scmp.lt.s32.totalorder %s18, 1
      %s263 = scalar_select %p262, %s18, 1
      %s264 = smul.addr %s263, 4
      %s265 = scalar_lea.vmem %s7, %s264
      %p266 = scmp.lt.s32.totalorder %s18, 1
      %s267 = scalar_select %p266, %s18, 1
      %s268 = smul.addr %s267, 4
      %s269 = scalar_lea.vmem %s0, %s268
      %p270 = scmp.lt.s32.totalorder %s18, 1
      %s271 = scalar_select %p270, %s18, 1
      %s272 = smul.addr %s271, 4
      %s273 = scalar_lea.vmem %s7, %s272
      %v275 = vld [vmem:[%s269] sm:$0xf]
      %v276 = vld [vmem:[%s1] sm:$0xf]
      %v277 = vld [vmem:[%s1 + $0x4] sm:$0xf]
      %v278 = vld [vmem:[%s1 + $0x8] sm:$0xf]
      %v279 = vld [vmem:[%s1 + $0xc] sm:$0xf]
      %v280 = vld [vmem:[%s1 + $0x10] sm:$0xf]
      %v281 = vld [vmem:[%s1 + $0x14] sm:$0xf]
      %v282 = vld [vmem:[%s1 + $0x18] sm:$0xf]
      %v283 = vld [vmem:[%s1 + $0x1c] sm:$0xf]
      %v284 = vld [vmem:[%s1 + $0x20] sm:$0xf]
      %v285 = vld [vmem:[%s1 + $0x24] sm:$0xf]
      %v286 = vld [vmem:[%s1 + $0x28] sm:$0xf]
      %v287 = vld [vmem:[%s1 + $0x2c] sm:$0xf]
      %v288 = vld [vmem:[%s1 + $0x30] sm:$0xf]
      %v289 = vld [vmem:[%s1 + $0x34] sm:$0xf]
      %v290 = vld [vmem:[%s1 + $0x38] sm:$0xf]
      %v291 = vld [vmem:[%s1 + $0x3c] sm:$0xf]
      %v292 = vld [vmem:[%s2] sm:$0x1]
      %v294 = vlaneseq
      %v295 = vshrl.u32 %v294, 7
      %v296 = vsub.s32 0, %v295
      %v297 = vrot.slane %v292, %v296
      %v315 = vunpack.c.l.b16 %v276
      %v316 = vunpack.c.l.b16 %v277
      %v317 = vunpack.c.l.b16 %v278
      %v318 = vunpack.c.l.b16 %v279
      %v319 = vunpack.c.l.b16 %v280
      %v320 = vunpack.c.l.b16 %v281
      %v321 = vunpack.c.l.b16 %v282
      %v322 = vunpack.c.l.b16 %v283
      %v323 = vunpack.c.l.b16 %v284
      %v324 = vunpack.c.l.b16 %v285
      %v325 = vunpack.c.l.b16 %v286
      %v326 = vunpack.c.l.b16 %v287
      %v327 = vunpack.c.l.b16 %v288
      %v328 = vunpack.c.l.b16 %v289
      %v329 = vunpack.c.l.b16 %v290
      %v330 = vunpack.c.l.b16 %v291
      %v331 = vpack.c.b16 %v316, %v315
      %v332 = vpack.c.b16 %v318, %v317
      %v333 = vpack.c.b16 %v320, %v319
      %v334 = vpack.c.b16 %v322, %v321
      %v335 = vpack.c.b16 %v324, %v323
      %v336 = vpack.c.b16 %v326, %v325
      %v337 = vpack.c.b16 %v328, %v327
      %v338 = vpack.c.b16 %v330, %v329
      %347 = vmatprep.subr.bf16.mxu0 0
      %348 = vmatpush1.bf16.msra.mxu0 %v331
      %349 = vmatprep.subr.bf16.mxu0 0
      %350 = vmatpush1.bf16.msra.mxu0 %v332
      %351 = vmatprep.subr.bf16.mxu0 0
      %352 = vmatpush1.bf16.msra.mxu0 %v333
      %353 = vmatprep.subr.bf16.mxu0 0
      %354 = vmatpush1.bf16.msra.mxu0 %v334
      %355 = vmatprep.subr.bf16.mxu0 0
      %356 = vmatpush1.bf16.msra.mxu0 %v335
      %357 = vmatprep.subr.bf16.mxu0 0
      %358 = vmatpush1.bf16.msra.mxu0 %v336
      %359 = vmatprep.subr.bf16.mxu0 0
      %360 = vmatpush1.bf16.msra.mxu0 %v337
      %361 = vmatprep.subr.bf16.mxu0 0
      %362 = vmatpush1.bf16.msra.mxu0 %v338
      %363 = vmatprep.subr.bf16.mxu0 0
      %364 = vmatpush1.bf16.msra.mxu0 0
      %365 = vmatprep.subr.bf16.mxu0 0
      %366 = vmatpush1.bf16.msra.mxu0 0
      %367 = vmatprep.subr.bf16.mxu0 0
      %368 = vmatpush1.bf16.msra.mxu0 0
      %369 = vmatprep.subr.bf16.mxu0 0
      %370 = vmatpush1.bf16.msra.mxu0 0
      %371 = vmatprep.subr.bf16.mxu0 0
      %372 = vmatpush1.bf16.msra.mxu0 0
      %373 = vmatprep.subr.bf16.mxu0 0
      %374 = vmatpush1.bf16.msra.mxu0 0
      %375 = vmatprep.subr.bf16.mxu0 0
      %376 = vmatpush1.bf16.msra.mxu0 0
      %377 = vmatprep.subr.bf16.mxu0 0
      %378 = vmatpush1.bf16.msra.mxu0 0
      %379 = vmatprep.mubr.bf16.mxu0 0
      %380 = vmatmul.mubr.bf16.gmra.mrb[0].mxu0 %v275
      %v381 = vpop.f32.mrb[0].mxu0
      %v382 = vadd.f32 %v297, %v381
      %v383 = vpop.f32.mrb[0].mxu0
      %v384 = vpop.f32.mrb[0].mxu0
      %v385 = vpop.f32.mrb[0].mxu0
      %386 = vdwg.mxu0
      %v387 = vmax.f32 %v382, 0.0
      %v388 = vpack.c.bf16 %v387, %v387
      %v389 = vld [vmem:[%s3] sm:$0xf]
      %v390 = vld [vmem:[%s3 + $0x4] sm:$0xf]
      %v391 = vld [vmem:[%s3 + $0x8] sm:$0xf]
      %v392 = vld [vmem:[%s3 + $0xc] sm:$0xf]
      %v393 = vld [vmem:[%s3 + $0x10] sm:$0xf]
      %v394 = vld [vmem:[%s3 + $0x14] sm:$0xf]
      %v395 = vld [vmem:[%s3 + $0x18] sm:$0xf]
      %v396 = vld [vmem:[%s3 + $0x1c] sm:$0xf]
      %v397 = vld [vmem:[%s3 + $0x20] sm:$0xf]
      %v398 = vld [vmem:[%s3 + $0x24] sm:$0xf]
      %v399 = vld [vmem:[%s3 + $0x28] sm:$0xf]
      %v400 = vld [vmem:[%s3 + $0x2c] sm:$0xf]
      %v401 = vld [vmem:[%s3 + $0x30] sm:$0xf]
      %v402 = vld [vmem:[%s3 + $0x34] sm:$0xf]
      %v403 = vld [vmem:[%s3 + $0x38] sm:$0xf]
      %v404 = vld [vmem:[%s3 + $0x3c] sm:$0xf]
      %v405 = vld [vmem:[%s4] sm:$0x1]
      %v407 = vlaneseq
      %v408 = vshrl.u32 %v407, 7
      %v409 = vsub.s32 0, %v408
      %v410 = vrot.slane %v405, %v409
      %v428 = vunpack.c.l.b16 %v389
      %v429 = vunpack.c.l.b16 %v390
      %v430 = vunpack.c.l.b16 %v391
      %v431 = vunpack.c.l.b16 %v392
      %v432 = vunpack.c.l.b16 %v393
      %v433 = vunpack.c.l.b16 %v394
      %v434 = vunpack.c.l.b16 %v395
      %v435 = vunpack.c.l.b16 %v396
      %v436 = vunpack.c.l.b16 %v397
      %v437 = vunpack.c.l.b16 %v398
      %v438 = vunpack.c.l.b16 %v399
      %v439 = vunpack.c.l.b16 %v400
      %v440 = vunpack.c.l.b16 %v401
      %v441 = vunpack.c.l.b16 %v402
      %v442 = vunpack.c.l.b16 %v403
      %v443 = vunpack.c.l.b16 %v404
      %v444 = vpack.c.b16 %v429, %v428
      %v445 = vpack.c.b16 %v431, %v430
      %v446 = vpack.c.b16 %v433, %v432
      %v447 = vpack.c.b16 %v435, %v434
      %v448 = vpack.c.b16 %v437, %v436
      %v449 = vpack.c.b16 %v439, %v438
      %v450 = vpack.c.b16 %v441, %v440
      %v451 = vpack.c.b16 %v443, %v442
      %460 = vmatprep.subr.bf16.mxu0 0
      %461 = vmatpush1.bf16.msra.mxu0 %v444
      %462 = vmatprep.subr.bf16.mxu0 0
      %463 = vmatpush1.bf16.msra.mxu0 %v445
      %464 = vmatprep.subr.bf16.mxu0 0
      %465 = vmatpush1.bf16.msra.mxu0 %v446
      %466 = vmatprep.subr.bf16.mxu0 0
      %467 = vmatpush1.bf16.msra.mxu0 %v447
      %468 = vmatprep.subr.bf16.mxu0 0
      %469 = vmatpush1.bf16.msra.mxu0 %v448
      %470 = vmatprep.subr.bf16.mxu0 0
      %471 = vmatpush1.bf16.msra.mxu0 %v449
      %472 = vmatprep.subr.bf16.mxu0 0
      %473 = vmatpush1.bf16.msra.mxu0 %v450
      %474 = vmatprep.subr.bf16.mxu0 0
      %475 = vmatpush1.bf16.msra.mxu0 %v451
      %476 = vmatprep.subr.bf16.mxu0 0
      %477 = vmatpush1.bf16.msra.mxu0 0
      %478 = vmatprep.subr.bf16.mxu0 0
      %479 = vmatpush1.bf16.msra.mxu0 0
      %480 = vmatprep.subr.bf16.mxu0 0
      %481 = vmatpush1.bf16.msra.mxu0 0
      %482 = vmatprep.subr.bf16.mxu0 0
      %483 = vmatpush1.bf16.msra.mxu0 0
      %484 = vmatprep.subr.bf16.mxu0 0
      %485 = vmatpush1.bf16.msra.mxu0 0
      %486 = vmatprep.subr.bf16.mxu0 0
      %487 = vmatpush1.bf16.msra.mxu0 0
      %488 = vmatprep.subr.bf16.mxu0 0
      %489 = vmatpush1.bf16.msra.mxu0 0
      %490 = vmatprep.subr.bf16.mxu0 0
      %491 = vmatpush1.bf16.msra.mxu0 0
      %492 = vmatprep.mubr.bf16.mxu0 0
      %493 = vmatmul.mubr.bf16.gmra.mrb[0].mxu0 %v388
      %v494 = vpop.f32.mrb[0].mxu0
      %v495 = vadd.f32 %v410, %v494
      %v496 = vpop.f32.mrb[0].mxu0
      %v497 = vpop.f32.mrb[0].mxu0
      %v498 = vpop.f32.mrb[0].mxu0
      %499 = vdwg.mxu0
      %v500 = vunpack.c.l.bf16 %v275
      %v501 = vadd.f32 %v495, %v500
      %v502 = vld [vmem:[%s5] sm:$0x1]
      %v503 = vld [vmem:[%s6] sm:$0x1]
      %504 = vadd.xlane.f32.xlu0 %v501
      %v505 = vpop.xlane.xlu0 %504
      %v506 = vrcp.pop 128.0
      %v507 = vmul.f32 %v505, %v506
      %v508 = vsub.f32 %v501, %v507
      %v509 = vmul.f32 %v508, %v508
      %510 = vadd.xlane.f32.xlu0 %v509
      %v511 = vpop.xlane.xlu0 %510
      %v512 = vmul.f32 %v511, %v506
      %v513 = vadd.f32 %v512, 1e-05
      %v514 = vrsqrt.pop %v513
      %v515 = vmul.f32 %v508, %v514
      %v517 = vlaneseq
      %v518 = vshrl.u32 %v517, 7
      %v519 = vsub.s32 0, %v518
      %v520 = vrot.slane %v502, %v519
      %v522 = vmul.f32 %v515, %v520
      %v524 = vlaneseq
      %v525 = vshrl.u32 %v524, 7
      %v526 = vsub.s32 0, %v525
      %v527 = vrot.slane %v503, %v526
      %v529 = vadd.f32 %v522, %v527
      %v530 = vpack.c.bf16 %v529, %v529
      %531 = vst [vmem:[%s273] sm:$0xf] %v530
      %p532 = scmp.lt.s32.totalorder %s18, 1
      %s533 = scalar_select %p532, %s18, 1
      %s534 = smul.addr %s533, 4
      %s535 = scalar_lea.vmem %s7, %s534
      // Predicated region
      $region49: #{transformer_forward.14} parent=47 // pred_check
        %p536 = pneg %p188
      $region50: #{transformer_forward.14} parent=47 // pred_check_branch
        %538 = sbr.rel (%p536) target = $region52
      $region51: #{transformer_forward.14} parent=47 // pred_region
        _
      $region52: #{transformer_forward.14} parent=47 // pred_fallthru
        _
    $region48: #{transformer_forward.14} parent=5 // pred_fallthru
      _
    %p539 = scmp.le.s32.totalorder 2, %s13
    // Predicated region
    $region53: #{transformer_forward.14} parent=5 // pred_check
      %p540 = pneg %p539
    $region54: #{transformer_forward.14} parent=5 // pred_check_branch
      %542 = sbr.rel (%p540) target = $region56
    $region55: #{transformer_forward.14} parent=5 // pred_region
      %s543 = ssub.s32 %s13, 2
      // Predicated region
      $region57: #{transformer_forward.14} parent=55 // pred_check
        %p544 = pneg %p194
      $region58: #{transformer_forward.14} parent=55 // pred_check_branch
        %546 = sbr.rel (%p544) target = $region60
      $region59: #{transformer_forward.14} parent=55 // pred_region
        %p547 = scmp.lt.s32.totalorder %s19, 1
        %s548 = scalar_select %p547, %s19, 1
        %s549 = smul.addr %s548, 4
        %s550 = scalar_lea.vmem %s7, %s549
      $region60: #{transformer_forward.14} parent=55 // pred_fallthru
        _
    $region56: #{transformer_forward.14} parent=5 // pred_fallthru
      _
  $region6: #{transformer_forward.14} parent=0 // loop_footer
    %s17 = sadd.s32 1, %s13
  $region7: #{transformer_forward.14} parent=0 // loop_footer_branch
    %12 = sbr.rel target = $region3
  $region8: #{transformer_forward.14} parent=0 // loop_exit
    _

// kernel: transformer_forward.25
$region0: #{transformer_forward.25}
  #allocation0 [shape = 'u32[]', space=smem, size = 0x4, offset = 0x4, fixed_abs, tag = 'smem constant byte address 0x4 - core index']
  #allocation1 [shape = 'u32[144,128]{1,0:T(1,128)}', space=vmem, size = 0x12000, scoped, tag = 'internal scratch']
  %s0 = inlined_call_operand.vmem [shape: bf16[16,128], index: 0, kind: input, shape index: {}]
  %s1 = inlined_call_operand.vmem [shape: bf16[128,56], index: 1, kind: input, shape index: {}]
  %s2 = inlined_call_operand.vmem [shape: f32[1,56], index: 2, kind: input, shape index: {}]
  %s3 = inlined_call_operand.vmem [shape: f32[16,56], index: 3, kind: output, shape index: {}]
  %s4 = sld [smem:[#allocation0]]
  $region45: #{transformer_forward.25} parent=0
    _
  %s6 = ssub.s32 1, %s4
  %s7 = scalar_select 0, %s6, %s4
  loop: start=0, step=1, limit=4
  $region2: #{transformer_forward.25} parent=0 // loop_pre_header
    _
  $region3: #{transformer_forward.25} parent=0 // loop_header
    %s9 = sphi 0, %s13
    %p10 = scmp.ge.s32.totalorder %s9, 4
    %s16 = sphi 0, %s28
    %s17 = sphi 0, %s24
    %s18 = sphi 0, %s16
    %s19 = sphi 0, %s17
    %s20 = sphi 0, %s18
    %s21 = sphi 0, %s19
    %s31 = sphi 0, %s33
    %s34 = sphi 0, %s31
    %s35 = sphi 0, %s34
    %s51 = sphi 0, %s35
    %s57 = sphi 0, %s59
    %s60 = sphi 0, %s57
    %s61 = sphi 0, %s60
    %s77 = sphi 0, %s61
    %s83 = sphi 0, %s85
    %s86 = sphi 0, %s83
    %s87 = sphi 0, %s86
    %s103 = sphi 0, %s87
    %s111 = sphi 0, %s113
    %s114 = sphi 0, %s111
    %s115 = sphi 0, %s114
    %s131 = sphi 0, %s115
  $region4: #{transformer_forward.25} parent=0 // loop_header_branch
    %12 = sbr.rel (%p10) target = $region8
  $region5: #{transformer_forward.25} parent=0 // loop_body
    %s14 = ssub.s32 %s9, 1
    %s15 = ssub.s32 %s9, 2
    %s22 = sadd.s32 1, %s17
    %p23 = scmp.ge.s32.totalorder %s22, 1
    %s24 = scalar_select %p23, 0, %s22
    %s25 = sadd.s32 1, %s16
    %s26 = scalar_select %p23, %s25, %s16
    %p27 = scmp.ge.s32.totalorder %s26, 2
    %s28 = scalar_select %p27, 0, %s26
    %s29 = ssub.s32 %s16, %s28
    %p30 = scmp.eq.s32.totalorder %s29, 0
    %s32 = sadd.s32 %s31, 1
    %s33 = scalar_select %p30, %s31, %s32
    %p36 = pneg %p30
    %p37 = scmp.eq.s32.totalorder %s9, 1
    %p38 = por %p36, %p37
    %p39 = scmp.ne.s32.totalorder %s31, %s34
    %p40 = scmp.eq.s32.totalorder %s9, 0
    %p41 = por %p39, %p40
    %p42 = scmp.ne.s32.totalorder %s31, %s34
    %p43 = scmp.eq.s32.totalorder %s14, 1
    %p44 = por %p42, %p43
    %p45 = scmp.ne.s32.totalorder %s34, %s35
    %p46 = scmp.eq.s32.totalorder %s14, 0
    %p47 = por %p45, %p46
    %p48 = scmp.ne.s32.totalorder %s34, %s35
    %p49 = scmp.eq.s32.totalorder %s15, 1
    %p50 = por %p48, %p49
    %p52 = scmp.ne.s32.totalorder %s35, %s51
    %p53 = scmp.eq.s32.totalorder %s15, 0
    %p54 = por %p52, %p53
    %s55 = ssub.s32 %s17, %s24
    %p56 = scmp.eq.s32.totalorder %s55, 0
    %s58 = sadd.s32 %s57, 1
    %s59 = scalar_select %p56, %s57, %s58
    %p62 = pneg %p56
    %p63 = scmp.eq.s32.totalorder %s9, 1
    %p64 = por %p62, %p63
    %p65 = scmp.ne.s32.totalorder %s57, %s60
    %p66 = scmp.eq.s32.totalorder %s9, 0
    %p67 = por %p65, %p66
    %p68 = scmp.ne.s32.totalorder %s57, %s60
    %p69 = scmp.eq.s32.totalorder %s14, 1
    %p70 = por %p68, %p69
    %p71 = scmp.ne.s32.totalorder %s60, %s61
    %p72 = scmp.eq.s32.totalorder %s14, 0
    %p73 = por %p71, %p72
    %p74 = scmp.ne.s32.totalorder %s60, %s61
    %p75 = scmp.eq.s32.totalorder %s15, 1
    %p76 = por %p74, %p75
    %p78 = scmp.ne.s32.totalorder %s61, %s77
    %p79 = scmp.eq.s32.totalorder %s15, 0
    %p80 = por %p78, %p79
    %s81 = ssub.s32 %s17, %s24
    %p82 = scmp.eq.s32.totalorder %s81, 0
    %s84 = sadd.s32 %s83, 1
    %s85 = scalar_select %p82, %s83, %s84
    %p88 = pneg %p82
    %p89 = scmp.eq.s32.totalorder %s9, 1
    %p90 = por %p88, %p89
    %p91 = scmp.ne.s32.totalorder %s83, %s86
    %p92 = scmp.eq.s32.totalorder %s9, 0
    %p93 = por %p91, %p92
    %p94 = scmp.ne.s32.totalorder %s83, %s86
    %p95 = scmp.eq.s32.totalorder %s14, 1
    %p96 = por %p94, %p95
    %p97 = scmp.ne.s32.totalorder %s86, %s87
    %p98 = scmp.eq.s32.totalorder %s14, 0
    %p99 = por %p97, %p98
    %p100 = scmp.ne.s32.totalorder %s86, %s87
    %p101 = scmp.eq.s32.totalorder %s15, 1
    %p102 = por %p100, %p101
    %p104 = scmp.ne.s32.totalorder %s87, %s103
    %p105 = scmp.eq.s32.totalorder %s15, 0
    %p106 = por %p104, %p105
    %s107 = ssub.s32 %s16, %s28
    %s108 = ssub.s32 %s17, %s24
    %s109 = sor.u32 %s107, %s108
    %p110 = scmp.eq.s32.totalorder %s109, 0
    %s112 = sadd.s32 %s111, 1
    %s113 = scalar_select %p110, %s111, %s112
    %p116 = pneg %p110
    %p117 = scmp.eq.s32.totalorder %s9, 1
    %p118 = por %p116, %p117
    %p119 = scmp.ne.s32.totalorder %s111, %s114
    %p120 = scmp.eq.s32.totalorder %s9, 0
    %p121 = por %p119, %p120
    %p122 = scmp.ne.s32.totalorder %s111, %s114
    %p123 = scmp.eq.s32.totalorder %s14, 1
    %p124 = por %p122, %p123
    %p125 = scmp.ne.s32.totalorder %s114, %s115
    %p126 = scmp.eq.s32.totalorder %s14, 0
    %p127 = por %p125, %p126
    %p128 = scmp.ne.s32.totalorder %s114, %s115
    %p129 = scmp.eq.s32.totalorder %s15, 1
    %p130 = por %p128, %p129
    %p132 = scmp.ne.s32.totalorder %s115, %s131
    %p133 = scmp.eq.s32.totalorder %s15, 0
    %p134 = por %p132, %p133
    %p135 = scmp.le.s32.totalorder 1, %s9
    %p136 = scmp.lt.s32.totalorder %s9, 3
    %p137 = pnand %p135, %p136
    %p138 = pneg %p137
    // Predicated region
    $region9: #{transformer_forward.25} parent=5 // pred_check
      _
    $region10: #{transformer_forward.25} parent=5 // pred_check_branch
      %140 = sbr.rel (%p137) target = $region12
    $region11: #{transformer_forward.25} parent=5 // pred_region
      %s141 = ssub.s32 %s9, 1
      // Predicated region
      $region13: #{transformer_forward.25} parent=11 // pred_check
        %p142 = pneg %p73
      $region14: #{transformer_forward.25} parent=11 // pred_check_branch
        %144 = sbr.rel (%p142) target = $region16
      $region15: #{transformer_forward.25} parent=11 // pred_region
        %p145 = scmp.lt.s32.totalorder %s19, 0
        %s146 = scalar_select %p145, %s19, 0
        %s147 = smul.addr %s146, 4
        %s148 = scalar_lea.vmem %s1, %s147
      $region16: #{transformer_forward.25} parent=11 // pred_fallthru
        _
      // Predicated region
      $region17: #{transformer_forward.25} parent=11 // pred_check
        %p149 = pneg %p99
      $region18: #{transformer_forward.25} parent=11 // pred_check_branch
        %151 = sbr.rel (%p149) target = $region20
      $region19: #{transformer_forward.25} parent=11 // pred_region
        %p152 = scmp.lt.s32.totalorder %s19, 0
        %s153 = scalar_select %p152, %s19, 0
        %s154 = scalar_lea.vmem %s2, %s153
      $region20: #{transformer_forward.25} parent=11 // pred_fallthru
        _
    $region12: #{transformer_forward.25} parent=5 // pred_fallthru
      _
    %p155 = scmp.lt.s32.totalorder %s9, 2
    // Predicated region
    $region21: #{transformer_forward.25} parent=5 // pred_check
      %p156 = pneg %p155
    $region22: #{transformer_forward.25} parent=5 // pred_check_branch
      %158 = sbr.rel (%p156) target = $region24
    $region23: #{transformer_forward.25} parent=5 // pred_region
      // Predicated region
      $region25: #{transformer_forward.25} parent=23 // pred_check
        %p159 = pneg %p41
      $region26: #{transformer_forward.25} parent=23 // pred_check_branch
        %161 = sbr.rel (%p159) target = $region28
      $region27: #{transformer_forward.25} parent=23 // pred_region
        %p162 = scmp.lt.s32.totalorder %s16, 1
        %s163 = scalar_select %p162, %s16, 1
        %s164 = smul.addr %s163, 4
        %s165 = scalar_lea.vmem %s0, %s164
      $region28: #{transformer_forward.25} parent=23 // pred_fallthru
        _
    $region24: #{transformer_forward.25} parent=5 // pred_fallthru
      _
    %p166 = scmp.le.s32.totalorder 1, %s9
    %p167 = scmp.lt.s32.totalorder %s9, 3
    %p168 = pnand %p166, %p167
    %p169 = pneg %p168
    // Predicated region
    $region29: #{transformer_forward.25} parent=5 // pred_check
      _
    $region30: #{transformer_forward.25} parent=5 // pred_check_branch
      %171 = sbr.rel (%p168) target = $region32
    $region31: #{transformer_forward.25} parent=5 // pred_region
      %s172 = ssub.s32 %s9, 1
      %p173 = scmp.lt.s32.totalorder %s18, 1
      %s174 = scalar_select %p173, %s18, 1
      %s175 = smul.addr %s174, 4
      %s176 = scalar_lea.vmem %s0, %s175
      %p177 = pneg %p47
      %p178 = pneg %p44
      %p179 = scmp.lt.s32.totalorder %s19, 0
      %s180 = scalar_select %p179, %s19, 0
      %s181 = smul.addr %s180, 4
      %s182 = scalar_lea.vmem %s1, %s181
      %p183 = pneg %p73
      %p184 = pneg %p70
      %p185 = scmp.lt.s32.totalorder %s19, 0
      %s186 = scalar_select %p185, %s19, 0
      %s187 = scalar_lea.vmem %s2, %s186
      %p188 = pneg %p99
      %p189 = pneg %p96
      %p190 = pneg %p127
      %p191 = pneg %p124
      %p192 = scmp.lt.s32.totalorder %s18, 1
      %s193 = scalar_select %p192, %s18, 1
      %p194 = scmp.lt.s32.totalorder %s19, 0
      %s195 = scalar_select %p194, %s19, 0
      %s196 = sadd.s32 %s195, %s193
      %s197 = smul.addr %s196, 8
      %s198 = scalar_lea.vmem %s3, %s197
      %p199 = scmp.lt.s32.totalorder %s18, 1
      %s200 = scalar_select %p199, %s18, 1
      %s201 = smul.addr %s200, 4
      %s202 = scalar_lea.vmem %s0, %s201
      %p203 = scmp.lt.s32.totalorder %s19, 0
      %s204 = scalar_select %p203, %s19, 0
      %s205 = smul.addr %s204, 4
      %s206 = scalar_lea.vmem %s1, %s205
      %p207 = scmp.lt.s32.totalorder %s19, 0
      %s208 = scalar_select %p207, %s19, 0
      %s209 = scalar_lea.vmem %s2, %s208
      %p210 = scmp.lt.s32.totalorder %s18, 1
      %s211 = scalar_select %p210, %s18, 1
      %p212 = scmp.lt.s32.totalorder %s19, 0
      %s213 = scalar_select %p212, %s19, 0
      %s214 = sadd.s32 %s213, %s211
      %s215 = smul.addr %s214, 8
      %s216 = scalar_lea.vmem %s3, %s215
      %v218 = vld [vmem:[%s202] sm:$0xf]
      %v219 = vld [vmem:[%s206] sm:$0xf]
      %v220 = vld [vmem:[%s206 + $0x4] sm:$0xf]
      %v221 = vld [vmem:[%s206 + $0x8] sm:$0xf]
      %v222 = vld [vmem:[%s206 + $0xc] sm:$0xf]
      %v223 = vld [vmem:[%s206 + $0x10] sm:$0xf]
      %v224 = vld [vmem:[%s206 + $0x14] sm:$0xf]
      %v225 = vld [vmem:[%s206 + $0x18] sm:$0xf]
      %v226 = vld [vmem:[%s206 + $0x1c] sm:$0xf]
      %v227 = vld [vmem:[%s206 + $0x20] sm:$0xf]
      %v228 = vld [vmem:[%s206 + $0x24] sm:$0xf]
      %v229 = vld [vmem:[%s206 + $0x28] sm:$0xf]
      %v230 = vld [vmem:[%s206 + $0x2c] sm:$0xf]
      %v231 = vld [vmem:[%s206 + $0x30] sm:$0xf]
      %v232 = vld [vmem:[%s206 + $0x34] sm:$0xf]
      %v233 = vld [vmem:[%s206 + $0x38] sm:$0xf]
      %v234 = vld [vmem:[%s206 + $0x3c] sm:$0xf]
      %v235 = vld [vmem:[%s209] sm:$0x1]
      %v237 = vlaneseq
      %v238 = vshrl.u32 %v237, 7
      %v239 = vsub.s32 0, %v238
      %v240 = vrot.slane %v235, %v239
      %v258 = vunpack.c.l.b16 %v219
      %v259 = vunpack.c.l.b16 %v220
      %v260 = vunpack.c.l.b16 %v221
      %v261 = vunpack.c.l.b16 %v222
      %v262 = vunpack.c.l.b16 %v223
      %v263 = vunpack.c.l.b16 %v224
      %v264 = vunpack.c.l.b16 %v225
      %v265 = vunpack.c.l.b16 %v226
      %v266 = vunpack.c.l.b16 %v227
      %v267 = vunpack.c.l.b16 %v228
      %v268 = vunpack.c.l.b16 %v229
      %v269 = vunpack.c.l.b16 %v230
      %v270 = vunpack.c.l.b16 %v231
      %v271 = vunpack.c.l.b16 %v232
      %v272 = vunpack.c.l.b16 %v233
      %v273 = vunpack.c.l.b16 %v234
      %v274 = vpack.c.b16 %v259, %v258
      %v275 = vpack.c.b16 %v261, %v260
      %v276 = vpack.c.b16 %v263, %v262
      %v277 = vpack.c.b16 %v265, %v264
      %v278 = vpack.c.b16 %v267, %v266
      %v279 = vpack.c.b16 %v269, %v268
      %v280 = vpack.c.b16 %v271, %v270
      %v281 = vpack.c.b16 %v273, %v272
      %290 = vmatprep.subr.bf16.mxu0 0
      %291 = vmatpush1.bf16.msra.mxu0 %v274
      %292 = vmatprep.subr.bf16.mxu0 0
      %293 = vmatpush1.bf16.msra.mxu0 %v275
      %294 = vmatprep.subr.bf16.mxu0 0
      %295 = vmatpush1.bf16.msra.mxu0 %v276
      %296 = vmatprep.subr.bf16.mxu0 0
      %297 = vmatpush1.bf16.msra.mxu0 %v277
      %298 = vmatprep.subr.bf16.mxu0 0
      %299 = vmatpush1.bf16.msra.mxu0 %v278
      %300 = vmatprep.subr.bf16.mxu0 0
      %301 = vmatpush1.bf16.msra.mxu0 %v279
      %302 = vmatprep.subr.bf16.mxu0 0
      %303 = vmatpush1.bf16.msra.mxu0 %v280
      %304 = vmatprep.subr.bf16.mxu0 0
      %305 = vmatpush1.bf16.msra.mxu0 %v281
      %306 = vmatprep.subr.bf16.mxu0 0
      %307 = vmatpush1.bf16.msra.mxu0 0
      %308 = vmatprep.subr.bf16.mxu0 0
      %309 = vmatpush1.bf16.msra.mxu0 0
      %310 = vmatprep.subr.bf16.mxu0 0
      %311 = vmatpush1.bf16.msra.mxu0 0
      %312 = vmatprep.subr.bf16.mxu0 0
      %313 = vmatpush1.bf16.msra.mxu0 0
      %314 = vmatprep.subr.bf16.mxu0 0
      %315 = vmatpush1.bf16.msra.mxu0 0
      %316 = vmatprep.subr.bf16.mxu0 0
      %317 = vmatpush1.bf16.msra.mxu0 0
      %318 = vmatprep.subr.bf16.mxu0 0
      %319 = vmatpush1.bf16.msra.mxu0 0
      %320 = vmatprep.subr.bf16.mxu0 0
      %321 = vmatpush1.bf16.msra.mxu0 0
      %322 = vmatprep.mubr.bf16.mxu0 0
      %323 = vmatmul.mubr.bf16.gmra.mrb[0].mxu0 %v218
      %v324 = vpop.f32.mrb[0].mxu0
      %v325 = vadd.f32 %v240, %v324
      %v326 = vpop.f32.mrb[0].mxu0
      %v327 = vpop.f32.mrb[0].mxu0
      %v328 = vpop.f32.mrb[0].mxu0
      %329 = vdwg.mxu0
      %vm330 = vcmask 457728
      %331 = vst.msk [vmem:[%s216] sm:$0xff] %vm330, %v325
      %p332 = scmp.lt.s32.totalorder %s18, 1
      %s333 = scalar_select %p332, %s18, 1
      %p334 = scmp.lt.s32.totalorder %s19, 0
      %s335 = scalar_select %p334, %s19, 0
      %s336 = sadd.s32 %s335, %s333
      %s337 = smul.addr %s336, 8
      %s338 = scalar_lea.vmem %s3, %s337
      // Predicated region
      $region33: #{transformer_forward.25} parent=31 // pred_check
        %p339 = pneg %p124
      $region34: #{transformer_forward.25} parent=31 // pred_check_branch
        %341 = sbr.rel (%p339) target = $region36
      $region35: #{transformer_forward.25} parent=31 // pred_region
        _
      $region36: #{transformer_forward.25} parent=31 // pred_fallthru
        _
    $region32: #{transformer_forward.25} parent=5 // pred_fallthru
      _
    %p342 = scmp.le.s32.totalorder 2, %s9
    // Predicated region
    $region37: #{transformer_forward.25} parent=5 // pred_check
      %p343 = pneg %p342
    $region38: #{transformer_forward.25} parent=5 // pred_check_branch
      %345 = sbr.rel (%p343) target = $region40
    $region39: #{transformer_forward.25} parent=5 // pred_region
      %s346 = ssub.s32 %s9, 2
      // Predicated region
      $region41: #{transformer_forward.25} parent=39 // pred_check
        %p347 = pneg %p130
      $region42: #{transformer_forward.25} parent=39 // pred_check_branch
        %349 = sbr.rel (%p347) target = $region44
      $region43: #{transformer_forward.25} parent=39 // pred_region
        %p350 = scmp.lt.s32.totalorder %s20, 1
        %s351 = scalar_select %p350, %s20, 1
        %p352 = scmp.lt.s32.totalorder %s21, 0
        %s353 = scalar_select %p352, %s21, 0
        %s354 = sadd.s32 %s353, %s351
        %s355 = smul.addr %s354, 8
        %s356 = scalar_lea.vmem %s3, %s355
      $region44: #{transformer_forward.25} parent=39 // pred_fallthru
        _
    $region40: #{transformer_forward.25} parent=5 // pred_fallthru
      _
  $region6: #{transformer_forward.25} parent=0 // loop_footer
    %s13 = sadd.s32 1, %s9
  $region7: #{transformer_forward.25} parent=0 // loop_footer_branch
    %8 = sbr.rel target = $region3
  $region8: #{transformer_forward.25} parent=0 // loop_exit
    _

// kernel: transformer_forward.19
$region0: #{transformer_forward.19}
  #allocation0 [shape = 'u32[]', space=smem, size = 0x4, offset = 0x4, fixed_abs, tag = 'smem constant byte address 0x4 - core index']
  #allocation1 [shape = 'u32[144,128]{1,0:T(1,128)}', space=vmem, size = 0x12000, scoped, tag = 'internal scratch']
  %s0 = inlined_call_operand.vmem [shape: bf16[2,8,128], index: 0, kind: input, shape index: {}]
  %s1 = inlined_call_operand.vmem [shape: bf16[2,8,128], index: 1, kind: input, shape index: {}]
  %s2 = inlined_call_operand.vmem [shape: f32[8,8], index: 2, kind: input, shape index: {}]
  %s3 = inlined_call_operand.vmem [shape: f32[2,1,8], index: 3, kind: input, shape index: {}]
  %s4 = inlined_call_operand.vmem [shape: bf16[4,128,32], index: 4, kind: input, shape index: {}]
  %s5 = inlined_call_operand.vmem [shape: f32[4,1,32], index: 5, kind: input, shape index: {}]
  %s6 = inlined_call_operand.vmem [shape: bf16[4,128,32], index: 6, kind: input, shape index: {}]
  %s7 = inlined_call_operand.vmem [shape: f32[4,1,32], index: 7, kind: input, shape index: {}]
  %s8 = inlined_call_operand.vmem [shape: bf16[4,128,32], index: 8, kind: input, shape index: {}]
  %s9 = inlined_call_operand.vmem [shape: f32[4,1,32], index: 9, kind: input, shape index: {}]
  %s10 = inlined_call_operand.vmem [shape: bf16[4,32,128], index: 10, kind: input, shape index: {}]
  %s11 = inlined_call_operand.vmem [shape: f32[1,128], index: 11, kind: input, shape index: {}]
  %s12 = inlined_call_operand.vmem [shape: f32[1,128], index: 12, kind: input, shape index: {}]
  %s13 = inlined_call_operand.vmem [shape: f32[1,128], index: 13, kind: input, shape index: {}]
  %s14 = inlined_call_operand.vmem [shape: bf16[2,8,128], index: 14, kind: output, shape index: {}]
  %s15 = sld [smem:[#allocation0]]
  $region89: #{transformer_forward.19} parent=0
    _
  %s17 = ssub.s32 1, %s15
  %s18 = scalar_select 0, %s17, %s15
  loop: start=0, step=1, limit=4
  $region2: #{transformer_forward.19} parent=0 // loop_pre_header
    _
  $region3: #{transformer_forward.19} parent=0 // loop_header
    %s20 = sphi 0, %s24
    %p21 = scmp.ge.s32.totalorder %s20, 4
    %s30 = sphi 0, %s32
    %s33 = sphi 0, %s30
    %s34 = sphi 0, %s33
    %s50 = sphi 0, %s34
    %s56 = sphi 0, %s58
    %s59 = sphi 0, %s56
    %s60 = sphi 0, %s59
    %s76 = sphi 0, %s60
    %s80 = sphi 0, %s80
    %s82 = sphi 0, %s80
    %s83 = sphi 0, %s82
    %s97 = sphi 0, %s83
    %s103 = sphi 0, %s105
    %s106 = sphi 0, %s103
    %s107 = sphi 0, %s106
    %s123 = sphi 0, %s107
    %s127 = sphi 0, %s127
    %s129 = sphi 0, %s127
    %s130 = sphi 0, %s129
    %s144 = sphi 0, %s130
    %s148 = sphi 0, %s148
    %s150 = sphi 0, %s148
    %s151 = sphi 0, %s150
    %s165 = sphi 0, %s151
    %s169 = sphi 0, %s169
    %s171 = sphi 0, %s169
    %s172 = sphi 0, %s171
    %s186 = sphi 0, %s172
    %s190 = sphi 0, %s190
    %s192 = sphi 0, %s190
    %s193 = sphi 0, %s192
    %s207 = sphi 0, %s193
    %s211 = sphi 0, %s211
    %s213 = sphi 0, %s211
    %s214 = sphi 0, %s213
    %s228 = sphi 0, %s214
    %s232 = sphi 0, %s232
    %s234 = sphi 0, %s232
    %s235 = sphi 0, %s234
    %s249 = sphi 0, %s235
    %s253 = sphi 0, %s253
    %s255 = sphi 0, %s253
    %s256 = sphi 0, %s255
    %s270 = sphi 0, %s256
    %s274 = sphi 0, %s274
    %s276 = sphi 0, %s274
    %s277 = sphi 0, %s276
    %s291 = sphi 0, %s277
    %s295 = sphi 0, %s295
    %s297 = sphi 0, %s295
    %s298 = sphi 0, %s297
    %s312 = sphi 0, %s298
    %s316 = sphi 0, %s316
    %s318 = sphi 0, %s316
    %s319 = sphi 0, %s318
    %s333 = sphi 0, %s319
    %s339 = sphi 0, %s341
    %s342 = sphi 0, %s339
    %s343 = sphi 0, %s342
    %s359 = sphi 0, %s343
  $region4: #{transformer_forward.19} parent=0 // loop_header_branch
    %23 = sbr.rel (%p21) target = $region8
  $region5: #{transformer_forward.19} parent=0 // loop_body
    %s25 = ssub.s32 %s20, 1
    %s26 = ssub.s32 %s20, 2
    %s27 = sadd.s32 %s20, 1
    %s28 = ssub.s32 %s20, %s27
    %p29 = scmp.eq.s32.totalorder %s28, 0
    %s31 = sadd.s32 %s30, 1
    %s32 = scalar_select %p29, %s30, %s31
    %p35 = pneg %p29
    %p36 = scmp.eq.s32.totalorder %s20, 1
    %p37 = por %p35, %p36
    %p38 = scmp.ne.s32.totalorder %s30, %s33
    %p39 = scmp.eq.s32.totalorder %s20, 0
    %p40 = por %p38, %p39
    %p41 = scmp.ne.s32.totalorder %s30, %s33
    %p42 = scmp.eq.s32.totalorder %s25, 1
    %p43 = por %p41, %p42
    %p44 = scmp.ne.s32.totalorder %s33, %s34
    %p45 = scmp.eq.s32.totalorder %s25, 0
    %p46 = por %p44, %p45
    %p47 = scmp.ne.s32.totalorder %s33, %s34
    %p48 = scmp.eq.s32.totalorder %s26, 1
    %p49 = por %p47, %p48
    %p51 = scmp.ne.s32.totalorder %s34, %s50
    %p52 = scmp.eq.s32.totalorder %s26, 0
    %p53 = por %p51, %p52
    %s54 = ssub.s32 %s20, %s27
    %p55 = scmp.eq.s32.totalorder %s54, 0
    %s57 = sadd.s32 %s56, 1
    %s58 = scalar_select %p55, %s56, %s57
    %p61 = pneg %p55
    %p62 = scmp.eq.s32.totalorder %s20, 1
    %p63 = por %p61, %p62
    %p64 = scmp.ne.s32.totalorder %s56, %s59
    %p65 = scmp.eq.s32.totalorder %s20, 0
    %p66 = por %p64, %p65
    %p67 = scmp.ne.s32.totalorder %s56, %s59
    %p68 = scmp.eq.s32.totalorder %s25, 1
    %p69 = por %p67, %p68
    %p70 = scmp.ne.s32.totalorder %s59, %s60
    %p71 = scmp.eq.s32.totalorder %s25, 0
    %p72 = por %p70, %p71
    %p73 = scmp.ne.s32.totalorder %s59, %s60
    %p74 = scmp.eq.s32.totalorder %s26, 1
    %p75 = por %p73, %p74
    %p77 = scmp.ne.s32.totalorder %s60, %s76
    %p78 = scmp.eq.s32.totalorder %s26, 0
    %p79 = por %p77, %p78
    %s81 = sadd.s32 %s80, 1
    %p84 = scmp.eq.s32.totalorder %s20, 1
    %p85 = scmp.ne.s32.totalorder %s80, %s82
    %p86 = scmp.eq.s32.totalorder %s20, 0
    %p87 = por %p85, %p86
    %p88 = scmp.ne.s32.totalorder %s80, %s82
    %p89 = scmp.eq.s32.totalorder %s25, 1
    %p90 = por %p88, %p89
    %p91 = scmp.ne.s32.totalorder %s82, %s83
    %p92 = scmp.eq.s32.totalorder %s25, 0
    %p93 = por %p91, %p92
    %p94 = scmp.ne.s32.totalorder %s82, %s83
    %p95 = scmp.eq.s32.totalorder %s26, 1
    %p96 = por %p94, %p95
    %p98 = scmp.ne.s32.totalorder %s83, %s97
    %p99 = scmp.eq.s32.totalorder %s26, 0
    %p100 = por %p98, %p99
    %s101 = ssub.s32 %s20, %s27
    %p102 = scmp.eq.s32.totalorder %s101, 0
    %s104 = sadd.s32 %s103, 1
    %s105 = scalar_select %p102, %s103, %s104
    %p108 = pneg %p102
    %p109 = scmp.eq.s32.totalorder %s20, 1
    %p110 = por %p108, %p109
    %p111 = scmp.ne.s32.totalorder %s103, %s106
    %p112 = scmp.eq.s32.totalorder %s20, 0
    %p113 = por %p111, %p112
    %p114 = scmp.ne.s32.totalorder %s103, %s106
    %p115 = scmp.eq.s32.totalorder %s25, 1
    %p116 = por %p114, %p115
    %p117 = scmp.ne.s32.totalorder %s106, %s107
    %p118 = scmp.eq.s32.totalorder %s25, 0
    %p119 = por %p117, %p118
    %p120 = scmp.ne.s32.totalorder %s106, %s107
    %p121 = scmp.eq.s32.totalorder %s26, 1
    %p122 = por %p120, %p121
    %p124 = scmp.ne.s32.totalorder %s107, %s123
    %p125 = scmp.eq.s32.totalorder %s26, 0
    %p126 = por %p124, %p125
    %s128 = sadd.s32 %s127, 1
    %p131 = scmp.eq.s32.totalorder %s20, 1
    %p132 = scmp.ne.s32.totalorder %s127, %s129
    %p133 = scmp.eq.s32.totalorder %s20, 0
    %p134 = por %p132, %p133
    %p135 = scmp.ne.s32.totalorder %s127, %s129
    %p136 = scmp.eq.s32.totalorder %s25, 1
    %p137 = por %p135, %p136
    %p138 = scmp.ne.s32.totalorder %s129, %s130
    %p139 = scmp.eq.s32.totalorder %s25, 0
    %p140 = por %p138, %p139
    %p141 = scmp.ne.s32.totalorder %s129, %s130
    %p142 = scmp.eq.s32.totalorder %s26, 1
    %p143 = por %p141, %p142
    %p145 = scmp.ne.s32.totalorder %s130, %s144
    %p146 = scmp.eq.s32.totalorder %s26, 0
    %p147 = por %p145, %p146
    %s149 = sadd.s32 %s148, 1
    %p152 = scmp.eq.s32.totalorder %s20, 1
    %p153 = scmp.ne.s32.totalorder %s148, %s150
    %p154 = scmp.eq.s32.totalorder %s20, 0
    %p155 = por %p153, %p154
    %p156 = scmp.ne.s32.totalorder %s148, %s150
    %p157 = scmp.eq.s32.totalorder %s25, 1
    %p158 = por %p156, %p157
    %p159 = scmp.ne.s32.totalorder %s150, %s151
    %p160 = scmp.eq.s32.totalorder %s25, 0
    %p161 = por %p159, %p160
    %p162 = scmp.ne.s32.totalorder %s150, %s151
    %p163 = scmp.eq.s32.totalorder %s26, 1
    %p164 = por %p162, %p163
    %p166 = scmp.ne.s32.totalorder %s151, %s165
    %p167 = scmp.eq.s32.totalorder %s26, 0
    %p168 = por %p166, %p167
    %s170 = sadd.s32 %s169, 1
    %p173 = scmp.eq.s32.totalorder %s20, 1
    %p174 = scmp.ne.s32.totalorder %s169, %s171
    %p175 = scmp.eq.s32.totalorder %s20, 0
    %p176 = por %p174, %p175
    %p177 = scmp.ne.s32.totalorder %s169, %s171
    %p178 = scmp.eq.s32.totalorder %s25, 1
    %p179 = por %p177, %p178
    %p180 = scmp.ne.s32.totalorder %s171, %s172
    %p181 = scmp.eq.s32.totalorder %s25, 0
    %p182 = por %p180, %p181
    %p183 = scmp.ne.s32.totalorder %s171, %s172
    %p184 = scmp.eq.s32.totalorder %s26, 1
    %p185 = por %p183, %p184
    %p187 = scmp.ne.s32.totalorder %s172, %s186
    %p188 = scmp.eq.s32.totalorder %s26, 0
    %p189 = por %p187, %p188
    %s191 = sadd.s32 %s190, 1
    %p194 = scmp.eq.s32.totalorder %s20, 1
    %p195 = scmp.ne.s32.totalorder %s190, %s192
    %p196 = scmp.eq.s32.totalorder %s20, 0
    %p197 = por %p195, %p196
    %p198 = scmp.ne.s32.totalorder %s190, %s192
    %p199 = scmp.eq.s32.totalorder %s25, 1
    %p200 = por %p198, %p199
    %p201 = scmp.ne.s32.totalorder %s192, %s193
    %p202 = scmp.eq.s32.totalorder %s25, 0
    %p203 = por %p201, %p202
    %p204 = scmp.ne.s32.totalorder %s192, %s193
    %p205 = scmp.eq.s32.totalorder %s26, 1
    %p206 = por %p204, %p205
    %p208 = scmp.ne.s32.totalorder %s193, %s207
    %p209 = scmp.eq.s32.totalorder %s26, 0
    %p210 = por %p208, %p209
    %s212 = sadd.s32 %s211, 1
    %p215 = scmp.eq.s32.totalorder %s20, 1
    %p216 = scmp.ne.s32.totalorder %s211, %s213
    %p217 = scmp.eq.s32.totalorder %s20, 0
    %p218 = por %p216, %p217
    %p219 = scmp.ne.s32.totalorder %s211, %s213
    %p220 = scmp.eq.s32.totalorder %s25, 1
    %p221 = por %p219, %p220
    %p222 = scmp.ne.s32.totalorder %s213, %s214
    %p223 = scmp.eq.s32.totalorder %s25, 0
    %p224 = por %p222, %p223
    %p225 = scmp.ne.s32.totalorder %s213, %s214
    %p226 = scmp.eq.s32.totalorder %s26, 1
    %p227 = por %p225, %p226
    %p229 = scmp.ne.s32.totalorder %s214, %s228
    %p230 = scmp.eq.s32.totalorder %s26, 0
    %p231 = por %p229, %p230
    %s233 = sadd.s32 %s232, 1
    %p236 = scmp.eq.s32.totalorder %s20, 1
    %p237 = scmp.ne.s32.totalorder %s232, %s234
    %p238 = scmp.eq.s32.totalorder %s20, 0
    %p239 = por %p237, %p238
    %p240 = scmp.ne.s32.totalorder %s232, %s234
    %p241 = scmp.eq.s32.totalorder %s25, 1
    %p242 = por %p240, %p241
    %p243 = scmp.ne.s32.totalorder %s234, %s235
    %p244 = scmp.eq.s32.totalorder %s25, 0
    %p245 = por %p243, %p244
    %p246 = scmp.ne.s32.totalorder %s234, %s235
    %p247 = scmp.eq.s32.totalorder %s26, 1
    %p248 = por %p246, %p247
    %p250 = scmp.ne.s32.totalorder %s235, %s249
    %p251 = scmp.eq.s32.totalorder %s26, 0
    %p252 = por %p250, %p251
    %s254 = sadd.s32 %s253, 1
    %p257 = scmp.eq.s32.totalorder %s20, 1
    %p258 = scmp.ne.s32.totalorder %s253, %s255
    %p259 = scmp.eq.s32.totalorder %s20, 0
    %p260 = por %p258, %p259
    %p261 = scmp.ne.s32.totalorder %s253, %s255
    %p262 = scmp.eq.s32.totalorder %s25, 1
    %p263 = por %p261, %p262
    %p264 = scmp.ne.s32.totalorder %s255, %s256
    %p265 = scmp.eq.s32.totalorder %s25, 0
    %p266 = por %p264, %p265
    %p267 = scmp.ne.s32.totalorder %s255, %s256
    %p268 = scmp.eq.s32.totalorder %s26, 1
    %p269 = por %p267, %p268
    %p271 = scmp.ne.s32.totalorder %s256, %s270
    %p272 = scmp.eq.s32.totalorder %s26, 0
    %p273 = por %p271, %p272
    %s275 = sadd.s32 %s274, 1
    %p278 = scmp.eq.s32.totalorder %s20, 1
    %p279 = scmp.ne.s32.totalorder %s274, %s276
    %p280 = scmp.eq.s32.totalorder %s20, 0
    %p281 = por %p279, %p280
    %p282 = scmp.ne.s32.totalorder %s274, %s276
    %p283 = scmp.eq.s32.totalorder %s25, 1
    %p284 = por %p282, %p283
    %p285 = scmp.ne.s32.totalorder %s276, %s277
    %p286 = scmp.eq.s32.totalorder %s25, 0
    %p287 = por %p285, %p286
    %p288 = scmp.ne.s32.totalorder %s276, %s277
    %p289 = scmp.eq.s32.totalorder %s26, 1
    %p290 = por %p288, %p289
    %p292 = scmp.ne.s32.totalorder %s277, %s291
    %p293 = scmp.eq.s32.totalorder %s26, 0
    %p294 = por %p292, %p293
    %s296 = sadd.s32 %s295, 1
    %p299 = scmp.eq.s32.totalorder %s20, 1
    %p300 = scmp.ne.s32.totalorder %s295, %s297
    %p301 = scmp.eq.s32.totalorder %s20, 0
    %p302 = por %p300, %p301
    %p303 = scmp.ne.s32.totalorder %s295, %s297
    %p304 = scmp.eq.s32.totalorder %s25, 1
    %p305 = por %p303, %p304
    %p306 = scmp.ne.s32.totalorder %s297, %s298
    %p307 = scmp.eq.s32.totalorder %s25, 0
    %p308 = por %p306, %p307
    %p309 = scmp.ne.s32.totalorder %s297, %s298
    %p310 = scmp.eq.s32.totalorder %s26, 1
    %p311 = por %p309, %p310
    %p313 = scmp.ne.s32.totalorder %s298, %s312
    %p314 = scmp.eq.s32.totalorder %s26, 0
    %p315 = por %p313, %p314
    %s317 = sadd.s32 %s316, 1
    %p320 = scmp.eq.s32.totalorder %s20, 1
    %p321 = scmp.ne.s32.totalorder %s316, %s318
    %p322 = scmp.eq.s32.totalorder %s20, 0
    %p323 = por %p321, %p322
    %p324 = scmp.ne.s32.totalorder %s316, %s318
    %p325 = scmp.eq.s32.totalorder %s25, 1
    %p326 = por %p324, %p325
    %p327 = scmp.ne.s32.totalorder %s318, %s319
    %p328 = scmp.eq.s32.totalorder %s25, 0
    %p329 = por %p327, %p328
    %p330 = scmp.ne.s32.totalorder %s318, %s319
    %p331 = scmp.eq.s32.totalorder %s26, 1
    %p332 = por %p330, %p331
    %p334 = scmp.ne.s32.totalorder %s319, %s333
    %p335 = scmp.eq.s32.totalorder %s26, 0
    %p336 = por %p334, %p335
    %s337 = ssub.s32 %s20, %s27
    %p338 = scmp.eq.s32.totalorder %s337, 0
    %s340 = sadd.s32 %s339, 1
    %s341 = scalar_select %p338, %s339, %s340
    %p344 = pneg %p338
    %p345 = scmp.eq.s32.totalorder %s20, 1
    %p346 = por %p344, %p345
    %p347 = scmp.ne.s32.totalorder %s339, %s342
    %p348 = scmp.eq.s32.totalorder %s20, 0
    %p349 = por %p347, %p348
    %p350 = scmp.ne.s32.totalorder %s339, %s342
    %p351 = scmp.eq.s32.totalorder %s25, 1
    %p352 = por %p350, %p351
    %p353 = scmp.ne.s32.totalorder %s342, %s343
    %p354 = scmp.eq.s32.totalorder %s25, 0
    %p355 = por %p353, %p354
    %p356 = scmp.ne.s32.totalorder %s342, %s343
    %p357 = scmp.eq.s32.totalorder %s26, 1
    %p358 = por %p356, %p357
    %p360 = scmp.ne.s32.totalorder %s343, %s359
    %p361 = scmp.eq.s32.totalorder %s26, 0
    %p362 = por %p360, %p361
    %p363 = scmp.le.s32.totalorder 1, %s20
    %p364 = scmp.lt.s32.totalorder %s20, 3
    %p365 = pnand %p363, %p364
    %p366 = pneg %p365
    // Predicated region
    $region9: #{transformer_forward.19} parent=5 // pred_check
      _
    $region10: #{transformer_forward.19} parent=5 // pred_check_branch
      %368 = sbr.rel (%p365) target = $region12
    $region11: #{transformer_forward.19} parent=5 // pred_region
      %s369 = ssub.s32 %s20, 1
      // Predicated region
      $region13: #{transformer_forward.19} parent=11 // pred_check
        %p370 = pneg %p93
      $region14: #{transformer_forward.19} parent=11 // pred_check_branch
        %372 = sbr.rel (%p370) target = $region16
      $region15: #{transformer_forward.19} parent=11 // pred_region
        _
      $region16: #{transformer_forward.19} parent=11 // pred_fallthru
        _
      // Predicated region
      $region17: #{transformer_forward.19} parent=11 // pred_check
        %p373 = pneg %p140
      $region18: #{transformer_forward.19} parent=11 // pred_check_branch
        %375 = sbr.rel (%p373) target = $region20
      $region19: #{transformer_forward.19} parent=11 // pred_region
        _
      $region20: #{transformer_forward.19} parent=11 // pred_fallthru
        _
      // Predicated region
      $region21: #{transformer_forward.19} parent=11 // pred_check
        %p376 = pneg %p161
      $region22: #{transformer_forward.19} parent=11 // pred_check_branch
        %378 = sbr.rel (%p376) target = $region24
      $region23: #{transformer_forward.19} parent=11 // pred_region
        _
      $region24: #{transformer_forward.19} parent=11 // pred_fallthru
        _
      // Predicated region
      $region25: #{transformer_forward.19} parent=11 // pred_check
        %p379 = pneg %p182
      $region26: #{transformer_forward.19} parent=11 // pred_check_branch
        %381 = sbr.rel (%p379) target = $region28
      $region27: #{transformer_forward.19} parent=11 // pred_region
        _
      $region28: #{transformer_forward.19} parent=11 // pred_fallthru
        _
      // Predicated region
      $region29: #{transformer_forward.19} parent=11 // pred_check
        %p382 = pneg %p203
      $region30: #{transformer_forward.19} parent=11 // pred_check_branch
        %384 = sbr.rel (%p382) target = $region32
      $region31: #{transformer_forward.19} parent=11 // pred_region
        _
      $region32: #{transformer_forward.19} parent=11 // pred_fallthru
        _
      // Predicated region
      $region33: #{transformer_forward.19} parent=11 // pred_check
        %p385 = pneg %p224
      $region34: #{transformer_forward.19} parent=11 // pred_check_branch
        %387 = sbr.rel (%p385) target = $region36
      $region35: #{transformer_forward.19} parent=11 // pred_region
        _
      $region36: #{transformer_forward.19} parent=11 // pred_fallthru
        _
      // Predicated region
      $region37: #{transformer_forward.19} parent=11 // pred_check
        %p388 = pneg %p245
      $region38: #{transformer_forward.19} parent=11 // pred_check_branch
        %390 = sbr.rel (%p388) target = $region40
      $region39: #{transformer_forward.19} parent=11 // pred_region
        _
      $region40: #{transformer_forward.19} parent=11 // pred_fallthru
        _
      // Predicated region
      $region41: #{transformer_forward.19} parent=11 // pred_check
        %p391 = pneg %p266
      $region42: #{transformer_forward.19} parent=11 // pred_check_branch
        %393 = sbr.rel (%p391) target = $region44
      $region43: #{transformer_forward.19} parent=11 // pred_region
        _
      $region44: #{transformer_forward.19} parent=11 // pred_fallthru
        _
      // Predicated region
      $region45: #{transformer_forward.19} parent=11 // pred_check
        %p394 = pneg %p287
      $region46: #{transformer_forward.19} parent=11 // pred_check_branch
        %396 = sbr.rel (%p394) target = $region48
      $region47: #{transformer_forward.19} parent=11 // pred_region
        _
      $region48: #{transformer_forward.19} parent=11 // pred_fallthru
        _
      // Predicated region
      $region49: #{transformer_forward.19} parent=11 // pred_check
        %p397 = pneg %p308
      $region50: #{transformer_forward.19} parent=11 // pred_check_branch
        %399 = sbr.rel (%p397) target = $region52
      $region51: #{transformer_forward.19} parent=11 // pred_region
        _
      $region52: #{transformer_forward.19} parent=11 // pred_fallthru
        _
      // Predicated region
      $region53: #{transformer_forward.19} parent=11 // pred_check
        %p400 = pneg %p329
      $region54: #{transformer_forward.19} parent=11 // pred_check_branch
        %402 = sbr.rel (%p400) target = $region56
      $region55: #{transformer_forward.19} parent=11 // pred_region
        _
      $region56: #{transformer_forward.19} parent=11 // pred_fallthru
        _
    $region12: #{transformer_forward.19} parent=5 // pred_fallthru
      _
    %p403 = scmp.lt.s32.totalorder %s20, 2
    // Predicated region
    $region57: #{transformer_forward.19} parent=5 // pred_check
      %p404 = pneg %p403
    $region58: #{transformer_forward.19} parent=5 // pred_check_branch
      %406 = sbr.rel (%p404) target = $region60
    $region59: #{transformer_forward.19} parent=5 // pred_region
      // Predicated region
      $region61: #{transformer_forward.19} parent=59 // pred_check
        %p407 = pneg %p40
      $region62: #{transformer_forward.19} parent=59 // pred_check_branch
        %409 = sbr.rel (%p407) target = $region64
      $region63: #{transformer_forward.19} parent=59 // pred_region
        %p410 = scmp.lt.s32.totalorder %s20, 1
        %s411 = scalar_select %p410, %s20, 1
        %s412 = smul.addr %s411, 4
        %s413 = scalar_lea.vmem %s0, %s412
      $region64: #{transformer_forward.19} parent=59 // pred_fallthru
        _
      // Predicated region
      $region65: #{transformer_forward.19} parent=59 // pred_check
        %p414 = pneg %p66
      $region66: #{transformer_forward.19} parent=59 // pred_check_branch
        %416 = sbr.rel (%p414) target = $region68
      $region67: #{transformer_forward.19} parent=59 // pred_region
        %p417 = scmp.lt.s32.totalorder %s20, 1
        %s418 = scalar_select %p417, %s20, 1
        %s419 = smul.addr %s418, 4
        %s420 = scalar_lea.vmem %s1, %s419
      $region68: #{transformer_forward.19} parent=59 // pred_fallthru
        _
      // Predicated region
      $region69: #{transformer_forward.19} parent=59 // pred_check
        %p421 = pneg %p113
      $region70: #{transformer_forward.19} parent=59 // pred_check_branch
        %423 = sbr.rel (%p421) target = $region72
      $region71: #{transformer_forward.19} parent=59 // pred_region
        %p424 = scmp.lt.s32.totalorder %s20, 1
        %s425 = scalar_select %p424, %s20, 1
        %s426 = scalar_lea.vmem %s3, %s425
      $region72: #{transformer_forward.19} parent=59 // pred_fallthru
        _
    $region60: #{transformer_forward.19} parent=5 // pred_fallthru
      _
    %p427 = scmp.le.s32.totalorder 1, %s20
    %p428 = scmp.lt.s32.totalorder %s20, 3
    %p429 = pnand %p427, %p428
    %p430 = pneg %p429
    // Predicated region
    $region73: #{transformer_forward.19} parent=5 // pred_check
      _
    $region74: #{transformer_forward.19} parent=5 // pred_check_branch
      %432 = sbr.rel (%p429) target = $region76
    $region75: #{transformer_forward.19} parent=5 // pred_region
      %s433 = ssub.s32 %s20, 1
      %p434 = scmp.lt.s32.totalorder %s25, 1
      %s435 = scalar_select %p434, %s25, 1
      %s436 = smul.addr %s435, 4
      %s437 = scalar_lea.vmem %s0, %s436
      %p438 = pneg %p46
      %p439 = pneg %p43
      %p440 = scmp.lt.s32.totalorder %s25, 1
      %s441 = scalar_select %p440, %s25, 1
      %s442 = smul.addr %s441, 4
      %s443 = scalar_lea.vmem %s1, %s442
      %p444 = pneg %p72
      %p445 = pneg %p69
      %p446 = pneg %p93
      %p447 = pneg %p90
      %p448 = scmp.lt.s32.totalorder %s25, 1
      %s449 = scalar_select %p448, %s25, 1
      %s450 = scalar_lea.vmem %s3, %s449
      %p451 = pneg %p119
      %p452 = pneg %p116
      %p453 = pneg %p140
      %p454 = pneg %p137
      %p455 = pneg %p161
      %p456 = pneg %p158
      %p457 = pneg %p182
      %p458 = pneg %p179
      %p459 = pneg %p203
      %p460 = pneg %p200
      %p461 = pneg %p224
      %p462 = pneg %p221
      %p463 = pneg %p245
      %p464 = pneg %p242
      %p465 = pneg %p266
      %p466 = pneg %p263
      %p467 = pneg %p287
      %p468 = pneg %p284
      %p469 = pneg %p308
      %p470 = pneg %p305
      %p471 = pneg %p329
      %p472 = pneg %p326
      %p473 = pneg %p355
      %p474 = pneg %p352
      %p475 = scmp.lt.s32.totalorder %s25, 1
      %s476 = scalar_select %p475, %s25, 1
      %s477 = smul.addr %s476, 4
      %s478 = scalar_lea.vmem %s14, %s477
      %p479 = scmp.lt.s32.totalorder %s25, 1
      %s480 = scalar_select %p479, %s25, 1
      %s481 = smul.addr %s480, 4
      %s482 = scalar_lea.vmem %s0, %s481
      %p483 = scmp.lt.s32.totalorder %s25, 1
      %s484 = scalar_select %p483, %s25, 1
      %s485 = smul.addr %s484, 4
      %s486 = scalar_lea.vmem %s1, %s485
      %p487 = scmp.lt.s32.totalorder %s25, 1
      %s488 = scalar_select %p487, %s25, 1
      %s489 = scalar_lea.vmem %s3, %s488
      %p490 = scmp.lt.s32.totalorder %s25, 1
      %s491 = scalar_select %p490, %s25, 1
      %s492 = smul.addr %s491, 4
      %s493 = scalar_lea.vmem %s14, %s492
      %v495 = vld [vmem:[%s482] sm:$0xf]
      %v496 = vld [vmem:[%s486] sm:$0xf]
      %v497 = vld [vmem:[%s2] sm:$0xff]
      %v498 = vld [vmem:[%s489] sm:$0x1]
      %v499 = vld [vmem:[%s4] sm:$0xf]
      %v500 = vld [vmem:[%s4 + $0x4] sm:$0xf]
      %v501 = vld [vmem:[%s4 + $0x8] sm:$0xf]
      %v502 = vld [vmem:[%s4 + $0xc] sm:$0xf]
      %v503 = vld [vmem:[%s4 + $0x10] sm:$0xf]
      %v504 = vld [vmem:[%s4 + $0x14] sm:$0xf]
      %v505 = vld [vmem:[%s4 + $0x18] sm:$0xf]
      %v506 = vld [vmem:[%s4 + $0x1c] sm:$0xf]
      %v507 = vld [vmem:[%s4 + $0x20] sm:$0xf]
      %v508 = vld [vmem:[%s4 + $0x24] sm:$0xf]
      %v509 = vld [vmem:[%s4 + $0x28] sm:$0xf]
      %v510 = vld [vmem:[%s4 + $0x2c] sm:$0xf]
      %v511 = vld [vmem:[%s4 + $0x30] sm:$0xf]
      %v512 = vld [vmem:[%s4 + $0x34] sm:$0xf]
      %v513 = vld [vmem:[%s4 + $0x38] sm:$0xf]
      %v514 = vld [vmem:[%s4 + $0x3c] sm:$0xf]
      %v515 = vld [vmem:[%s4 + $0x40] sm:$0xf]
      %v516 = vld [vmem:[%s4 + $0x44] sm:$0xf]
      %v517 = vld [vmem:[%s4 + $0x48] sm:$0xf]
      %v518 = vld [vmem:[%s4 + $0x4c] sm:$0xf]
      %v519 = vld [vmem:[%s4 + $0x50] sm:$0xf]
      %v520 = vld [vmem:[%s4 + $0x54] sm:$0xf]
      %v521 = vld [vmem:[%s4 + $0x58] sm:$0xf]
      %v522 = vld [vmem:[%s4 + $0x5c] sm:$0xf]
      %v523 = vld [vmem:[%s4 + $0x60] sm:$0xf]
      %v524 = vld [vmem:[%s4 + $0x64] sm:$0xf]
      %v525 = vld [vmem:[%s4 + $0x68] sm:$0xf]
      %v526 = vld [vmem:[%s4 + $0x6c] sm:$0xf]
      %v527 = vld [vmem:[%s4 + $0x70] sm:$0xf]
      %v528 = vld [vmem:[%s4 + $0x74] sm:$0xf]
      %v529 = vld [vmem:[%s4 + $0x78] sm:$0xf]
      %v530 = vld [vmem:[%s4 + $0x7c] sm:$0xf]
      %v531 = vld [vmem:[%s4 + $0x80] sm:$0xf]
      %v532 = vld [vmem:[%s4 + $0x84] sm:$0xf]
      %v533 = vld [vmem:[%s4 + $0x88] sm:$0xf]
      %v534 = vld [vmem:[%s4 + $0x8c] sm:$0xf]
      %v535 = vld [vmem:[%s4 + $0x90] sm:$0xf]
      %v536 = vld [vmem:[%s4 + $0x94] sm:$0xf]
      %v537 = vld [vmem:[%s4 + $0x98] sm:$0xf]
      %v538 = vld [vmem:[%s4 + $0x9c] sm:$0xf]
      %v539 = vld [vmem:[%s4 + $0xa0] sm:$0xf]
      %v540 = vld [vmem:[%s4 + $0xa4] sm:$0xf]
      %v541 = vld [vmem:[%s4 + $0xa8] sm:$0xf]
      %v542 = vld [vmem:[%s4 + $0xac] sm:$0xf]
      %v543 = vld [vmem:[%s4 + $0xb0] sm:$0xf]
      %v544 = vld [vmem:[%s4 + $0xb4] sm:$0xf]
      %v545 = vld [vmem:[%s4 + $0xb8] sm:$0xf]
      %v546 = vld [vmem:[%s4 + $0xbc] sm:$0xf]
      %v547 = vld [vmem:[%s4 + $0xc0] sm:$0xf]
      %v548 = vld [vmem:[%s4 + $0xc4] sm:$0xf]
      %v549 = vld [vmem:[%s4 + $0xc8] sm:$0xf]
      %v550 = vld [vmem:[%s4 + $0xcc] sm:$0xf]
      %v551 = vld [vmem:[%s4 + $0xd0] sm:$0xf]
      %v552 = vld [vmem:[%s4 + $0xd4] sm:$0xf]
      %v553 = vld [vmem:[%s4 + $0xd8] sm:$0xf]
      %v554 = vld [vmem:[%s4 + $0xdc] sm:$0xf]
      %v555 = vld [vmem:[%s4 + $0xe0] sm:$0xf]
      %v556 = vld [vmem:[%s4 + $0xe4] sm:$0xf]
      %v557 = vld [vmem:[%s4 + $0xe8] sm:$0xf]
      %v558 = vld [vmem:[%s4 + $0xec] sm:$0xf]
      %v559 = vld [vmem:[%s4 + $0xf0] sm:$0xf]
      %v560 = vld [vmem:[%s4 + $0xf4] sm:$0xf]
      %v561 = vld [vmem:[%s4 + $0xf8] sm:$0xf]
      %v562 = vld [vmem:[%s4 + $0xfc] sm:$0xf]
      %v563 = vld [vmem:[%s5] sm:$0x1]
      %v564 = vld [vmem:[%s5 + $0x1] sm:$0x1]
      %v565 = vld [vmem:[%s5 + $0x2] sm:$0x1]
      %v566 = vld [vmem:[%s5 + $0x3] sm:$0x1]
      %v571 = vlaneseq
      %v572 = vshrl.u32 %v571, 7
      %v573 = vsub.s32 0, %v572
      %v574 = vrot.slane %v563, %v573
      %v575 = vlaneseq
      %v576 = vshrl.u32 %v575, 7
      %v577 = vsub.s32 0, %v576
      %v578 = vrot.slane %v564, %v577
      %v579 = vlaneseq
      %v580 = vshrl.u32 %v579, 7
      %v581 = vsub.s32 0, %v580
      %v582 = vrot.slane %v565, %v581
      %v583 = vlaneseq
      %v584 = vshrl.u32 %v583, 7
      %v585 = vsub.s32 0, %v584
      %v586 = vrot.slane %v566, %v585
      %v607 = vunpack.c.l.b16 %v499
      %v608 = vunpack.c.l.b16 %v500
      %v609 = vunpack.c.l.b16 %v501
      %v610 = vunpack.c.l.b16 %v502
      %v611 = vunpack.c.l.b16 %v503
      %v612 = vunpack.c.l.b16 %v504
      %v613 = vunpack.c.l.b16 %v505
      %v614 = vunpack.c.l.b16 %v506
      %v615 = vunpack.c.l.b16 %v507
      %v616 = vunpack.c.l.b16 %v508
      %v617 = vunpack.c.l.b16 %v509
      %v618 = vunpack.c.l.b16 %v510
      %v619 = vunpack.c.l.b16 %v511
      %v620 = vunpack.c.l.b16 %v512
      %v621 = vunpack.c.l.b16 %v513
      %v622 = vunpack.c.l.b16 %v514
      %v623 = vpack.c.b16 %v608, %v607
      %v624 = vpack.c.b16 %v610, %v609
      %v625 = vpack.c.b16 %v612, %v611
      %v626 = vpack.c.b16 %v614, %v613
      %v627 = vpack.c.b16 %v616, %v615
      %v628 = vpack.c.b16 %v618, %v617
      %v629 = vpack.c.b16 %v620, %v619
      %v630 = vpack.c.b16 %v622, %v621
      %639 = vmatprep.subr.bf16.mxu0 0
      %640 = vmatpush1.bf16.msra.mxu0 %v623
      %641 = vmatprep.subr.bf16.mxu0 0
      %642 = vmatpush1.bf16.msra.mxu0 %v624
      %643 = vmatprep.subr.bf16.mxu0 0
      %644 = vmatpush1.bf16.msra.mxu0 %v625
      %645 = vmatprep.subr.bf16.mxu0 0
      %646 = vmatpush1.bf16.msra.mxu0 %v626
      %647 = vmatprep.subr.bf16.mxu0 0
      %648 = vmatpush1.bf16.msra.mxu0 %v627
      %649 = vmatprep.subr.bf16.mxu0 0
      %650 = vmatpush1.bf16.msra.mxu0 %v628
      %651 = vmatprep.subr.bf16.mxu0 0
      %652 = vmatpush1.bf16.msra.mxu0 %v629
      %653 = vmatprep.subr.bf16.mxu0 0
      %654 = vmatpush1.bf16.msra.mxu0 %v630
      %655 = vmatprep.subr.bf16.mxu0 0
      %656 = vmatpush1.bf16.msra.mxu0 0
      %657 = vmatprep.subr.bf16.mxu0 0
      %658 = vmatpush1.bf16.msra.mxu0 0
      %659 = vmatprep.subr.bf16.mxu0 0
      %660 = vmatpush1.bf16.msra.mxu0 0
      %661 = vmatprep.subr.bf16.mxu0 0
      %662 = vmatpush1.bf16.msra.mxu0 0
      %663 = vmatprep.subr.bf16.mxu0 0
      %664 = vmatpush1.bf16.msra.mxu0 0
      %665 = vmatprep.subr.bf16.mxu0 0
      %666 = vmatpush1.bf16.msra.mxu0 0
      %667 = vmatprep.subr.bf16.mxu0 0
      %668 = vmatpush1.bf16.msra.mxu0 0
      %669 = vmatprep.subr.bf16.mxu0 0
      %670 = vmatpush1.bf16.msra.mxu0 0
      %671 = vmatprep.mubr.bf16.mxu0 0
      %672 = vmatmul.mubr.bf16.gmra.mrb[0].mxu0 %v495
      %v673 = vpop.f32.mrb[0].mxu0
      %v674 = vadd.f32 %v574, %v673
      %v675 = vpop.f32.mrb[0].mxu0
      %v676 = vpop.f32.mrb[0].mxu0
      %v677 = vpop.f32.mrb[0].mxu0
      %678 = vdwg.mxu0
      %v695 = vunpack.c.l.b16 %v515
      %v696 = vunpack.c.l.b16 %v516
      %v697 = vunpack.c.l.b16 %v517
      %v698 = vunpack.c.l.b16 %v518
      %v699 = vunpack.c.l.b16 %v519
      %v700 = vunpack.c.l.b16 %v520
      %v701 = vunpack.c.l.b16 %v521
      %v702 = vunpack.c.l.b16 %v522
      %v703 = vunpack.c.l.b16 %v523
      %v704 = vunpack.c.l.b16 %v524
      %v705 = vunpack.c.l.b16 %v525
      %v706 = vunpack.c.l.b16 %v526
      %v707 = vunpack.c.l.b16 %v527
      %v708 = vunpack.c.l.b16 %v528
      %v709 = vunpack.c.l.b16 %v529
      %v710 = vunpack.c.l.b16 %v530
      %v711 = vpack.c.b16 %v696, %v695
      %v712 = vpack.c.b16 %v698, %v697
      %v713 = vpack.c.b16 %v700, %v699
      %v714 = vpack.c.b16 %v702, %v701
      %v715 = vpack.c.b16 %v704, %v703
      %v716 = vpack.c.b16 %v706, %v705
      %v717 = vpack.c.b16 %v708, %v707
      %v718 = vpack.c.b16 %v710, %v709
      %727 = vmatprep.subr.bf16.mxu0 0
      %728 = vmatpush1.bf16.msra.mxu0 %v711
      %729 = vmatprep.subr.bf16.mxu0 0
      %730 = vmatpush1.bf16.msra.mxu0 %v712
      %731 = vmatprep.subr.bf16.mxu0 0
      %732 = vmatpush1.bf16.msra.mxu0 %v713
      %733 = vmatprep.subr.bf16.mxu0 0
      %734 = vmatpush1.bf16.msra.mxu0 %v714
      %735 = vmatprep.subr.bf16.mxu0 0
      %736 = vmatpush1.bf16.msra.mxu0 %v715
      %737 = vmatprep.subr.bf16.mxu0 0
      %738 = vmatpush1.bf16.msra.mxu0 %v716
      %739 = vmatprep.subr.bf16.mxu0 0
      %740 = vmatpush1.bf16.msra.mxu0 %v717
      %741 = vmatprep.subr.bf16.mxu0 0
      %742 = vmatpush1.bf16.msra.mxu0 %v718
      %743 = vmatprep.subr.bf16.mxu0 0
      %744 = vmatpush1.bf16.msra.mxu0 0
      %745 = vmatprep.subr.bf16.mxu0 0
      %746 = vmatpush1.bf16.msra.mxu0 0
      %747 = vmatprep.subr.bf16.mxu0 0
      %748 = vmatpush1.bf16.msra.mxu0 0
      %749 = vmatprep.subr.bf16.mxu0 0
      %750 = vmatpush1.bf16.msra.mxu0 0
      %751 = vmatprep.subr.bf16.mxu0 0
      %752 = vmatpush1.bf16.msra.mxu0 0
      %753 = vmatprep.subr.bf16.mxu0 0
      %754 = vmatpush1.bf16.msra.mxu0 0
      %755 = vmatprep.subr.bf16.mxu0 0
      %756 = vmatpush1.bf16.msra.mxu0 0
      %757 = vmatprep.subr.bf16.mxu0 0
      %758 = vmatpush1.bf16.msra.mxu0 0
      %759 = vmatprep.mubr.bf16.mxu0 0
      %760 = vmatmul.mubr.bf16.gmra.mrb[0].mxu0 %v495
      %v761 = vpop.f32.mrb[0].mxu0
      %v762 = vadd.f32 %v578, %v761
      %v763 = vpop.f32.mrb[0].mxu0
      %v764 = vpop.f32.mrb[0].mxu0
      %v765 = vpop.f32.mrb[0].mxu0
      %766 = vdwg.mxu0
      %v783 = vunpack.c.l.b16 %v531
      %v784 = vunpack.c.l.b16 %v532
      %v785 = vunpack.c.l.b16 %v533
      %v786 = vunpack.c.l.b16 %v534
      %v787 = vunpack.c.l.b16 %v535
      %v788 = vunpack.c.l.b16 %v536
      %v789 = vunpack.c.l.b16 %v537
      %v790 = vunpack.c.l.b16 %v538
      %v791 = vunpack.c.l.b16 %v539
      %v792 = vunpack.c.l.b16 %v540
      %v793 = vunpack.c.l.b16 %v541
      %v794 = vunpack.c.l.b16 %v542
      %v795 = vunpack.c.l.b16 %v543
      %v796 = vunpack.c.l.b16 %v544
      %v797 = vunpack.c.l.b16 %v545
      %v798 = vunpack.c.l.b16 %v546
      %v799 = vpack.c.b16 %v784, %v783
      %v800 = vpack.c.b16 %v786, %v785
      %v801 = vpack.c.b16 %v788, %v787
      %v802 = vpack.c.b16 %v790, %v789
      %v803 = vpack.c.b16 %v792, %v791
      %v804 = vpack.c.b16 %v794, %v793
      %v805 = vpack.c.b16 %v796, %v795
      %v806 = vpack.c.b16 %v798, %v797
      %815 = vmatprep.subr.bf16.mxu0 0
      %816 = vmatpush1.bf16.msra.mxu0 %v799
      %817 = vmatprep.subr.bf16.mxu0 0
      %818 = vmatpush1.bf16.msra.mxu0 %v800
      %819 = vmatprep.subr.bf16.mxu0 0
      %820 = vmatpush1.bf16.msra.mxu0 %v801
      %821 = vmatprep.subr.bf16.mxu0 0
      %822 = vmatpush1.bf16.msra.mxu0 %v802
      %823 = vmatprep.subr.bf16.mxu0 0
      %824 = vmatpush1.bf16.msra.mxu0 %v803
      %825 = vmatprep.subr.bf16.mxu0 0
      %826 = vmatpush1.bf16.msra.mxu0 %v804
      %827 = vmatprep.subr.bf16.mxu0 0
      %828 = vmatpush1.bf16.msra.mxu0 %v805
      %829 = vmatprep.subr.bf16.mxu0 0
      %830 = vmatpush1.bf16.msra.mxu0 %v806
      %831 = vmatprep.subr.bf16.mxu0 0
      %832 = vmatpush1.bf16.msra.mxu0 0
      %833 = vmatprep.subr.bf16.mxu0 0
      %834 = vmatpush1.bf16.msra.mxu0 0
      %835 = vmatprep.subr.bf16.mxu0 0
      %836 = vmatpush1.bf16.msra.mxu0 0
      %837 = vmatprep.subr.bf16.mxu0 0
      %838 = vmatpush1.bf16.msra.mxu0 0
      %839 = vmatprep.subr.bf16.mxu0 0
      %840 = vmatpush1.bf16.msra.mxu0 0
      %841 = vmatprep.subr.bf16.mxu0 0
      %842 = vmatpush1.bf16.msra.mxu0 0
      %843 = vmatprep.subr.bf16.mxu0 0
      %844 = vmatpush1.bf16.msra.mxu0 0
      %845 = vmatprep.subr.bf16.mxu0 0
      %846 = vmatpush1.bf16.msra.mxu0 0
      %847 = vmatprep.mubr.bf16.mxu0 0
      %848 = vmatmul.mubr.bf16.gmra.mrb[0].mxu0 %v495
      %v849 = vpop.f32.mrb[0].mxu0
      %v850 = vadd.f32 %v582, %v849
      %v851 = vpop.f32.mrb[0].mxu0
      %v852 = vpop.f32.mrb[0].mxu0
      %v853 = vpop.f32.mrb[0].mxu0
      %854 = vdwg.mxu0
      %v871 = vunpack.c.l.b16 %v547
      %v872 = vunpack.c.l.b16 %v548
      %v873 = vunpack.c.l.b16 %v549
      %v874 = vunpack.c.l.b16 %v550
      %v875 = vunpack.c.l.b16 %v551
      %v876 = vunpack.c.l.b16 %v552
      %v877 = vunpack.c.l.b16 %v553
      %v878 = vunpack.c.l.b16 %v554
      %v879 = vunpack.c.l.b16 %v555
      %v880 = vunpack.c.l.b16 %v556
      %v881 = vunpack.c.l.b16 %v557
      %v882 = vunpack.c.l.b16 %v558
      %v883 = vunpack.c.l.b16 %v559
      %v884 = vunpack.c.l.b16 %v560
      %v885 = vunpack.c.l.b16 %v561
      %v886 = vunpack.c.l.b16 %v562
      %v887 = vpack.c.b16 %v872, %v871
      %v888 = vpack.c.b16 %v874, %v873
      %v889 = vpack.c.b16 %v876, %v875
      %v890 = vpack.c.b16 %v878, %v877
      %v891 = vpack.c.b16 %v880, %v879
      %v892 = vpack.c.b16 %v882, %v881
      %v893 = vpack.c.b16 %v884, %v883
      %v894 = vpack.c.b16 %v886, %v885
      %903 = vmatprep.subr.bf16.mxu0 0
      %904 = vmatpush1.bf16.msra.mxu0 %v887
      %905 = vmatprep.subr.bf16.mxu0 0
      %906 = vmatpush1.bf16.msra.mxu0 %v888
      %907 = vmatprep.subr.bf16.mxu0 0
      %908 = vmatpush1.bf16.msra.mxu0 %v889
      %909 = vmatprep.subr.bf16.mxu0 0
      %910 = vmatpush1.bf16.msra.mxu0 %v890
      %911 = vmatprep.subr.bf16.mxu0 0
      %912 = vmatpush1.bf16.msra.mxu0 %v891
      %913 = vmatprep.subr.bf16.mxu0 0
      %914 = vmatpush1.bf16.msra.mxu0 %v892
      %915 = vmatprep.subr.bf16.mxu0 0
      %916 = vmatpush1.bf16.msra.mxu0 %v893
      %917 = vmatprep.subr.bf16.mxu0 0
      %918 = vmatpush1.bf16.msra.mxu0 %v894
      %919 = vmatprep.subr.bf16.mxu0 0
      %920 = vmatpush1.bf16.msra.mxu0 0
      %921 = vmatprep.subr.bf16.mxu0 0
      %922 = vmatpush1.bf16.msra.mxu0 0
      %923 = vmatprep.subr.bf16.mxu0 0
      %924 = vmatpush1.bf16.msra.mxu0 0
      %925 = vmatprep.subr.bf16.mxu0 0
      %926 = vmatpush1.bf16.msra.mxu0 0
      %927 = vmatprep.subr.bf16.mxu0 0
      %928 = vmatpush1.bf16.msra.mxu0 0
      %929 = vmatprep.subr.bf16.mxu0 0
      %930 = vmatpush1.bf16.msra.mxu0 0
      %931 = vmatprep.subr.bf16.mxu0 0
      %932 = vmatpush1.bf16.msra.mxu0 0
      %933 = vmatprep.subr.bf16.mxu0 0
      %934 = vmatpush1.bf16.msra.mxu0 0
      %935 = vmatprep.mubr.bf16.mxu0 0
      %936 = vmatmul.mubr.bf16.gmra.mrb[0].mxu0 %v495
      %v937 = vpop.f32.mrb[0].mxu0
      %v938 = vadd.f32 %v586, %v937
      %v939 = vpop.f32.mrb[0].mxu0
      %v940 = vpop.f32.mrb[0].mxu0
      %v941 = vpop.f32.mrb[0].mxu0
      %942 = vdwg.mxu0
      %v943 = vmul.f32 %v674, 0.17677669
      %v944 = vmul.f32 %v762, 0.17677669
      %v945 = vmul.f32 %v850, 0.17677669
      %v946 = vmul.f32 %v938, 0.17677669
      %v947 = vld [vmem:[%s6] sm:$0xf]
      %v948 = vld [vmem:[%s6 + $0x4] sm:$0xf]
      %v949 = vld [vmem:[%s6 + $0x8] sm:$0xf]
      %v950 = vld [vmem:[%s6 + $0xc] sm:$0xf]
      %v951 = vld [vmem:[%s6 + $0x10] sm:$0xf]
      %v952 = vld [vmem:[%s6 + $0x14] sm:$0xf]
      %v953 = vld [vmem:[%s6 + $0x18] sm:$0xf]
      %v954 = vld [vmem:[%s6 + $0x1c] sm:$0xf]
      %v955 = vld [vmem:[%s6 + $0x20] sm:$0xf]
      %v956 = vld [vmem:[%s6 + $0x24] sm:$0xf]
      %v957 = vld [vmem:[%s6 + $0x28] sm:$0xf]
      %v958 = vld [vmem:[%s6 + $0x2c] sm:$0xf]
      %v959 = vld [vmem:[%s6 + $0x30] sm:$0xf]
      %v960 = vld [vmem:[%s6 + $0x34] sm:$0xf]
      %v961 = vld [vmem:[%s6 + $0x38] sm:$0xf]
      %v962 = vld [vmem:[%s6 + $0x3c] sm:$0xf]
      %v963 = vld [vmem:[%s6 + $0x40] sm:$0xf]
      %v964 = vld [vmem:[%s6 + $0x44] sm:$0xf]
      %v965 = vld [vmem:[%s6 + $0x48] sm:$0xf]
      %v966 = vld [vmem:[%s6 + $0x4c] sm:$0xf]
      %v967 = vld [vmem:[%s6 + $0x50] sm:$0xf]
      %v968 = vld [vmem:[%s6 + $0x54] sm:$0xf]
      %v969 = vld [vmem:[%s6 + $0x58] sm:$0xf]
      %v970 = vld [vmem:[%s6 + $0x5c] sm:$0xf]
      %v971 = vld [vmem:[%s6 + $0x60] sm:$0xf]
      %v972 = vld [vmem:[%s6 + $0x64] sm:$0xf]
      %v973 = vld [vmem:[%s6 + $0x68] sm:$0xf]
      %v974 = vld [vmem:[%s6 + $0x6c] sm:$0xf]
      %v975 = vld [vmem:[%s6 + $0x70] sm:$0xf]
      %v976 = vld [vmem:[%s6 + $0x74] sm:$0xf]
      %v977 = vld [vmem:[%s6 + $0x78] sm:$0xf]
      %v978 = vld [vmem:[%s6 + $0x7c] sm:$0xf]
      %v979 = vld [vmem:[%s6 + $0x80] sm:$0xf]
      %v980 = vld [vmem:[%s6 + $0x84] sm:$0xf]
      %v981 = vld [vmem:[%s6 + $0x88] sm:$0xf]
      %v982 = vld [vmem:[%s6 + $0x8c] sm:$0xf]
      %v983 = vld [vmem:[%s6 + $0x90] sm:$0xf]
      %v984 = vld [vmem:[%s6 + $0x94] sm:$0xf]
      %v985 = vld [vmem:[%s6 + $0x98] sm:$0xf]
      %v986 = vld [vmem:[%s6 + $0x9c] sm:$0xf]
      %v987 = vld [vmem:[%s6 + $0xa0] sm:$0xf]
      %v988 = vld [vmem:[%s6 + $0xa4] sm:$0xf]
      %v989 = vld [vmem:[%s6 + $0xa8] sm:$0xf]
      %v990 = vld [vmem:[%s6 + $0xac] sm:$0xf]
      %v991 = vld [vmem:[%s6 + $0xb0] sm:$0xf]
      %v992 = vld [vmem:[%s6 + $0xb4] sm:$0xf]
      %v993 = vld [vmem:[%s6 + $0xb8] sm:$0xf]
      %v994 = vld [vmem:[%s6 + $0xbc] sm:$0xf]
      %v995 = vld [vmem:[%s6 + $0xc0] sm:$0xf]
      %v996 = vld [vmem:[%s6 + $0xc4] sm:$0xf]
      %v997 = vld [vmem:[%s6 + $0xc8] sm:$0xf]
      %v998 = vld [vmem:[%s6 + $0xcc] sm:$0xf]
      %v999 = vld [vmem:[%s6 + $0xd0] sm:$0xf]
      %v1000 = vld [vmem:[%s6 + $0xd4] sm:$0xf]
      %v1001 = vld [vmem:[%s6 + $0xd8] sm:$0xf]
      %v1002 = vld [vmem:[%s6 + $0xdc] sm:$0xf]
      %v1003 = vld [vmem:[%s6 + $0xe0] sm:$0xf]
      %v1004 = vld [vmem:[%s6 + $0xe4] sm:$0xf]
      %v1005 = vld [vmem:[%s6 + $0xe8] sm:$0xf]
      %v1006 = vld [vmem:[%s6 + $0xec] sm:$0xf]
      %v1007 = vld [vmem:[%s6 + $0xf0] sm:$0xf]
      %v1008 = vld [vmem:[%s6 + $0xf4] sm:$0xf]
      %v1009 = vld [vmem:[%s6 + $0xf8] sm:$0xf]
      %v1010 = vld [vmem:[%s6 + $0xfc] sm:$0xf]
      %v1011 = vld [vmem:[%s7] sm:$0x1]
      %v1012 = vld [vmem:[%s7 + $0x1] sm:$0x1]
      %v1013 = vld [vmem:[%s7 + $0x2] sm:$0x1]
      %v1014 = vld [vmem:[%s7 + $0x3] sm:$0x1]
      %v1019 = vlaneseq
      %v1020 = vshrl.u32 %v1019, 7
      %v1021 = vsub.s32 0, %v1020
      %v1022 = vrot.slane %v1011, %v1021
      %v1023 = vlaneseq
      %v1024 = vshrl.u32 %v1023, 7
      %v1025 = vsub.s32 0, %v1024
      %v1026 = vrot.slane %v1012, %v1025
      %v1027 = vlaneseq
      %v1028 = vshrl.u32 %v1027, 7
      %v1029 = vsub.s32 0, %v1028
      %v1030 = vrot.slane %v1013, %v1029
      %v1031 = vlaneseq
      %v1032 = vshrl.u32 %v1031, 7
      %v1033 = vsub.s32 0, %v1032
      %v1034 = vrot.slane %v1014, %v1033
      %v1055 = vunpack.c.l.b16 %v947
      %v1056 = vunpack.c.l.b16 %v948
      %v1057 = vunpack.c.l.b16 %v949
      %v1058 = vunpack.c.l.b16 %v950
      %v1059 = vunpack.c.l.b16 %v951
      %v1060 = vunpack.c.l.b16 %v952
      %v1061 = vunpack.c.l.b16 %v953
      %v1062 = vunpack.c.l.b16 %v954
      %v1063 = vunpack.c.l.b16 %v955
      %v1064 = vunpack.c.l.b16 %v956
      %v1065 = vunpack.c.l.b16 %v957
      %v1066 = vunpack.c.l.b16 %v958
      %v1067 = vunpack.c.l.b16 %v959
      %v1068 = vunpack.c.l.b16 %v960
      %v1069 = vunpack.c.l.b16 %v961
      %v1070 = vunpack.c.l.b16 %v962
      %v1071 = vpack.c.b16 %v1056, %v1055
      %v1072 = vpack.c.b16 %v1058, %v1057
      %v1073 = vpack.c.b16 %v1060, %v1059
      %v1074 = vpack.c.b16 %v1062, %v1061
      %v1075 = vpack.c.b16 %v1064, %v1063
      %v1076 = vpack.c.b16 %v1066, %v1065
      %v1077 = vpack.c.b16 %v1068, %v1067
      %v1078 = vpack.c.b16 %v1070, %v1069
      %1087 = vmatprep.subr.bf16.mxu0 0
      %1088 = vmatpush1.bf16.msra.mxu0 %v1071
      %1089 = vmatprep.subr.bf16.mxu0 0
      %1090 = vmatpush1.bf16.msra.mxu0 %v1072
      %1091 = vmatprep.subr.bf16.mxu0 0
      %1092 = vmatpush1.bf16.msra.mxu0 %v1073
      %1093 = vmatprep.subr.bf16.mxu0 0
      %1094 = vmatpush1.bf16.msra.mxu0 %v1074
      %1095 = vmatprep.subr.bf16.mxu0 0
      %1096 = vmatpush1.bf16.msra.mxu0 %v1075
      %1097 = vmatprep.subr.bf16.mxu0 0
      %1098 = vmatpush1.bf16.msra.mxu0 %v1076
      %1099 = vmatprep.subr.bf16.mxu0 0
      %1100 = vmatpush1.bf16.msra.mxu0 %v1077
      %1101 = vmatprep.subr.bf16.mxu0 0
      %1102 = vmatpush1.bf16.msra.mxu0 %v1078
      %1103 = vmatprep.subr.bf16.mxu0 0
      %1104 = vmatpush1.bf16.msra.mxu0 0
      %1105 = vmatprep.subr.bf16.mxu0 0
      %1106 = vmatpush1.bf16.msra.mxu0 0
      %1107 = vmatprep.subr.bf16.mxu0 0
      %1108 = vmatpush1.bf16.msra.mxu0 0
      %1109 = vmatprep.subr.bf16.mxu0 0
      %1110 = vmatpush1.bf16.msra.mxu0 0
      %1111 = vmatprep.subr.bf16.mxu0 0
      %1112 = vmatpush1.bf16.msra.mxu0 0
      %1113 = vmatprep.subr.bf16.mxu0 0
      %1114 = vmatpush1.bf16.msra.mxu0 0
      %1115 = vmatprep.subr.bf16.mxu0 0
      %1116 = vmatpush1.bf16.msra.mxu0 0
      %1117 = vmatprep.subr.bf16.mxu0 0
      %1118 = vmatpush1.bf16.msra.mxu0 0
      %1119 = vmatprep.mubr.bf16.mxu0 0
      %1120 = vmatmul.mubr.bf16.gmra.mrb[0].mxu0 %v496
      %v1121 = vpop.f32.mrb[0].mxu0
      %v1122 = vadd.f32 %v1022, %v1121
      %v1123 = vpop.f32.mrb[0].mxu0
      %v1124 = vpop.f32.mrb[0].mxu0
      %v1125 = vpop.f32.mrb[0].mxu0
      %1126 = vdwg.mxu0
      %v1143 = vunpack.c.l.b16 %v963
      %v1144 = vunpack.c.l.b16 %v964
      %v1145 = vunpack.c.l.b16 %v965
      %v1146 = vunpack.c.l.b16 %v966
      %v1147 = vunpack.c.l.b16 %v967
      %v1148 = vunpack.c.l.b16 %v968
      %v1149 = vunpack.c.l.b16 %v969
      %v1150 = vunpack.c.l.b16 %v970
      %v1151 = vunpack.c.l.b16 %v971
      %v1152 = vunpack.c.l.b16 %v972
      %v1153 = vunpack.c.l.b16 %v973
      %v1154 = vunpack.c.l.b16 %v974
      %v1155 = vunpack.c.l.b16 %v975
      %v1156 = vunpack.c.l.b16 %v976
      %v1157 = vunpack.c.l.b16 %v977
      %v1158 = vunpack.c.l.b16 %v978
      %v1159 = vpack.c.b16 %v1144, %v1143
      %v1160 = vpack.c.b16 %v1146, %v1145
      %v1161 = vpack.c.b16 %v1148, %v1147
      %v1162 = vpack.c.b16 %v1150, %v1149
      %v1163 = vpack.c.b16 %v1152, %v1151
      %v1164 = vpack.c.b16 %v1154, %v1153
      %v1165 = vpack.c.b16 %v1156, %v1155
      %v1166 = vpack.c.b16 %v1158, %v1157
      %1175 = vmatprep.subr.bf16.mxu0 0
      %1176 = vmatpush1.bf16.msra.mxu0 %v1159
      %1177 = vmatprep.subr.bf16.mxu0 0
      %1178 = vmatpush1.bf16.msra.mxu0 %v1160
      %1179 = vmatprep.subr.bf16.mxu0 0
      %1180 = vmatpush1.bf16.msra.mxu0 %v1161
      %1181 = vmatprep.subr.bf16.mxu0 0
      %1182 = vmatpush1.bf16.msra.mxu0 %v1162
      %1183 = vmatprep.subr.bf16.mxu0 0
      %1184 = vmatpush1.bf16.msra.mxu0 %v1163
      %1185 = vmatprep.subr.bf16.mxu0 0
      %1186 = vmatpush1.bf16.msra.mxu0 %v1164
      %1187 = vmatprep.subr.bf16.mxu0 0
      %1188 = vmatpush1.bf16.msra.mxu0 %v1165
      %1189 = vmatprep.subr.bf16.mxu0 0
      %1190 = vmatpush1.bf16.msra.mxu0 %v1166
      %1191 = vmatprep.subr.bf16.mxu0 0
      %1192 = vmatpush1.bf16.msra.mxu0 0
      %1193 = vmatprep.subr.bf16.mxu0 0
      %1194 = vmatpush1.bf16.msra.mxu0 0
      %1195 = vmatprep.subr.bf16.mxu0 0
      %1196 = vmatpush1.bf16.msra.mxu0 0
      %1197 = vmatprep.subr.bf16.mxu0 0
      %1198 = vmatpush1.bf16.msra.mxu0 0
      %1199 = vmatprep.subr.bf16.mxu0 0
      %1200 = vmatpush1.bf16.msra.mxu0 0
      %1201 = vmatprep.subr.bf16.mxu0 0
      %1202 = vmatpush1.bf16.msra.mxu0 0
      %1203 = vmatprep.subr.bf16.mxu0 0
      %1204 = vmatpush1.bf16.msra.mxu0 0
      %1205 = vmatprep.subr.bf16.mxu0 0
      %1206 = vmatpush1.bf16.msra.mxu0 0
      %1207 = vmatprep.mubr.bf16.mxu0 0
      %1208 = vmatmul.mubr.bf16.gmra.mrb[0].mxu0 %v496
      %v1209 = vpop.f32.mrb[0].mxu0
      %v1210 = vadd.f32 %v1026, %v1209
      %v1211 = vpop.f32.mrb[0].mxu0
      %v1212 = vpop.f32.mrb[0].mxu0
      %v1213 = vpop.f32.mrb[0].mxu0
      %1214 = vdwg.mxu0
      %v1231 = vunpack.c.l.b16 %v979
      %v1232 = vunpack.c.l.b16 %v980
      %v1233 = vunpack.c.l.b16 %v981
      %v1234 = vunpack.c.l.b16 %v982
      %v1235 = vunpack.c.l.b16 %v983
      %v1236 = vunpack.c.l.b16 %v984
      %v1237 = vunpack.c.l.b16 %v985
      %v1238 = vunpack.c.l.b16 %v986
      %v1239 = vunpack.c.l.b16 %v987
      %v1240 = vunpack.c.l.b16 %v988
      %v1241 = vunpack.c.l.b16 %v989
      %v1242 = vunpack.c.l.b16 %v990
      %v1243 = vunpack.c.l.b16 %v991
      %v1244 = vunpack.c.l.b16 %v992
      %v1245 = vunpack.c.l.b16 %v993
      %v1246 = vunpack.c.l.b16 %v994
      %v1247 = vpack.c.b16 %v1232, %v1231
      %v1248 = vpack.c.b16 %v1234, %v1233
      %v1249 = vpack.c.b16 %v1236, %v1235
      %v1250 = vpack.c.b16 %v1238, %v1237
      %v1251 = vpack.c.b16 %v1240, %v1239
      %v1252 = vpack.c.b16 %v1242, %v1241
      %v1253 = vpack.c.b16 %v1244, %v1243
      %v1254 = vpack.c.b16 %v1246, %v1245
      %1263 = vmatprep.subr.bf16.mxu0 0
      %1264 = vmatpush1.bf16.msra.mxu0 %v1247
      %1265 = vmatprep.subr.bf16.mxu0 0
      %1266 = vmatpush1.bf16.msra.mxu0 %v1248
      %1267 = vmatprep.subr.bf16.mxu0 0
      %1268 = vmatpush1.bf16.msra.mxu0 %v1249
      %1269 = vmatprep.subr.bf16.mxu0 0
      %1270 = vmatpush1.bf16.msra.mxu0 %v1250
      %1271 = vmatprep.subr.bf16.mxu0 0
      %1272 = vmatpush1.bf16.msra.mxu0 %v1251
      %1273 = vmatprep.subr.bf16.mxu0 0
      %1274 = vmatpush1.bf16.msra.mxu0 %v1252
      %1275 = vmatprep.subr.bf16.mxu0 0
      %1276 = vmatpush1.bf16.msra.mxu0 %v1253
      %1277 = vmatprep.subr.bf16.mxu0 0
      %1278 = vmatpush1.bf16.msra.mxu0 %v1254
      %1279 = vmatprep.subr.bf16.mxu0 0
      %1280 = vmatpush1.bf16.msra.mxu0 0
      %1281 = vmatprep.subr.bf16.mxu0 0
      %1282 = vmatpush1.bf16.msra.mxu0 0
      %1283 = vmatprep.subr.bf16.mxu0 0
      %1284 = vmatpush1.bf16.msra.mxu0 0
      %1285 = vmatprep.subr.bf16.mxu0 0
      %1286 = vmatpush1.bf16.msra.mxu0 0
      %1287 = vmatprep.subr.bf16.mxu0 0
      %1288 = vmatpush1.bf16.msra.mxu0 0
      %1289 = vmatprep.subr.bf16.mxu0 0
      %1290 = vmatpush1.bf16.msra.mxu0 0
      %1291 = vmatprep.subr.bf16.mxu0 0
      %1292 = vmatpush1.bf16.msra.mxu0 0
      %1293 = vmatprep.subr.bf16.mxu0 0
      %1294 = vmatpush1.bf16.msra.mxu0 0
      %1295 = vmatprep.mubr.bf16.mxu0 0
      %1296 = vmatmul.mubr.bf16.gmra.mrb[0].mxu0 %v496
      %v1297 = vpop.f32.mrb[0].mxu0
      %v1298 = vadd.f32 %v1030, %v1297
      %v1299 = vpop.f32.mrb[0].mxu0
      %v1300 = vpop.f32.mrb[0].mxu0
      %v1301 = vpop.f32.mrb[0].mxu0
      %1302 = vdwg.mxu0
      %v1319 = vunpack.c.l.b16 %v995
      %v1320 = vunpack.c.l.b16 %v996
      %v1321 = vunpack.c.l.b16 %v997
      %v1322 = vunpack.c.l.b16 %v998
      %v1323 = vunpack.c.l.b16 %v999
      %v1324 = vunpack.c.l.b16 %v1000
      %v1325 = vunpack.c.l.b16 %v1001
      %v1326 = vunpack.c.l.b16 %v1002
      %v1327 = vunpack.c.l.b16 %v1003
      %v1328 = vunpack.c.l.b16 %v1004
      %v1329 = vunpack.c.l.b16 %v1005
      %v1330 = vunpack.c.l.b16 %v1006
      %v1331 = vunpack.c.l.b16 %v1007
      %v1332 = vunpack.c.l.b16 %v1008
      %v1333 = vunpack.c.l.b16 %v1009
      %v1334 = vunpack.c.l.b16 %v1010
      %v1335 = vpack.c.b16 %v1320, %v1319
      %v1336 = vpack.c.b16 %v1322, %v1321
      %v1337 = vpack.c.b16 %v1324, %v1323
      %v1338 = vpack.c.b16 %v1326, %v1325
      %v1339 = vpack.c.b16 %v1328, %v1327
      %v1340 = vpack.c.b16 %v1330, %v1329
      %v1341 = vpack.c.b16 %v1332, %v1331
      %v1342 = vpack.c.b16 %v1334, %v1333
      %1351 = vmatprep.subr.bf16.mxu0 0
      %1352 = vmatpush1.bf16.msra.mxu0 %v1335
      %1353 = vmatprep.subr.bf16.mxu0 0
      %1354 = vmatpush1.bf16.msra.mxu0 %v1336
      %1355 = vmatprep.subr.bf16.mxu0 0
      %1356 = vmatpush1.bf16.msra.mxu0 %v1337
      %1357 = vmatprep.subr.bf16.mxu0 0
      %1358 = vmatpush1.bf16.msra.mxu0 %v1338
      %1359 = vmatprep.subr.bf16.mxu0 0
      %1360 = vmatpush1.bf16.msra.mxu0 %v1339
      %1361 = vmatprep.subr.bf16.mxu0 0
      %1362 = vmatpush1.bf16.msra.mxu0 %v1340
      %1363 = vmatprep.subr.bf16.mxu0 0
      %1364 = vmatpush1.bf16.msra.mxu0 %v1341
      %1365 = vmatprep.subr.bf16.mxu0 0
      %1366 = vmatpush1.bf16.msra.mxu0 %v1342
      %1367 = vmatprep.subr.bf16.mxu0 0
      %1368 = vmatpush1.bf16.msra.mxu0 0
      %1369 = vmatprep.subr.bf16.mxu0 0
      %1370 = vmatpush1.bf16.msra.mxu0 0
      %1371 = vmatprep.subr.bf16.mxu0 0
      %1372 = vmatpush1.bf16.msra.mxu0 0
      %1373 = vmatprep.subr.bf16.mxu0 0
      %1374 = vmatpush1.bf16.msra.mxu0 0
      %1375 = vmatprep.subr.bf16.mxu0 0
      %1376 = vmatpush1.bf16.msra.mxu0 0
      %1377 = vmatprep.subr.bf16.mxu0 0
      %1378 = vmatpush1.bf16.msra.mxu0 0
      %1379 = vmatprep.subr.bf16.mxu0 0
      %1380 = vmatpush1.bf16.msra.mxu0 0
      %1381 = vmatprep.subr.bf16.mxu0 0
      %1382 = vmatpush1.bf16.msra.mxu0 0
      %1383 = vmatprep.mubr.bf16.mxu0 0
      %1384 = vmatmul.mubr.bf16.gmra.mrb[0].mxu0 %v496
      %v1385 = vpop.f32.mrb[0].mxu0
      %v1386 = vadd.f32 %v1034, %v1385
      %v1387 = vpop.f32.mrb[0].mxu0
      %v1388 = vpop.f32.mrb[0].mxu0
      %v1389 = vpop.f32.mrb[0].mxu0
      %1390 = vdwg.mxu0
      %v1391 = vld [vmem:[%s8] sm:$0xf]
      %v1392 = vld [vmem:[%s8 + $0x4] sm:$0xf]
      %v1393 = vld [vmem:[%s8 + $0x8] sm:$0xf]
      %v1394 = vld [vmem:[%s8 + $0xc] sm:$0xf]
      %v1395 = vld [vmem:[%s8 + $0x10] sm:$0xf]
      %v1396 = vld [vmem:[%s8 + $0x14] sm:$0xf]
      %v1397 = vld [vmem:[%s8 + $0x18] sm:$0xf]
      %v1398 = vld [vmem:[%s8 + $0x1c] sm:$0xf]
      %v1399 = vld [vmem:[%s8 + $0x20] sm:$0xf]
      %v1400 = vld [vmem:[%s8 + $0x24] sm:$0xf]
      %v1401 = vld [vmem:[%s8 + $0x28] sm:$0xf]
      %v1402 = vld [vmem:[%s8 + $0x2c] sm:$0xf]
      %v1403 = vld [vmem:[%s8 + $0x30] sm:$0xf]
      %v1404 = vld [vmem:[%s8 + $0x34] sm:$0xf]
      %v1405 = vld [vmem:[%s8 + $0x38] sm:$0xf]
      %v1406 = vld [vmem:[%s8 + $0x3c] sm:$0xf]
      %v1407 = vld [vmem:[%s8 + $0x40] sm:$0xf]
      %v1408 = vld [vmem:[%s8 + $0x44] sm:$0xf]
      %v1409 = vld [vmem:[%s8 + $0x48] sm:$0xf]
      %v1410 = vld [vmem:[%s8 + $0x4c] sm:$0xf]
      %v1411 = vld [vmem:[%s8 + $0x50] sm:$0xf]
      %v1412 = vld [vmem:[%s8 + $0x54] sm:$0xf]
      %v1413 = vld [vmem:[%s8 + $0x58] sm:$0xf]
      %v1414 = vld [vmem:[%s8 + $0x5c] sm:$0xf]
      %v1415 = vld [vmem:[%s8 + $0x60] sm:$0xf]
      %v1416 = vld [vmem:[%s8 + $0x64] sm:$0xf]
      %v1417 = vld [vmem:[%s8 + $0x68] sm:$0xf]
      %v1418 = vld [vmem:[%s8 + $0x6c] sm:$0xf]
      %v1419 = vld [vmem:[%s8 + $0x70] sm:$0xf]
      %v1420 = vld [vmem:[%s8 + $0x74] sm:$0xf]
      %v1421 = vld [vmem:[%s8 + $0x78] sm:$0xf]
      %v1422 = vld [vmem:[%s8 + $0x7c] sm:$0xf]
      %v1423 = vld [vmem:[%s8 + $0x80] sm:$0xf]
      %v1424 = vld [vmem:[%s8 + $0x84] sm:$0xf]
      %v1425 = vld [vmem:[%s8 + $0x88] sm:$0xf]
      %v1426 = vld [vmem:[%s8 + $0x8c] sm:$0xf]
      %v1427 = vld [vmem:[%s8 + $0x90] sm:$0xf]
      %v1428 = vld [vmem:[%s8 + $0x94] sm:$0xf]
      %v1429 = vld [vmem:[%s8 + $0x98] sm:$0xf]
      %v1430 = vld [vmem:[%s8 + $0x9c] sm:$0xf]
      %v1431 = vld [vmem:[%s8 + $0xa0] sm:$0xf]
      %v1432 = vld [vmem:[%s8 + $0xa4] sm:$0xf]
      %v1433 = vld [vmem:[%s8 + $0xa8] sm:$0xf]
      %v1434 = vld [vmem:[%s8 + $0xac] sm:$0xf]
      %v1435 = vld [vmem:[%s8 + $0xb0] sm:$0xf]
      %v1436 = vld [vmem:[%s8 + $0xb4] sm:$0xf]
      %v1437 = vld [vmem:[%s8 + $0xb8] sm:$0xf]
      %v1438 = vld [vmem:[%s8 + $0xbc] sm:$0xf]
      %v1439 = vld [vmem:[%s8 + $0xc0] sm:$0xf]
      %v1440 = vld [vmem:[%s8 + $0xc4] sm:$0xf]
      %v1441 = vld [vmem:[%s8 + $0xc8] sm:$0xf]
      %v1442 = vld [vmem:[%s8 + $0xcc] sm:$0xf]
      %v1443 = vld [vmem:[%s8 + $0xd0] sm:$0xf]
      %v1444 = vld [vmem:[%s8 + $0xd4] sm:$0xf]
      %v1445 = vld [vmem:[%s8 + $0xd8] sm:$0xf]
      %v1446 = vld [vmem:[%s8 + $0xdc] sm:$0xf]
      %v1447 = vld [vmem:[%s8 + $0xe0] sm:$0xf]
      %v1448 = vld [vmem:[%s8 + $0xe4] sm:$0xf]
      %v1449 = vld [vmem:[%s8 + $0xe8] sm:$0xf]
      %v1450 = vld [vmem:[%s8 + $0xec] sm:$0xf]
      %v1451 = vld [vmem:[%s8 + $0xf0] sm:$0xf]
      %v1452 = vld [vmem:[%s8 + $0xf4] sm:$0xf]
      %v1453 = vld [vmem:[%s8 + $0xf8] sm:$0xf]
      %v1454 = vld [vmem:[%s8 + $0xfc] sm:$0xf]
      %v1455 = vld [vmem:[%s9] sm:$0x1]
      %v1456 = vld [vmem:[%s9 + $0x1] sm:$0x1]
      %v1457 = vld [vmem:[%s9 + $0x2] sm:$0x1]
      %v1458 = vld [vmem:[%s9 + $0x3] sm:$0x1]
      %v1463 = vlaneseq
      %v1464 = vshrl.u32 %v1463, 7
      %v1465 = vsub.s32 0, %v1464
      %v1466 = vrot.slane %v1455, %v1465
      %v1467 = vlaneseq
      %v1468 = vshrl.u32 %v1467, 7
      %v1469 = vsub.s32 0, %v1468
      %v1470 = vrot.slane %v1456, %v1469
      %v1471 = vlaneseq
      %v1472 = vshrl.u32 %v1471, 7
      %v1473 = vsub.s32 0, %v1472
      %v1474 = vrot.slane %v1457, %v1473
      %v1475 = vlaneseq
      %v1476 = vshrl.u32 %v1475, 7
      %v1477 = vsub.s32 0, %v1476
      %v1478 = vrot.slane %v1458, %v1477
      %v1499 = vunpack.c.l.b16 %v1391
      %v1500 = vunpack.c.l.b16 %v1392
      %v1501 = vunpack.c.l.b16 %v1393
      %v1502 = vunpack.c.l.b16 %v1394
      %v1503 = vunpack.c.l.b16 %v1395
      %v1504 = vunpack.c.l.b16 %v1396
      %v1505 = vunpack.c.l.b16 %v1397
      %v1506 = vunpack.c.l.b16 %v1398
      %v1507 = vunpack.c.l.b16 %v1399
      %v1508 = vunpack.c.l.b16 %v1400
      %v1509 = vunpack.c.l.b16 %v1401
      %v1510 = vunpack.c.l.b16 %v1402
      %v1511 = vunpack.c.l.b16 %v1403
      %v1512 = vunpack.c.l.b16 %v1404
      %v1513 = vunpack.c.l.b16 %v1405
      %v1514 = vunpack.c.l.b16 %v1406
      %v1515 = vpack.c.b16 %v1500, %v1499
      %v1516 = vpack.c.b16 %v1502, %v1501
      %v1517 = vpack.c.b16 %v1504, %v1503
      %v1518 = vpack.c.b16 %v1506, %v1505
      %v1519 = vpack.c.b16 %v1508, %v1507
      %v1520 = vpack.c.b16 %v1510, %v1509
      %v1521 = vpack.c.b16 %v1512, %v1511
      %v1522 = vpack.c.b16 %v1514, %v1513
      %1531 = vmatprep.subr.bf16.mxu0 0
      %1532 = vmatpush1.bf16.msra.mxu0 %v1515
      %1533 = vmatprep.subr.bf16.mxu0 0
      %1534 = vmatpush1.bf16.msra.mxu0 %v1516
      %1535 = vmatprep.subr.bf16.mxu0 0
      %1536 = vmatpush1.bf16.msra.mxu0 %v1517
      %1537 = vmatprep.subr.bf16.mxu0 0
      %1538 = vmatpush1.bf16.msra.mxu0 %v1518
      %1539 = vmatprep.subr.bf16.mxu0 0
      %1540 = vmatpush1.bf16.msra.mxu0 %v1519
      %1541 = vmatprep.subr.bf16.mxu0 0
      %1542 = vmatpush1.bf16.msra.mxu0 %v1520
      %1543 = vmatprep.subr.bf16.mxu0 0
      %1544 = vmatpush1.bf16.msra.mxu0 %v1521
      %1545 = vmatprep.subr.bf16.mxu0 0
      %1546 = vmatpush1.bf16.msra.mxu0 %v1522
      %1547 = vmatprep.subr.bf16.mxu0 0
      %1548 = vmatpush1.bf16.msra.mxu0 0
      %1549 = vmatprep.subr.bf16.mxu0 0
      %1550 = vmatpush1.bf16.msra.mxu0 0
      %1551 = vmatprep.subr.bf16.mxu0 0
      %1552 = vmatpush1.bf16.msra.mxu0 0
      %1553 = vmatprep.subr.bf16.mxu0 0
      %1554 = vmatpush1.bf16.msra.mxu0 0
      %1555 = vmatprep.subr.bf16.mxu0 0
      %1556 = vmatpush1.bf16.msra.mxu0 0
      %1557 = vmatprep.subr.bf16.mxu0 0
      %1558 = vmatpush1.bf16.msra.mxu0 0
      %1559 = vmatprep.subr.bf16.mxu0 0
      %1560 = vmatpush1.bf16.msra.mxu0 0
      %1561 = vmatprep.subr.bf16.mxu0 0
      %1562 = vmatpush1.bf16.msra.mxu0 0
      %1563 = vmatprep.mubr.bf16.mxu0 0
      %1564 = vmatmul.mubr.bf16.gmra.mrb[0].mxu0 %v496
      %v1565 = vpop.f32.mrb[0].mxu0
      %v1566 = vadd.f32 %v1466, %v1565
      %v1567 = vpop.f32.mrb[0].mxu0
      %v1568 = vpop.f32.mrb[0].mxu0
      %v1569 = vpop.f32.mrb[0].mxu0
      %1570 = vdwg.mxu0
      %v1587 = vunpack.c.l.b16 %v1407
      %v1588 = vunpack.c.l.b16 %v1408
      %v1589 = vunpack.c.l.b16 %v1409
      %v1590 = vunpack.c.l.b16 %v1410
      %v1591 = vunpack.c.l.b16 %v1411
      %v1592 = vunpack.c.l.b16 %v1412
      %v1593 = vunpack.c.l.b16 %v1413
      %v1594 = vunpack.c.l.b16 %v1414
      %v1595 = vunpack.c.l.b16 %v1415
      %v1596 = vunpack.c.l.b16 %v1416
      %v1597 = vunpack.c.l.b16 %v1417
      %v1598 = vunpack.c.l.b16 %v1418
      %v1599 = vunpack.c.l.b16 %v1419
      %v1600 = vunpack.c.l.b16 %v1420
      %v1601 = vunpack.c.l.b16 %v1421
      %v1602 = vunpack.c.l.b16 %v1422
      %v1603 = vpack.c.b16 %v1588, %v1587
      %v1604 = vpack.c.b16 %v1590, %v1589
      %v1605 = vpack.c.b16 %v1592, %v1591
      %v1606 = vpack.c.b16 %v1594, %v1593
      %v1607 = vpack.c.b16 %v1596, %v1595
      %v1608 = vpack.c.b16 %v1598, %v1597
      %v1609 = vpack.c.b16 %v1600, %v1599
      %v1610 = vpack.c.b16 %v1602, %v1601
      %1619 = vmatprep.subr.bf16.mxu0 0
      %1620 = vmatpush1.bf16.msra.mxu0 %v1603
      %1621 = vmatprep.subr.bf16.mxu0 0
      %1622 = vmatpush1.bf16.msra.mxu0 %v1604
      %1623 = vmatprep.subr.bf16.mxu0 0
      %1624 = vmatpush1.bf16.msra.mxu0 %v1605
      %1625 = vmatprep.subr.bf16.mxu0 0
      %1626 = vmatpush1.bf16.msra.mxu0 %v1606
      %1627 = vmatprep.subr.bf16.mxu0 0
      %1628 = vmatpush1.bf16.msra.mxu0 %v1607
      %1629 = vmatprep.subr.bf16.mxu0 0
      %1630 = vmatpush1.bf16.msra.mxu0 %v1608
      %1631 = vmatprep.subr.bf16.mxu0 0
      %1632 = vmatpush1.bf16.msra.mxu0 %v1609
      %1633 = vmatprep.subr.bf16.mxu0 0
      %1634 = vmatpush1.bf16.msra.mxu0 %v1610
      %1635 = vmatprep.subr.bf16.mxu0 0
      %1636 = vmatpush1.bf16.msra.mxu0 0
      %1637 = vmatprep.subr.bf16.mxu0 0
      %1638 = vmatpush1.bf16.msra.mxu0 0
      %1639 = vmatprep.subr.bf16.mxu0 0
      %1640 = vmatpush1.bf16.msra.mxu0 0
      %1641 = vmatprep.subr.bf16.mxu0 0
      %1642 = vmatpush1.bf16.msra.mxu0 0
      %1643 = vmatprep.subr.bf16.mxu0 0
      %1644 = vmatpush1.bf16.msra.mxu0 0
      %1645 = vmatprep.subr.bf16.mxu0 0
      %1646 = vmatpush1.bf16.msra.mxu0 0
      %1647 = vmatprep.subr.bf16.mxu0 0
      %1648 = vmatpush1.bf16.msra.mxu0 0
      %1649 = vmatprep.subr.bf16.mxu0 0
      %1650 = vmatpush1.bf16.msra.mxu0 0
      %1651 = vmatprep.mubr.bf16.mxu0 0
      %1652 = vmatmul.mubr.bf16.gmra.mrb[0].mxu0 %v496
      %v1653 = vpop.f32.mrb[0].mxu0
      %v1654 = vadd.f32 %v1470, %v1653
      %v1655 = vpop.f32.mrb[0].mxu0
      %v1656 = vpop.f32.mrb[0].mxu0
      %v1657 = vpop.f32.mrb[0].mxu0
      %1658 = vdwg.mxu0
      %v1675 = vunpack.c.l.b16 %v1423
      %v1676 = vunpack.c.l.b16 %v1424
      %v1677 = vunpack.c.l.b16 %v1425
      %v1678 = vunpack.c.l.b16 %v1426
      %v1679 = vunpack.c.l.b16 %v1427
      %v1680 = vunpack.c.l.b16 %v1428
      %v1681 = vunpack.c.l.b16 %v1429
      %v1682 = vunpack.c.l.b16 %v1430
      %v1683 = vunpack.c.l.b16 %v1431
      %v1684 = vunpack.c.l.b16 %v1432
      %v1685 = vunpack.c.l.b16 %v1433
      %v1686 = vunpack.c.l.b16 %v1434
      %v1687 = vunpack.c.l.b16 %v1435
      %v1688 = vunpack.c.l.b16 %v1436
      %v1689 = vunpack.c.l.b16 %v1437
      %v1690 = vunpack.c.l.b16 %v1438
      %v1691 = vpack.c.b16 %v1676, %v1675
      %v1692 = vpack.c.b16 %v1678, %v1677
      %v1693 = vpack.c.b16 %v1680, %v1679
      %v1694 = vpack.c.b16 %v1682, %v1681
      %v1695 = vpack.c.b16 %v1684, %v1683
      %v1696 = vpack.c.b16 %v1686, %v1685
      %v1697 = vpack.c.b16 %v1688, %v1687
      %v1698 = vpack.c.b16 %v1690, %v1689
      %1707 = vmatprep.subr.bf16.mxu0 0
      %1708 = vmatpush1.bf16.msra.mxu0 %v1691
      %1709 = vmatprep.subr.bf16.mxu0 0
      %1710 = vmatpush1.bf16.msra.mxu0 %v1692
      %1711 = vmatprep.subr.bf16.mxu0 0
      %1712 = vmatpush1.bf16.msra.mxu0 %v1693
      %1713 = vmatprep.subr.bf16.mxu0 0
      %1714 = vmatpush1.bf16.msra.mxu0 %v1694
      %1715 = vmatprep.subr.bf16.mxu0 0
      %1716 = vmatpush1.bf16.msra.mxu0 %v1695
      %1717 = vmatprep.subr.bf16.mxu0 0
      %1718 = vmatpush1.bf16.msra.mxu0 %v1696
      %1719 = vmatprep.subr.bf16.mxu0 0
      %1720 = vmatpush1.bf16.msra.mxu0 %v1697
      %1721 = vmatprep.subr.bf16.mxu0 0
      %1722 = vmatpush1.bf16.msra.mxu0 %v1698
      %1723 = vmatprep.subr.bf16.mxu0 0
      %1724 = vmatpush1.bf16.msra.mxu0 0
      %1725 = vmatprep.subr.bf16.mxu0 0
      %1726 = vmatpush1.bf16.msra.mxu0 0
      %1727 = vmatprep.subr.bf16.mxu0 0
      %1728 = vmatpush1.bf16.msra.mxu0 0
      %1729 = vmatprep.subr.bf16.mxu0 0
      %1730 = vmatpush1.bf16.msra.mxu0 0
      %1731 = vmatprep.subr.bf16.mxu0 0
      %1732 = vmatpush1.bf16.msra.mxu0 0
      %1733 = vmatprep.subr.bf16.mxu0 0
      %1734 = vmatpush1.bf16.msra.mxu0 0
      %1735 = vmatprep.subr.bf16.mxu0 0
      %1736 = vmatpush1.bf16.msra.mxu0 0
      %1737 = vmatprep.subr.bf16.mxu0 0
      %1738 = vmatpush1.bf16.msra.mxu0 0
      %1739 = vmatprep.mubr.bf16.mxu0 0
      %1740 = vmatmul.mubr.bf16.gmra.mrb[0].mxu0 %v496
      %v1741 = vpop.f32.mrb[0].mxu0
      %v1742 = vadd.f32 %v1474, %v1741
      %v1743 = vpop.f32.mrb[0].mxu0
      %v1744 = vpop.f32.mrb[0].mxu0
      %v1745 = vpop.f32.mrb[0].mxu0
      %1746 = vdwg.mxu0
      %v1763 = vunpack.c.l.b16 %v1439
      %v1764 = vunpack.c.l.b16 %v1440
      %v1765 = vunpack.c.l.b16 %v1441
      %v1766 = vunpack.c.l.b16 %v1442
      %v1767 = vunpack.c.l.b16 %v1443
      %v1768 = vunpack.c.l.b16 %v1444
      %v1769 = vunpack.c.l.b16 %v1445
      %v1770 = vunpack.c.l.b16 %v1446
      %v1771 = vunpack.c.l.b16 %v1447
      %v1772 = vunpack.c.l.b16 %v1448
      %v1773 = vunpack.c.l.b16 %v1449
      %v1774 = vunpack.c.l.b16 %v1450
      %v1775 = vunpack.c.l.b16 %v1451
      %v1776 = vunpack.c.l.b16 %v1452
      %v1777 = vunpack.c.l.b16 %v1453
      %v1778 = vunpack.c.l.b16 %v1454
      %v1779 = vpack.c.b16 %v1764, %v1763
      %v1780 = vpack.c.b16 %v1766, %v1765
      %v1781 = vpack.c.b16 %v1768, %v1767
      %v1782 = vpack.c.b16 %v1770, %v1769
      %v1783 = vpack.c.b16 %v1772, %v1771
      %v1784 = vpack.c.b16 %v1774, %v1773
      %v1785 = vpack.c.b16 %v1776, %v1775
      %v1786 = vpack.c.b16 %v1778, %v1777
      %1795 = vmatprep.subr.bf16.mxu0 0
      %1796 = vmatpush1.bf16.msra.mxu0 %v1779
      %1797 = vmatprep.subr.bf16.mxu0 0
      %1798 = vmatpush1.bf16.msra.mxu0 %v1780
      %1799 = vmatprep.subr.bf16.mxu0 0
      %1800 = vmatpush1.bf16.msra.mxu0 %v1781
      %1801 = vmatprep.subr.bf16.mxu0 0
      %1802 = vmatpush1.bf16.msra.mxu0 %v1782
      %1803 = vmatprep.subr.bf16.mxu0 0
      %1804 = vmatpush1.bf16.msra.mxu0 %v1783
      %1805 = vmatprep.subr.bf16.mxu0 0
      %1806 = vmatpush1.bf16.msra.mxu0 %v1784
      %1807 = vmatprep.subr.bf16.mxu0 0
      %1808 = vmatpush1.bf16.msra.mxu0 %v1785
      %1809 = vmatprep.subr.bf16.mxu0 0
      %1810 = vmatpush1.bf16.msra.mxu0 %v1786
      %1811 = vmatprep.subr.bf16.mxu0 0
      %1812 = vmatpush1.bf16.msra.mxu0 0
      %1813 = vmatprep.subr.bf16.mxu0 0
      %1814 = vmatpush1.bf16.msra.mxu0 0
      %1815 = vmatprep.subr.bf16.mxu0 0
      %1816 = vmatpush1.bf16.msra.mxu0 0
      %1817 = vmatprep.subr.bf16.mxu0 0
      %1818 = vmatpush1.bf16.msra.mxu0 0
      %1819 = vmatprep.subr.bf16.mxu0 0
      %1820 = vmatpush1.bf16.msra.mxu0 0
      %1821 = vmatprep.subr.bf16.mxu0 0
      %1822 = vmatpush1.bf16.msra.mxu0 0
      %1823 = vmatprep.subr.bf16.mxu0 0
      %1824 = vmatpush1.bf16.msra.mxu0 0
      %1825 = vmatprep.subr.bf16.mxu0 0
      %1826 = vmatpush1.bf16.msra.mxu0 0
      %1827 = vmatprep.mubr.bf16.mxu0 0
      %1828 = vmatmul.mubr.bf16.gmra.mrb[0].mxu0 %v496
      %v1829 = vpop.f32.mrb[0].mxu0
      %v1830 = vadd.f32 %v1478, %v1829
      %v1831 = vpop.f32.mrb[0].mxu0
      %v1832 = vpop.f32.mrb[0].mxu0
      %v1833 = vpop.f32.mrb[0].mxu0
      %1834 = vdwg.mxu0
      %v1835 = vpack.c.bf16 %v943, %v943
      %v1836 = vpack.c.bf16 %v944, %v944
      %v1837 = vpack.c.bf16 %v945, %v945
      %v1838 = vpack.c.bf16 %v946, %v946
      %v1839 = vpack.c.bf16 %v1122, %v1122
      %v1840 = vpack.c.bf16 %v1210, %v1210
      %v1841 = vpack.c.bf16 %v1298, %v1298
      %v1842 = vpack.c.bf16 %v1386, %v1386
      %vm1843 = vcmask 261120
      %v1845 = vsel %vm1843, %v1835, 0
      %v1848 = vsel %vm1843, %v1839, 0
      %1850 = vmatprep.subr.bf16.mxu0 0
      %1851 = vmatpush1.bf16.xpose.msra.mxu0 %v1848
      %1852 = vmatprep.subr.bf16.mxu0 0
      %1853 = vmatpush1.bf16.xpose.msra.mxu0 0
      %1854 = vmatprep.subr.bf16.mxu0 0
      %1855 = vmatpush1.bf16.xpose.msra.mxu0 0
      %1856 = vmatprep.subr.bf16.mxu0 0
      %1857 = vmatpush1.bf16.xpose.msra.mxu0 0
      %1858 = vmatprep.subr.bf16.mxu0 0
      %1859 = vmatpush1.bf16.xpose.msra.mxu0 0
      %1860 = vmatprep.subr.bf16.mxu0 0
      %1861 = vmatpush1.bf16.xpose.msra.mxu0 0
      %1862 = vmatprep.subr.bf16.mxu0 0
      %1863 = vmatpush1.bf16.xpose.msra.mxu0 0
      %1864 = vmatprep.subr.bf16.mxu0 0
      %1865 = vmatpush1.bf16.xpose.msra.mxu0 0
      %1866 = vmatprep.subr.bf16.mxu0 0
      %1867 = vmatpush1.bf16.xpose.msra.mxu0 0
      %1868 = vmatprep.subr.bf16.mxu0 0
      %1869 = vmatpush1.bf16.xpose.msra.mxu0 0
      %1870 = vmatprep.subr.bf16.mxu0 0
      %1871 = vmatpush1.bf16.xpose.msra.mxu0 0
      %1872 = vmatprep.subr.bf16.mxu0 0
      %1873 = vmatpush1.bf16.xpose.msra.mxu0 0
      %1874 = vmatprep.subr.bf16.mxu0 0
      %1875 = vmatpush1.bf16.xpose.msra.mxu0 0
      %1876 = vmatprep.subr.bf16.mxu0 0
      %1877 = vmatpush1.bf16.xpose.msra.mxu0 0
      %1878 = vmatprep.subr.bf16.mxu0 0
      %1879 = vmatpush1.bf16.xpose.msra.mxu0 0
      %1880 = vmatprep.subr.bf16.mxu0 0
      %1881 = vmatpush1.bf16.xpose.msra.mxu0 0
      %1882 = vmatprep.mubr.bf16.mxu0 0
      %1883 = vmatmul.mubr.bf16.gmra.mrb[0].mxu0 %v1845
      %v1884 = vpop.f32.mrb[0].mxu0
      %v1885 = vadd.f32 %v497, %v1884
      %v1886 = vpop.f32.mrb[0].mxu0
      %v1887 = vpop.f32.mrb[0].mxu0
      %v1888 = vpop.f32.mrb[0].mxu0
      %1889 = vdwg.mxu0
      %v1891 = vsel %vm1843, %v1836, 0
      %v1894 = vsel %vm1843, %v1840, 0
      %1896 = vmatprep.subr.bf16.mxu0 0
      %1897 = vmatpush1.bf16.xpose.msra.mxu0 %v1894
      %1898 = vmatprep.subr.bf16.mxu0 0
      %1899 = vmatpush1.bf16.xpose.msra.mxu0 0
      %1900 = vmatprep.subr.bf16.mxu0 0
      %1901 = vmatpush1.bf16.xpose.msra.mxu0 0
      %1902 = vmatprep.subr.bf16.mxu0 0
      %1903 = vmatpush1.bf16.xpose.msra.mxu0 0
      %1904 = vmatprep.subr.bf16.mxu0 0
      %1905 = vmatpush1.bf16.xpose.msra.mxu0 0
      %1906 = vmatprep.subr.bf16.mxu0 0
      %1907 = vmatpush1.bf16.xpose.msra.mxu0 0
      %1908 = vmatprep.subr.bf16.mxu0 0
      %1909 = vmatpush1.bf16.xpose.msra.mxu0 0
      %1910 = vmatprep.subr.bf16.mxu0 0
      %1911 = vmatpush1.bf16.xpose.msra.mxu0 0
      %1912 = vmatprep.subr.bf16.mxu0 0
      %1913 = vmatpush1.bf16.xpose.msra.mxu0 0
      %1914 = vmatprep.subr.bf16.mxu0 0
      %1915 = vmatpush1.bf16.xpose.msra.mxu0 0
      %1916 = vmatprep.subr.bf16.mxu0 0
      %1917 = vmatpush1.bf16.xpose.msra.mxu0 0
      %1918 = vmatprep.subr.bf16.mxu0 0
      %1919 = vmatpush1.bf16.xpose.msra.mxu0 0
      %1920 = vmatprep.subr.bf16.mxu0 0
      %1921 = vmatpush1.bf16.xpose.msra.mxu0 0
      %1922 = vmatprep.subr.bf16.mxu0 0
      %1923 = vmatpush1.bf16.xpose.msra.mxu0 0
      %1924 = vmatprep.subr.bf16.mxu0 0
      %1925 = vmatpush1.bf16.xpose.msra.mxu0 0
      %1926 = vmatprep.subr.bf16.mxu0 0
      %1927 = vmatpush1.bf16.xpose.msra.mxu0 0
      %1928 = vmatprep.mubr.bf16.mxu0 0
      %1929 = vmatmul.mubr.bf16.gmra.mrb[0].mxu0 %v1891
      %v1930 = vpop.f32.mrb[0].mxu0
      %v1931 = vadd.f32 %v497, %v1930
      %v1932 = vpop.f32.mrb[0].mxu0
      %v1933 = vpop.f32.mrb[0].mxu0
      %v1934 = vpop.f32.mrb[0].mxu0
      %1935 = vdwg.mxu0
      %v1937 = vsel %vm1843, %v1837, 0
      %v1940 = vsel %vm1843, %v1841, 0
      %1942 = vmatprep.subr.bf16.mxu0 0
      %1943 = vmatpush1.bf16.xpose.msra.mxu0 %v1940
      %1944 = vmatprep.subr.bf16.mxu0 0
      %1945 = vmatpush1.bf16.xpose.msra.mxu0 0
      %1946 = vmatprep.subr.bf16.mxu0 0
      %1947 = vmatpush1.bf16.xpose.msra.mxu0 0
      %1948 = vmatprep.subr.bf16.mxu0 0
      %1949 = vmatpush1.bf16.xpose.msra.mxu0 0
      %1950 = vmatprep.subr.bf16.mxu0 0
      %1951 = vmatpush1.bf16.xpose.msra.mxu0 0
      %1952 = vmatprep.subr.bf16.mxu0 0
      %1953 = vmatpush1.bf16.xpose.msra.mxu0 0
      %1954 = vmatprep.subr.bf16.mxu0 0
      %1955 = vmatpush1.bf16.xpose.msra.mxu0 0
      %1956 = vmatprep.subr.bf16.mxu0 0
      %1957 = vmatpush1.bf16.xpose.msra.mxu0 0
      %1958 = vmatprep.subr.bf16.mxu0 0
      %1959 = vmatpush1.bf16.xpose.msra.mxu0 0
      %1960 = vmatprep.subr.bf16.mxu0 0
      %1961 = vmatpush1.bf16.xpose.msra.mxu0 0
      %1962 = vmatprep.subr.bf16.mxu0 0
      %1963 = vmatpush1.bf16.xpose.msra.mxu0 0
      %1964 = vmatprep.subr.bf16.mxu0 0
      %1965 = vmatpush1.bf16.xpose.msra.mxu0 0
      %1966 = vmatprep.subr.bf16.mxu0 0
      %1967 = vmatpush1.bf16.xpose.msra.mxu0 0
      %1968 = vmatprep.subr.bf16.mxu0 0
      %1969 = vmatpush1.bf16.xpose.msra.mxu0 0
      %1970 = vmatprep.subr.bf16.mxu0 0
      %1971 = vmatpush1.bf16.xpose.msra.mxu0 0
      %1972 = vmatprep.subr.bf16.mxu0 0
      %1973 = vmatpush1.bf16.xpose.msra.mxu0 0
      %1974 = vmatprep.mubr.bf16.mxu0 0
      %1975 = vmatmul.mubr.bf16.gmra.mrb[0].mxu0 %v1937
      %v1976 = vpop.f32.mrb[0].mxu0
      %v1977 = vadd.f32 %v497, %v1976
      %v1978 = vpop.f32.mrb[0].mxu0
      %v1979 = vpop.f32.mrb[0].mxu0
      %v1980 = vpop.f32.mrb[0].mxu0
      %1981 = vdwg.mxu0
      %v1983 = vsel %vm1843, %v1838, 0
      %v1986 = vsel %vm1843, %v1842, 0
      %1988 = vmatprep.subr.bf16.mxu0 0
      %1989 = vmatpush1.bf16.xpose.msra.mxu0 %v1986
      %1990 = vmatprep.subr.bf16.mxu0 0
      %1991 = vmatpush1.bf16.xpose.msra.mxu0 0
      %1992 = vmatprep.subr.bf16.mxu0 0
      %1993 = vmatpush1.bf16.xpose.msra.mxu0 0
      %1994 = vmatprep.subr.bf16.mxu0 0
      %1995 = vmatpush1.bf16.xpose.msra.mxu0 0
      %1996 = vmatprep.subr.bf16.mxu0 0
      %1997 = vmatpush1.bf16.xpose.msra.mxu0 0
      %1998 = vmatprep.subr.bf16.mxu0 0
      %1999 = vmatpush1.bf16.xpose.msra.mxu0 0
      %2000 = vmatprep.subr.bf16.mxu0 0
      %2001 = vmatpush1.bf16.xpose.msra.mxu0 0
      %2002 = vmatprep.subr.bf16.mxu0 0
      %2003 = vmatpush1.bf16.xpose.msra.mxu0 0
      %2004 = vmatprep.subr.bf16.mxu0 0
      %2005 = vmatpush1.bf16.xpose.msra.mxu0 0
      %2006 = vmatprep.subr.bf16.mxu0 0
      %2007 = vmatpush1.bf16.xpose.msra.mxu0 0
      %2008 = vmatprep.subr.bf16.mxu0 0
      %2009 = vmatpush1.bf16.xpose.msra.mxu0 0
      %2010 = vmatprep.subr.bf16.mxu0 0
      %2011 = vmatpush1.bf16.xpose.msra.mxu0 0
      %2012 = vmatprep.subr.bf16.mxu0 0
      %2013 = vmatpush1.bf16.xpose.msra.mxu0 0
      %2014 = vmatprep.subr.bf16.mxu0 0
      %2015 = vmatpush1.bf16.xpose.msra.mxu0 0
      %2016 = vmatprep.subr.bf16.mxu0 0
      %2017 = vmatpush1.bf16.xpose.msra.mxu0 0
      %2018 = vmatprep.subr.bf16.mxu0 0
      %2019 = vmatpush1.bf16.xpose.msra.mxu0 0
      %2020 = vmatprep.mubr.bf16.mxu0 0
      %2021 = vmatmul.mubr.bf16.gmra.mrb[0].mxu0 %v1983
      %v2022 = vpop.f32.mrb[0].mxu0
      %v2023 = vadd.f32 %v497, %v2022
      %v2024 = vpop.f32.mrb[0].mxu0
      %v2025 = vpop.f32.mrb[0].mxu0
      %v2026 = vpop.f32.mrb[0].mxu0
      %2027 = vdwg.mxu0
      %v2029 = vlaneseq
      %v2030 = vshrl.u32 %v2029, 7
      %v2031 = vsub.s32 0, %v2030
      %v2032 = vrot.slane %v498, %v2031
      %v2034 = vadd.f32 %v1885, %v2032
      %v2035 = vadd.f32 %v1931, %v2032
      %v2036 = vadd.f32 %v1977, %v2032
      %v2037 = vadd.f32 %v2023, %v2032
      %vm2038 = vcmask 64512
      %v2039 = vsel %vm2038, %v2034, -inf
      %2040 = vmax.xlane.f32.xlu0 %v2039
      %v2041 = vpop.xlane.xlu0 %2040
      %v2042 = vsel %vm2038, %v2035, -inf
      %2043 = vmax.xlane.f32.xlu0 %v2042
      %v2044 = vpop.xlane.xlu0 %2043
      %v2045 = vsel %vm2038, %v2036, -inf
      %2046 = vmax.xlane.f32.xlu0 %v2045
      %v2047 = vpop.xlane.xlu0 %2046
      %v2048 = vsel %vm2038, %v2037, -inf
      %2049 = vmax.xlane.f32.xlu0 %v2048
      %v2050 = vpop.xlane.xlu0 %2049
      %v2051 = vsub.f32 %v2034, %v2041
      %v2052 = vsub.f32 %v2035, %v2044
      %v2053 = vsub.f32 %v2036, %v2047
      %v2054 = vsub.f32 %v2037, %v2050
      %v2055 = vmul.f32 %v2051, 1.442695
      %v2056 = vpow.pop %v2055
      %v2057 = vmul.f32 %v2052, 1.442695
      %v2058 = vpow.pop %v2057
      %v2059 = vmul.f32 %v2053, 1.442695
      %v2060 = vpow.pop %v2059
      %v2061 = vmul.f32 %v2054, 1.442695
      %v2062 = vpow.pop %v2061
      %v2063 = vsel %vm2038, %v2056, 0.0
      %2064 = vadd.xlane.f32.xlu0 %v2063
      %v2065 = vpop.xlane.xlu0 %2064
      %v2066 = vsel %vm2038, %v2058, 0.0
      %2067 = vadd.xlane.f32.xlu0 %v2066
      %v2068 = vpop.xlane.xlu0 %2067
      %v2069 = vsel %vm2038, %v2060, 0.0
      %2070 = vadd.xlane.f32.xlu0 %v2069
      %v2071 = vpop.xlane.xlu0 %2070
      %v2072 = vsel %vm2038, %v2062, 0.0
      %2073 = vadd.xlane.f32.xlu0 %v2072
      %v2074 = vpop.xlane.xlu0 %2073
      %v2075 = vrcp.pop %v2065
      %v2076 = vrcp.pop %v2068
      %v2077 = vrcp.pop %v2071
      %v2078 = vrcp.pop %v2074
      %v2079 = vmul.f32 %v2056, %v2075
      %v2080 = vmul.f32 %v2058, %v2076
      %v2081 = vmul.f32 %v2060, %v2077
      %v2082 = vmul.f32 %v2062, %v2078
      %v2083 = vpack.c.bf16 %v2079, %v2079
      %v2084 = vpack.c.bf16 %v2080, %v2080
      %v2085 = vpack.c.bf16 %v2081, %v2081
      %v2086 = vpack.c.bf16 %v2082, %v2082
      %v2087 = vpack.c.bf16 %v1566, %v1566
      %v2088 = vpack.c.bf16 %v1654, %v1654
      %v2089 = vpack.c.bf16 %v1742, %v1742
      %v2090 = vpack.c.bf16 %v1830, %v1830
      %v2092 = vsel %vm2038, %v2083, 0
      %vm2094 = vcmask 1043456
      %v2096 = vsel %vm2094, %v2087, 0
      %2098 = vmatprep.subr.bf16.mxu0 0
      %2099 = vmatpush1.bf16.msra.mxu0 %v2096
      %2100 = vmatprep.subr.bf16.mxu0 0
      %2101 = vmatpush1.bf16.msra.mxu0 0
      %2102 = vmatprep.subr.bf16.mxu0 0
      %2103 = vmatpush1.bf16.msra.mxu0 0
      %2104 = vmatprep.subr.bf16.mxu0 0
      %2105 = vmatpush1.bf16.msra.mxu0 0
      %2106 = vmatprep.subr.bf16.mxu0 0
      %2107 = vmatpush1.bf16.msra.mxu0 0
      %2108 = vmatprep.subr.bf16.mxu0 0
      %2109 = vmatpush1.bf16.msra.mxu0 0
      %2110 = vmatprep.subr.bf16.mxu0 0
      %2111 = vmatpush1.bf16.msra.mxu0 0
      %2112 = vmatprep.subr.bf16.mxu0 0
      %2113 = vmatpush1.bf16.msra.mxu0 0
      %2114 = vmatprep.subr.bf16.mxu0 0
      %2115 = vmatpush1.bf16.msra.mxu0 0
      %2116 = vmatprep.subr.bf16.mxu0 0
      %2117 = vmatpush1.bf16.msra.mxu0 0
      %2118 = vmatprep.subr.bf16.mxu0 0
      %2119 = vmatpush1.bf16.msra.mxu0 0
      %2120 = vmatprep.subr.bf16.mxu0 0
      %2121 = vmatpush1.bf16.msra.mxu0 0
      %2122 = vmatprep.subr.bf16.mxu0 0
      %2123 = vmatpush1.bf16.msra.mxu0 0
      %2124 = vmatprep.subr.bf16.mxu0 0
      %2125 = vmatpush1.bf16.msra.mxu0 0
      %2126 = vmatprep.subr.bf16.mxu0 0
      %2127 = vmatpush1.bf16.msra.mxu0 0
      %2128 = vmatprep.subr.bf16.mxu0 0
      %2129 = vmatpush1.bf16.msra.mxu0 0
      %2130 = vmatprep.mubr.bf16.mxu0 0
      %2131 = vmatmul.mubr.bf16.gmra.mrb[0].mxu0 %v2092
      %v2132 = vpop.f32.mrb[0].mxu0
      %v2133 = vadd.f32 0.0, %v2132
      %v2134 = vpop.f32.mrb[0].mxu0
      %v2135 = vpop.f32.mrb[0].mxu0
      %v2136 = vpop.f32.mrb[0].mxu0
      %2137 = vdwg.mxu0
      %v2139 = vsel %vm2038, %v2084, 0
      %v2142 = vsel %vm2094, %v2088, 0
      %2144 = vmatprep.subr.bf16.mxu0 0
      %2145 = vmatpush1.bf16.msra.mxu0 %v2142
      %2146 = vmatprep.subr.bf16.mxu0 0
      %2147 = vmatpush1.bf16.msra.mxu0 0
      %2148 = vmatprep.subr.bf16.mxu0 0
      %2149 = vmatpush1.bf16.msra.mxu0 0
      %2150 = vmatprep.subr.bf16.mxu0 0
      %2151 = vmatpush1.bf16.msra.mxu0 0
      %2152 = vmatprep.subr.bf16.mxu0 0
      %2153 = vmatpush1.bf16.msra.mxu0 0
      %2154 = vmatprep.subr.bf16.mxu0 0
      %2155 = vmatpush1.bf16.msra.mxu0 0
      %2156 = vmatprep.subr.bf16.mxu0 0
      %2157 = vmatpush1.bf16.msra.mxu0 0
      %2158 = vmatprep.subr.bf16.mxu0 0
      %2159 = vmatpush1.bf16.msra.mxu0 0
      %2160 = vmatprep.subr.bf16.mxu0 0
      %2161 = vmatpush1.bf16.msra.mxu0 0
      %2162 = vmatprep.subr.bf16.mxu0 0
      %2163 = vmatpush1.bf16.msra.mxu0 0
      %2164 = vmatprep.subr.bf16.mxu0 0
      %2165 = vmatpush1.bf16.msra.mxu0 0
      %2166 = vmatprep.subr.bf16.mxu0 0
      %2167 = vmatpush1.bf16.msra.mxu0 0
      %2168 = vmatprep.subr.bf16.mxu0 0
      %2169 = vmatpush1.bf16.msra.mxu0 0
      %2170 = vmatprep.subr.bf16.mxu0 0
      %2171 = vmatpush1.bf16.msra.mxu0 0
      %2172 = vmatprep.subr.bf16.mxu0 0
      %2173 = vmatpush1.bf16.msra.mxu0 0
      %2174 = vmatprep.subr.bf16.mxu0 0
      %2175 = vmatpush1.bf16.msra.mxu0 0
      %2176 = vmatprep.mubr.bf16.mxu0 0
      %2177 = vmatmul.mubr.bf16.gmra.mrb[0].mxu0 %v2139
      %v2178 = vpop.f32.mrb[0].mxu0
      %v2179 = vadd.f32 0.0, %v2178
      %v2180 = vpop.f32.mrb[0].mxu0
      %v2181 = vpop.f32.mrb[0].mxu0
      %v2182 = vpop.f32.mrb[0].mxu0
      %2183 = vdwg.mxu0
      %v2185 = vsel %vm2038, %v2085, 0
      %v2188 = vsel %vm2094, %v2089, 0
      %2190 = vmatprep.subr.bf16.mxu0 0
      %2191 = vmatpush1.bf16.msra.mxu0 %v2188
      %2192 = vmatprep.subr.bf16.mxu0 0
      %2193 = vmatpush1.bf16.msra.mxu0 0
      %2194 = vmatprep.subr.bf16.mxu0 0
      %2195 = vmatpush1.bf16.msra.mxu0 0
      %2196 = vmatprep.subr.bf16.mxu0 0
      %2197 = vmatpush1.bf16.msra.mxu0 0
      %2198 = vmatprep.subr.bf16.mxu0 0
      %2199 = vmatpush1.bf16.msra.mxu0 0
      %2200 = vmatprep.subr.bf16.mxu0 0
      %2201 = vmatpush1.bf16.msra.mxu0 0
      %2202 = vmatprep.subr.bf16.mxu0 0
      %2203 = vmatpush1.bf16.msra.mxu0 0
      %2204 = vmatprep.subr.bf16.mxu0 0
      %2205 = vmatpush1.bf16.msra.mxu0 0
      %2206 = vmatprep.subr.bf16.mxu0 0
      %2207 = vmatpush1.bf16.msra.mxu0 0
      %2208 = vmatprep.subr.bf16.mxu0 0
      %2209 = vmatpush1.bf16.msra.mxu0 0
      %2210 = vmatprep.subr.bf16.mxu0 0
      %2211 = vmatpush1.bf16.msra.mxu0 0
      %2212 = vmatprep.subr.bf16.mxu0 0
      %2213 = vmatpush1.bf16.msra.mxu0 0
      %2214 = vmatprep.subr.bf16.mxu0 0
      %2215 = vmatpush1.bf16.msra.mxu0 0
      %2216 = vmatprep.subr.bf16.mxu0 0
      %2217 = vmatpush1.bf16.msra.mxu0 0
      %2218 = vmatprep.subr.bf16.mxu0 0
      %2219 = vmatpush1.bf16.msra.mxu0 0
      %2220 = vmatprep.subr.bf16.mxu0 0
      %2221 = vmatpush1.bf16.msra.mxu0 0
      %2222 = vmatprep.mubr.bf16.mxu0 0
      %2223 = vmatmul.mubr.bf16.gmra.mrb[0].mxu0 %v2185
      %v2224 = vpop.f32.mrb[0].mxu0
      %v2225 = vadd.f32 0.0, %v2224
      %v2226 = vpop.f32.mrb[0].mxu0
      %v2227 = vpop.f32.mrb[0].mxu0
      %v2228 = vpop.f32.mrb[0].mxu0
      %2229 = vdwg.mxu0
      %v2231 = vsel %vm2038, %v2086, 0
      %v2234 = vsel %vm2094, %v2090, 0
      %2236 = vmatprep.subr.bf16.mxu0 0
      %2237 = vmatpush1.bf16.msra.mxu0 %v2234
      %2238 = vmatprep.subr.bf16.mxu0 0
      %2239 = vmatpush1.bf16.msra.mxu0 0
      %2240 = vmatprep.subr.bf16.mxu0 0
      %2241 = vmatpush1.bf16.msra.mxu0 0
      %2242 = vmatprep.subr.bf16.mxu0 0
      %2243 = vmatpush1.bf16.msra.mxu0 0
      %2244 = vmatprep.subr.bf16.mxu0 0
      %2245 = vmatpush1.bf16.msra.mxu0 0
      %2246 = vmatprep.subr.bf16.mxu0 0
      %2247 = vmatpush1.bf16.msra.mxu0 0
      %2248 = vmatprep.subr.bf16.mxu0 0
      %2249 = vmatpush1.bf16.msra.mxu0 0
      %2250 = vmatprep.subr.bf16.mxu0 0
      %2251 = vmatpush1.bf16.msra.mxu0 0
      %2252 = vmatprep.subr.bf16.mxu0 0
      %2253 = vmatpush1.bf16.msra.mxu0 0
      %2254 = vmatprep.subr.bf16.mxu0 0
      %2255 = vmatpush1.bf16.msra.mxu0 0
      %2256 = vmatprep.subr.bf16.mxu0 0
      %2257 = vmatpush1.bf16.msra.mxu0 0
      %2258 = vmatprep.subr.bf16.mxu0 0
      %2259 = vmatpush1.bf16.msra.mxu0 0
      %2260 = vmatprep.subr.bf16.mxu0 0
      %2261 = vmatpush1.bf16.msra.mxu0 0
      %2262 = vmatprep.subr.bf16.mxu0 0
      %2263 = vmatpush1.bf16.msra.mxu0 0
      %2264 = vmatprep.subr.bf16.mxu0 0
      %2265 = vmatpush1.bf16.msra.mxu0 0
      %2266 = vmatprep.subr.bf16.mxu0 0
      %2267 = vmatpush1.bf16.msra.mxu0 0
      %2268 = vmatprep.mubr.bf16.mxu0 0
      %2269 = vmatmul.mubr.bf16.gmra.mrb[0].mxu0 %v2231
      %v2270 = vpop.f32.mrb[0].mxu0
      %v2271 = vadd.f32 0.0, %v2270
      %v2272 = vpop.f32.mrb[0].mxu0
      %v2273 = vpop.f32.mrb[0].mxu0
      %v2274 = vpop.f32.mrb[0].mxu0
      %2275 = vdwg.mxu0
      %v2276 = vpack.c.bf16 %v2133, %v2133
      %v2277 = vpack.c.bf16 %v2179, %v2179
      %v2278 = vpack.c.bf16 %v2225, %v2225
      %v2279 = vpack.c.bf16 %v2271, %v2271
      %v2280 = vld [vmem:[%s10] sm:$0xf]
      %v2281 = vld [vmem:[%s10 + $0x4] sm:$0xf]
      %v2282 = vld [vmem:[%s10 + $0x8] sm:$0xf]
      %v2283 = vld [vmem:[%s10 + $0xc] sm:$0xf]
      %v2284 = vld [vmem:[%s10 + $0x10] sm:$0xf]
      %v2285 = vld [vmem:[%s10 + $0x14] sm:$0xf]
      %v2286 = vld [vmem:[%s10 + $0x18] sm:$0xf]
      %v2287 = vld [vmem:[%s10 + $0x1c] sm:$0xf]
      %v2288 = vld [vmem:[%s10 + $0x20] sm:$0xf]
      %v2289 = vld [vmem:[%s10 + $0x24] sm:$0xf]
      %v2290 = vld [vmem:[%s10 + $0x28] sm:$0xf]
      %v2291 = vld [vmem:[%s10 + $0x2c] sm:$0xf]
      %v2292 = vld [vmem:[%s10 + $0x30] sm:$0xf]
      %v2293 = vld [vmem:[%s10 + $0x34] sm:$0xf]
      %v2294 = vld [vmem:[%s10 + $0x38] sm:$0xf]
      %v2295 = vld [vmem:[%s10 + $0x3c] sm:$0xf]
      %v2300 = vunpack.c.l.b16 %v2280
      %v2301 = vunpack.c.l.b16 %v2281
      %v2302 = vunpack.c.l.b16 %v2282
      %v2303 = vunpack.c.l.b16 %v2283
      %v2304 = vpack.c.b16 %v2301, %v2300
      %v2305 = vpack.c.b16 %v2303, %v2302
      %v2309 = vsel %vm1843, %v2276, 0
      %2311 = vmatprep.subr.bf16.mxu0 0
      %2312 = vmatpush1.bf16.msra.mxu0 %v2304
      %2313 = vmatprep.subr.bf16.mxu0 0
      %2314 = vmatpush1.bf16.msra.mxu0 %v2305
      %2315 = vmatprep.subr.bf16.mxu0 0
      %2316 = vmatpush1.bf16.msra.mxu0 0
      %2317 = vmatprep.subr.bf16.mxu0 0
      %2318 = vmatpush1.bf16.msra.mxu0 0
      %2319 = vmatprep.subr.bf16.mxu0 0
      %2320 = vmatpush1.bf16.msra.mxu0 0
      %2321 = vmatprep.subr.bf16.mxu0 0
      %2322 = vmatpush1.bf16.msra.mxu0 0
      %2323 = vmatprep.subr.bf16.mxu0 0
      %2324 = vmatpush1.bf16.msra.mxu0 0
      %2325 = vmatprep.subr.bf16.mxu0 0
      %2326 = vmatpush1.bf16.msra.mxu0 0
      %2327 = vmatprep.subr.bf16.mxu0 0
      %2328 = vmatpush1.bf16.msra.mxu0 0
      %2329 = vmatprep.subr.bf16.mxu0 0
      %2330 = vmatpush1.bf16.msra.mxu0 0
      %2331 = vmatprep.subr.bf16.mxu0 0
      %2332 = vmatpush1.bf16.msra.mxu0 0
      %2333 = vmatprep.subr.bf16.mxu0 0
      %2334 = vmatpush1.bf16.msra.mxu0 0
      %2335 = vmatprep.subr.bf16.mxu0 0
      %2336 = vmatpush1.bf16.msra.mxu0 0
      %2337 = vmatprep.subr.bf16.mxu0 0
      %2338 = vmatpush1.bf16.msra.mxu0 0
      %2339 = vmatprep.subr.bf16.mxu0 0
      %2340 = vmatpush1.bf16.msra.mxu0 0
      %2341 = vmatprep.subr.bf16.mxu0 0
      %2342 = vmatpush1.bf16.msra.mxu0 0
      %2343 = vmatprep.mubr.bf16.mxu0 0
      %2344 = vmatmul.mubr.bf16.gmra.mrb[0].mxu0 %v2309
      %v2345 = vpop.f32.mrb[0].mxu0
      %v2346 = vadd.f32 0.0, %v2345
      %v2347 = vpop.f32.mrb[0].mxu0
      %v2348 = vpop.f32.mrb[0].mxu0
      %v2349 = vpop.f32.mrb[0].mxu0
      %2350 = vdwg.mxu0
      %v2355 = vunpack.c.l.b16 %v2284
      %v2356 = vunpack.c.l.b16 %v2285
      %v2357 = vunpack.c.l.b16 %v2286
      %v2358 = vunpack.c.l.b16 %v2287
      %v2359 = vpack.c.b16 %v2356, %v2355
      %v2360 = vpack.c.b16 %v2358, %v2357
      %v2364 = vsel %vm1843, %v2277, 0
      %2366 = vmatprep.subr.bf16.mxu0 0
      %2367 = vmatpush1.bf16.msra.mxu0 %v2359
      %2368 = vmatprep.subr.bf16.mxu0 0
      %2369 = vmatpush1.bf16.msra.mxu0 %v2360
      %2370 = vmatprep.subr.bf16.mxu0 0
      %2371 = vmatpush1.bf16.msra.mxu0 0
      %2372 = vmatprep.subr.bf16.mxu0 0
      %2373 = vmatpush1.bf16.msra.mxu0 0
      %2374 = vmatprep.subr.bf16.mxu0 0
      %2375 = vmatpush1.bf16.msra.mxu0 0
      %2376 = vmatprep.subr.bf16.mxu0 0
      %2377 = vmatpush1.bf16.msra.mxu0 0
      %2378 = vmatprep.subr.bf16.mxu0 0
      %2379 = vmatpush1.bf16.msra.mxu0 0
      %2380 = vmatprep.subr.bf16.mxu0 0
      %2381 = vmatpush1.bf16.msra.mxu0 0
      %2382 = vmatprep.subr.bf16.mxu0 0
      %2383 = vmatpush1.bf16.msra.mxu0 0
      %2384 = vmatprep.subr.bf16.mxu0 0
      %2385 = vmatpush1.bf16.msra.mxu0 0
      %2386 = vmatprep.subr.bf16.mxu0 0
      %2387 = vmatpush1.bf16.msra.mxu0 0
      %2388 = vmatprep.subr.bf16.mxu0 0
      %2389 = vmatpush1.bf16.msra.mxu0 0
      %2390 = vmatprep.subr.bf16.mxu0 0
      %2391 = vmatpush1.bf16.msra.mxu0 0
      %2392 = vmatprep.subr.bf16.mxu0 0
      %2393 = vmatpush1.bf16.msra.mxu0 0
      %2394 = vmatprep.subr.bf16.mxu0 0
      %2395 = vmatpush1.bf16.msra.mxu0 0
      %2396 = vmatprep.subr.bf16.mxu0 0
      %2397 = vmatpush1.bf16.msra.mxu0 0
      %2398 = vmatprep.mubr.bf16.mxu0 0
      %2399 = vmatmul.mubr.bf16.gmra.mrb[0].mxu0 %v2364
      %v2400 = vpop.f32.mrb[0].mxu0
      %v2401 = vadd.f32 0.0, %v2400
      %v2402 = vpop.f32.mrb[0].mxu0
      %v2403 = vpop.f32.mrb[0].mxu0
      %v2404 = vpop.f32.mrb[0].mxu0
      %2405 = vdwg.mxu0
      %v2410 = vunpack.c.l.b16 %v2288
      %v2411 = vunpack.c.l.b16 %v2289
      %v2412 = vunpack.c.l.b16 %v2290
      %v2413 = vunpack.c.l.b16 %v2291
      %v2414 = vpack.c.b16 %v2411, %v2410
      %v2415 = vpack.c.b16 %v2413, %v2412
      %v2419 = vsel %vm1843, %v2278, 0
      %2421 = vmatprep.subr.bf16.mxu0 0
      %2422 = vmatpush1.bf16.msra.mxu0 %v2414
      %2423 = vmatprep.subr.bf16.mxu0 0
      %2424 = vmatpush1.bf16.msra.mxu0 %v2415
      %2425 = vmatprep.subr.bf16.mxu0 0
      %2426 = vmatpush1.bf16.msra.mxu0 0
      %2427 = vmatprep.subr.bf16.mxu0 0
      %2428 = vmatpush1.bf16.msra.mxu0 0
      %2429 = vmatprep.subr.bf16.mxu0 0
      %2430 = vmatpush1.bf16.msra.mxu0 0
      %2431 = vmatprep.subr.bf16.mxu0 0
      %2432 = vmatpush1.bf16.msra.mxu0 0
      %2433 = vmatprep.subr.bf16.mxu0 0
      %2434 = vmatpush1.bf16.msra.mxu0 0
      %2435 = vmatprep.subr.bf16.mxu0 0
      %2436 = vmatpush1.bf16.msra.mxu0 0
      %2437 = vmatprep.subr.bf16.mxu0 0
      %2438 = vmatpush1.bf16.msra.mxu0 0
      %2439 = vmatprep.subr.bf16.mxu0 0
      %2440 = vmatpush1.bf16.msra.mxu0 0
      %2441 = vmatprep.subr.bf16.mxu0 0
      %2442 = vmatpush1.bf16.msra.mxu0 0
      %2443 = vmatprep.subr.bf16.mxu0 0
      %2444 = vmatpush1.bf16.msra.mxu0 0
      %2445 = vmatprep.subr.bf16.mxu0 0
      %2446 = vmatpush1.bf16.msra.mxu0 0
      %2447 = vmatprep.subr.bf16.mxu0 0
      %2448 = vmatpush1.bf16.msra.mxu0 0
      %2449 = vmatprep.subr.bf16.mxu0 0
      %2450 = vmatpush1.bf16.msra.mxu0 0
      %2451 = vmatprep.subr.bf16.mxu0 0
      %2452 = vmatpush1.bf16.msra.mxu0 0
      %2453 = vmatprep.mubr.bf16.mxu0 0
      %2454 = vmatmul.mubr.bf16.gmra.mrb[0].mxu0 %v2419
      %v2455 = vpop.f32.mrb[0].mxu0
      %v2456 = vadd.f32 0.0, %v2455
      %v2457 = vpop.f32.mrb[0].mxu0
      %v2458 = vpop.f32.mrb[0].mxu0
      %v2459 = vpop.f32.mrb[0].mxu0
      %2460 = vdwg.mxu0
      %v2465 = vunpack.c.l.b16 %v2292
      %v2466 = vunpack.c.l.b16 %v2293
      %v2467 = vunpack.c.l.b16 %v2294
      %v2468 = vunpack.c.l.b16 %v2295
      %v2469 = vpack.c.b16 %v2466, %v2465
      %v2470 = vpack.c.b16 %v2468, %v2467
      %v2474 = vsel %vm1843, %v2279, 0
      %2476 = vmatprep.subr.bf16.mxu0 0
      %2477 = vmatpush1.bf16.msra.mxu0 %v2469
      %2478 = vmatprep.subr.bf16.mxu0 0
      %2479 = vmatpush1.bf16.msra.mxu0 %v2470
      %2480 = vmatprep.subr.bf16.mxu0 0
      %2481 = vmatpush1.bf16.msra.mxu0 0
      %2482 = vmatprep.subr.bf16.mxu0 0
      %2483 = vmatpush1.bf16.msra.mxu0 0
      %2484 = vmatprep.subr.bf16.mxu0 0
      %2485 = vmatpush1.bf16.msra.mxu0 0
      %2486 = vmatprep.subr.bf16.mxu0 0
      %2487 = vmatpush1.bf16.msra.mxu0 0
      %2488 = vmatprep.subr.bf16.mxu0 0
      %2489 = vmatpush1.bf16.msra.mxu0 0
      %2490 = vmatprep.subr.bf16.mxu0 0
      %2491 = vmatpush1.bf16.msra.mxu0 0
      %2492 = vmatprep.subr.bf16.mxu0 0
      %2493 = vmatpush1.bf16.msra.mxu0 0
      %2494 = vmatprep.subr.bf16.mxu0 0
      %2495 = vmatpush1.bf16.msra.mxu0 0
      %2496 = vmatprep.subr.bf16.mxu0 0
      %2497 = vmatpush1.bf16.msra.mxu0 0
      %2498 = vmatprep.subr.bf16.mxu0 0
      %2499 = vmatpush1.bf16.msra.mxu0 0
      %2500 = vmatprep.subr.bf16.mxu0 0
      %2501 = vmatpush1.bf16.msra.mxu0 0
      %2502 = vmatprep.subr.bf16.mxu0 0
      %2503 = vmatpush1.bf16.msra.mxu0 0
      %2504 = vmatprep.subr.bf16.mxu0 0
      %2505 = vmatpush1.bf16.msra.mxu0 0
      %2506 = vmatprep.subr.bf16.mxu0 0
      %2507 = vmatpush1.bf16.msra.mxu0 0
      %2508 = vmatprep.mubr.bf16.mxu0 0
      %2509 = vmatmul.mubr.bf16.gmra.mrb[0].mxu0 %v2474
      %v2510 = vpop.f32.mrb[0].mxu0
      %v2511 = vadd.f32 0.0, %v2510
      %v2512 = vpop.f32.mrb[0].mxu0
      %v2513 = vpop.f32.mrb[0].mxu0
      %v2514 = vpop.f32.mrb[0].mxu0
      %2515 = vdwg.mxu0
      %v2516 = vadd.f32 %v2346, %v2401
      %v2517 = vadd.f32 %v2516, %v2456
      %v2518 = vadd.f32 %v2517, %v2511
      %v2519 = vld [vmem:[%s11] sm:$0x1]
      %v2521 = vlaneseq
      %v2522 = vshrl.u32 %v2521, 7
      %v2523 = vsub.s32 0, %v2522
      %v2524 = vrot.slane %v2519, %v2523
      %v2526 = vadd.f32 %v2518, %v2524
      %v2527 = vunpack.c.l.bf16 %v495
      %v2528 = vadd.f32 %v2526, %v2527
      %v2529 = vld [vmem:[%s12] sm:$0x1]
      %v2530 = vld [vmem:[%s13] sm:$0x1]
      %2531 = vadd.xlane.f32.xlu0 %v2528
      %v2532 = vpop.xlane.xlu0 %2531
      %v2533 = vrcp.pop 128.0
      %v2534 = vmul.f32 %v2532, %v2533
      %v2535 = vsub.f32 %v2528, %v2534
      %v2536 = vmul.f32 %v2535, %v2535
      %2537 = vadd.xlane.f32.xlu0 %v2536
      %v2538 = vpop.xlane.xlu0 %2537
      %v2539 = vmul.f32 %v2538, %v2533
      %v2540 = vadd.f32 %v2539, 1e-05
      %v2541 = vrsqrt.pop %v2540
      %v2542 = vmul.f32 %v2535, %v2541
      %v2544 = vlaneseq
      %v2545 = vshrl.u32 %v2544, 7
      %v2546 = vsub.s32 0, %v2545
      %v2547 = vrot.slane %v2529, %v2546
      %v2549 = vmul.f32 %v2542, %v2547
      %v2551 = vlaneseq
      %v2552 = vshrl.u32 %v2551, 7
      %v2553 = vsub.s32 0, %v2552
      %v2554 = vrot.slane %v2530, %v2553
      %v2556 = vadd.f32 %v2549, %v2554
      %v2557 = vpack.c.bf16 %v2556, %v2556
      %2558 = vst [vmem:[%s493] sm:$0xf] %v2557
      %p2559 = scmp.lt.s32.totalorder %s25, 1
      %s2560 = scalar_select %p2559, %s25, 1
      %s2561 = smul.addr %s2560, 4
      %s2562 = scalar_lea.vmem %s14, %s2561
      // Predicated region
      $region77: #{transformer_forward.19} parent=75 // pred_check
        %p2563 = pneg %p352
      $region78: #{transformer_forward.19} parent=75 // pred_check_branch
        %2565 = sbr.rel (%p2563) target = $region80
      $region79: #{transformer_forward.19} parent=75 // pred_region
        _
      $region80: #{transformer_forward.19} parent=75 // pred_fallthru
        _
    $region76: #{transformer_forward.19} parent=5 // pred_fallthru
      _
    %p2566 = scmp.le.s32.totalorder 2, %s20
    // Predicated region
    $region81: #{transformer_forward.19} parent=5 // pred_check
      %p2567 = pneg %p2566
    $region82: #{transformer_forward.19} parent=5 // pred_check_branch
      %2569 = sbr.rel (%p2567) target = $region84
    $region83: #{transformer_forward.19} parent=5 // pred_region
      %s2570 = ssub.s32 %s20, 2
      // Predicated region
      $region85: #{transformer_forward.19} parent=83 // pred_check
        %p2571 = pneg %p358
      $region86: #{transformer_forward.19} parent=83 // pred_check_branch
        %2573 = sbr.rel (%p2571) target = $region88
      $region87: #{transformer_forward.19} parent=83 // pred_region
        %p2574 = scmp.lt.s32.totalorder %s26, 1
        %s2575 = scalar_select %p2574, %s26, 1
        %s2576 = smul.addr %s2575, 4
        %s2577 = scalar_lea.vmem %s14, %s2576
      $region88: #{transformer_forward.19} parent=83 // pred_fallthru
        _
    $region84: #{transformer_forward.19} parent=5 // pred_fallthru
      _
  $region6: #{transformer_forward.19} parent=0 // loop_footer
    %s24 = sadd.s32 1, %s20
  $region7: #{transformer_forward.19} parent=0 // loop_footer_branch
    %19 = sbr.rel target = $region3
  $region8: #{transformer_forward.19} parent=0 // loop_exit
    _

// kernel: transformer_forward.13
$region0: #{transformer_forward.13}
  #allocation0 [shape = 'u32[]', space=smem, size = 0x4, offset = 0x4, fixed_abs, tag = 'smem constant byte address 0x4 - core index']
  #allocation1 [shape = 'u32[144,128]{1,0:T(1,128)}', space=vmem, size = 0x12000, scoped, tag = 'internal scratch']
  %s0 = inlined_call_operand.vmem [shape: bf16[2,8,128], index: 0, kind: input, shape index: {}]
  %s1 = inlined_call_operand.vmem [shape: f32[8,8], index: 1, kind: input, shape index: {}]
  %s2 = inlined_call_operand.vmem [shape: f32[2,1,8], index: 2, kind: input, shape index: {}]
  %s3 = inlined_call_operand.vmem [shape: bf16[4,128,32], index: 3, kind: input, shape index: {}]
  %s4 = inlined_call_operand.vmem [shape: f32[4,1,32], index: 4, kind: input, shape index: {}]
  %s5 = inlined_call_operand.vmem [shape: bf16[4,128,32], index: 5, kind: input, shape index: {}]
  %s6 = inlined_call_operand.vmem [shape: f32[4,1,32], index: 6, kind: input, shape index: {}]
  %s7 = inlined_call_operand.vmem [shape: bf16[4,128,32], index: 7, kind: input, shape index: {}]
  %s8 = inlined_call_operand.vmem [shape: f32[4,1,32], index: 8, kind: input, shape index: {}]
  %s9 = inlined_call_operand.vmem [shape: bf16[4,32,128], index: 9, kind: input, shape index: {}]
  %s10 = inlined_call_operand.vmem [shape: f32[1,128], index: 10, kind: input, shape index: {}]
  %s11 = inlined_call_operand.vmem [shape: f32[1,128], index: 11, kind: input, shape index: {}]
  %s12 = inlined_call_operand.vmem [shape: f32[1,128], index: 12, kind: input, shape index: {}]
  %s13 = inlined_call_operand.vmem [shape: bf16[2,8,128], index: 13, kind: output, shape index: {}]
  %s14 = sld [smem:[#allocation0]]
  $region85: #{transformer_forward.13} parent=0
    _
  %s16 = ssub.s32 1, %s14
  %s17 = scalar_select 0, %s16, %s14
  loop: start=0, step=1, limit=4
  $region2: #{transformer_forward.13} parent=0 // loop_pre_header
    _
  $region3: #{transformer_forward.13} parent=0 // loop_header
    %s19 = sphi 0, %s23
    %p20 = scmp.ge.s32.totalorder %s19, 4
    %s29 = sphi 0, %s31
    %s32 = sphi 0, %s29
    %s33 = sphi 0, %s32
    %s49 = sphi 0, %s33
    %s53 = sphi 0, %s53
    %s55 = sphi 0, %s53
    %s56 = sphi 0, %s55
    %s70 = sphi 0, %s56
    %s76 = sphi 0, %s78
    %s79 = sphi 0, %s76
    %s80 = sphi 0, %s79
    %s96 = sphi 0, %s80
    %s100 = sphi 0, %s100
    %s102 = sphi 0, %s100
    %s103 = sphi 0, %s102
    %s117 = sphi 0, %s103
    %s121 = sphi 0, %s121
    %s123 = sphi 0, %s121
    %s124 = sphi 0, %s123
    %s138 = sphi 0, %s124
    %s142 = sphi 0, %s142
    %s144 = sphi 0, %s142
    %s145 = sphi 0, %s144
    %s159 = sphi 0, %s145
    %s163 = sphi 0, %s163
    %s165 = sphi 0, %s163
    %s166 = sphi 0, %s165
    %s180 = sphi 0, %s166
    %s184 = sphi 0, %s184
    %s186 = sphi 0, %s184
    %s187 = sphi 0, %s186
    %s201 = sphi 0, %s187
    %s205 = sphi 0, %s205
    %s207 = sphi 0, %s205
    %s208 = sphi 0, %s207
    %s222 = sphi 0, %s208
    %s226 = sphi 0, %s226
    %s228 = sphi 0, %s226
    %s229 = sphi 0, %s228
    %s243 = sphi 0, %s229
    %s247 = sphi 0, %s247
    %s249 = sphi 0, %s247
    %s250 = sphi 0, %s249
    %s264 = sphi 0, %s250
    %s268 = sphi 0, %s268
    %s270 = sphi 0, %s268
    %s271 = sphi 0, %s270
    %s285 = sphi 0, %s271
    %s289 = sphi 0, %s289
    %s291 = sphi 0, %s289
    %s292 = sphi 0, %s291
    %s306 = sphi 0, %s292
    %s312 = sphi 0, %s314
    %s315 = sphi 0, %s312
    %s316 = sphi 0, %s315
    %s332 = sphi 0, %s316
  $region4: #{transformer_forward.13} parent=0 // loop_header_branch
    %22 = sbr.rel (%p20) target = $region8
  $region5: #{transformer_forward.13} parent=0 // loop_body
    %s24 = ssub.s32 %s19, 1
    %s25 = ssub.s32 %s19, 2
    %s26 = sadd.s32 %s19, 1
    %s27 = ssub.s32 %s19, %s26
    %p28 = scmp.eq.s32.totalorder %s27, 0
    %s30 = sadd.s32 %s29, 1
    %s31 = scalar_select %p28, %s29, %s30
    %p34 = pneg %p28
    %p35 = scmp.eq.s32.totalorder %s19, 1
    %p36 = por %p34, %p35
    %p37 = scmp.ne.s32.totalorder %s29, %s32
    %p38 = scmp.eq.s32.totalorder %s19, 0
    %p39 = por %p37, %p38
    %p40 = scmp.ne.s32.totalorder %s29, %s32
    %p41 = scmp.eq.s32.totalorder %s24, 1
    %p42 = por %p40, %p41
    %p43 = scmp.ne.s32.totalorder %s32, %s33
    %p44 = scmp.eq.s32.totalorder %s24, 0
    %p45 = por %p43, %p44
    %p46 = scmp.ne.s32.totalorder %s32, %s33
    %p47 = scmp.eq.s32.totalorder %s25, 1
    %p48 = por %p46, %p47
    %p50 = scmp.ne.s32.totalorder %s33, %s49
    %p51 = scmp.eq.s32.totalorder %s25, 0
    %p52 = por %p50, %p51
    %s54 = sadd.s32 %s53, 1
    %p57 = scmp.eq.s32.totalorder %s19, 1
    %p58 = scmp.ne.s32.totalorder %s53, %s55
    %p59 = scmp.eq.s32.totalorder %s19, 0
    %p60 = por %p58, %p59
    %p61 = scmp.ne.s32.totalorder %s53, %s55
    %p62 = scmp.eq.s32.totalorder %s24, 1
    %p63 = por %p61, %p62
    %p64 = scmp.ne.s32.totalorder %s55, %s56
    %p65 = scmp.eq.s32.totalorder %s24, 0
    %p66 = por %p64, %p65
    %p67 = scmp.ne.s32.totalorder %s55, %s56
    %p68 = scmp.eq.s32.totalorder %s25, 1
    %p69 = por %p67, %p68
    %p71 = scmp.ne.s32.totalorder %s56, %s70
    %p72 = scmp.eq.s32.totalorder %s25, 0
    %p73 = por %p71, %p72
    %s74 = ssub.s32 %s19, %s26
    %p75 = scmp.eq.s32.totalorder %s74, 0
    %s77 = sadd.s32 %s76, 1
    %s78 = scalar_select %p75, %s76, %s77
    %p81 = pneg %p75
    %p82 = scmp.eq.s32.totalorder %s19, 1
    %p83 = por %p81, %p82
    %p84 = scmp.ne.s32.totalorder %s76, %s79
    %p85 = scmp.eq.s32.totalorder %s19, 0
    %p86 = por %p84, %p85
    %p87 = scmp.ne.s32.totalorder %s76, %s79
    %p88 = scmp.eq.s32.totalorder %s24, 1
    %p89 = por %p87, %p88
    %p90 = scmp.ne.s32.totalorder %s79, %s80
    %p91 = scmp.eq.s32.totalorder %s24, 0
    %p92 = por %p90, %p91
    %p93 = scmp.ne.s32.totalorder %s79, %s80
    %p94 = scmp.eq.s32.totalorder %s25, 1
    %p95 = por %p93, %p94
    %p97 = scmp.ne.s32.totalorder %s80, %s96
    %p98 = scmp.eq.s32.totalorder %s25, 0
    %p99 = por %p97, %p98
    %s101 = sadd.s32 %s100, 1
    %p104 = scmp.eq.s32.totalorder %s19, 1
    %p105 = scmp.ne.s32.totalorder %s100, %s102
    %p106 = scmp.eq.s32.totalorder %s19, 0
    %p107 = por %p105, %p106
    %p108 = scmp.ne.s32.totalorder %s100, %s102
    %p109 = scmp.eq.s32.totalorder %s24, 1
    %p110 = por %p108, %p109
    %p111 = scmp.ne.s32.totalorder %s102, %s103
    %p112 = scmp.eq.s32.totalorder %s24, 0
    %p113 = por %p111, %p112
    %p114 = scmp.ne.s32.totalorder %s102, %s103
    %p115 = scmp.eq.s32.totalorder %s25, 1
    %p116 = por %p114, %p115
    %p118 = scmp.ne.s32.totalorder %s103, %s117
    %p119 = scmp.eq.s32.totalorder %s25, 0
    %p120 = por %p118, %p119
    %s122 = sadd.s32 %s121, 1
    %p125 = scmp.eq.s32.totalorder %s19, 1
    %p126 = scmp.ne.s32.totalorder %s121, %s123
    %p127 = scmp.eq.s32.totalorder %s19, 0
    %p128 = por %p126, %p127
    %p129 = scmp.ne.s32.totalorder %s121, %s123
    %p130 = scmp.eq.s32.totalorder %s24, 1
    %p131 = por %p129, %p130
    %p132 = scmp.ne.s32.totalorder %s123, %s124
    %p133 = scmp.eq.s32.totalorder %s24, 0
    %p134 = por %p132, %p133
    %p135 = scmp.ne.s32.totalorder %s123, %s124
    %p136 = scmp.eq.s32.totalorder %s25, 1
    %p137 = por %p135, %p136
    %p139 = scmp.ne.s32.totalorder %s124, %s138
    %p140 = scmp.eq.s32.totalorder %s25, 0
    %p141 = por %p139, %p140
    %s143 = sadd.s32 %s142, 1
    %p146 = scmp.eq.s32.totalorder %s19, 1
    %p147 = scmp.ne.s32.totalorder %s142, %s144
    %p148 = scmp.eq.s32.totalorder %s19, 0
    %p149 = por %p147, %p148
    %p150 = scmp.ne.s32.totalorder %s142, %s144
    %p151 = scmp.eq.s32.totalorder %s24, 1
    %p152 = por %p150, %p151
    %p153 = scmp.ne.s32.totalorder %s144, %s145
    %p154 = scmp.eq.s32.totalorder %s24, 0
    %p155 = por %p153, %p154
    %p156 = scmp.ne.s32.totalorder %s144, %s145
    %p157 = scmp.eq.s32.totalorder %s25, 1
    %p158 = por %p156, %p157
    %p160 = scmp.ne.s32.totalorder %s145, %s159
    %p161 = scmp.eq.s32.totalorder %s25, 0
    %p162 = por %p160, %p161
    %s164 = sadd.s32 %s163, 1
    %p167 = scmp.eq.s32.totalorder %s19, 1
    %p168 = scmp.ne.s32.totalorder %s163, %s165
    %p169 = scmp.eq.s32.totalorder %s19, 0
    %p170 = por %p168, %p169
    %p171 = scmp.ne.s32.totalorder %s163, %s165
    %p172 = scmp.eq.s32.totalorder %s24, 1
    %p173 = por %p171, %p172
    %p174 = scmp.ne.s32.totalorder %s165, %s166
    %p175 = scmp.eq.s32.totalorder %s24, 0
    %p176 = por %p174, %p175
    %p177 = scmp.ne.s32.totalorder %s165, %s166
    %p178 = scmp.eq.s32.totalorder %s25, 1
    %p179 = por %p177, %p178
    %p181 = scmp.ne.s32.totalorder %s166, %s180
    %p182 = scmp.eq.s32.totalorder %s25, 0
    %p183 = por %p181, %p182
    %s185 = sadd.s32 %s184, 1
    %p188 = scmp.eq.s32.totalorder %s19, 1
    %p189 = scmp.ne.s32.totalorder %s184, %s186
    %p190 = scmp.eq.s32.totalorder %s19, 0
    %p191 = por %p189, %p190
    %p192 = scmp.ne.s32.totalorder %s184, %s186
    %p193 = scmp.eq.s32.totalorder %s24, 1
    %p194 = por %p192, %p193
    %p195 = scmp.ne.s32.totalorder %s186, %s187
    %p196 = scmp.eq.s32.totalorder %s24, 0
    %p197 = por %p195, %p196
    %p198 = scmp.ne.s32.totalorder %s186, %s187
    %p199 = scmp.eq.s32.totalorder %s25, 1
    %p200 = por %p198, %p199
    %p202 = scmp.ne.s32.totalorder %s187, %s201
    %p203 = scmp.eq.s32.totalorder %s25, 0
    %p204 = por %p202, %p203
    %s206 = sadd.s32 %s205, 1
    %p209 = scmp.eq.s32.totalorder %s19, 1
    %p210 = scmp.ne.s32.totalorder %s205, %s207
    %p211 = scmp.eq.s32.totalorder %s19, 0
    %p212 = por %p210, %p211
    %p213 = scmp.ne.s32.totalorder %s205, %s207
    %p214 = scmp.eq.s32.totalorder %s24, 1
    %p215 = por %p213, %p214
    %p216 = scmp.ne.s32.totalorder %s207, %s208
    %p217 = scmp.eq.s32.totalorder %s24, 0
    %p218 = por %p216, %p217
    %p219 = scmp.ne.s32.totalorder %s207, %s208
    %p220 = scmp.eq.s32.totalorder %s25, 1
    %p221 = por %p219, %p220
    %p223 = scmp.ne.s32.totalorder %s208, %s222
    %p224 = scmp.eq.s32.totalorder %s25, 0
    %p225 = por %p223, %p224
    %s227 = sadd.s32 %s226, 1
    %p230 = scmp.eq.s32.totalorder %s19, 1
    %p231 = scmp.ne.s32.totalorder %s226, %s228
    %p232 = scmp.eq.s32.totalorder %s19, 0
    %p233 = por %p231, %p232
    %p234 = scmp.ne.s32.totalorder %s226, %s228
    %p235 = scmp.eq.s32.totalorder %s24, 1
    %p236 = por %p234, %p235
    %p237 = scmp.ne.s32.totalorder %s228, %s229
    %p238 = scmp.eq.s32.totalorder %s24, 0
    %p239 = por %p237, %p238
    %p240 = scmp.ne.s32.totalorder %s228, %s229
    %p241 = scmp.eq.s32.totalorder %s25, 1
    %p242 = por %p240, %p241
    %p244 = scmp.ne.s32.totalorder %s229, %s243
    %p245 = scmp.eq.s32.totalorder %s25, 0
    %p246 = por %p244, %p245
    %s248 = sadd.s32 %s247, 1
    %p251 = scmp.eq.s32.totalorder %s19, 1
    %p252 = scmp.ne.s32.totalorder %s247, %s249
    %p253 = scmp.eq.s32.totalorder %s19, 0
    %p254 = por %p252, %p253
    %p255 = scmp.ne.s32.totalorder %s247, %s249
    %p256 = scmp.eq.s32.totalorder %s24, 1
    %p257 = por %p255, %p256
    %p258 = scmp.ne.s32.totalorder %s249, %s250
    %p259 = scmp.eq.s32.totalorder %s24, 0
    %p260 = por %p258, %p259
    %p261 = scmp.ne.s32.totalorder %s249, %s250
    %p262 = scmp.eq.s32.totalorder %s25, 1
    %p263 = por %p261, %p262
    %p265 = scmp.ne.s32.totalorder %s250, %s264
    %p266 = scmp.eq.s32.totalorder %s25, 0
    %p267 = por %p265, %p266
    %s269 = sadd.s32 %s268, 1
    %p272 = scmp.eq.s32.totalorder %s19, 1
    %p273 = scmp.ne.s32.totalorder %s268, %s270
    %p274 = scmp.eq.s32.totalorder %s19, 0
    %p275 = por %p273, %p274
    %p276 = scmp.ne.s32.totalorder %s268, %s270
    %p277 = scmp.eq.s32.totalorder %s24, 1
    %p278 = por %p276, %p277
    %p279 = scmp.ne.s32.totalorder %s270, %s271
    %p280 = scmp.eq.s32.totalorder %s24, 0
    %p281 = por %p279, %p280
    %p282 = scmp.ne.s32.totalorder %s270, %s271
    %p283 = scmp.eq.s32.totalorder %s25, 1
    %p284 = por %p282, %p283
    %p286 = scmp.ne.s32.totalorder %s271, %s285
    %p287 = scmp.eq.s32.totalorder %s25, 0
    %p288 = por %p286, %p287
    %s290 = sadd.s32 %s289, 1
    %p293 = scmp.eq.s32.totalorder %s19, 1
    %p294 = scmp.ne.s32.totalorder %s289, %s291
    %p295 = scmp.eq.s32.totalorder %s19, 0
    %p296 = por %p294, %p295
    %p297 = scmp.ne.s32.totalorder %s289, %s291
    %p298 = scmp.eq.s32.totalorder %s24, 1
    %p299 = por %p297, %p298
    %p300 = scmp.ne.s32.totalorder %s291, %s292
    %p301 = scmp.eq.s32.totalorder %s24, 0
    %p302 = por %p300, %p301
    %p303 = scmp.ne.s32.totalorder %s291, %s292
    %p304 = scmp.eq.s32.totalorder %s25, 1
    %p305 = por %p303, %p304
    %p307 = scmp.ne.s32.totalorder %s292, %s306
    %p308 = scmp.eq.s32.totalorder %s25, 0
    %p309 = por %p307, %p308
    %s310 = ssub.s32 %s19, %s26
    %p311 = scmp.eq.s32.totalorder %s310, 0
    %s313 = sadd.s32 %s312, 1
    %s314 = scalar_select %p311, %s312, %s313
    %p317 = pneg %p311
    %p318 = scmp.eq.s32.totalorder %s19, 1
    %p319 = por %p317, %p318
    %p320 = scmp.ne.s32.totalorder %s312, %s315
    %p321 = scmp.eq.s32.totalorder %s19, 0
    %p322 = por %p320, %p321
    %p323 = scmp.ne.s32.totalorder %s312, %s315
    %p324 = scmp.eq.s32.totalorder %s24, 1
    %p325 = por %p323, %p324
    %p326 = scmp.ne.s32.totalorder %s315, %s316
    %p327 = scmp.eq.s32.totalorder %s24, 0
    %p328 = por %p326, %p327
    %p329 = scmp.ne.s32.totalorder %s315, %s316
    %p330 = scmp.eq.s32.totalorder %s25, 1
    %p331 = por %p329, %p330
    %p333 = scmp.ne.s32.totalorder %s316, %s332
    %p334 = scmp.eq.s32.totalorder %s25, 0
    %p335 = por %p333, %p334
    %p336 = scmp.le.s32.totalorder 1, %s19
    %p337 = scmp.lt.s32.totalorder %s19, 3
    %p338 = pnand %p336, %p337
    %p339 = pneg %p338
    // Predicated region
    $region9: #{transformer_forward.13} parent=5 // pred_check
      _
    $region10: #{transformer_forward.13} parent=5 // pred_check_branch
      %341 = sbr.rel (%p338) target = $region12
    $region11: #{transformer_forward.13} parent=5 // pred_region
      %s342 = ssub.s32 %s19, 1
      // Predicated region
      $region13: #{transformer_forward.13} parent=11 // pred_check
        %p343 = pneg %p66
      $region14: #{transformer_forward.13} parent=11 // pred_check_branch
        %345 = sbr.rel (%p343) target = $region16
      $region15: #{transformer_forward.13} parent=11 // pred_region
        _
      $region16: #{transformer_forward.13} parent=11 // pred_fallthru
        _
      // Predicated region
      $region17: #{transformer_forward.13} parent=11 // pred_check
        %p346 = pneg %p113
      $region18: #{transformer_forward.13} parent=11 // pred_check_branch
        %348 = sbr.rel (%p346) target = $region20
      $region19: #{transformer_forward.13} parent=11 // pred_region
        _
      $region20: #{transformer_forward.13} parent=11 // pred_fallthru
        _
      // Predicated region
      $region21: #{transformer_forward.13} parent=11 // pred_check
        %p349 = pneg %p134
      $region22: #{transformer_forward.13} parent=11 // pred_check_branch
        %351 = sbr.rel (%p349) target = $region24
      $region23: #{transformer_forward.13} parent=11 // pred_region
        _
      $region24: #{transformer_forward.13} parent=11 // pred_fallthru
        _
      // Predicated region
      $region25: #{transformer_forward.13} parent=11 // pred_check
        %p352 = pneg %p155
      $region26: #{transformer_forward.13} parent=11 // pred_check_branch
        %354 = sbr.rel (%p352) target = $region28
      $region27: #{transformer_forward.13} parent=11 // pred_region
        _
      $region28: #{transformer_forward.13} parent=11 // pred_fallthru
        _
      // Predicated region
      $region29: #{transformer_forward.13} parent=11 // pred_check
        %p355 = pneg %p176
      $region30: #{transformer_forward.13} parent=11 // pred_check_branch
        %357 = sbr.rel (%p355) target = $region32
      $region31: #{transformer_forward.13} parent=11 // pred_region
        _
      $region32: #{transformer_forward.13} parent=11 // pred_fallthru
        _
      // Predicated region
      $region33: #{transformer_forward.13} parent=11 // pred_check
        %p358 = pneg %p197
      $region34: #{transformer_forward.13} parent=11 // pred_check_branch
        %360 = sbr.rel (%p358) target = $region36
      $region35: #{transformer_forward.13} parent=11 // pred_region
        _
      $region36: #{transformer_forward.13} parent=11 // pred_fallthru
        _
      // Predicated region
      $region37: #{transformer_forward.13} parent=11 // pred_check
        %p361 = pneg %p218
      $region38: #{transformer_forward.13} parent=11 // pred_check_branch
        %363 = sbr.rel (%p361) target = $region40
      $region39: #{transformer_forward.13} parent=11 // pred_region
        _
      $region40: #{transformer_forward.13} parent=11 // pred_fallthru
        _
      // Predicated region
      $region41: #{transformer_forward.13} parent=11 // pred_check
        %p364 = pneg %p239
      $region42: #{transformer_forward.13} parent=11 // pred_check_branch
        %366 = sbr.rel (%p364) target = $region44
      $region43: #{transformer_forward.13} parent=11 // pred_region
        _
      $region44: #{transformer_forward.13} parent=11 // pred_fallthru
        _
      // Predicated region
      $region45: #{transformer_forward.13} parent=11 // pred_check
        %p367 = pneg %p260
      $region46: #{transformer_forward.13} parent=11 // pred_check_branch
        %369 = sbr.rel (%p367) target = $region48
      $region47: #{transformer_forward.13} parent=11 // pred_region
        _
      $region48: #{transformer_forward.13} parent=11 // pred_fallthru
        _
      // Predicated region
      $region49: #{transformer_forward.13} parent=11 // pred_check
        %p370 = pneg %p281
      $region50: #{transformer_forward.13} parent=11 // pred_check_branch
        %372 = sbr.rel (%p370) target = $region52
      $region51: #{transformer_forward.13} parent=11 // pred_region
        _
      $region52: #{transformer_forward.13} parent=11 // pred_fallthru
        _
      // Predicated region
      $region53: #{transformer_forward.13} parent=11 // pred_check
        %p373 = pneg %p302
      $region54: #{transformer_forward.13} parent=11 // pred_check_branch
        %375 = sbr.rel (%p373) target = $region56
      $region55: #{transformer_forward.13} parent=11 // pred_region
        _
      $region56: #{transformer_forward.13} parent=11 // pred_fallthru
        _
    $region12: #{transformer_forward.13} parent=5 // pred_fallthru
      _
    %p376 = scmp.lt.s32.totalorder %s19, 2
    // Predicated region
    $region57: #{transformer_forward.13} parent=5 // pred_check
      %p377 = pneg %p376
    $region58: #{transformer_forward.13} parent=5 // pred_check_branch
      %379 = sbr.rel (%p377) target = $region60
    $region59: #{transformer_forward.13} parent=5 // pred_region
      // Predicated region
      $region61: #{transformer_forward.13} parent=59 // pred_check
        %p380 = pneg %p39
      $region62: #{transformer_forward.13} parent=59 // pred_check_branch
        %382 = sbr.rel (%p380) target = $region64
      $region63: #{transformer_forward.13} parent=59 // pred_region
        %p383 = scmp.lt.s32.totalorder %s19, 1
        %s384 = scalar_select %p383, %s19, 1
        %s385 = smul.addr %s384, 4
        %s386 = scalar_lea.vmem %s0, %s385
      $region64: #{transformer_forward.13} parent=59 // pred_fallthru
        _
      // Predicated region
      $region65: #{transformer_forward.13} parent=59 // pred_check
        %p387 = pneg %p86
      $region66: #{transformer_forward.13} parent=59 // pred_check_branch
        %389 = sbr.rel (%p387) target = $region68
      $region67: #{transformer_forward.13} parent=59 // pred_region
        %p390 = scmp.lt.s32.totalorder %s19, 1
        %s391 = scalar_select %p390, %s19, 1
        %s392 = scalar_lea.vmem %s2, %s391
      $region68: #{transformer_forward.13} parent=59 // pred_fallthru
        _
    $region60: #{transformer_forward.13} parent=5 // pred_fallthru
      _
    %p393 = scmp.le.s32.totalorder 1, %s19
    %p394 = scmp.lt.s32.totalorder %s19, 3
    %p395 = pnand %p393, %p394
    %p396 = pneg %p395
    // Predicated region
    $region69: #{transformer_forward.13} parent=5 // pred_check
      _
    $region70: #{transformer_forward.13} parent=5 // pred_check_branch
      %398 = sbr.rel (%p395) target = $region72
    $region71: #{transformer_forward.13} parent=5 // pred_region
      %s399 = ssub.s32 %s19, 1
      %p400 = scmp.lt.s32.totalorder %s24, 1
      %s401 = scalar_select %p400, %s24, 1
      %s402 = smul.addr %s401, 4
      %s403 = scalar_lea.vmem %s0, %s402
      %p404 = pneg %p45
      %p405 = pneg %p42
      %p406 = pneg %p66
      %p407 = pneg %p63
      %p408 = scmp.lt.s32.totalorder %s24, 1
      %s409 = scalar_select %p408, %s24, 1
      %s410 = scalar_lea.vmem %s2, %s409
      %p411 = pneg %p92
      %p412 = pneg %p89
      %p413 = pneg %p113
      %p414 = pneg %p110
      %p415 = pneg %p134
      %p416 = pneg %p131
      %p417 = pneg %p155
      %p418 = pneg %p152
      %p419 = pneg %p176
      %p420 = pneg %p173
      %p421 = pneg %p197
      %p422 = pneg %p194
      %p423 = pneg %p218
      %p424 = pneg %p215
      %p425 = pneg %p239
      %p426 = pneg %p236
      %p427 = pneg %p260
      %p428 = pneg %p257
      %p429 = pneg %p281
      %p430 = pneg %p278
      %p431 = pneg %p302
      %p432 = pneg %p299
      %p433 = pneg %p328
      %p434 = pneg %p325
      %p435 = scmp.lt.s32.totalorder %s24, 1
      %s436 = scalar_select %p435, %s24, 1
      %s437 = smul.addr %s436, 4
      %s438 = scalar_lea.vmem %s13, %s437
      %p439 = scmp.lt.s32.totalorder %s24, 1
      %s440 = scalar_select %p439, %s24, 1
      %s441 = smul.addr %s440, 4
      %s442 = scalar_lea.vmem %s0, %s441
      %p443 = scmp.lt.s32.totalorder %s24, 1
      %s444 = scalar_select %p443, %s24, 1
      %s445 = scalar_lea.vmem %s2, %s444
      %p446 = scmp.lt.s32.totalorder %s24, 1
      %s447 = scalar_select %p446, %s24, 1
      %s448 = smul.addr %s447, 4
      %s449 = scalar_lea.vmem %s13, %s448
      %v451 = vld [vmem:[%s442] sm:$0xf]
      %v452 = vld [vmem:[%s1] sm:$0xff]
      %v453 = vld [vmem:[%s445] sm:$0x1]
      %v454 = vld [vmem:[%s3] sm:$0xf]
      %v455 = vld [vmem:[%s3 + $0x4] sm:$0xf]
      %v456 = vld [vmem:[%s3 + $0x8] sm:$0xf]
      %v457 = vld [vmem:[%s3 + $0xc] sm:$0xf]
      %v458 = vld [vmem:[%s3 + $0x10] sm:$0xf]
      %v459 = vld [vmem:[%s3 + $0x14] sm:$0xf]
      %v460 = vld [vmem:[%s3 + $0x18] sm:$0xf]
      %v461 = vld [vmem:[%s3 + $0x1c] sm:$0xf]
      %v462 = vld [vmem:[%s3 + $0x20] sm:$0xf]
      %v463 = vld [vmem:[%s3 + $0x24] sm:$0xf]
      %v464 = vld [vmem:[%s3 + $0x28] sm:$0xf]
      %v465 = vld [vmem:[%s3 + $0x2c] sm:$0xf]
      %v466 = vld [vmem:[%s3 + $0x30] sm:$0xf]
      %v467 = vld [vmem:[%s3 + $0x34] sm:$0xf]
      %v468 = vld [vmem:[%s3 + $0x38] sm:$0xf]
      %v469 = vld [vmem:[%s3 + $0x3c] sm:$0xf]
      %v470 = vld [vmem:[%s3 + $0x40] sm:$0xf]
      %v471 = vld [vmem:[%s3 + $0x44] sm:$0xf]
      %v472 = vld [vmem:[%s3 + $0x48] sm:$0xf]
      %v473 = vld [vmem:[%s3 + $0x4c] sm:$0xf]
      %v474 = vld [vmem:[%s3 + $0x50] sm:$0xf]
      %v475 = vld [vmem:[%s3 + $0x54] sm:$0xf]
      %v476 = vld [vmem:[%s3 + $0x58] sm:$0xf]
      %v477 = vld [vmem:[%s3 + $0x5c] sm:$0xf]
      %v478 = vld [vmem:[%s3 + $0x60] sm:$0xf]
      %v479 = vld [vmem:[%s3 + $0x64] sm:$0xf]
      %v480 = vld [vmem:[%s3 + $0x68] sm:$0xf]
      %v481 = vld [vmem:[%s3 + $0x6c] sm:$0xf]
      %v482 = vld [vmem:[%s3 + $0x70] sm:$0xf]
      %v483 = vld [vmem:[%s3 + $0x74] sm:$0xf]
      %v484 = vld [vmem:[%s3 + $0x78] sm:$0xf]
      %v485 = vld [vmem:[%s3 + $0x7c] sm:$0xf]
      %v486 = vld [vmem:[%s3 + $0x80] sm:$0xf]
      %v487 = vld [vmem:[%s3 + $0x84] sm:$0xf]
      %v488 = vld [vmem:[%s3 + $0x88] sm:$0xf]
      %v489 = vld [vmem:[%s3 + $0x8c] sm:$0xf]
      %v490 = vld [vmem:[%s3 + $0x90] sm:$0xf]
      %v491 = vld [vmem:[%s3 + $0x94] sm:$0xf]
      %v492 = vld [vmem:[%s3 + $0x98] sm:$0xf]
      %v493 = vld [vmem:[%s3 + $0x9c] sm:$0xf]
      %v494 = vld [vmem:[%s3 + $0xa0] sm:$0xf]
      %v495 = vld [vmem:[%s3 + $0xa4] sm:$0xf]
      %v496 = vld [vmem:[%s3 + $0xa8] sm:$0xf]
      %v497 = vld [vmem:[%s3 + $0xac] sm:$0xf]
      %v498 = vld [vmem:[%s3 + $0xb0] sm:$0xf]
      %v499 = vld [vmem:[%s3 + $0xb4] sm:$0xf]
      %v500 = vld [vmem:[%s3 + $0xb8] sm:$0xf]
      %v501 = vld [vmem:[%s3 + $0xbc] sm:$0xf]
      %v502 = vld [vmem:[%s3 + $0xc0] sm:$0xf]
      %v503 = vld [vmem:[%s3 + $0xc4] sm:$0xf]
      %v504 = vld [vmem:[%s3 + $0xc8] sm:$0xf]
      %v505 = vld [vmem:[%s3 + $0xcc] sm:$0xf]
      %v506 = vld [vmem:[%s3 + $0xd0] sm:$0xf]
      %v507 = vld [vmem:[%s3 + $0xd4] sm:$0xf]
      %v508 = vld [vmem:[%s3 + $0xd8] sm:$0xf]
      %v509 = vld [vmem:[%s3 + $0xdc] sm:$0xf]
      %v510 = vld [vmem:[%s3 + $0xe0] sm:$0xf]
      %v511 = vld [vmem:[%s3 + $0xe4] sm:$0xf]
      %v512 = vld [vmem:[%s3 + $0xe8] sm:$0xf]
      %v513 = vld [vmem:[%s3 + $0xec] sm:$0xf]
      %v514 = vld [vmem:[%s3 + $0xf0] sm:$0xf]
      %v515 = vld [vmem:[%s3 + $0xf4] sm:$0xf]
      %v516 = vld [vmem:[%s3 + $0xf8] sm:$0xf]
      %v517 = vld [vmem:[%s3 + $0xfc] sm:$0xf]
      %v518 = vld [vmem:[%s4] sm:$0x1]
      %v519 = vld [vmem:[%s4 + $0x1] sm:$0x1]
      %v520 = vld [vmem:[%s4 + $0x2] sm:$0x1]
      %v521 = vld [vmem:[%s4 + $0x3] sm:$0x1]
      %v526 = vlaneseq
      %v527 = vshrl.u32 %v526, 7
      %v528 = vsub.s32 0, %v527
      %v529 = vrot.slane %v518, %v528
      %v530 = vlaneseq
      %v531 = vshrl.u32 %v530, 7
      %v532 = vsub.s32 0, %v531
      %v533 = vrot.slane %v519, %v532
      %v534 = vlaneseq
      %v535 = vshrl.u32 %v534, 7
      %v536 = vsub.s32 0, %v535
      %v537 = vrot.slane %v520, %v536
      %v538 = vlaneseq
      %v539 = vshrl.u32 %v538, 7
      %v540 = vsub.s32 0, %v539
      %v541 = vrot.slane %v521, %v540
      %v562 = vunpack.c.l.b16 %v454
      %v563 = vunpack.c.l.b16 %v455
      %v564 = vunpack.c.l.b16 %v456
      %v565 = vunpack.c.l.b16 %v457
      %v566 = vunpack.c.l.b16 %v458
      %v567 = vunpack.c.l.b16 %v459
      %v568 = vunpack.c.l.b16 %v460
      %v569 = vunpack.c.l.b16 %v461
      %v570 = vunpack.c.l.b16 %v462
      %v571 = vunpack.c.l.b16 %v463
      %v572 = vunpack.c.l.b16 %v464
      %v573 = vunpack.c.l.b16 %v465
      %v574 = vunpack.c.l.b16 %v466
      %v575 = vunpack.c.l.b16 %v467
      %v576 = vunpack.c.l.b16 %v468
      %v577 = vunpack.c.l.b16 %v469
      %v578 = vpack.c.b16 %v563, %v562
      %v579 = vpack.c.b16 %v565, %v564
      %v580 = vpack.c.b16 %v567, %v566
      %v581 = vpack.c.b16 %v569, %v568
      %v582 = vpack.c.b16 %v571, %v570
      %v583 = vpack.c.b16 %v573, %v572
      %v584 = vpack.c.b16 %v575, %v574
      %v585 = vpack.c.b16 %v577, %v576
      %594 = vmatprep.subr.bf16.mxu0 0
      %595 = vmatpush1.bf16.msra.mxu0 %v578
      %596 = vmatprep.subr.bf16.mxu0 0
      %597 = vmatpush1.bf16.msra.mxu0 %v579
      %598 = vmatprep.subr.bf16.mxu0 0
      %599 = vmatpush1.bf16.msra.mxu0 %v580
      %600 = vmatprep.subr.bf16.mxu0 0
      %601 = vmatpush1.bf16.msra.mxu0 %v581
      %602 = vmatprep.subr.bf16.mxu0 0
      %603 = vmatpush1.bf16.msra.mxu0 %v582
      %604 = vmatprep.subr.bf16.mxu0 0
      %605 = vmatpush1.bf16.msra.mxu0 %v583
      %606 = vmatprep.subr.bf16.mxu0 0
      %607 = vmatpush1.bf16.msra.mxu0 %v584
      %608 = vmatprep.subr.bf16.mxu0 0
      %609 = vmatpush1.bf16.msra.mxu0 %v585
      %610 = vmatprep.subr.bf16.mxu0 0
      %611 = vmatpush1.bf16.msra.mxu0 0
      %612 = vmatprep.subr.bf16.mxu0 0
      %613 = vmatpush1.bf16.msra.mxu0 0
      %614 = vmatprep.subr.bf16.mxu0 0
      %615 = vmatpush1.bf16.msra.mxu0 0
      %616 = vmatprep.subr.bf16.mxu0 0
      %617 = vmatpush1.bf16.msra.mxu0 0
      %618 = vmatprep.subr.bf16.mxu0 0
      %619 = vmatpush1.bf16.msra.mxu0 0
      %620 = vmatprep.subr.bf16.mxu0 0
      %621 = vmatpush1.bf16.msra.mxu0 0
      %622 = vmatprep.subr.bf16.mxu0 0
      %623 = vmatpush1.bf16.msra.mxu0 0
      %624 = vmatprep.subr.bf16.mxu0 0
      %625 = vmatpush1.bf16.msra.mxu0 0
      %626 = vmatprep.mubr.bf16.mxu0 0
      %627 = vmatmul.mubr.bf16.gmra.mrb[0].mxu0 %v451
      %v628 = vpop.f32.mrb[0].mxu0
      %v629 = vadd.f32 %v529, %v628
      %v630 = vpop.f32.mrb[0].mxu0
      %v631 = vpop.f32.mrb[0].mxu0
      %v632 = vpop.f32.mrb[0].mxu0
      %633 = vdwg.mxu0
      %v650 = vunpack.c.l.b16 %v470
      %v651 = vunpack.c.l.b16 %v471
      %v652 = vunpack.c.l.b16 %v472
      %v653 = vunpack.c.l.b16 %v473
      %v654 = vunpack.c.l.b16 %v474
      %v655 = vunpack.c.l.b16 %v475
      %v656 = vunpack.c.l.b16 %v476
      %v657 = vunpack.c.l.b16 %v477
      %v658 = vunpack.c.l.b16 %v478
      %v659 = vunpack.c.l.b16 %v479
      %v660 = vunpack.c.l.b16 %v480
      %v661 = vunpack.c.l.b16 %v481
      %v662 = vunpack.c.l.b16 %v482
      %v663 = vunpack.c.l.b16 %v483
      %v664 = vunpack.c.l.b16 %v484
      %v665 = vunpack.c.l.b16 %v485
      %v666 = vpack.c.b16 %v651, %v650
      %v667 = vpack.c.b16 %v653, %v652
      %v668 = vpack.c.b16 %v655, %v654
      %v669 = vpack.c.b16 %v657, %v656
      %v670 = vpack.c.b16 %v659, %v658
      %v671 = vpack.c.b16 %v661, %v660
      %v672 = vpack.c.b16 %v663, %v662
      %v673 = vpack.c.b16 %v665, %v664
      %682 = vmatprep.subr.bf16.mxu0 0
      %683 = vmatpush1.bf16.msra.mxu0 %v666
      %684 = vmatprep.subr.bf16.mxu0 0
      %685 = vmatpush1.bf16.msra.mxu0 %v667
      %686 = vmatprep.subr.bf16.mxu0 0
      %687 = vmatpush1.bf16.msra.mxu0 %v668
      %688 = vmatprep.subr.bf16.mxu0 0
      %689 = vmatpush1.bf16.msra.mxu0 %v669
      %690 = vmatprep.subr.bf16.mxu0 0
      %691 = vmatpush1.bf16.msra.mxu0 %v670
      %692 = vmatprep.subr.bf16.mxu0 0
      %693 = vmatpush1.bf16.msra.mxu0 %v671
      %694 = vmatprep.subr.bf16.mxu0 0
      %695 = vmatpush1.bf16.msra.mxu0 %v672
      %696 = vmatprep.subr.bf16.mxu0 0
      %697 = vmatpush1.bf16.msra.mxu0 %v673
      %698 = vmatprep.subr.bf16.mxu0 0
      %699 = vmatpush1.bf16.msra.mxu0 0
      %700 = vmatprep.subr.bf16.mxu0 0
      %701 = vmatpush1.bf16.msra.mxu0 0
      %702 = vmatprep.subr.bf16.mxu0 0
      %703 = vmatpush1.bf16.msra.mxu0 0
      %704 = vmatprep.subr.bf16.mxu0 0
      %705 = vmatpush1.bf16.msra.mxu0 0
      %706 = vmatprep.subr.bf16.mxu0 0
      %707 = vmatpush1.bf16.msra.mxu0 0
      %708 = vmatprep.subr.bf16.mxu0 0
      %709 = vmatpush1.bf16.msra.mxu0 0
      %710 = vmatprep.subr.bf16.mxu0 0
      %711 = vmatpush1.bf16.msra.mxu0 0
      %712 = vmatprep.subr.bf16.mxu0 0
      %713 = vmatpush1.bf16.msra.mxu0 0
      %714 = vmatprep.mubr.bf16.mxu0 0
      %715 = vmatmul.mubr.bf16.gmra.mrb[0].mxu0 %v451
      %v716 = vpop.f32.mrb[0].mxu0
      %v717 = vadd.f32 %v533, %v716
      %v718 = vpop.f32.mrb[0].mxu0
      %v719 = vpop.f32.mrb[0].mxu0
      %v720 = vpop.f32.mrb[0].mxu0
      %721 = vdwg.mxu0
      %v738 = vunpack.c.l.b16 %v486
      %v739 = vunpack.c.l.b16 %v487
      %v740 = vunpack.c.l.b16 %v488
      %v741 = vunpack.c.l.b16 %v489
      %v742 = vunpack.c.l.b16 %v490
      %v743 = vunpack.c.l.b16 %v491
      %v744 = vunpack.c.l.b16 %v492
      %v745 = vunpack.c.l.b16 %v493
      %v746 = vunpack.c.l.b16 %v494
      %v747 = vunpack.c.l.b16 %v495
      %v748 = vunpack.c.l.b16 %v496
      %v749 = vunpack.c.l.b16 %v497
      %v750 = vunpack.c.l.b16 %v498
      %v751 = vunpack.c.l.b16 %v499
      %v752 = vunpack.c.l.b16 %v500
      %v753 = vunpack.c.l.b16 %v501
      %v754 = vpack.c.b16 %v739, %v738
      %v755 = vpack.c.b16 %v741, %v740
      %v756 = vpack.c.b16 %v743, %v742
      %v757 = vpack.c.b16 %v745, %v744
      %v758 = vpack.c.b16 %v747, %v746
      %v759 = vpack.c.b16 %v749, %v748
      %v760 = vpack.c.b16 %v751, %v750
      %v761 = vpack.c.b16 %v753, %v752
      %770 = vmatprep.subr.bf16.mxu0 0
      %771 = vmatpush1.bf16.msra.mxu0 %v754
      %772 = vmatprep.subr.bf16.mxu0 0
      %773 = vmatpush1.bf16.msra.mxu0 %v755
      %774 = vmatprep.subr.bf16.mxu0 0
      %775 = vmatpush1.bf16.msra.mxu0 %v756
      %776 = vmatprep.subr.bf16.mxu0 0
      %777 = vmatpush1.bf16.msra.mxu0 %v757
      %778 = vmatprep.subr.bf16.mxu0 0
      %779 = vmatpush1.bf16.msra.mxu0 %v758
      %780 = vmatprep.subr.bf16.mxu0 0
      %781 = vmatpush1.bf16.msra.mxu0 %v759
      %782 = vmatprep.subr.bf16.mxu0 0
      %783 = vmatpush1.bf16.msra.mxu0 %v760
      %784 = vmatprep.subr.bf16.mxu0 0
      %785 = vmatpush1.bf16.msra.mxu0 %v761
      %786 = vmatprep.subr.bf16.mxu0 0
      %787 = vmatpush1.bf16.msra.mxu0 0
      %788 = vmatprep.subr.bf16.mxu0 0
      %789 = vmatpush1.bf16.msra.mxu0 0
      %790 = vmatprep.subr.bf16.mxu0 0
      %791 = vmatpush1.bf16.msra.mxu0 0
      %792 = vmatprep.subr.bf16.mxu0 0
      %793 = vmatpush1.bf16.msra.mxu0 0
      %794 = vmatprep.subr.bf16.mxu0 0
      %795 = vmatpush1.bf16.msra.mxu0 0
      %796 = vmatprep.subr.bf16.mxu0 0
      %797 = vmatpush1.bf16.msra.mxu0 0
      %798 = vmatprep.subr.bf16.mxu0 0
      %799 = vmatpush1.bf16.msra.mxu0 0
      %800 = vmatprep.subr.bf16.mxu0 0
      %801 = vmatpush1.bf16.msra.mxu0 0
      %802 = vmatprep.mubr.bf16.mxu0 0
      %803 = vmatmul.mubr.bf16.gmra.mrb[0].mxu0 %v451
      %v804 = vpop.f32.mrb[0].mxu0
      %v805 = vadd.f32 %v537, %v804
      %v806 = vpop.f32.mrb[0].mxu0
      %v807 = vpop.f32.mrb[0].mxu0
      %v808 = vpop.f32.mrb[0].mxu0
      %809 = vdwg.mxu0
      %v826 = vunpack.c.l.b16 %v502
      %v827 = vunpack.c.l.b16 %v503
      %v828 = vunpack.c.l.b16 %v504
      %v829 = vunpack.c.l.b16 %v505
      %v830 = vunpack.c.l.b16 %v506
      %v831 = vunpack.c.l.b16 %v507
      %v832 = vunpack.c.l.b16 %v508
      %v833 = vunpack.c.l.b16 %v509
      %v834 = vunpack.c.l.b16 %v510
      %v835 = vunpack.c.l.b16 %v511
      %v836 = vunpack.c.l.b16 %v512
      %v837 = vunpack.c.l.b16 %v513
      %v838 = vunpack.c.l.b16 %v514
      %v839 = vunpack.c.l.b16 %v515
      %v840 = vunpack.c.l.b16 %v516
      %v841 = vunpack.c.l.b16 %v517
      %v842 = vpack.c.b16 %v827, %v826
      %v843 = vpack.c.b16 %v829, %v828
      %v844 = vpack.c.b16 %v831, %v830
      %v845 = vpack.c.b16 %v833, %v832
      %v846 = vpack.c.b16 %v835, %v834
      %v847 = vpack.c.b16 %v837, %v836
      %v848 = vpack.c.b16 %v839, %v838
      %v849 = vpack.c.b16 %v841, %v840
      %858 = vmatprep.subr.bf16.mxu0 0
      %859 = vmatpush1.bf16.msra.mxu0 %v842
      %860 = vmatprep.subr.bf16.mxu0 0
      %861 = vmatpush1.bf16.msra.mxu0 %v843
      %862 = vmatprep.subr.bf16.mxu0 0
      %863 = vmatpush1.bf16.msra.mxu0 %v844
      %864 = vmatprep.subr.bf16.mxu0 0
      %865 = vmatpush1.bf16.msra.mxu0 %v845
      %866 = vmatprep.subr.bf16.mxu0 0
      %867 = vmatpush1.bf16.msra.mxu0 %v846
      %868 = vmatprep.subr.bf16.mxu0 0
      %869 = vmatpush1.bf16.msra.mxu0 %v847
      %870 = vmatprep.subr.bf16.mxu0 0
      %871 = vmatpush1.bf16.msra.mxu0 %v848
      %872 = vmatprep.subr.bf16.mxu0 0
      %873 = vmatpush1.bf16.msra.mxu0 %v849
      %874 = vmatprep.subr.bf16.mxu0 0
      %875 = vmatpush1.bf16.msra.mxu0 0
      %876 = vmatprep.subr.bf16.mxu0 0
      %877 = vmatpush1.bf16.msra.mxu0 0
      %878 = vmatprep.subr.bf16.mxu0 0
      %879 = vmatpush1.bf16.msra.mxu0 0
      %880 = vmatprep.subr.bf16.mxu0 0
      %881 = vmatpush1.bf16.msra.mxu0 0
      %882 = vmatprep.subr.bf16.mxu0 0
      %883 = vmatpush1.bf16.msra.mxu0 0
      %884 = vmatprep.subr.bf16.mxu0 0
      %885 = vmatpush1.bf16.msra.mxu0 0
      %886 = vmatprep.subr.bf16.mxu0 0
      %887 = vmatpush1.bf16.msra.mxu0 0
      %888 = vmatprep.subr.bf16.mxu0 0
      %889 = vmatpush1.bf16.msra.mxu0 0
      %890 = vmatprep.mubr.bf16.mxu0 0
      %891 = vmatmul.mubr.bf16.gmra.mrb[0].mxu0 %v451
      %v892 = vpop.f32.mrb[0].mxu0
      %v893 = vadd.f32 %v541, %v892
      %v894 = vpop.f32.mrb[0].mxu0
      %v895 = vpop.f32.mrb[0].mxu0
      %v896 = vpop.f32.mrb[0].mxu0
      %897 = vdwg.mxu0
      %v898 = vmul.f32 %v629, 0.17677669
      %v899 = vmul.f32 %v717, 0.17677669
      %v900 = vmul.f32 %v805, 0.17677669
      %v901 = vmul.f32 %v893, 0.17677669
      %v902 = vld [vmem:[%s5] sm:$0xf]
      %v903 = vld [vmem:[%s5 + $0x4] sm:$0xf]
      %v904 = vld [vmem:[%s5 + $0x8] sm:$0xf]
      %v905 = vld [vmem:[%s5 + $0xc] sm:$0xf]
      %v906 = vld [vmem:[%s5 + $0x10] sm:$0xf]
      %v907 = vld [vmem:[%s5 + $0x14] sm:$0xf]
      %v908 = vld [vmem:[%s5 + $0x18] sm:$0xf]
      %v909 = vld [vmem:[%s5 + $0x1c] sm:$0xf]
      %v910 = vld [vmem:[%s5 + $0x20] sm:$0xf]
      %v911 = vld [vmem:[%s5 + $0x24] sm:$0xf]
      %v912 = vld [vmem:[%s5 + $0x28] sm:$0xf]
      %v913 = vld [vmem:[%s5 + $0x2c] sm:$0xf]
      %v914 = vld [vmem:[%s5 + $0x30] sm:$0xf]
      %v915 = vld [vmem:[%s5 + $0x34] sm:$0xf]
      %v916 = vld [vmem:[%s5 + $0x38] sm:$0xf]
      %v917 = vld [vmem:[%s5 + $0x3c] sm:$0xf]
      %v918 = vld [vmem:[%s5 + $0x40] sm:$0xf]
      %v919 = vld [vmem:[%s5 + $0x44] sm:$0xf]
      %v920 = vld [vmem:[%s5 + $0x48] sm:$0xf]
      %v921 = vld [vmem:[%s5 + $0x4c] sm:$0xf]
      %v922 = vld [vmem:[%s5 + $0x50] sm:$0xf]
      %v923 = vld [vmem:[%s5 + $0x54] sm:$0xf]
      %v924 = vld [vmem:[%s5 + $0x58] sm:$0xf]
      %v925 = vld [vmem:[%s5 + $0x5c] sm:$0xf]
      %v926 = vld [vmem:[%s5 + $0x60] sm:$0xf]
      %v927 = vld [vmem:[%s5 + $0x64] sm:$0xf]
      %v928 = vld [vmem:[%s5 + $0x68] sm:$0xf]
      %v929 = vld [vmem:[%s5 + $0x6c] sm:$0xf]
      %v930 = vld [vmem:[%s5 + $0x70] sm:$0xf]
      %v931 = vld [vmem:[%s5 + $0x74] sm:$0xf]
      %v932 = vld [vmem:[%s5 + $0x78] sm:$0xf]
      %v933 = vld [vmem:[%s5 + $0x7c] sm:$0xf]
      %v934 = vld [vmem:[%s5 + $0x80] sm:$0xf]
      %v935 = vld [vmem:[%s5 + $0x84] sm:$0xf]
      %v936 = vld [vmem:[%s5 + $0x88] sm:$0xf]
      %v937 = vld [vmem:[%s5 + $0x8c] sm:$0xf]
      %v938 = vld [vmem:[%s5 + $0x90] sm:$0xf]
      %v939 = vld [vmem:[%s5 + $0x94] sm:$0xf]
      %v940 = vld [vmem:[%s5 + $0x98] sm:$0xf]
      %v941 = vld [vmem:[%s5 + $0x9c] sm:$0xf]
      %v942 = vld [vmem:[%s5 + $0xa0] sm:$0xf]
      %v943 = vld [vmem:[%s5 + $0xa4] sm:$0xf]
      %v944 = vld [vmem:[%s5 + $0xa8] sm:$0xf]
      %v945 = vld [vmem:[%s5 + $0xac] sm:$0xf]
      %v946 = vld [vmem:[%s5 + $0xb0] sm:$0xf]
      %v947 = vld [vmem:[%s5 + $0xb4] sm:$0xf]
      %v948 = vld [vmem:[%s5 + $0xb8] sm:$0xf]
      %v949 = vld [vmem:[%s5 + $0xbc] sm:$0xf]
      %v950 = vld [vmem:[%s5 + $0xc0] sm:$0xf]
      %v951 = vld [vmem:[%s5 + $0xc4] sm:$0xf]
      %v952 = vld [vmem:[%s5 + $0xc8] sm:$0xf]
      %v953 = vld [vmem:[%s5 + $0xcc] sm:$0xf]
      %v954 = vld [vmem:[%s5 + $0xd0] sm:$0xf]
      %v955 = vld [vmem:[%s5 + $0xd4] sm:$0xf]
      %v956 = vld [vmem:[%s5 + $0xd8] sm:$0xf]
      %v957 = vld [vmem:[%s5 + $0xdc] sm:$0xf]
      %v958 = vld [vmem:[%s5 + $0xe0] sm:$0xf]
      %v959 = vld [vmem:[%s5 + $0xe4] sm:$0xf]
      %v960 = vld [vmem:[%s5 + $0xe8] sm:$0xf]
      %v961 = vld [vmem:[%s5 + $0xec] sm:$0xf]
      %v962 = vld [vmem:[%s5 + $0xf0] sm:$0xf]
      %v963 = vld [vmem:[%s5 + $0xf4] sm:$0xf]
      %v964 = vld [vmem:[%s5 + $0xf8] sm:$0xf]
      %v965 = vld [vmem:[%s5 + $0xfc] sm:$0xf]
      %v966 = vld [vmem:[%s6] sm:$0x1]
      %v967 = vld [vmem:[%s6 + $0x1] sm:$0x1]
      %v968 = vld [vmem:[%s6 + $0x2] sm:$0x1]
      %v969 = vld [vmem:[%s6 + $0x3] sm:$0x1]
      %v974 = vlaneseq
      %v975 = vshrl.u32 %v974, 7
      %v976 = vsub.s32 0, %v975
      %v977 = vrot.slane %v966, %v976
      %v978 = vlaneseq
      %v979 = vshrl.u32 %v978, 7
      %v980 = vsub.s32 0, %v979
      %v981 = vrot.slane %v967, %v980
      %v982 = vlaneseq
      %v983 = vshrl.u32 %v982, 7
      %v984 = vsub.s32 0, %v983
      %v985 = vrot.slane %v968, %v984
      %v986 = vlaneseq
      %v987 = vshrl.u32 %v986, 7
      %v988 = vsub.s32 0, %v987
      %v989 = vrot.slane %v969, %v988
      %v1010 = vunpack.c.l.b16 %v902
      %v1011 = vunpack.c.l.b16 %v903
      %v1012 = vunpack.c.l.b16 %v904
      %v1013 = vunpack.c.l.b16 %v905
      %v1014 = vunpack.c.l.b16 %v906
      %v1015 = vunpack.c.l.b16 %v907
      %v1016 = vunpack.c.l.b16 %v908
      %v1017 = vunpack.c.l.b16 %v909
      %v1018 = vunpack.c.l.b16 %v910
      %v1019 = vunpack.c.l.b16 %v911
      %v1020 = vunpack.c.l.b16 %v912
      %v1021 = vunpack.c.l.b16 %v913
      %v1022 = vunpack.c.l.b16 %v914
      %v1023 = vunpack.c.l.b16 %v915
      %v1024 = vunpack.c.l.b16 %v916
      %v1025 = vunpack.c.l.b16 %v917
      %v1026 = vpack.c.b16 %v1011, %v1010
      %v1027 = vpack.c.b16 %v1013, %v1012
      %v1028 = vpack.c.b16 %v1015, %v1014
      %v1029 = vpack.c.b16 %v1017, %v1016
      %v1030 = vpack.c.b16 %v1019, %v1018
      %v1031 = vpack.c.b16 %v1021, %v1020
      %v1032 = vpack.c.b16 %v1023, %v1022
      %v1033 = vpack.c.b16 %v1025, %v1024
      %1042 = vmatprep.subr.bf16.mxu0 0
      %1043 = vmatpush1.bf16.msra.mxu0 %v1026
      %1044 = vmatprep.subr.bf16.mxu0 0
      %1045 = vmatpush1.bf16.msra.mxu0 %v1027
      %1046 = vmatprep.subr.bf16.mxu0 0
      %1047 = vmatpush1.bf16.msra.mxu0 %v1028
      %1048 = vmatprep.subr.bf16.mxu0 0
      %1049 = vmatpush1.bf16.msra.mxu0 %v1029
      %1050 = vmatprep.subr.bf16.mxu0 0
      %1051 = vmatpush1.bf16.msra.mxu0 %v1030
      %1052 = vmatprep.subr.bf16.mxu0 0
      %1053 = vmatpush1.bf16.msra.mxu0 %v1031
      %1054 = vmatprep.subr.bf16.mxu0 0
      %1055 = vmatpush1.bf16.msra.mxu0 %v1032
      %1056 = vmatprep.subr.bf16.mxu0 0
      %1057 = vmatpush1.bf16.msra.mxu0 %v1033
      %1058 = vmatprep.subr.bf16.mxu0 0
      %1059 = vmatpush1.bf16.msra.mxu0 0
      %1060 = vmatprep.subr.bf16.mxu0 0
      %1061 = vmatpush1.bf16.msra.mxu0 0
      %1062 = vmatprep.subr.bf16.mxu0 0
      %1063 = vmatpush1.bf16.msra.mxu0 0
      %1064 = vmatprep.subr.bf16.mxu0 0
      %1065 = vmatpush1.bf16.msra.mxu0 0
      %1066 = vmatprep.subr.bf16.mxu0 0
      %1067 = vmatpush1.bf16.msra.mxu0 0
      %1068 = vmatprep.subr.bf16.mxu0 0
      %1069 = vmatpush1.bf16.msra.mxu0 0
      %1070 = vmatprep.subr.bf16.mxu0 0
      %1071 = vmatpush1.bf16.msra.mxu0 0
      %1072 = vmatprep.subr.bf16.mxu0 0
      %1073 = vmatpush1.bf16.msra.mxu0 0
      %1074 = vmatprep.mubr.bf16.mxu0 0
      %1075 = vmatmul.mubr.bf16.gmra.mrb[0].mxu0 %v451
      %v1076 = vpop.f32.mrb[0].mxu0
      %v1077 = vadd.f32 %v977, %v1076
      %v1078 = vpop.f32.mrb[0].mxu0
      %v1079 = vpop.f32.mrb[0].mxu0
      %v1080 = vpop.f32.mrb[0].mxu0
      %1081 = vdwg.mxu0
      %v1098 = vunpack.c.l.b16 %v918
      %v1099 = vunpack.c.l.b16 %v919
      %v1100 = vunpack.c.l.b16 %v920
      %v1101 = vunpack.c.l.b16 %v921
      %v1102 = vunpack.c.l.b16 %v922
      %v1103 = vunpack.c.l.b16 %v923
      %v1104 = vunpack.c.l.b16 %v924
      %v1105 = vunpack.c.l.b16 %v925
      %v1106 = vunpack.c.l.b16 %v926
      %v1107 = vunpack.c.l.b16 %v927
      %v1108 = vunpack.c.l.b16 %v928
      %v1109 = vunpack.c.l.b16 %v929
      %v1110 = vunpack.c.l.b16 %v930
      %v1111 = vunpack.c.l.b16 %v931
      %v1112 = vunpack.c.l.b16 %v932
      %v1113 = vunpack.c.l.b16 %v933
      %v1114 = vpack.c.b16 %v1099, %v1098
      %v1115 = vpack.c.b16 %v1101, %v1100
      %v1116 = vpack.c.b16 %v1103, %v1102
      %v1117 = vpack.c.b16 %v1105, %v1104
      %v1118 = vpack.c.b16 %v1107, %v1106
      %v1119 = vpack.c.b16 %v1109, %v1108
      %v1120 = vpack.c.b16 %v1111, %v1110
      %v1121 = vpack.c.b16 %v1113, %v1112
      %1130 = vmatprep.subr.bf16.mxu0 0
      %1131 = vmatpush1.bf16.msra.mxu0 %v1114
      %1132 = vmatprep.subr.bf16.mxu0 0
      %1133 = vmatpush1.bf16.msra.mxu0 %v1115
      %1134 = vmatprep.subr.bf16.mxu0 0
      %1135 = vmatpush1.bf16.msra.mxu0 %v1116
      %1136 = vmatprep.subr.bf16.mxu0 0
      %1137 = vmatpush1.bf16.msra.mxu0 %v1117
      %1138 = vmatprep.subr.bf16.mxu0 0
      %1139 = vmatpush1.bf16.msra.mxu0 %v1118
      %1140 = vmatprep.subr.bf16.mxu0 0
      %1141 = vmatpush1.bf16.msra.mxu0 %v1119
      %1142 = vmatprep.subr.bf16.mxu0 0
      %1143 = vmatpush1.bf16.msra.mxu0 %v1120
      %1144 = vmatprep.subr.bf16.mxu0 0
      %1145 = vmatpush1.bf16.msra.mxu0 %v1121
      %1146 = vmatprep.subr.bf16.mxu0 0
      %1147 = vmatpush1.bf16.msra.mxu0 0
      %1148 = vmatprep.subr.bf16.mxu0 0
      %1149 = vmatpush1.bf16.msra.mxu0 0
      %1150 = vmatprep.subr.bf16.mxu0 0
      %1151 = vmatpush1.bf16.msra.mxu0 0
      %1152 = vmatprep.subr.bf16.mxu0 0
      %1153 = vmatpush1.bf16.msra.mxu0 0
      %1154 = vmatprep.subr.bf16.mxu0 0
      %1155 = vmatpush1.bf16.msra.mxu0 0
      %1156 = vmatprep.subr.bf16.mxu0 0
      %1157 = vmatpush1.bf16.msra.mxu0 0
      %1158 = vmatprep.subr.bf16.mxu0 0
      %1159 = vmatpush1.bf16.msra.mxu0 0
      %1160 = vmatprep.subr.bf16.mxu0 0
      %1161 = vmatpush1.bf16.msra.mxu0 0
      %1162 = vmatprep.mubr.bf16.mxu0 0
      %1163 = vmatmul.mubr.bf16.gmra.mrb[0].mxu0 %v451
      %v1164 = vpop.f32.mrb[0].mxu0
      %v1165 = vadd.f32 %v981, %v1164
      %v1166 = vpop.f32.mrb[0].mxu0
      %v1167 = vpop.f32.mrb[0].mxu0
      %v1168 = vpop.f32.mrb[0].mxu0
      %1169 = vdwg.mxu0
      %v1186 = vunpack.c.l.b16 %v934
      %v1187 = vunpack.c.l.b16 %v935
      %v1188 = vunpack.c.l.b16 %v936
      %v1189 = vunpack.c.l.b16 %v937
      %v1190 = vunpack.c.l.b16 %v938
      %v1191 = vunpack.c.l.b16 %v939
      %v1192 = vunpack.c.l.b16 %v940
      %v1193 = vunpack.c.l.b16 %v941
      %v1194 = vunpack.c.l.b16 %v942
      %v1195 = vunpack.c.l.b16 %v943
      %v1196 = vunpack.c.l.b16 %v944
      %v1197 = vunpack.c.l.b16 %v945
      %v1198 = vunpack.c.l.b16 %v946
      %v1199 = vunpack.c.l.b16 %v947
      %v1200 = vunpack.c.l.b16 %v948
      %v1201 = vunpack.c.l.b16 %v949
      %v1202 = vpack.c.b16 %v1187, %v1186
      %v1203 = vpack.c.b16 %v1189, %v1188
      %v1204 = vpack.c.b16 %v1191, %v1190
      %v1205 = vpack.c.b16 %v1193, %v1192
      %v1206 = vpack.c.b16 %v1195, %v1194
      %v1207 = vpack.c.b16 %v1197, %v1196
      %v1208 = vpack.c.b16 %v1199, %v1198
      %v1209 = vpack.c.b16 %v1201, %v1200
      %1218 = vmatprep.subr.bf16.mxu0 0
      %1219 = vmatpush1.bf16.msra.mxu0 %v1202
      %1220 = vmatprep.subr.bf16.mxu0 0
      %1221 = vmatpush1.bf16.msra.mxu0 %v1203
      %1222 = vmatprep.subr.bf16.mxu0 0
      %1223 = vmatpush1.bf16.msra.mxu0 %v1204
      %1224 = vmatprep.subr.bf16.mxu0 0
      %1225 = vmatpush1.bf16.msra.mxu0 %v1205
      %1226 = vmatprep.subr.bf16.mxu0 0
      %1227 = vmatpush1.bf16.msra.mxu0 %v1206
      %1228 = vmatprep.subr.bf16.mxu0 0
      %1229 = vmatpush1.bf16.msra.mxu0 %v1207
      %1230 = vmatprep.subr.bf16.mxu0 0
      %1231 = vmatpush1.bf16.msra.mxu0 %v1208
      %1232 = vmatprep.subr.bf16.mxu0 0
      %1233 = vmatpush1.bf16.msra.mxu0 %v1209
      %1234 = vmatprep.subr.bf16.mxu0 0
      %1235 = vmatpush1.bf16.msra.mxu0 0
      %1236 = vmatprep.subr.bf16.mxu0 0
      %1237 = vmatpush1.bf16.msra.mxu0 0
      %1238 = vmatprep.subr.bf16.mxu0 0
      %1239 = vmatpush1.bf16.msra.mxu0 0
      %1240 = vmatprep.subr.bf16.mxu0 0
      %1241 = vmatpush1.bf16.msra.mxu0 0
      %1242 = vmatprep.subr.bf16.mxu0 0
      %1243 = vmatpush1.bf16.msra.mxu0 0
      %1244 = vmatprep.subr.bf16.mxu0 0
      %1245 = vmatpush1.bf16.msra.mxu0 0
      %1246 = vmatprep.subr.bf16.mxu0 0
      %1247 = vmatpush1.bf16.msra.mxu0 0
      %1248 = vmatprep.subr.bf16.mxu0 0
      %1249 = vmatpush1.bf16.msra.mxu0 0
      %1250 = vmatprep.mubr.bf16.mxu0 0
      %1251 = vmatmul.mubr.bf16.gmra.mrb[0].mxu0 %v451
      %v1252 = vpop.f32.mrb[0].mxu0
      %v1253 = vadd.f32 %v985, %v1252
      %v1254 = vpop.f32.mrb[0].mxu0
      %v1255 = vpop.f32.mrb[0].mxu0
      %v1256 = vpop.f32.mrb[0].mxu0
      %1257 = vdwg.mxu0
      %v1274 = vunpack.c.l.b16 %v950
      %v1275 = vunpack.c.l.b16 %v951
      %v1276 = vunpack.c.l.b16 %v952
      %v1277 = vunpack.c.l.b16 %v953
      %v1278 = vunpack.c.l.b16 %v954
      %v1279 = vunpack.c.l.b16 %v955
      %v1280 = vunpack.c.l.b16 %v956
      %v1281 = vunpack.c.l.b16 %v957
      %v1282 = vunpack.c.l.b16 %v958
      %v1283 = vunpack.c.l.b16 %v959
      %v1284 = vunpack.c.l.b16 %v960
      %v1285 = vunpack.c.l.b16 %v961
      %v1286 = vunpack.c.l.b16 %v962
      %v1287 = vunpack.c.l.b16 %v963
      %v1288 = vunpack.c.l.b16 %v964
      %v1289 = vunpack.c.l.b16 %v965
      %v1290 = vpack.c.b16 %v1275, %v1274
      %v1291 = vpack.c.b16 %v1277, %v1276
      %v1292 = vpack.c.b16 %v1279, %v1278
      %v1293 = vpack.c.b16 %v1281, %v1280
      %v1294 = vpack.c.b16 %v1283, %v1282
      %v1295 = vpack.c.b16 %v1285, %v1284
      %v1296 = vpack.c.b16 %v1287, %v1286
      %v1297 = vpack.c.b16 %v1289, %v1288
      %1306 = vmatprep.subr.bf16.mxu0 0
      %1307 = vmatpush1.bf16.msra.mxu0 %v1290
      %1308 = vmatprep.subr.bf16.mxu0 0
      %1309 = vmatpush1.bf16.msra.mxu0 %v1291
      %1310 = vmatprep.subr.bf16.mxu0 0
      %1311 = vmatpush1.bf16.msra.mxu0 %v1292
      %1312 = vmatprep.subr.bf16.mxu0 0
      %1313 = vmatpush1.bf16.msra.mxu0 %v1293
      %1314 = vmatprep.subr.bf16.mxu0 0
      %1315 = vmatpush1.bf16.msra.mxu0 %v1294
      %1316 = vmatprep.subr.bf16.mxu0 0
      %1317 = vmatpush1.bf16.msra.mxu0 %v1295
      %1318 = vmatprep.subr.bf16.mxu0 0
      %1319 = vmatpush1.bf16.msra.mxu0 %v1296
      %1320 = vmatprep.subr.bf16.mxu0 0
      %1321 = vmatpush1.bf16.msra.mxu0 %v1297
      %1322 = vmatprep.subr.bf16.mxu0 0
      %1323 = vmatpush1.bf16.msra.mxu0 0
      %1324 = vmatprep.subr.bf16.mxu0 0
      %1325 = vmatpush1.bf16.msra.mxu0 0
      %1326 = vmatprep.subr.bf16.mxu0 0
      %1327 = vmatpush1.bf16.msra.mxu0 0
      %1328 = vmatprep.subr.bf16.mxu0 0
      %1329 = vmatpush1.bf16.msra.mxu0 0
      %1330 = vmatprep.subr.bf16.mxu0 0
      %1331 = vmatpush1.bf16.msra.mxu0 0
      %1332 = vmatprep.subr.bf16.mxu0 0
      %1333 = vmatpush1.bf16.msra.mxu0 0
      %1334 = vmatprep.subr.bf16.mxu0 0
      %1335 = vmatpush1.bf16.msra.mxu0 0
      %1336 = vmatprep.subr.bf16.mxu0 0
      %1337 = vmatpush1.bf16.msra.mxu0 0
      %1338 = vmatprep.mubr.bf16.mxu0 0
      %1339 = vmatmul.mubr.bf16.gmra.mrb[0].mxu0 %v451
      %v1340 = vpop.f32.mrb[0].mxu0
      %v1341 = vadd.f32 %v989, %v1340
      %v1342 = vpop.f32.mrb[0].mxu0
      %v1343 = vpop.f32.mrb[0].mxu0
      %v1344 = vpop.f32.mrb[0].mxu0
      %1345 = vdwg.mxu0
      %v1346 = vld [vmem:[%s7] sm:$0xf]
      %v1347 = vld [vmem:[%s7 + $0x4] sm:$0xf]
      %v1348 = vld [vmem:[%s7 + $0x8] sm:$0xf]
      %v1349 = vld [vmem:[%s7 + $0xc] sm:$0xf]
      %v1350 = vld [vmem:[%s7 + $0x10] sm:$0xf]
      %v1351 = vld [vmem:[%s7 + $0x14] sm:$0xf]
      %v1352 = vld [vmem:[%s7 + $0x18] sm:$0xf]
      %v1353 = vld [vmem:[%s7 + $0x1c] sm:$0xf]
      %v1354 = vld [vmem:[%s7 + $0x20] sm:$0xf]
      %v1355 = vld [vmem:[%s7 + $0x24] sm:$0xf]
      %v1356 = vld [vmem:[%s7 + $0x28] sm:$0xf]
      %v1357 = vld [vmem:[%s7 + $0x2c] sm:$0xf]
      %v1358 = vld [vmem:[%s7 + $0x30] sm:$0xf]
      %v1359 = vld [vmem:[%s7 + $0x34] sm:$0xf]
      %v1360 = vld [vmem:[%s7 + $0x38] sm:$0xf]
      %v1361 = vld [vmem:[%s7 + $0x3c] sm:$0xf]
      %v1362 = vld [vmem:[%s7 + $0x40] sm:$0xf]
      %v1363 = vld [vmem:[%s7 + $0x44] sm:$0xf]
      %v1364 = vld [vmem:[%s7 + $0x48] sm:$0xf]
      %v1365 = vld [vmem:[%s7 + $0x4c] sm:$0xf]
      %v1366 = vld [vmem:[%s7 + $0x50] sm:$0xf]
      %v1367 = vld [vmem:[%s7 + $0x54] sm:$0xf]
      %v1368 = vld [vmem:[%s7 + $0x58] sm:$0xf]
      %v1369 = vld [vmem:[%s7 + $0x5c] sm:$0xf]
      %v1370 = vld [vmem:[%s7 + $0x60] sm:$0xf]
      %v1371 = vld [vmem:[%s7 + $0x64] sm:$0xf]
      %v1372 = vld [vmem:[%s7 + $0x68] sm:$0xf]
      %v1373 = vld [vmem:[%s7 + $0x6c] sm:$0xf]
      %v1374 = vld [vmem:[%s7 + $0x70] sm:$0xf]
      %v1375 = vld [vmem:[%s7 + $0x74] sm:$0xf]
      %v1376 = vld [vmem:[%s7 + $0x78] sm:$0xf]
      %v1377 = vld [vmem:[%s7 + $0x7c] sm:$0xf]
      %v1378 = vld [vmem:[%s7 + $0x80] sm:$0xf]
      %v1379 = vld [vmem:[%s7 + $0x84] sm:$0xf]
      %v1380 = vld [vmem:[%s7 + $0x88] sm:$0xf]
      %v1381 = vld [vmem:[%s7 + $0x8c] sm:$0xf]
      %v1382 = vld [vmem:[%s7 + $0x90] sm:$0xf]
      %v1383 = vld [vmem:[%s7 + $0x94] sm:$0xf]
      %v1384 = vld [vmem:[%s7 + $0x98] sm:$0xf]
      %v1385 = vld [vmem:[%s7 + $0x9c] sm:$0xf]
      %v1386 = vld [vmem:[%s7 + $0xa0] sm:$0xf]
      %v1387 = vld [vmem:[%s7 + $0xa4] sm:$0xf]
      %v1388 = vld [vmem:[%s7 + $0xa8] sm:$0xf]
      %v1389 = vld [vmem:[%s7 + $0xac] sm:$0xf]
      %v1390 = vld [vmem:[%s7 + $0xb0] sm:$0xf]
      %v1391 = vld [vmem:[%s7 + $0xb4] sm:$0xf]
      %v1392 = vld [vmem:[%s7 + $0xb8] sm:$0xf]
      %v1393 = vld [vmem:[%s7 + $0xbc] sm:$0xf]
      %v1394 = vld [vmem:[%s7 + $0xc0] sm:$0xf]
      %v1395 = vld [vmem:[%s7 + $0xc4] sm:$0xf]
      %v1396 = vld [vmem:[%s7 + $0xc8] sm:$0xf]
      %v1397 = vld [vmem:[%s7 + $0xcc] sm:$0xf]
      %v1398 = vld [vmem:[%s7 + $0xd0] sm:$0xf]
      %v1399 = vld [vmem:[%s7 + $0xd4] sm:$0xf]
      %v1400 = vld [vmem:[%s7 + $0xd8] sm:$0xf]
      %v1401 = vld [vmem:[%s7 + $0xdc] sm:$0xf]
      %v1402 = vld [vmem:[%s7 + $0xe0] sm:$0xf]
      %v1403 = vld [vmem:[%s7 + $0xe4] sm:$0xf]
      %v1404 = vld [vmem:[%s7 + $0xe8] sm:$0xf]
      %v1405 = vld [vmem:[%s7 + $0xec] sm:$0xf]
      %v1406 = vld [vmem:[%s7 + $0xf0] sm:$0xf]
      %v1407 = vld [vmem:[%s7 + $0xf4] sm:$0xf]
      %v1408 = vld [vmem:[%s7 + $0xf8] sm:$0xf]
      %v1409 = vld [vmem:[%s7 + $0xfc] sm:$0xf]
      %v1410 = vld [vmem:[%s8] sm:$0x1]
      %v1411 = vld [vmem:[%s8 + $0x1] sm:$0x1]
      %v1412 = vld [vmem:[%s8 + $0x2] sm:$0x1]
      %v1413 = vld [vmem:[%s8 + $0x3] sm:$0x1]
      %v1418 = vlaneseq
      %v1419 = vshrl.u32 %v1418, 7
      %v1420 = vsub.s32 0, %v1419
      %v1421 = vrot.slane %v1410, %v1420
      %v1422 = vlaneseq
      %v1423 = vshrl.u32 %v1422, 7
      %v1424 = vsub.s32 0, %v1423
      %v1425 = vrot.slane %v1411, %v1424
      %v1426 = vlaneseq
      %v1427 = vshrl.u32 %v1426, 7
      %v1428 = vsub.s32 0, %v1427
      %v1429 = vrot.slane %v1412, %v1428
      %v1430 = vlaneseq
      %v1431 = vshrl.u32 %v1430, 7
      %v1432 = vsub.s32 0, %v1431
      %v1433 = vrot.slane %v1413, %v1432
      %v1454 = vunpack.c.l.b16 %v1346
      %v1455 = vunpack.c.l.b16 %v1347
      %v1456 = vunpack.c.l.b16 %v1348
      %v1457 = vunpack.c.l.b16 %v1349
      %v1458 = vunpack.c.l.b16 %v1350
      %v1459 = vunpack.c.l.b16 %v1351
      %v1460 = vunpack.c.l.b16 %v1352
      %v1461 = vunpack.c.l.b16 %v1353
      %v1462 = vunpack.c.l.b16 %v1354
      %v1463 = vunpack.c.l.b16 %v1355
      %v1464 = vunpack.c.l.b16 %v1356
      %v1465 = vunpack.c.l.b16 %v1357
      %v1466 = vunpack.c.l.b16 %v1358
      %v1467 = vunpack.c.l.b16 %v1359
      %v1468 = vunpack.c.l.b16 %v1360
      %v1469 = vunpack.c.l.b16 %v1361
      %v1470 = vpack.c.b16 %v1455, %v1454
      %v1471 = vpack.c.b16 %v1457, %v1456
      %v1472 = vpack.c.b16 %v1459, %v1458
      %v1473 = vpack.c.b16 %v1461, %v1460
      %v1474 = vpack.c.b16 %v1463, %v1462
      %v1475 = vpack.c.b16 %v1465, %v1464
      %v1476 = vpack.c.b16 %v1467, %v1466
      %v1477 = vpack.c.b16 %v1469, %v1468
      %1486 = vmatprep.subr.bf16.mxu0 0
      %1487 = vmatpush1.bf16.msra.mxu0 %v1470
      %1488 = vmatprep.subr.bf16.mxu0 0
      %1489 = vmatpush1.bf16.msra.mxu0 %v1471
      %1490 = vmatprep.subr.bf16.mxu0 0
      %1491 = vmatpush1.bf16.msra.mxu0 %v1472
      %1492 = vmatprep.subr.bf16.mxu0 0
      %1493 = vmatpush1.bf16.msra.mxu0 %v1473
      %1494 = vmatprep.subr.bf16.mxu0 0
      %1495 = vmatpush1.bf16.msra.mxu0 %v1474
      %1496 = vmatprep.subr.bf16.mxu0 0
      %1497 = vmatpush1.bf16.msra.mxu0 %v1475
      %1498 = vmatprep.subr.bf16.mxu0 0
      %1499 = vmatpush1.bf16.msra.mxu0 %v1476
      %1500 = vmatprep.subr.bf16.mxu0 0
      %1501 = vmatpush1.bf16.msra.mxu0 %v1477
      %1502 = vmatprep.subr.bf16.mxu0 0
      %1503 = vmatpush1.bf16.msra.mxu0 0
      %1504 = vmatprep.subr.bf16.mxu0 0
      %1505 = vmatpush1.bf16.msra.mxu0 0
      %1506 = vmatprep.subr.bf16.mxu0 0
      %1507 = vmatpush1.bf16.msra.mxu0 0
      %1508 = vmatprep.subr.bf16.mxu0 0
      %1509 = vmatpush1.bf16.msra.mxu0 0
      %1510 = vmatprep.subr.bf16.mxu0 0
      %1511 = vmatpush1.bf16.msra.mxu0 0
      %1512 = vmatprep.subr.bf16.mxu0 0
      %1513 = vmatpush1.bf16.msra.mxu0 0
      %1514 = vmatprep.subr.bf16.mxu0 0
      %1515 = vmatpush1.bf16.msra.mxu0 0
      %1516 = vmatprep.subr.bf16.mxu0 0
      %1517 = vmatpush1.bf16.msra.mxu0 0
      %1518 = vmatprep.mubr.bf16.mxu0 0
      %1519 = vmatmul.mubr.bf16.gmra.mrb[0].mxu0 %v451
      %v1520 = vpop.f32.mrb[0].mxu0
      %v1521 = vadd.f32 %v1421, %v1520
      %v1522 = vpop.f32.mrb[0].mxu0
      %v1523 = vpop.f32.mrb[0].mxu0
      %v1524 = vpop.f32.mrb[0].mxu0
      %1525 = vdwg.mxu0
      %v1542 = vunpack.c.l.b16 %v1362
      %v1543 = vunpack.c.l.b16 %v1363
      %v1544 = vunpack.c.l.b16 %v1364
      %v1545 = vunpack.c.l.b16 %v1365
      %v1546 = vunpack.c.l.b16 %v1366
      %v1547 = vunpack.c.l.b16 %v1367
      %v1548 = vunpack.c.l.b16 %v1368
      %v1549 = vunpack.c.l.b16 %v1369
      %v1550 = vunpack.c.l.b16 %v1370
      %v1551 = vunpack.c.l.b16 %v1371
      %v1552 = vunpack.c.l.b16 %v1372
      %v1553 = vunpack.c.l.b16 %v1373
      %v1554 = vunpack.c.l.b16 %v1374
      %v1555 = vunpack.c.l.b16 %v1375
      %v1556 = vunpack.c.l.b16 %v1376
      %v1557 = vunpack.c.l.b16 %v1377
      %v1558 = vpack.c.b16 %v1543, %v1542
      %v1559 = vpack.c.b16 %v1545, %v1544
      %v1560 = vpack.c.b16 %v1547, %v1546
      %v1561 = vpack.c.b16 %v1549, %v1548
      %v1562 = vpack.c.b16 %v1551, %v1550
      %v1563 = vpack.c.b16 %v1553, %v1552
      %v1564 = vpack.c.b16 %v1555, %v1554
      %v1565 = vpack.c.b16 %v1557, %v1556
      %1574 = vmatprep.subr.bf16.mxu0 0
      %1575 = vmatpush1.bf16.msra.mxu0 %v1558
      %1576 = vmatprep.subr.bf16.mxu0 0
      %1577 = vmatpush1.bf16.msra.mxu0 %v1559
      %1578 = vmatprep.subr.bf16.mxu0 0
      %1579 = vmatpush1.bf16.msra.mxu0 %v1560
      %1580 = vmatprep.subr.bf16.mxu0 0
      %1581 = vmatpush1.bf16.msra.mxu0 %v1561
      %1582 = vmatprep.subr.bf16.mxu0 0
      %1583 = vmatpush1.bf16.msra.mxu0 %v1562
      %1584 = vmatprep.subr.bf16.mxu0 0
      %1585 = vmatpush1.bf16.msra.mxu0 %v1563
      %1586 = vmatprep.subr.bf16.mxu0 0
      %1587 = vmatpush1.bf16.msra.mxu0 %v1564
      %1588 = vmatprep.subr.bf16.mxu0 0
      %1589 = vmatpush1.bf16.msra.mxu0 %v1565
      %1590 = vmatprep.subr.bf16.mxu0 0
      %1591 = vmatpush1.bf16.msra.mxu0 0
      %1592 = vmatprep.subr.bf16.mxu0 0
      %1593 = vmatpush1.bf16.msra.mxu0 0
      %1594 = vmatprep.subr.bf16.mxu0 0
      %1595 = vmatpush1.bf16.msra.mxu0 0
      %1596 = vmatprep.subr.bf16.mxu0 0
      %1597 = vmatpush1.bf16.msra.mxu0 0
      %1598 = vmatprep.subr.bf16.mxu0 0
      %1599 = vmatpush1.bf16.msra.mxu0 0
      %1600 = vmatprep.subr.bf16.mxu0 0
      %1601 = vmatpush1.bf16.msra.mxu0 0
      %1602 = vmatprep.subr.bf16.mxu0 0
      %1603 = vmatpush1.bf16.msra.mxu0 0
      %1604 = vmatprep.subr.bf16.mxu0 0
      %1605 = vmatpush1.bf16.msra.mxu0 0
      %1606 = vmatprep.mubr.bf16.mxu0 0
      %1607 = vmatmul.mubr.bf16.gmra.mrb[0].mxu0 %v451
      %v1608 = vpop.f32.mrb[0].mxu0
      %v1609 = vadd.f32 %v1425, %v1608
      %v1610 = vpop.f32.mrb[0].mxu0
      %v1611 = vpop.f32.mrb[0].mxu0
      %v1612 = vpop.f32.mrb[0].mxu0
      %1613 = vdwg.mxu0
      %v1630 = vunpack.c.l.b16 %v1378
      %v1631 = vunpack.c.l.b16 %v1379
      %v1632 = vunpack.c.l.b16 %v1380
      %v1633 = vunpack.c.l.b16 %v1381
      %v1634 = vunpack.c.l.b16 %v1382
      %v1635 = vunpack.c.l.b16 %v1383
      %v1636 = vunpack.c.l.b16 %v1384
      %v1637 = vunpack.c.l.b16 %v1385
      %v1638 = vunpack.c.l.b16 %v1386
      %v1639 = vunpack.c.l.b16 %v1387
      %v1640 = vunpack.c.l.b16 %v1388
      %v1641 = vunpack.c.l.b16 %v1389
      %v1642 = vunpack.c.l.b16 %v1390
      %v1643 = vunpack.c.l.b16 %v1391
      %v1644 = vunpack.c.l.b16 %v1392
      %v1645 = vunpack.c.l.b16 %v1393
      %v1646 = vpack.c.b16 %v1631, %v1630
      %v1647 = vpack.c.b16 %v1633, %v1632
      %v1648 = vpack.c.b16 %v1635, %v1634
      %v1649 = vpack.c.b16 %v1637, %v1636
      %v1650 = vpack.c.b16 %v1639, %v1638
      %v1651 = vpack.c.b16 %v1641, %v1640
      %v1652 = vpack.c.b16 %v1643, %v1642
      %v1653 = vpack.c.b16 %v1645, %v1644
      %1662 = vmatprep.subr.bf16.mxu0 0
      %1663 = vmatpush1.bf16.msra.mxu0 %v1646
      %1664 = vmatprep.subr.bf16.mxu0 0
      %1665 = vmatpush1.bf16.msra.mxu0 %v1647
      %1666 = vmatprep.subr.bf16.mxu0 0
      %1667 = vmatpush1.bf16.msra.mxu0 %v1648
      %1668 = vmatprep.subr.bf16.mxu0 0
      %1669 = vmatpush1.bf16.msra.mxu0 %v1649
      %1670 = vmatprep.subr.bf16.mxu0 0
      %1671 = vmatpush1.bf16.msra.mxu0 %v1650
      %1672 = vmatprep.subr.bf16.mxu0 0
      %1673 = vmatpush1.bf16.msra.mxu0 %v1651
      %1674 = vmatprep.subr.bf16.mxu0 0
      %1675 = vmatpush1.bf16.msra.mxu0 %v1652
      %1676 = vmatprep.subr.bf16.mxu0 0
      %1677 = vmatpush1.bf16.msra.mxu0 %v1653
      %1678 = vmatprep.subr.bf16.mxu0 0
      %1679 = vmatpush1.bf16.msra.mxu0 0
      %1680 = vmatprep.subr.bf16.mxu0 0
      %1681 = vmatpush1.bf16.msra.mxu0 0
      %1682 = vmatprep.subr.bf16.mxu0 0
      %1683 = vmatpush1.bf16.msra.mxu0 0
      %1684 = vmatprep.subr.bf16.mxu0 0
      %1685 = vmatpush1.bf16.msra.mxu0 0
      %1686 = vmatprep.subr.bf16.mxu0 0
      %1687 = vmatpush1.bf16.msra.mxu0 0
      %1688 = vmatprep.subr.bf16.mxu0 0
      %1689 = vmatpush1.bf16.msra.mxu0 0
      %1690 = vmatprep.subr.bf16.mxu0 0
      %1691 = vmatpush1.bf16.msra.mxu0 0
      %1692 = vmatprep.subr.bf16.mxu0 0
      %1693 = vmatpush1.bf16.msra.mxu0 0
      %1694 = vmatprep.mubr.bf16.mxu0 0
      %1695 = vmatmul.mubr.bf16.gmra.mrb[0].mxu0 %v451
      %v1696 = vpop.f32.mrb[0].mxu0
      %v1697 = vadd.f32 %v1429, %v1696
      %v1698 = vpop.f32.mrb[0].mxu0
      %v1699 = vpop.f32.mrb[0].mxu0
      %v1700 = vpop.f32.mrb[0].mxu0
      %1701 = vdwg.mxu0
      %v1718 = vunpack.c.l.b16 %v1394
      %v1719 = vunpack.c.l.b16 %v1395
      %v1720 = vunpack.c.l.b16 %v1396
      %v1721 = vunpack.c.l.b16 %v1397
      %v1722 = vunpack.c.l.b16 %v1398
      %v1723 = vunpack.c.l.b16 %v1399
      %v1724 = vunpack.c.l.b16 %v1400
      %v1725 = vunpack.c.l.b16 %v1401
      %v1726 = vunpack.c.l.b16 %v1402
      %v1727 = vunpack.c.l.b16 %v1403
      %v1728 = vunpack.c.l.b16 %v1404
      %v1729 = vunpack.c.l.b16 %v1405
      %v1730 = vunpack.c.l.b16 %v1406
      %v1731 = vunpack.c.l.b16 %v1407
      %v1732 = vunpack.c.l.b16 %v1408
      %v1733 = vunpack.c.l.b16 %v1409
      %v1734 = vpack.c.b16 %v1719, %v1718
      %v1735 = vpack.c.b16 %v1721, %v1720
      %v1736 = vpack.c.b16 %v1723, %v1722
      %v1737 = vpack.c.b16 %v1725, %v1724
      %v1738 = vpack.c.b16 %v1727, %v1726
      %v1739 = vpack.c.b16 %v1729, %v1728
      %v1740 = vpack.c.b16 %v1731, %v1730
      %v1741 = vpack.c.b16 %v1733, %v1732
      %1750 = vmatprep.subr.bf16.mxu0 0
      %1751 = vmatpush1.bf16.msra.mxu0 %v1734
      %1752 = vmatprep.subr.bf16.mxu0 0
      %1753 = vmatpush1.bf16.msra.mxu0 %v1735
      %1754 = vmatprep.subr.bf16.mxu0 0
      %1755 = vmatpush1.bf16.msra.mxu0 %v1736
      %1756 = vmatprep.subr.bf16.mxu0 0
      %1757 = vmatpush1.bf16.msra.mxu0 %v1737
      %1758 = vmatprep.subr.bf16.mxu0 0
      %1759 = vmatpush1.bf16.msra.mxu0 %v1738
      %1760 = vmatprep.subr.bf16.mxu0 0
      %1761 = vmatpush1.bf16.msra.mxu0 %v1739
      %1762 = vmatprep.subr.bf16.mxu0 0
      %1763 = vmatpush1.bf16.msra.mxu0 %v1740
      %1764 = vmatprep.subr.bf16.mxu0 0
      %1765 = vmatpush1.bf16.msra.mxu0 %v1741
      %1766 = vmatprep.subr.bf16.mxu0 0
      %1767 = vmatpush1.bf16.msra.mxu0 0
      %1768 = vmatprep.subr.bf16.mxu0 0
      %1769 = vmatpush1.bf16.msra.mxu0 0
      %1770 = vmatprep.subr.bf16.mxu0 0
      %1771 = vmatpush1.bf16.msra.mxu0 0
      %1772 = vmatprep.subr.bf16.mxu0 0
      %1773 = vmatpush1.bf16.msra.mxu0 0
      %1774 = vmatprep.subr.bf16.mxu0 0
      %1775 = vmatpush1.bf16.msra.mxu0 0
      %1776 = vmatprep.subr.bf16.mxu0 0
      %1777 = vmatpush1.bf16.msra.mxu0 0
      %1778 = vmatprep.subr.bf16.mxu0 0
      %1779 = vmatpush1.bf16.msra.mxu0 0
      %1780 = vmatprep.subr.bf16.mxu0 0
      %1781 = vmatpush1.bf16.msra.mxu0 0
      %1782 = vmatprep.mubr.bf16.mxu0 0
      %1783 = vmatmul.mubr.bf16.gmra.mrb[0].mxu0 %v451
      %v1784 = vpop.f32.mrb[0].mxu0
      %v1785 = vadd.f32 %v1433, %v1784
      %v1786 = vpop.f32.mrb[0].mxu0
      %v1787 = vpop.f32.mrb[0].mxu0
      %v1788 = vpop.f32.mrb[0].mxu0
      %1789 = vdwg.mxu0
      %v1790 = vpack.c.bf16 %v898, %v898
      %v1791 = vpack.c.bf16 %v899, %v899
      %v1792 = vpack.c.bf16 %v900, %v900
      %v1793 = vpack.c.bf16 %v901, %v901
      %v1794 = vpack.c.bf16 %v1077, %v1077
      %v1795 = vpack.c.bf16 %v1165, %v1165
      %v1796 = vpack.c.bf16 %v1253, %v1253
      %v1797 = vpack.c.bf16 %v1341, %v1341
      %vm1798 = vcmask 261120
      %v1800 = vsel %vm1798, %v1790, 0
      %v1803 = vsel %vm1798, %v1794, 0
      %1805 = vmatprep.subr.bf16.mxu0 0
      %1806 = vmatpush1.bf16.xpose.msra.mxu0 %v1803
      %1807 = vmatprep.subr.bf16.mxu0 0
      %1808 = vmatpush1.bf16.xpose.msra.mxu0 0
      %1809 = vmatprep.subr.bf16.mxu0 0
      %1810 = vmatpush1.bf16.xpose.msra.mxu0 0
      %1811 = vmatprep.subr.bf16.mxu0 0
      %1812 = vmatpush1.bf16.xpose.msra.mxu0 0
      %1813 = vmatprep.subr.bf16.mxu0 0
      %1814 = vmatpush1.bf16.xpose.msra.mxu0 0
      %1815 = vmatprep.subr.bf16.mxu0 0
      %1816 = vmatpush1.bf16.xpose.msra.mxu0 0
      %1817 = vmatprep.subr.bf16.mxu0 0
      %1818 = vmatpush1.bf16.xpose.msra.mxu0 0
      %1819 = vmatprep.subr.bf16.mxu0 0
      %1820 = vmatpush1.bf16.xpose.msra.mxu0 0
      %1821 = vmatprep.subr.bf16.mxu0 0
      %1822 = vmatpush1.bf16.xpose.msra.mxu0 0
      %1823 = vmatprep.subr.bf16.mxu0 0
      %1824 = vmatpush1.bf16.xpose.msra.mxu0 0
      %1825 = vmatprep.subr.bf16.mxu0 0
      %1826 = vmatpush1.bf16.xpose.msra.mxu0 0
      %1827 = vmatprep.subr.bf16.mxu0 0
      %1828 = vmatpush1.bf16.xpose.msra.mxu0 0
      %1829 = vmatprep.subr.bf16.mxu0 0
      %1830 = vmatpush1.bf16.xpose.msra.mxu0 0
      %1831 = vmatprep.subr.bf16.mxu0 0
      %1832 = vmatpush1.bf16.xpose.msra.mxu0 0
      %1833 = vmatprep.subr.bf16.mxu0 0
      %1834 = vmatpush1.bf16.xpose.msra.mxu0 0
      %1835 = vmatprep.subr.bf16.mxu0 0
      %1836 = vmatpush1.bf16.xpose.msra.mxu0 0
      %1837 = vmatprep.mubr.bf16.mxu0 0
      %1838 = vmatmul.mubr.bf16.gmra.mrb[0].mxu0 %v1800
      %v1839 = vpop.f32.mrb[0].mxu0
      %v1840 = vadd.f32 %v452, %v1839
      %v1841 = vpop.f32.mrb[0].mxu0
      %v1842 = vpop.f32.mrb[0].mxu0
      %v1843 = vpop.f32.mrb[0].mxu0
      %1844 = vdwg.mxu0
      %v1846 = vsel %vm1798, %v1791, 0
      %v1849 = vsel %vm1798, %v1795, 0
      %1851 = vmatprep.subr.bf16.mxu0 0
      %1852 = vmatpush1.bf16.xpose.msra.mxu0 %v1849
      %1853 = vmatprep.subr.bf16.mxu0 0
      %1854 = vmatpush1.bf16.xpose.msra.mxu0 0
      %1855 = vmatprep.subr.bf16.mxu0 0
      %1856 = vmatpush1.bf16.xpose.msra.mxu0 0
      %1857 = vmatprep.subr.bf16.mxu0 0
      %1858 = vmatpush1.bf16.xpose.msra.mxu0 0
      %1859 = vmatprep.subr.bf16.mxu0 0
      %1860 = vmatpush1.bf16.xpose.msra.mxu0 0
      %1861 = vmatprep.subr.bf16.mxu0 0
      %1862 = vmatpush1.bf16.xpose.msra.mxu0 0
      %1863 = vmatprep.subr.bf16.mxu0 0
      %1864 = vmatpush1.bf16.xpose.msra.mxu0 0
      %1865 = vmatprep.subr.bf16.mxu0 0
      %1866 = vmatpush1.bf16.xpose.msra.mxu0 0
      %1867 = vmatprep.subr.bf16.mxu0 0
      %1868 = vmatpush1.bf16.xpose.msra.mxu0 0
      %1869 = vmatprep.subr.bf16.mxu0 0
      %1870 = vmatpush1.bf16.xpose.msra.mxu0 0
      %1871 = vmatprep.subr.bf16.mxu0 0
      %1872 = vmatpush1.bf16.xpose.msra.mxu0 0
      %1873 = vmatprep.subr.bf16.mxu0 0
      %1874 = vmatpush1.bf16.xpose.msra.mxu0 0
      %1875 = vmatprep.subr.bf16.mxu0 0
      %1876 = vmatpush1.bf16.xpose.msra.mxu0 0
      %1877 = vmatprep.subr.bf16.mxu0 0
      %1878 = vmatpush1.bf16.xpose.msra.mxu0 0
      %1879 = vmatprep.subr.bf16.mxu0 0
      %1880 = vmatpush1.bf16.xpose.msra.mxu0 0
      %1881 = vmatprep.subr.bf16.mxu0 0
      %1882 = vmatpush1.bf16.xpose.msra.mxu0 0
      %1883 = vmatprep.mubr.bf16.mxu0 0
      %1884 = vmatmul.mubr.bf16.gmra.mrb[0].mxu0 %v1846
      %v1885 = vpop.f32.mrb[0].mxu0
      %v1886 = vadd.f32 %v452, %v1885
      %v1887 = vpop.f32.mrb[0].mxu0
      %v1888 = vpop.f32.mrb[0].mxu0
      %v1889 = vpop.f32.mrb[0].mxu0
      %1890 = vdwg.mxu0
      %v1892 = vsel %vm1798, %v1792, 0
      %v1895 = vsel %vm1798, %v1796, 0
      %1897 = vmatprep.subr.bf16.mxu0 0
      %1898 = vmatpush1.bf16.xpose.msra.mxu0 %v1895
      %1899 = vmatprep.subr.bf16.mxu0 0
      %1900 = vmatpush1.bf16.xpose.msra.mxu0 0
      %1901 = vmatprep.subr.bf16.mxu0 0
      %1902 = vmatpush1.bf16.xpose.msra.mxu0 0
      %1903 = vmatprep.subr.bf16.mxu0 0
      %1904 = vmatpush1.bf16.xpose.msra.mxu0 0
      %1905 = vmatprep.subr.bf16.mxu0 0
      %1906 = vmatpush1.bf16.xpose.msra.mxu0 0
      %1907 = vmatprep.subr.bf16.mxu0 0
      %1908 = vmatpush1.bf16.xpose.msra.mxu0 0
      %1909 = vmatprep.subr.bf16.mxu0 0
      %1910 = vmatpush1.bf16.xpose.msra.mxu0 0
      %1911 = vmatprep.subr.bf16.mxu0 0
      %1912 = vmatpush1.bf16.xpose.msra.mxu0 0
      %1913 = vmatprep.subr.bf16.mxu0 0
      %1914 = vmatpush1.bf16.xpose.msra.mxu0 0
      %1915 = vmatprep.subr.bf16.mxu0 0
      %1916 = vmatpush1.bf16.xpose.msra.mxu0 0
      %1917 = vmatprep.subr.bf16.mxu0 0
      %1918 = vmatpush1.bf16.xpose.msra.mxu0 0
      %1919 = vmatprep.subr.bf16.mxu0 0
      %1920 = vmatpush1.bf16.xpose.msra.mxu0 0
      %1921 = vmatprep.subr.bf16.mxu0 0
      %1922 = vmatpush1.bf16.xpose.msra.mxu0 0
      %1923 = vmatprep.subr.bf16.mxu0 0
      %1924 = vmatpush1.bf16.xpose.msra.mxu0 0
      %1925 = vmatprep.subr.bf16.mxu0 0
      %1926 = vmatpush1.bf16.xpose.msra.mxu0 0
      %1927 = vmatprep.subr.bf16.mxu0 0
      %1928 = vmatpush1.bf16.xpose.msra.mxu0 0
      %1929 = vmatprep.mubr.bf16.mxu0 0
      %1930 = vmatmul.mubr.bf16.gmra.mrb[0].mxu0 %v1892
      %v1931 = vpop.f32.mrb[0].mxu0
      %v1932 = vadd.f32 %v452, %v1931
      %v1933 = vpop.f32.mrb[0].mxu0
      %v1934 = vpop.f32.mrb[0].mxu0
      %v1935 = vpop.f32.mrb[0].mxu0
      %1936 = vdwg.mxu0
      %v1938 = vsel %vm1798, %v1793, 0
      %v1941 = vsel %vm1798, %v1797, 0
      %1943 = vmatprep.subr.bf16.mxu0 0
      %1944 = vmatpush1.bf16.xpose.msra.mxu0 %v1941
      %1945 = vmatprep.subr.bf16.mxu0 0
      %1946 = vmatpush1.bf16.xpose.msra.mxu0 0
      %1947 = vmatprep.subr.bf16.mxu0 0
      %1948 = vmatpush1.bf16.xpose.msra.mxu0 0
      %1949 = vmatprep.subr.bf16.mxu0 0
      %1950 = vmatpush1.bf16.xpose.msra.mxu0 0
      %1951 = vmatprep.subr.bf16.mxu0 0
      %1952 = vmatpush1.bf16.xpose.msra.mxu0 0
      %1953 = vmatprep.subr.bf16.mxu0 0
      %1954 = vmatpush1.bf16.xpose.msra.mxu0 0
      %1955 = vmatprep.subr.bf16.mxu0 0
      %1956 = vmatpush1.bf16.xpose.msra.mxu0 0
      %1957 = vmatprep.subr.bf16.mxu0 0
      %1958 = vmatpush1.bf16.xpose.msra.mxu0 0
      %1959 = vmatprep.subr.bf16.mxu0 0
      %1960 = vmatpush1.bf16.xpose.msra.mxu0 0
      %1961 = vmatprep.subr.bf16.mxu0 0
      %1962 = vmatpush1.bf16.xpose.msra.mxu0 0
      %1963 = vmatprep.subr.bf16.mxu0 0
      %1964 = vmatpush1.bf16.xpose.msra.mxu0 0
      %1965 = vmatprep.subr.bf16.mxu0 0
      %1966 = vmatpush1.bf16.xpose.msra.mxu0 0
      %1967 = vmatprep.subr.bf16.mxu0 0
      %1968 = vmatpush1.bf16.xpose.msra.mxu0 0
      %1969 = vmatprep.subr.bf16.mxu0 0
      %1970 = vmatpush1.bf16.xpose.msra.mxu0 0
      %1971 = vmatprep.subr.bf16.mxu0 0
      %1972 = vmatpush1.bf16.xpose.msra.mxu0 0
      %1973 = vmatprep.subr.bf16.mxu0 0
      %1974 = vmatpush1.bf16.xpose.msra.mxu0 0
      %1975 = vmatprep.mubr.bf16.mxu0 0
      %1976 = vmatmul.mubr.bf16.gmra.mrb[0].mxu0 %v1938
      %v1977 = vpop.f32.mrb[0].mxu0
      %v1978 = vadd.f32 %v452, %v1977
      %v1979 = vpop.f32.mrb[0].mxu0
      %v1980 = vpop.f32.mrb[0].mxu0
      %v1981 = vpop.f32.mrb[0].mxu0
      %1982 = vdwg.mxu0
      %v1984 = vlaneseq
      %v1985 = vshrl.u32 %v1984, 7
      %v1986 = vsub.s32 0, %v1985
      %v1987 = vrot.slane %v453, %v1986
      %v1989 = vadd.f32 %v1840, %v1987
      %v1990 = vadd.f32 %v1886, %v1987
      %v1991 = vadd.f32 %v1932, %v1987
      %v1992 = vadd.f32 %v1978, %v1987
      %vm1993 = vcmask 64512
      %v1994 = vsel %vm1993, %v1989, -inf
      %1995 = vmax.xlane.f32.xlu0 %v1994
      %v1996 = vpop.xlane.xlu0 %1995
      %v1997 = vsel %vm1993, %v1990, -inf
      %1998 = vmax.xlane.f32.xlu0 %v1997
      %v1999 = vpop.xlane.xlu0 %1998
      %v2000 = vsel %vm1993, %v1991, -inf
      %2001 = vmax.xlane.f32.xlu0 %v2000
      %v2002 = vpop.xlane.xlu0 %2001
      %v2003 = vsel %vm1993, %v1992, -inf
      %2004 = vmax.xlane.f32.xlu0 %v2003
      %v2005 = vpop.xlane.xlu0 %2004
      %v2006 = vsub.f32 %v1989, %v1996
      %v2007 = vsub.f32 %v1990, %v1999
      %v2008 = vsub.f32 %v1991, %v2002
      %v2009 = vsub.f32 %v1992, %v2005
      %v2010 = vmul.f32 %v2006, 1.442695
      %v2011 = vpow.pop %v2010
      %v2012 = vmul.f32 %v2007, 1.442695
      %v2013 = vpow.pop %v2012
      %v2014 = vmul.f32 %v2008, 1.442695
      %v2015 = vpow.pop %v2014
      %v2016 = vmul.f32 %v2009, 1.442695
      %v2017 = vpow.pop %v2016
      %v2018 = vsel %vm1993, %v2011, 0.0
      %2019 = vadd.xlane.f32.xlu0 %v2018
      %v2020 = vpop.xlane.xlu0 %2019
      %v2021 = vsel %vm1993, %v2013, 0.0
      %2022 = vadd.xlane.f32.xlu0 %v2021
      %v2023 = vpop.xlane.xlu0 %2022
      %v2024 = vsel %vm1993, %v2015, 0.0
      %2025 = vadd.xlane.f32.xlu0 %v2024
      %v2026 = vpop.xlane.xlu0 %2025
      %v2027 = vsel %vm1993, %v2017, 0.0
      %2028 = vadd.xlane.f32.xlu0 %v2027
      %v2029 = vpop.xlane.xlu0 %2028
      %v2030 = vrcp.pop %v2020
      %v2031 = vrcp.pop %v2023
      %v2032 = vrcp.pop %v2026
      %v2033 = vrcp.pop %v2029
      %v2034 = vmul.f32 %v2011, %v2030
      %v2035 = vmul.f32 %v2013, %v2031
      %v2036 = vmul.f32 %v2015, %v2032
      %v2037 = vmul.f32 %v2017, %v2033
      %v2038 = vpack.c.bf16 %v2034, %v2034
      %v2039 = vpack.c.bf16 %v2035, %v2035
      %v2040 = vpack.c.bf16 %v2036, %v2036
      %v2041 = vpack.c.bf16 %v2037, %v2037
      %v2042 = vpack.c.bf16 %v1521, %v1521
      %v2043 = vpack.c.bf16 %v1609, %v1609
      %v2044 = vpack.c.bf16 %v1697, %v1697
      %v2045 = vpack.c.bf16 %v1785, %v1785
      %v2047 = vsel %vm1993, %v2038, 0
      %vm2049 = vcmask 1043456
      %v2051 = vsel %vm2049, %v2042, 0
      %2053 = vmatprep.subr.bf16.mxu0 0
      %2054 = vmatpush1.bf16.msra.mxu0 %v2051
      %2055 = vmatprep.subr.bf16.mxu0 0
      %2056 = vmatpush1.bf16.msra.mxu0 0
      %2057 = vmatprep.subr.bf16.mxu0 0
      %2058 = vmatpush1.bf16.msra.mxu0 0
      %2059 = vmatprep.subr.bf16.mxu0 0
      %2060 = vmatpush1.bf16.msra.mxu0 0
      %2061 = vmatprep.subr.bf16.mxu0 0
      %2062 = vmatpush1.bf16.msra.mxu0 0
      %2063 = vmatprep.subr.bf16.mxu0 0
      %2064 = vmatpush1.bf16.msra.mxu0 0
      %2065 = vmatprep.subr.bf16.mxu0 0
      %2066 = vmatpush1.bf16.msra.mxu0 0
      %2067 = vmatprep.subr.bf16.mxu0 0
      %2068 = vmatpush1.bf16.msra.mxu0 0
      %2069 = vmatprep.subr.bf16.mxu0 0
      %2070 = vmatpush1.bf16.msra.mxu0 0
      %2071 = vmatprep.subr.bf16.mxu0 0
      %2072 = vmatpush1.bf16.msra.mxu0 0
      %2073 = vmatprep.subr.bf16.mxu0 0
      %2074 = vmatpush1.bf16.msra.mxu0 0
      %2075 = vmatprep.subr.bf16.mxu0 0
      %2076 = vmatpush1.bf16.msra.mxu0 0
      %2077 = vmatprep.subr.bf16.mxu0 0
      %2078 = vmatpush1.bf16.msra.mxu0 0
      %2079 = vmatprep.subr.bf16.mxu0 0
      %2080 = vmatpush1.bf16.msra.mxu0 0
      %2081 = vmatprep.subr.bf16.mxu0 0
      %2082 = vmatpush1.bf16.msra.mxu0 0
      %2083 = vmatprep.subr.bf16.mxu0 0
      %2084 = vmatpush1.bf16.msra.mxu0 0
      %2085 = vmatprep.mubr.bf16.mxu0 0
      %2086 = vmatmul.mubr.bf16.gmra.mrb[0].mxu0 %v2047
      %v2087 = vpop.f32.mrb[0].mxu0
      %v2088 = vadd.f32 0.0, %v2087
      %v2089 = vpop.f32.mrb[0].mxu0
      %v2090 = vpop.f32.mrb[0].mxu0
      %v2091 = vpop.f32.mrb[0].mxu0
      %2092 = vdwg.mxu0
      %v2094 = vsel %vm1993, %v2039, 0
      %v2097 = vsel %vm2049, %v2043, 0
      %2099 = vmatprep.subr.bf16.mxu0 0
      %2100 = vmatpush1.bf16.msra.mxu0 %v2097
      %2101 = vmatprep.subr.bf16.mxu0 0
      %2102 = vmatpush1.bf16.msra.mxu0 0
      %2103 = vmatprep.subr.bf16.mxu0 0
      %2104 = vmatpush1.bf16.msra.mxu0 0
      %2105 = vmatprep.subr.bf16.mxu0 0
      %2106 = vmatpush1.bf16.msra.mxu0 0
      %2107 = vmatprep.subr.bf16.mxu0 0
      %2108 = vmatpush1.bf16.msra.mxu0 0
      %2109 = vmatprep.subr.bf16.mxu0 0
      %2110 = vmatpush1.bf16.msra.mxu0 0
      %2111 = vmatprep.subr.bf16.mxu0 0
      %2112 = vmatpush1.bf16.msra.mxu0 0
      %2113 = vmatprep.subr.bf16.mxu0 0
      %2114 = vmatpush1.bf16.msra.mxu0 0
      %2115 = vmatprep.subr.bf16.mxu0 0
      %2116 = vmatpush1.bf16.msra.mxu0 0
      %2117 = vmatprep.subr.bf16.mxu0 0
      %2118 = vmatpush1.bf16.msra.mxu0 0
      %2119 = vmatprep.subr.bf16.mxu0 0
      %2120 = vmatpush1.bf16.msra.mxu0 0
      %2121 = vmatprep.subr.bf16.mxu0 0
      %2122 = vmatpush1.bf16.msra.mxu0 0
      %2123 = vmatprep.subr.bf16.mxu0 0
      %2124 = vmatpush1.bf16.msra.mxu0 0
      %2125 = vmatprep.subr.bf16.mxu0 0
      %2126 = vmatpush1.bf16.msra.mxu0 0
      %2127 = vmatprep.subr.bf16.mxu0 0
      %2128 = vmatpush1.bf16.msra.mxu0 0
      %2129 = vmatprep.subr.bf16.mxu0 0
      %2130 = vmatpush1.bf16.msra.mxu0 0
      %2131 = vmatprep.mubr.bf16.mxu0 0
      %2132 = vmatmul.mubr.bf16.gmra.mrb[0].mxu0 %v2094
      %v2133 = vpop.f32.mrb[0].mxu0
      %v2134 = vadd.f32 0.0, %v2133
      %v2135 = vpop.f32.mrb[0].mxu0
      %v2136 = vpop.f32.mrb[0].mxu0
      %v2137 = vpop.f32.mrb[0].mxu0
      %2138 = vdwg.mxu0
      %v2140 = vsel %vm1993, %v2040, 0
      %v2143 = vsel %vm2049, %v2044, 0
      %2145 = vmatprep.subr.bf16.mxu0 0
      %2146 = vmatpush1.bf16.msra.mxu0 %v2143
      %2147 = vmatprep.subr.bf16.mxu0 0
      %2148 = vmatpush1.bf16.msra.mxu0 0
      %2149 = vmatprep.subr.bf16.mxu0 0
      %2150 = vmatpush1.bf16.msra.mxu0 0
      %2151 = vmatprep.subr.bf16.mxu0 0
      %2152 = vmatpush1.bf16.msra.mxu0 0
      %2153 = vmatprep.subr.bf16.mxu0 0
      %2154 = vmatpush1.bf16.msra.mxu0 0
      %2155 = vmatprep.subr.bf16.mxu0 0
      %2156 = vmatpush1.bf16.msra.mxu0 0
      %2157 = vmatprep.subr.bf16.mxu0 0
      %2158 = vmatpush1.bf16.msra.mxu0 0
      %2159 = vmatprep.subr.bf16.mxu0 0
      %2160 = vmatpush1.bf16.msra.mxu0 0
      %2161 = vmatprep.subr.bf16.mxu0 0
      %2162 = vmatpush1.bf16.msra.mxu0 0
      %2163 = vmatprep.subr.bf16.mxu0 0
      %2164 = vmatpush1.bf16.msra.mxu0 0
      %2165 = vmatprep.subr.bf16.mxu0 0
      %2166 = vmatpush1.bf16.msra.mxu0 0
      %2167 = vmatprep.subr.bf16.mxu0 0
      %2168 = vmatpush1.bf16.msra.mxu0 0
      %2169 = vmatprep.subr.bf16.mxu0 0
      %2170 = vmatpush1.bf16.msra.mxu0 0
      %2171 = vmatprep.subr.bf16.mxu0 0
      %2172 = vmatpush1.bf16.msra.mxu0 0
      %2173 = vmatprep.subr.bf16.mxu0 0
      %2174 = vmatpush1.bf16.msra.mxu0 0
      %2175 = vmatprep.subr.bf16.mxu0 0
      %2176 = vmatpush1.bf16.msra.mxu0 0
      %2177 = vmatprep.mubr.bf16.mxu0 0
      %2178 = vmatmul.mubr.bf16.gmra.mrb[0].mxu0 %v2140
      %v2179 = vpop.f32.mrb[0].mxu0
      %v2180 = vadd.f32 0.0, %v2179
      %v2181 = vpop.f32.mrb[0].mxu0
      %v2182 = vpop.f32.mrb[0].mxu0
      %v2183 = vpop.f32.mrb[0].mxu0
      %2184 = vdwg.mxu0
      %v2186 = vsel %vm1993, %v2041, 0
      %v2189 = vsel %vm2049, %v2045, 0
      %2191 = vmatprep.subr.bf16.mxu0 0
      %2192 = vmatpush1.bf16.msra.mxu0 %v2189
      %2193 = vmatprep.subr.bf16.mxu0 0
      %2194 = vmatpush1.bf16.msra.mxu0 0
      %2195 = vmatprep.subr.bf16.mxu0 0
      %2196 = vmatpush1.bf16.msra.mxu0 0
      %2197 = vmatprep.subr.bf16.mxu0 0
      %2198 = vmatpush1.bf16.msra.mxu0 0
      %2199 = vmatprep.subr.bf16.mxu0 0
      %2200 = vmatpush1.bf16.msra.mxu0 0
      %2201 = vmatprep.subr.bf16.mxu0 0
      %2202 = vmatpush1.bf16.msra.mxu0 0
      %2203 = vmatprep.subr.bf16.mxu0 0
      %2204 = vmatpush1.bf16.msra.mxu0 0
      %2205 = vmatprep.subr.bf16.mxu0 0
      %2206 = vmatpush1.bf16.msra.mxu0 0
      %2207 = vmatprep.subr.bf16.mxu0 0
      %2208 = vmatpush1.bf16.msra.mxu0 0
      %2209 = vmatprep.subr.bf16.mxu0 0
      %2210 = vmatpush1.bf16.msra.mxu0 0
      %2211 = vmatprep.subr.bf16.mxu0 0
      %2212 = vmatpush1.bf16.msra.mxu0 0
      %2213 = vmatprep.subr.bf16.mxu0 0
      %2214 = vmatpush1.bf16.msra.mxu0 0
      %2215 = vmatprep.subr.bf16.mxu0 0
      %2216 = vmatpush1.bf16.msra.mxu0 0
      %2217 = vmatprep.subr.bf16.mxu0 0
      %2218 = vmatpush1.bf16.msra.mxu0 0
      %2219 = vmatprep.subr.bf16.mxu0 0
      %2220 = vmatpush1.bf16.msra.mxu0 0
      %2221 = vmatprep.subr.bf16.mxu0 0
      %2222 = vmatpush1.bf16.msra.mxu0 0
      %2223 = vmatprep.mubr.bf16.mxu0 0
      %2224 = vmatmul.mubr.bf16.gmra.mrb[0].mxu0 %v2186
      %v2225 = vpop.f32.mrb[0].mxu0
      %v2226 = vadd.f32 0.0, %v2225
      %v2227 = vpop.f32.mrb[0].mxu0
      %v2228 = vpop.f32.mrb[0].mxu0
      %v2229 = vpop.f32.mrb[0].mxu0
      %2230 = vdwg.mxu0
      %v2231 = vpack.c.bf16 %v2088, %v2088
      %v2232 = vpack.c.bf16 %v2134, %v2134
      %v2233 = vpack.c.bf16 %v2180, %v2180
      %v2234 = vpack.c.bf16 %v2226, %v2226
      %v2235 = vld [vmem:[%s9] sm:$0xf]
      %v2236 = vld [vmem:[%s9 + $0x4] sm:$0xf]
      %v2237 = vld [vmem:[%s9 + $0x8] sm:$0xf]
      %v2238 = vld [vmem:[%s9 + $0xc] sm:$0xf]
      %v2239 = vld [vmem:[%s9 + $0x10] sm:$0xf]
      %v2240 = vld [vmem:[%s9 + $0x14] sm:$0xf]
      %v2241 = vld [vmem:[%s9 + $0x18] sm:$0xf]
      %v2242 = vld [vmem:[%s9 + $0x1c] sm:$0xf]
      %v2243 = vld [vmem:[%s9 + $0x20] sm:$0xf]
      %v2244 = vld [vmem:[%s9 + $0x24] sm:$0xf]
      %v2245 = vld [vmem:[%s9 + $0x28] sm:$0xf]
      %v2246 = vld [vmem:[%s9 + $0x2c] sm:$0xf]
      %v2247 = vld [vmem:[%s9 + $0x30] sm:$0xf]
      %v2248 = vld [vmem:[%s9 + $0x34] sm:$0xf]
      %v2249 = vld [vmem:[%s9 + $0x38] sm:$0xf]
      %v2250 = vld [vmem:[%s9 + $0x3c] sm:$0xf]
      %v2255 = vunpack.c.l.b16 %v2235
      %v2256 = vunpack.c.l.b16 %v2236
      %v2257 = vunpack.c.l.b16 %v2237
      %v2258 = vunpack.c.l.b16 %v2238
      %v2259 = vpack.c.b16 %v2256, %v2255
      %v2260 = vpack.c.b16 %v2258, %v2257
      %v2264 = vsel %vm1798, %v2231, 0
      %2266 = vmatprep.subr.bf16.mxu0 0
      %2267 = vmatpush1.bf16.msra.mxu0 %v2259
      %2268 = vmatprep.subr.bf16.mxu0 0
      %2269 = vmatpush1.bf16.msra.mxu0 %v2260
      %2270 = vmatprep.subr.bf16.mxu0 0
      %2271 = vmatpush1.bf16.msra.mxu0 0
      %2272 = vmatprep.subr.bf16.mxu0 0
      %2273 = vmatpush1.bf16.msra.mxu0 0
      %2274 = vmatprep.subr.bf16.mxu0 0
      %2275 = vmatpush1.bf16.msra.mxu0 0
      %2276 = vmatprep.subr.bf16.mxu0 0
      %2277 = vmatpush1.bf16.msra.mxu0 0
      %2278 = vmatprep.subr.bf16.mxu0 0
      %2279 = vmatpush1.bf16.msra.mxu0 0
      %2280 = vmatprep.subr.bf16.mxu0 0
      %2281 = vmatpush1.bf16.msra.mxu0 0
      %2282 = vmatprep.subr.bf16.mxu0 0
      %2283 = vmatpush1.bf16.msra.mxu0 0
      %2284 = vmatprep.subr.bf16.mxu0 0
      %2285 = vmatpush1.bf16.msra.mxu0 0
      %2286 = vmatprep.subr.bf16.mxu0 0
      %2287 = vmatpush1.bf16.msra.mxu0 0
      %2288 = vmatprep.subr.bf16.mxu0 0
      %2289 = vmatpush1.bf16.msra.mxu0 0
      %2290 = vmatprep.subr.bf16.mxu0 0
      %2291 = vmatpush1.bf16.msra.mxu0 0
      %2292 = vmatprep.subr.bf16.mxu0 0
      %2293 = vmatpush1.bf16.msra.mxu0 0
      %2294 = vmatprep.subr.bf16.mxu0 0
      %2295 = vmatpush1.bf16.msra.mxu0 0
      %2296 = vmatprep.subr.bf16.mxu0 0
      %2297 = vmatpush1.bf16.msra.mxu0 0
      %2298 = vmatprep.mubr.bf16.mxu0 0
      %2299 = vmatmul.mubr.bf16.gmra.mrb[0].mxu0 %v2264
      %v2300 = vpop.f32.mrb[0].mxu0
      %v2301 = vadd.f32 0.0, %v2300
      %v2302 = vpop.f32.mrb[0].mxu0
      %v2303 = vpop.f32.mrb[0].mxu0
      %v2304 = vpop.f32.mrb[0].mxu0
      %2305 = vdwg.mxu0
      %v2310 = vunpack.c.l.b16 %v2239
      %v2311 = vunpack.c.l.b16 %v2240
      %v2312 = vunpack.c.l.b16 %v2241
      %v2313 = vunpack.c.l.b16 %v2242
      %v2314 = vpack.c.b16 %v2311, %v2310
      %v2315 = vpack.c.b16 %v2313, %v2312
      %v2319 = vsel %vm1798, %v2232, 0
      %2321 = vmatprep.subr.bf16.mxu0 0
      %2322 = vmatpush1.bf16.msra.mxu0 %v2314
      %2323 = vmatprep.subr.bf16.mxu0 0
      %2324 = vmatpush1.bf16.msra.mxu0 %v2315
      %2325 = vmatprep.subr.bf16.mxu0 0
      %2326 = vmatpush1.bf16.msra.mxu0 0
      %2327 = vmatprep.subr.bf16.mxu0 0
      %2328 = vmatpush1.bf16.msra.mxu0 0
      %2329 = vmatprep.subr.bf16.mxu0 0
      %2330 = vmatpush1.bf16.msra.mxu0 0
      %2331 = vmatprep.subr.bf16.mxu0 0
      %2332 = vmatpush1.bf16.msra.mxu0 0
      %2333 = vmatprep.subr.bf16.mxu0 0
      %2334 = vmatpush1.bf16.msra.mxu0 0
      %2335 = vmatprep.subr.bf16.mxu0 0
      %2336 = vmatpush1.bf16.msra.mxu0 0
      %2337 = vmatprep.subr.bf16.mxu0 0
      %2338 = vmatpush1.bf16.msra.mxu0 0
      %2339 = vmatprep.subr.bf16.mxu0 0
      %2340 = vmatpush1.bf16.msra.mxu0 0
      %2341 = vmatprep.subr.bf16.mxu0 0
      %2342 = vmatpush1.bf16.msra.mxu0 0
      %2343 = vmatprep.subr.bf16.mxu0 0
      %2344 = vmatpush1.bf16.msra.mxu0 0
      %2345 = vmatprep.subr.bf16.mxu0 0
      %2346 = vmatpush1.bf16.msra.mxu0 0
      %2347 = vmatprep.subr.bf16.mxu0 0
      %2348 = vmatpush1.bf16.msra.mxu0 0
      %2349 = vmatprep.subr.bf16.mxu0 0
      %2350 = vmatpush1.bf16.msra.mxu0 0
      %2351 = vmatprep.subr.bf16.mxu0 0
      %2352 = vmatpush1.bf16.msra.mxu0 0
      %2353 = vmatprep.mubr.bf16.mxu0 0
      %2354 = vmatmul.mubr.bf16.gmra.mrb[0].mxu0 %v2319
      %v2355 = vpop.f32.mrb[0].mxu0
      %v2356 = vadd.f32 0.0, %v2355
      %v2357 = vpop.f32.mrb[0].mxu0
      %v2358 = vpop.f32.mrb[0].mxu0
      %v2359 = vpop.f32.mrb[0].mxu0
      %2360 = vdwg.mxu0
      %v2365 = vunpack.c.l.b16 %v2243
      %v2366 = vunpack.c.l.b16 %v2244
      %v2367 = vunpack.c.l.b16 %v2245
      %v2368 = vunpack.c.l.b16 %v2246
      %v2369 = vpack.c.b16 %v2366, %v2365
      %v2370 = vpack.c.b16 %v2368, %v2367
      %v2374 = vsel %vm1798, %v2233, 0
      %2376 = vmatprep.subr.bf16.mxu0 0
      %2377 = vmatpush1.bf16.msra.mxu0 %v2369
      %2378 = vmatprep.subr.bf16.mxu0 0
      %2379 = vmatpush1.bf16.msra.mxu0 %v2370
      %2380 = vmatprep.subr.bf16.mxu0 0
      %2381 = vmatpush1.bf16.msra.mxu0 0
      %2382 = vmatprep.subr.bf16.mxu0 0
      %2383 = vmatpush1.bf16.msra.mxu0 0
      %2384 = vmatprep.subr.bf16.mxu0 0
      %2385 = vmatpush1.bf16.msra.mxu0 0
      %2386 = vmatprep.subr.bf16.mxu0 0
      %2387 = vmatpush1.bf16.msra.mxu0 0
      %2388 = vmatprep.subr.bf16.mxu0 0
      %2389 = vmatpush1.bf16.msra.mxu0 0
      %2390 = vmatprep.subr.bf16.mxu0 0
      %2391 = vmatpush1.bf16.msra.mxu0 0
      %2392 = vmatprep.subr.bf16.mxu0 0
      %2393 = vmatpush1.bf16.msra.mxu0 0
      %2394 = vmatprep.subr.bf16.mxu0 0
      %2395 = vmatpush1.bf16.msra.mxu0 0
      %2396 = vmatprep.subr.bf16.mxu0 0
      %2397 = vmatpush1.bf16.msra.mxu0 0
      %2398 = vmatprep.subr.bf16.mxu0 0
      %2399 = vmatpush1.bf16.msra.mxu0 0
      %2400 = vmatprep.subr.bf16.mxu0 0
      %2401 = vmatpush1.bf16.msra.mxu0 0
      %2402 = vmatprep.subr.bf16.mxu0 0
      %2403 = vmatpush1.bf16.msra.mxu0 0
      %2404 = vmatprep.subr.bf16.mxu0 0
      %2405 = vmatpush1.bf16.msra.mxu0 0
      %2406 = vmatprep.subr.bf16.mxu0 0
      %2407 = vmatpush1.bf16.msra.mxu0 0
      %2408 = vmatprep.mubr.bf16.mxu0 0
      %2409 = vmatmul.mubr.bf16.gmra.mrb[0].mxu0 %v2374
      %v2410 = vpop.f32.mrb[0].mxu0
      %v2411 = vadd.f32 0.0, %v2410
      %v2412 = vpop.f32.mrb[0].mxu0
      %v2413 = vpop.f32.mrb[0].mxu0
      %v2414 = vpop.f32.mrb[0].mxu0
      %2415 = vdwg.mxu0
      %v2420 = vunpack.c.l.b16 %v2247
      %v2421 = vunpack.c.l.b16 %v2248
      %v2422 = vunpack.c.l.b16 %v2249
      %v2423 = vunpack.c.l.b16 %v2250
      %v2424 = vpack.c.b16 %v2421, %v2420
      %v2425 = vpack.c.b16 %v2423, %v2422
      %v2429 = vsel %vm1798, %v2234, 0
      %2431 = vmatprep.subr.bf16.mxu0 0
      %2432 = vmatpush1.bf16.msra.mxu0 %v2424
      %2433 = vmatprep.subr.bf16.mxu0 0
      %2434 = vmatpush1.bf16.msra.mxu0 %v2425
      %2435 = vmatprep.subr.bf16.mxu0 0
      %2436 = vmatpush1.bf16.msra.mxu0 0
      %2437 = vmatprep.subr.bf16.mxu0 0
      %2438 = vmatpush1.bf16.msra.mxu0 0
      %2439 = vmatprep.subr.bf16.mxu0 0
      %2440 = vmatpush1.bf16.msra.mxu0 0
      %2441 = vmatprep.subr.bf16.mxu0 0
      %2442 = vmatpush1.bf16.msra.mxu0 0
      %2443 = vmatprep.subr.bf16.mxu0 0
      %2444 = vmatpush1.bf16.msra.mxu0 0
      %2445 = vmatprep.subr.bf16.mxu0 0
      %2446 = vmatpush1.bf16.msra.mxu0 0
      %2447 = vmatprep.subr.bf16.mxu0 0
      %2448 = vmatpush1.bf16.msra.mxu0 0
      %2449 = vmatprep.subr.bf16.mxu0 0
      %2450 = vmatpush1.bf16.msra.mxu0 0
      %2451 = vmatprep.subr.bf16.mxu0 0
      %2452 = vmatpush1.bf16.msra.mxu0 0
      %2453 = vmatprep.subr.bf16.mxu0 0
      %2454 = vmatpush1.bf16.msra.mxu0 0
      %2455 = vmatprep.subr.bf16.mxu0 0
      %2456 = vmatpush1.bf16.msra.mxu0 0
      %2457 = vmatprep.subr.bf16.mxu0 0
      %2458 = vmatpush1.bf16.msra.mxu0 0
      %2459 = vmatprep.subr.bf16.mxu0 0
      %2460 = vmatpush1.bf16.msra.mxu0 0
      %2461 = vmatprep.subr.bf16.mxu0 0
      %2462 = vmatpush1.bf16.msra.mxu0 0
      %2463 = vmatprep.mubr.bf16.mxu0 0
      %2464 = vmatmul.mubr.bf16.gmra.mrb[0].mxu0 %v2429
      %v2465 = vpop.f32.mrb[0].mxu0
      %v2466 = vadd.f32 0.0, %v2465
      %v2467 = vpop.f32.mrb[0].mxu0
      %v2468 = vpop.f32.mrb[0].mxu0
      %v2469 = vpop.f32.mrb[0].mxu0
      %2470 = vdwg.mxu0
      %v2471 = vadd.f32 %v2301, %v2356
      %v2472 = vadd.f32 %v2471, %v2411
      %v2473 = vadd.f32 %v2472, %v2466
      %v2474 = vld [vmem:[%s10] sm:$0x1]
      %v2476 = vlaneseq
      %v2477 = vshrl.u32 %v2476, 7
      %v2478 = vsub.s32 0, %v2477
      %v2479 = vrot.slane %v2474, %v2478
      %v2481 = vadd.f32 %v2473, %v2479
      %v2482 = vunpack.c.l.bf16 %v451
      %v2483 = vadd.f32 %v2481, %v2482
      %v2484 = vld [vmem:[%s11] sm:$0x1]
      %v2485 = vld [vmem:[%s12] sm:$0x1]
      %2486 = vadd.xlane.f32.xlu0 %v2483
      %v2487 = vpop.xlane.xlu0 %2486
      %v2488 = vrcp.pop 128.0
      %v2489 = vmul.f32 %v2487, %v2488
      %v2490 = vsub.f32 %v2483, %v2489
      %v2491 = vmul.f32 %v2490, %v2490
      %2492 = vadd.xlane.f32.xlu0 %v2491
      %v2493 = vpop.xlane.xlu0 %2492
      %v2494 = vmul.f32 %v2493, %v2488
      %v2495 = vadd.f32 %v2494, 1e-05
      %v2496 = vrsqrt.pop %v2495
      %v2497 = vmul.f32 %v2490, %v2496
      %v2499 = vlaneseq
      %v2500 = vshrl.u32 %v2499, 7
      %v2501 = vsub.s32 0, %v2500
      %v2502 = vrot.slane %v2484, %v2501
      %v2504 = vmul.f32 %v2497, %v2502
      %v2506 = vlaneseq
      %v2507 = vshrl.u32 %v2506, 7
      %v2508 = vsub.s32 0, %v2507
      %v2509 = vrot.slane %v2485, %v2508
      %v2511 = vadd.f32 %v2504, %v2509
      %v2512 = vpack.c.bf16 %v2511, %v2511
      %2513 = vst [vmem:[%s449] sm:$0xf] %v2512
      %p2514 = scmp.lt.s32.totalorder %s24, 1
      %s2515 = scalar_select %p2514, %s24, 1
      %s2516 = smul.addr %s2515, 4
      %s2517 = scalar_lea.vmem %s13, %s2516
      // Predicated region
      $region73: #{transformer_forward.13} parent=71 // pred_check
        %p2518 = pneg %p325
      $region74: #{transformer_forward.13} parent=71 // pred_check_branch
        %2520 = sbr.rel (%p2518) target = $region76
      $region75: #{transformer_forward.13} parent=71 // pred_region
        _
      $region76: #{transformer_forward.13} parent=71 // pred_fallthru
        _
    $region72: #{transformer_forward.13} parent=5 // pred_fallthru
      _
    %p2521 = scmp.le.s32.totalorder 2, %s19
    // Predicated region
    $region77: #{transformer_forward.13} parent=5 // pred_check
      %p2522 = pneg %p2521
    $region78: #{transformer_forward.13} parent=5 // pred_check_branch
      %2524 = sbr.rel (%p2522) target = $region80
    $region79: #{transformer_forward.13} parent=5 // pred_region
      %s2525 = ssub.s32 %s19, 2
      // Predicated region
      $region81: #{transformer_forward.13} parent=79 // pred_check
        %p2526 = pneg %p331
      $region82: #{transformer_forward.13} parent=79 // pred_check_branch
        %2528 = sbr.rel (%p2526) target = $region84
      $region83: #{transformer_forward.13} parent=79 // pred_region
        %p2529 = scmp.lt.s32.totalorder %s25, 1
        %s2530 = scalar_select %p2529, %s25, 1
        %s2531 = smul.addr %s2530, 4
        %s2532 = scalar_lea.vmem %s13, %s2531
      $region84: #{transformer_forward.13} parent=79 // pred_fallthru
        _
    $region80: #{transformer_forward.13} parent=5 // pred_fallthru
      _
  $region6: #{transformer_forward.13} parent=0 // loop_footer
    %s23 = sadd.s32 1, %s19
  $region7: #{transformer_forward.13} parent=0 // loop_footer_branch
    %18 = sbr.rel target = $region3
  $region8: #{transformer_forward.13} parent=0 // loop_exit
    _

</llo_original>
